<compile_context>
chip_gen: v7x
topology: tpu7x:2x2x1
jax: 0.10.0
libtpu: 0.0.40
codegen_flags: <defaults>
</compile_context>

<pallas_src>
import functools

import jax
import jax.numpy as jnp
from jax import lax
from jax.experimental import pallas as pl
from jax.experimental.pallas import tpu as pltpu

EMBED_DIM = 768
LANES = 128                      # lane-dense packed/output width
SEG_COLS = 2                     # seg_classifier logits -> slab[:, 0:2]
CLS_COLS = 15                    # classifier logits     -> slab[:, 2:17]
B2_COL = SEG_COLS + CLS_COLS     # ws2 bias scalar parked in bias lane 17 (never read back)
NEG_INF = -1e30


def _bf16_tanh_ok():
    """bf16 tanh only where the EUP has a bf16 path (v6e / v7x); keep f32 on v5e & older."""
    try:
        kind = jax.devices()[0].device_kind.lower()
    except Exception:
        return False
    return any(tag in kind for tag in ("v6", "v7", "7x"))


_USE_BF16_TANH = _bf16_tanh_ok()


def xlnet_head_kernel(x_ref, enc_ref, gra_ref, meta_ref,
                      w1_ref, wb_ref, rhs_ref, bias_ref, out_ref,
                      *, use_bf16_tanh):
    """One grid step = one block of `m` sentences (several whole documents).

    x_ref   : (m, H)    f32  sen_vec (XLNet <sep> representations)
    enc_ref : (m, H)    f32  Encoder output ("out")
    gra_ref : (m, H)    f32  GraphEncoder output ("gra_out")
    meta_ref: (m, 128)  f32  lane 0 = 1.0 on the last sentence of each document
    w1_ref  : (H, H)    bf16 ws1 weight                    (grid-resident, pinned)
    wb_ref  : (2, H)    f32  row 0 = ws1 bias, row 1 = ws2 weight as a row
    rhs_ref : (3, H, 128) bf16 packed small weights:
                block 0: cols 0:2 = seg_classifier W, cols 2:17 = classifier W[:H]
                block 1: cols 2:17 = classifier W[H:2H]   (consumes tanh(seg_emb))
                block 2: cols 2:17 = classifier W[2H:3H]  (consumes tanh(gra_out))
    bias_ref: (1, 128)  f32  cols 0:2 seg bias, 2:17 classifier bias, col 17 = ws2 bias
    out_ref : (m, 128)  f32  lane-dense slab [seg_out(2) | class_out(15) | pad]
              (pad col 17 ends up holding the ws2 bias value; the wrapper never reads it)
    """
    f32, bf16 = jnp.float32, jnp.bfloat16
    m = x_ref.shape[0]
    bias = bias_ref[...]                       # (1, 128)
    wb = wb_ref[...]                           # (2, H)
    doc_end = meta_ref[:, 0:1]                 # (m, 1)

    # ---- seg_classifier + classifier term 1, fused over one packed (H,128) RHS ----
    # tanh(enc) stays in f32 on purpose: it feeds the discrete argmax/label decision,
    # and the f32 EUP path is bit-stable vs. the pure-JAX reference on every generation.
    tanh_enc = jnp.tanh(enc_ref[...]).astype(bf16)
    slab = jnp.dot(tanh_enc, rhs_ref[0], preferred_element_type=f32) + bias   # (m, 128)

    # ---- classifier term 3 (independent of the softmax chain, issue its MXU pass early) ----
    if use_bf16_tanh:
        tanh_gra = jnp.tanh(gra_ref[...].astype(bf16))
    else:
        tanh_gra = jnp.tanh(gra_ref[...]).astype(bf16)
    slab = slab + jnp.dot(tanh_gra, rhs_ref[2], preferred_element_type=f32)
    # TODO(synk): fuse this with the first dot as one (m, 2H) x (2H, 128) MXU pass
    # (concat tanh_enc / tanh_gra along K) to drop one push/pop sequence.

    # ---- pre_seg_index + per-document fixup ("if label[-1] == 0: label[-1] = 1") ----
    label = (slab[:, 1:2] > slab[:, 0:1]).astype(f32)          # (m, 1)
    label = jnp.maximum(label, doc_end)

    # ---- self-attention score s = ws2(tanh(ws1(x))); ws2 as a VPU lane reduction ----
    xb = x_ref[...].astype(bf16)
    pre = jnp.dot(xb, w1_ref[...], preferred_element_type=f32) + wb[0:1, :]
    a = jnp.tanh(pre.astype(bf16)) if use_bf16_tanh else jnp.tanh(pre)
    s = jnp.sum(a * wb[1:2, :], axis=1, keepdims=True) + bias[:, B2_COL:B2_COL + 1]

    # ---- one canonical XLU transpose moves the per-sentence scalars into lanes ----
    ci_small = lax.broadcasted_iota(jnp.int32, (m, LANES), 1)
    packed_cols = (label * (ci_small == 0).astype(f32)
                   + s * (ci_small == 1).astype(f32))          # (m, 128)
    packed_rows = jnp.transpose(packed_cols)                   # (128, m)
    lab_row = packed_rows[0:1, :]                              # (1, m) label along lanes
    s_row = packed_rows[1:2, :]                                # (1, m) score along lanes

    # ---- segment id of sentence j = # boundary labels strictly before j ----
    # Cumulative across the whole block: the forced boundary at every document end keeps
    # segments from ever crossing documents, so the mask below is block-diagonal per doc.
    # f32 sums are exact for any realistic block size (< 2^24 rows).
    ri = lax.broadcasted_iota(jnp.int32, (m, m), 0)
    ci = lax.broadcasted_iota(jnp.int32, (m, m), 1)
    seg_col = jnp.sum(jnp.where(ci < ri, jnp.broadcast_to(lab_row, (m, m)), 0.0),
                      axis=1, keepdims=True)                   # (m, 1)
    seg_row = jnp.sum(jnp.where(ri < ci, jnp.broadcast_to(label, (m, m)), 0.0),
                      axis=0, keepdims=True)                   # (1, m)
    # TODO(synk): for block_rows >> 128 replace the two (m, m) masked sums with a
    # log-step sublane scan (pltpu.roll) to keep the temporaries O(m log m).

    # ---- masked (same-segment) softmax + weighted sum of sen_vec ----
    same = seg_col == seg_row                                  # (m, m)
    logits = jnp.where(same, jnp.broadcast_to(s_row, (m, m)), NEG_INF)
    mx = jnp.max(logits, axis=1, keepdims=True)
    e = jnp.exp(logits - mx)
    p = e * pl.reciprocal(jnp.sum(e, axis=1, keepdims=True), approx=True)   # EUP recip
    seg_emb = jnp.dot(p.astype(bf16), xb, preferred_element_type=f32)       # (m, H)

    # ---- classifier term 2 ----
    if use_bf16_tanh:
        tanh_seg = jnp.tanh(seg_emb.astype(bf16))
    else:
        tanh_seg = jnp.tanh(seg_emb).astype(bf16)
    slab = slab + jnp.dot(tanh_seg, rhs_ref[1], preferred_element_type=f32)

    out_ref[...] = slab                          # single unmasked lane-dense (m, 128) store


def xlnet_encoder_head(sen_vec, enc_out, gcn_out, doc_end, packed, block_rows=128):
    """sen_vec / enc_out / gcn_out: (R, H) f32 with R = num_blocks * block_rows rows
    (documents concatenated along rows, whole documents per block).
    doc_end: (R, 128) f32, lane 0 = 1.0 at the last sentence of each document.
    Returns (seg_out (R, 2), class_out (R, 15))."""
    R, H = sen_vec.shape
    assert R % block_rows == 0 and block_rows % 8 == 0
    nb = R // block_rows

    act_spec = pl.BlockSpec((block_rows, H), lambda b: (b, 0))
    meta_spec = pl.BlockSpec((block_rows, LANES), lambda b: (b, 0))
    out_spec = pl.BlockSpec((block_rows, LANES), lambda b: (b, 0))
    # Weights pinned to block 0: the same block index every grid step -> no re-DMA,
    # w1/rhs/wb/bias stay resident in VMEM across the whole document grid.
    pinned = lambda shape: pl.BlockSpec(shape, lambda b, _s=shape: (0,) * len(_s))

    kernel = functools.partial(xlnet_head_kernel, use_bf16_tanh=_USE_BF16_TANH)
    slab = pl.pallas_call(
        kernel,
        out_shape=jax.ShapeDtypeStruct((R, LANES), jnp.float32),
        grid=(nb,),
        in_specs=[act_spec, act_spec, act_spec, meta_spec,
                  pinned((H, H)), pinned((2, H)), pinned((3, H, LANES)),
                  pinned((1, LANES))],
        out_specs=out_spec,
        compiler_params=pltpu.CompilerParams(
            dimension_semantics=("parallel",),          # splits doc blocks across v7x TCs
            vmem_limit_bytes=32 * 1024 * 1024,          # explicit; fits v7x 64 MiB physical
        ),
    )(sen_vec, enc_out, gcn_out, doc_end,
      packed['w1'], packed['wb'], packed['rhs'], packed['bias'])
    return slab[:, 0:SEG_COLS], slab[:, SEG_COLS:SEG_COLS + CLS_COLS]


def init_params(key, h=EMBED_DIM):
    """Deterministic synthetic init matching the nn.Linear shapes in __init__."""
    ks = jax.random.split(key, 4)

    def lin(k, fan_in, fan_out):
        lim = 1.0 / jnp.sqrt(jnp.float32(fan_in))
        kw, kb = jax.random.split(k)
        w = jax.random.uniform(kw, (fan_in, fan_out), jnp.float32, -lim, lim)
        b = jax.random.uniform(kb, (1, fan_out), jnp.float32, -lim, lim)
        return w, b

    w1, b1 = lin(ks[0], h, h)            # ws1: Linear(768, 768)
    w2, b2 = lin(ks[1], h, 1)            # ws2: Linear(768, 1)
    wseg, bseg = lin(ks[2], h, 2)        # seg_classifier: Linear(768, 2)
    wc, bc = lin(ks[3], 3 * h, 15)       # classifier: Linear(2304, 15)
    return dict(w1=w1, b1=b1, w2=w2, b2=b2, wseg=wseg, bseg=bseg,
                wc1=wc[:h], wc2=wc[h:2 * h], wc3=wc[2 * h:], bc=bc)


def pack_params(p, h=EMBED_DIM, lanes=LANES):
    """Host-side packing: 13 parameter tensors -> 4 kernel inputs."""
    rhs_enc = (jnp.zeros((h, lanes), jnp.float32)
               .at[:, 0:SEG_COLS].set(p['wseg'])
               .at[:, SEG_COLS:SEG_COLS + CLS_COLS].set(p['wc1']))
    rhs_seg = jnp.zeros((h, lanes), jnp.float32).at[:, SEG_COLS:SEG_COLS + CLS_COLS].set(p['wc2'])
    rhs_gra = jnp.zeros((h, lanes), jnp.float32).at[:, SEG_COLS:SEG_COLS + CLS_COLS].set(p['wc3'])
    rhs = jnp.stack([rhs_enc, rhs_seg, rhs_gra]).astype(jnp.bfloat16)   # (3, H, 128) bf16
    wb = jnp.concatenate([p['b1'], p['w2'].T], axis=0)                  # (2, H) f32
    bias = (jnp.zeros((1, lanes), jnp.float32)
            .at[:, 0:SEG_COLS].set(p['bseg'])
            .at[:, SEG_COLS:SEG_COLS + CLS_COLS].set(p['bc'])
            .at[0, B2_COL].set(p['b2'][0, 0]))
    return dict(w1=p['w1'].astype(jnp.bfloat16), wb=wb, rhs=rhs, bias=bias)


def reference(sen_vec, enc_out, gcn_out, p, doc_lens, use_bf16_tanh):
    """Pure-JAX per-document reference of the same math (same matmul / tanh precision)."""
    bf, f32 = jnp.bfloat16, jnp.float32

    def tanh_b(v):   # mirrors the kernel's bf16-tanh policy for gra / seg_emb
        return jnp.tanh(v.astype(bf)) if use_bf16_tanh else jnp.tanh(v).astype(bf)

    seg_list, cls_list = [], []
    start = 0
    for n in doc_lens:
        x = sen_vec[start:start + n]
        enc = enc_out[start:start + n]
        gra = gcn_out[start:start + n]
        start += n

        te = jnp.tanh(enc).astype(bf)                    # kernel keeps this tanh in f32
        seg_out = jnp.dot(te, p['wseg'].astype(bf), preferred_element_type=f32) + p['bseg']
        label = (seg_out[:, 1] > seg_out[:, 0]).astype(f32)
        label = label.at[-1].set(1.0)                    # "if label[-1] == 0: label[-1] = 1"
        seg_id = jnp.cumsum(jnp.concatenate([jnp.zeros((1,), f32), label[:-1]]))

        xb = x.astype(bf)
        pre = jnp.dot(xb, p['w1'].astype(bf), preferred_element_type=f32) + p['b1']
        a = jnp.tanh(pre.astype(bf)).astype(f32) if use_bf16_tanh else jnp.tanh(pre)
        s = jnp.sum(a * p['w2'][:, 0][None, :], axis=1) + p['b2'][0, 0]
        same = seg_id[:, None] == seg_id[None, :]
        prob = jax.nn.softmax(jnp.where(same, s[None, :], NEG_INF), axis=1)
        seg_emb = jnp.dot(prob.astype(bf), xb, preferred_element_type=f32)

        class_out = (jnp.dot(te, p['wc1'].astype(bf), preferred_element_type=f32)
                     + jnp.dot(tanh_b(seg_emb), p['wc2'].astype(bf), preferred_element_type=f32)
                     + jnp.dot(tanh_b(gra), p['wc3'].astype(bf), preferred_element_type=f32)
                     + p['bc'])
        seg_list.append(seg_out)
        cls_list.append(class_out)
    return jnp.concatenate(seg_list, axis=0), jnp.concatenate(cls_list, axis=0)


if __name__ == "__main__":
    key = jax.random.PRNGKey(0)
    k_p, k_x, k_e, k_g = jax.random.split(key, 4)

    H = EMBED_DIM                      # 768, fixed by the module's Linear layers
    SENTS_PER_DOC = 16
    DOCS_PER_BLOCK = 8
    NUM_BLOCKS = 2
    BLOCK_ROWS = SENTS_PER_DOC * DOCS_PER_BLOCK        # 128 rows per grid step (fills MXU)
    R = BLOCK_ROWS * NUM_BLOCKS                        # 256 sentences = 16 documents
    NUM_DOCS = R // SENTS_PER_DOC

    params = init_params(k_p, H)
    packed = pack_params(params)

    # Stand-in activations for the XLNet <sep> vectors, the Encoder and the GraphEncoder.
    sen_vec = jax.random.normal(k_x, (R, H), jnp.float32)
    enc_out = jax.random.normal(k_e, (R, H), jnp.float32)
    gcn_out = jax.random.normal(k_g, (R, H), jnp.float32)

    # Lane 0 marks the last sentence of each document (drives the per-doc label fixup
    # and keeps segments / the softmax mask from crossing document boundaries).
    doc_end = jnp.zeros((R, LANES), jnp.float32)
    end_rows = (jnp.arange(NUM_DOCS) + 1) * SENTS_PER_DOC - 1
    doc_end = doc_end.at[end_rows, 0].set(1.0)

    seg_out, class_out = jax.block_until_ready(
        xlnet_encoder_head(sen_vec, enc_out, gcn_out, doc_end, packed,
                           block_rows=BLOCK_ROWS))

    ref_seg, ref_class = reference(sen_vec, enc_out, gcn_out, params,
                                   doc_lens=[SENTS_PER_DOC] * NUM_DOCS,
                                   use_bf16_tanh=_USE_BF16_TANH)

    assert seg_out.shape == (R, 2) and class_out.shape == (R, 15)
    # approx=True reciprocal in the masked softmax gives ~1e-3 relative error on the
    # attention weights; well inside this tolerance, not bit-exact vs jax.nn.softmax.
    assert jnp.allclose(seg_out, ref_seg, atol=2e-2, rtol=2e-2)
    assert jnp.allclose(class_out, ref_class, atol=2e-2, rtol=2e-2)
    print("KERNEL_OK")
</pallas_src>

<mosaic_0001>
module attributes {stable_mosaic.version = 11 : i64} {
  func.func @xlnet_head_kernel(%arg0: i32, %arg1: memref<128x768xf32, #tpu.memory_space<vmem>>, %arg2: memref<128x768xf32, #tpu.memory_space<vmem>>, %arg3: memref<128x768xf32, #tpu.memory_space<vmem>>, %arg4: memref<128x128xf32, #tpu.memory_space<vmem>>, %arg5: memref<768x768xbf16, #tpu.memory_space<vmem>>, %arg6: memref<2x768xf32, #tpu.memory_space<vmem>>, %arg7: memref<3x768x128xbf16, #tpu.memory_space<vmem>>, %arg8: memref<1x128xf32, #tpu.memory_space<vmem>>, %arg9: memref<128x128xf32, #tpu.memory_space<vmem>>) attributes {dimension_semantics = [#tpu.dimension_semantics<parallel>], iteration_bounds = array<i64: 2>, scalar_prefetch = 0 : i64, scratch_operands = 0 : i64, tpu.core_type = #tpu.core_type<tc>, window_params = [{transform_indices = @transform_0, window_bounds = array<i64: 128, 768>}, {transform_indices = @transform_1, window_bounds = array<i64: 128, 768>}, {transform_indices = @transform_2, window_bounds = array<i64: 128, 768>}, {transform_indices = @transform_3, window_bounds = array<i64: 128, 128>}, {pipeline_mode = #tpu.pipeline_mode<synchronous>, transform_indices = @transform_4, window_bounds = array<i64: 768, 768>}, {pipeline_mode = #tpu.pipeline_mode<synchronous>, transform_indices = @transform_5, window_bounds = array<i64: 2, 768>}, {pipeline_mode = #tpu.pipeline_mode<synchronous>, transform_indices = @transform_6, window_bounds = array<i64: 3, 768, 128>}, {pipeline_mode = #tpu.pipeline_mode<synchronous>, transform_indices = @transform_7, window_bounds = array<i64: 1, 128>}, {transform_indices = @transform_8, window_bounds = array<i64: 128, 128>}]} {
    %c0 = arith.constant 0 : index
    %c0_0 = arith.constant 0 : index
    %0 = vector.load %arg8[%c0, %c0_0] : memref<1x128xf32, #tpu.memory_space<vmem>>, vector<1x128xf32>
    %c0_1 = arith.constant 0 : index
    %c0_2 = arith.constant 0 : index
    %1 = vector.load %arg6[%c0_1, %c0_2] : memref<2x768xf32, #tpu.memory_space<vmem>>, vector<2x768xf32>
    %c0_3 = arith.constant 0 : index
    %c0_4 = arith.constant 0 : index
    %2 = vector.load %arg4[%c0_3, %c0_4] : memref<128x128xf32, #tpu.memory_space<vmem>>, vector<128x1xf32>
    %c0_5 = arith.constant 0 : index
    %c0_6 = arith.constant 0 : index
    %3 = vector.load %arg2[%c0_5, %c0_6] : memref<128x768xf32, #tpu.memory_space<vmem>>, vector<128x768xf32>
    %4 = math.tanh %3 : vector<128x768xf32>
    %5 = arith.truncf %4 : vector<128x768xf32> to vector<128x768xbf16>
    %c0_7 = arith.constant 0 : index
    %c0_8 = arith.constant 0 : index
    %c0_9 = arith.constant 0 : index
    %6 = vector.load %arg7[%c0_7, %c0_8, %c0_9] : memref<3x768x128xbf16, #tpu.memory_space<vmem>>, vector<1x768x128xbf16>
    %7 = vector.shape_cast %6 : vector<1x768x128xbf16> to vector<768x128xbf16>
    %cst = arith.constant dense<0.000000e+00> : vector<128x128xf32>
    %8 = tpu.matmul %5, %7, %cst {dimension_numbers = #tpu.dot_dimension_numbers<[1], [0], [0], [1], [0, 0, 1, 1], [], []>} : vector<128x768xbf16>, vector<768x128xbf16>, vector<128x128xf32> -> vector<128x128xf32>
    %9 = vector.broadcast %0 : vector<1x128xf32> to vector<128x128xf32>
    %10 = arith.addf %8, %9 : vector<128x128xf32>
    %c0_10 = arith.constant 0 : index
    %c0_11 = arith.constant 0 : index
    %11 = vector.load %arg3[%c0_10, %c0_11] : memref<128x768xf32, #tpu.memory_space<vmem>>, vector<128x768xf32>
    %12 = math.tanh %11 : vector<128x768xf32>
    %13 = arith.truncf %12 : vector<128x768xf32> to vector<128x768xbf16>
    %c2 = arith.constant 2 : index
    %c0_12 = arith.constant 0 : index
    %c0_13 = arith.constant 0 : index
    %14 = vector.load %arg7[%c2, %c0_12, %c0_13] : memref<3x768x128xbf16, #tpu.memory_space<vmem>>, vector<1x768x128xbf16>
    %15 = vector.shape_cast %14 : vector<1x768x128xbf16> to vector<768x128xbf16>
    %cst_14 = arith.constant dense<0.000000e+00> : vector<128x128xf32>
    %16 = tpu.matmul %13, %15, %cst_14 {dimension_numbers = #tpu.dot_dimension_numbers<[1], [0], [0], [1], [0, 0, 1, 1], [], []>} : vector<128x768xbf16>, vector<768x128xbf16>, vector<128x128xf32> -> vector<128x128xf32>
    %17 = arith.addf %10, %16 : vector<128x128xf32>
    %18 = vector.extract_strided_slice %17 {offsets = [0, 1], sizes = [128, 1], strides = [1, 1]} : vector<128x128xf32> to vector<128x1xf32>
    %19 = vector.extract_strided_slice %17 {offsets = [0, 0], sizes = [128, 1], strides = [1, 1]} : vector<128x128xf32> to vector<128x1xf32>
    %20 = arith.cmpf ogt, %18, %19 : vector<128x1xf32>
    %21 = arith.extui %20 : vector<128x1xi1> to vector<128x1xi32>
    %22 = arith.sitofp %21 : vector<128x1xi32> to vector<128x1xf32>
    %23 = arith.maximumf %22, %2 : vector<128x1xf32>
    %c0_15 = arith.constant 0 : index
    %c0_16 = arith.constant 0 : index
    %24 = vector.load %arg1[%c0_15, %c0_16] : memref<128x768xf32, #tpu.memory_space<vmem>>, vector<128x768xf32>
    %25 = arith.truncf %24 : vector<128x768xf32> to vector<128x768xbf16>
    %c0_17 = arith.constant 0 : index
    %c0_18 = arith.constant 0 : index
    %26 = vector.load %arg5[%c0_17, %c0_18] : memref<768x768xbf16, #tpu.memory_space<vmem>>, vector<768x768xbf16>
    %cst_19 = arith.constant dense<0.000000e+00> : vector<128x768xf32>
    %27 = tpu.matmul %25, %26, %cst_19 {dimension_numbers = #tpu.dot_dimension_numbers<[1], [0], [0], [1], [0, 0, 1, 1], [], []>} : vector<128x768xbf16>, vector<768x768xbf16>, vector<128x768xf32> -> vector<128x768xf32>
    %28 = vector.extract_strided_slice %1 {offsets = [0, 0], sizes = [1, 768], strides = [1, 1]} : vector<2x768xf32> to vector<1x768xf32>
    %29 = vector.broadcast %28 : vector<1x768xf32> to vector<128x768xf32>
    %30 = arith.addf %27, %29 : vector<128x768xf32>
    %31 = math.tanh %30 : vector<128x768xf32>
    %32 = vector.extract_strided_slice %1 {offsets = [1, 0], sizes = [1, 768], strides = [1, 1]} : vector<2x768xf32> to vector<1x768xf32>
    %33 = vector.broadcast %32 : vector<1x768xf32> to vector<128x768xf32>
    %34 = arith.mulf %31, %33 : vector<128x768xf32>
    %cst_20 = arith.constant dense<0.000000e+00> : vector<128xf32>
    %35 = vector.multi_reduction <add>, %34, %cst_20 [1] : vector<128x768xf32> to vector<128xf32>
    %36 = vector.shape_cast %35 : vector<128xf32> to vector<128x1xf32>
    %37 = vector.extract_strided_slice %0 {offsets = [0, 17], sizes = [1, 1], strides = [1, 1]} : vector<1x128xf32> to vector<1x1xf32>
    %38 = vector.broadcast %37 : vector<1x1xf32> to vector<128x1xf32>
    %39 = arith.addf %36, %38 : vector<128x1xf32>
    %40 = tpu.iota {dimensions = array<i32: 1>} : vector<128x128xi32>
    %c0_i32 = arith.constant 0 : i32
    %41 = vector.broadcast %c0_i32 : i32 to vector<128x128xi32>
    %42 = arith.cmpi eq, %40, %41 : vector<128x128xi32>
    %43 = arith.extui %42 : vector<128x128xi1> to vector<128x128xi32>
    %44 = arith.sitofp %43 : vector<128x128xi32> to vector<128x128xf32>
    %45 = vector.broadcast %23 : vector<128x1xf32> to vector<128x128xf32>
    %46 = arith.mulf %45, %44 : vector<128x128xf32>
    %c1_i32 = arith.constant 1 : i32
    %47 = vector.broadcast %c1_i32 : i32 to vector<128x128xi32>
    %48 = arith.cmpi eq, %40, %47 : vector<128x128xi32>
    %49 = arith.extui %48 : vector<128x128xi1> to vector<128x128xi32>
    %50 = arith.sitofp %49 : vector<128x128xi32> to vector<128x128xf32>
    %51 = vector.broadcast %39 : vector<128x1xf32> to vector<128x128xf32>
    %52 = arith.mulf %51, %50 : vector<128x128xf32>
    %53 = arith.addf %46, %52 : vector<128x128xf32>
    %54 = tpu.transpose %53, [1, 0] : vector<128x128xf32> -> vector<128x128xf32>
    %55 = vector.extract_strided_slice %54 {offsets = [0, 0], sizes = [1, 128], strides = [1, 1]} : vector<128x128xf32> to vector<1x128xf32>
    %56 = vector.extract_strided_slice %54 {offsets = [1, 0], sizes = [1, 128], strides = [1, 1]} : vector<128x128xf32> to vector<1x128xf32>
    %57 = tpu.iota {dimensions = array<i32: 0>} : vector<128x128xi32>
    %58 = tpu.iota {dimensions = array<i32: 1>} : vector<128x128xi32>
    %59 = arith.cmpi slt, %58, %57 : vector<128x128xi32>
    %60 = vector.shape_cast %55 : vector<1x128xf32> to vector<1x128xf32>
    %61 = vector.broadcast %60 : vector<1x128xf32> to vector<128x128xf32>
    %cst_21 = arith.constant 0.000000e+00 : f32
    %62 = vector.broadcast %cst_21 : f32 to vector<128x128xf32>
    %63 = arith.select %59, %61, %62 : vector<128x128xi1>, vector<128x128xf32>
    %cst_22 = arith.constant dense<0.000000e+00> : vector<128xf32>
    %64 = vector.multi_reduction <add>, %63, %cst_22 [1] : vector<128x128xf32> to vector<128xf32>
    %65 = vector.shape_cast %64 : vector<128xf32> to vector<128x1xf32>
    %66 = arith.cmpi slt, %57, %58 : vector<128x128xi32>
    %67 = vector.shape_cast %23 : vector<128x1xf32> to vector<128x1xf32>
    %68 = vector.broadcast %67 : vector<128x1xf32> to vector<128x128xf32>
    %cst_23 = arith.constant 0.000000e+00 : f32
    %69 = vector.broadcast %cst_23 : f32 to vector<128x128xf32>
    %70 = arith.select %66, %68, %69 : vector<128x128xi1>, vector<128x128xf32>
    %cst_24 = arith.constant dense<0.000000e+00> : vector<128xf32>
    %71 = vector.multi_reduction <add>, %70, %cst_24 [0] : vector<128x128xf32> to vector<128xf32>
    %72 = vector.shape_cast %71 : vector<128xf32> to vector<1x128xf32>
    %73 = vector.broadcast %65 : vector<128x1xf32> to vector<128x128xf32>
    %74 = vector.broadcast %72 : vector<1x128xf32> to vector<128x128xf32>
    %75 = arith.cmpf oeq, %73, %74 : vector<128x128xf32>
    %76 = vector.shape_cast %56 : vector<1x128xf32> to vector<1x128xf32>
    %77 = vector.broadcast %76 : vector<1x128xf32> to vector<128x128xf32>
    %cst_25 = arith.constant -1.000000e+30 : f32
    %78 = vector.broadcast %cst_25 : f32 to vector<128x128xf32>
    %79 = arith.select %75, %77, %78 : vector<128x128xi1>, vector<128x128xf32>
    %cst_26 = arith.constant dense<0xFF800000> : vector<128xf32>
    %80 = vector.multi_reduction <maximumf>, %79, %cst_26 [1] : vector<128x128xf32> to vector<128xf32>
    %81 = vector.shape_cast %80 : vector<128xf32> to vector<128x1xf32>
    %82 = vector.broadcast %81 : vector<128x1xf32> to vector<128x128xf32>
    %83 = arith.subf %79, %82 : vector<128x128xf32>
    %84 = math.exp %83 : vector<128x128xf32>
    %cst_27 = arith.constant dense<0.000000e+00> : vector<128xf32>
    %85 = vector.multi_reduction <add>, %84, %cst_27 [1] : vector<128x128xf32> to vector<128xf32>
    %86 = vector.shape_cast %85 : vector<128xf32> to vector<128x1xf32>
    %87 = tpu.reciprocal %86 {approx = true} : vector<128x1xf32> -> vector<128x1xf32>
    %88 = vector.broadcast %87 : vector<128x1xf32> to vector<128x128xf32>
    %89 = arith.mulf %84, %88 : vector<128x128xf32>
    %90 = arith.truncf %89 : vector<128x128xf32> to vector<128x128xbf16>
    %cst_28 = arith.constant dense<0.000000e+00> : vector<128x768xf32>
    %91 = tpu.matmul %90, %25, %cst_28 {dimension_numbers = #tpu.dot_dimension_numbers<[1], [0], [0], [1], [0, 0, 1, 1], [], []>} : vector<128x128xbf16>, vector<128x768xbf16>, vector<128x768xf32> -> vector<128x768xf32>
    %92 = math.tanh %91 : vector<128x768xf32>
    %93 = arith.truncf %92 : vector<128x768xf32> to vector<128x768xbf16>
    %c1 = arith.constant 1 : index
    %c0_29 = arith.constant 0 : index
    %c0_30 = arith.constant 0 : index
    %94 = vector.load %arg7[%c1, %c0_29, %c0_30] : memref<3x768x128xbf16, #tpu.memory_space<vmem>>, vector<1x768x128xbf16>
    %95 = vector.shape_cast %94 : vector<1x768x128xbf16> to vector<768x128xbf16>
    %cst_31 = arith.constant dense<0.000000e+00> : vector<128x128xf32>
    %96 = tpu.matmul %93, %95, %cst_31 {dimension_numbers = #tpu.dot_dimension_numbers<[1], [0], [0], [1], [0, 0, 1, 1], [], []>} : vector<128x768xbf16>, vector<768x128xbf16>, vector<128x128xf32> -> vector<128x128xf32>
    %97 = arith.addf %17, %96 : vector<128x128xf32>
    %c0_32 = arith.constant 0 : index
    %c0_33 = arith.constant 0 : index
    %98 = vector.load %arg9[%c0_32, %c0_33] : memref<128x128xf32, #tpu.memory_space<vmem>>, vector<128x128xf32>
    tpu.vector_store %arg9[%c0_32, %c0_33], %97 {strides = array<i32>} : memref<128x128xf32, #tpu.memory_space<vmem>>, vector<128x128xf32>,
    return
  }
  func.func @transform_0(%arg0: i32) -> (i32, i32) {
    %c0_i32 = arith.constant 0 : i32
    %c0_i32_0 = arith.constant 0 : i32
    return %arg0, %c0_i32 : i32, i32
  }
  func.func @transform_1(%arg0: i32) -> (i32, i32) {
    %c0_i32 = arith.constant 0 : i32
    %c0_i32_0 = arith.constant 0 : i32
    return %arg0, %c0_i32 : i32, i32
  }
  func.func @transform_2(%arg0: i32) -> (i32, i32) {
    %c0_i32 = arith.constant 0 : i32
    %c0_i32_0 = arith.constant 0 : i32
    return %arg0, %c0_i32 : i32, i32
  }
  func.func @transform_3(%arg0: i32) -> (i32, i32) {
    %c0_i32 = arith.constant 0 : i32
    %c0_i32_0 = arith.constant 0 : i32
    return %arg0, %c0_i32 : i32, i32
  }
  func.func @transform_4(%arg0: i32) -> (i32, i32) {
    %c0_i32 = arith.constant 0 : i32
    %c0_i32_0 = arith.constant 0 : i32
    %c0_i32_1 = arith.constant 0 : i32
    return %c0_i32, %c0_i32_0 : i32, i32
  }
  func.func @transform_5(%arg0: i32) -> (i32, i32) {
    %c0_i32 = arith.constant 0 : i32
    %c0_i32_0 = arith.constant 0 : i32
    %c0_i32_1 = arith.constant 0 : i32
    return %c0_i32, %c0_i32_0 : i32, i32
  }
  func.func @transform_6(%arg0: i32) -> (i32, i32, i32) {
    %c0_i32 = arith.constant 0 : i32
    %c0_i32_0 = arith.constant 0 : i32
    %c0_i32_1 = arith.constant 0 : i32
    %c0_i32_2 = arith.constant 0 : i32
    return %c0_i32, %c0_i32_0, %c0_i32_1 : i32, i32, i32
  }
  func.func @transform_7(%arg0: i32) -> (i32, i32) {
    %c0_i32 = arith.constant 0 : i32
    %c0_i32_0 = arith.constant 0 : i32
    %c0_i32_1 = arith.constant 0 : i32
    return %c0_i32, %c0_i32_0 : i32, i32
  }
  func.func @transform_8(%arg0: i32) -> (i32, i32) {
    %c0_i32 = arith.constant 0 : i32
    %c0_i32_0 = arith.constant 0 : i32
    return %arg0, %c0_i32 : i32, i32
  }
}

</mosaic_0001>

<llo_original>
// kernel: tpu_custom_call.1
$region0: #{tpu_custom_call.1}
  #allocation0 [shape = 'u32[]', space=smem, size = 0x4, offset = 0x4, fixed_abs, tag = 'smem constant byte address 0x4 - core index']
  #allocation1 [shape = 'u32[144,128]{1,0:T(1,128)}', space=vmem, size = 0x12000, scoped, tag = 'internal scratch']
  %s0 = inlined_call_operand.hbm [shape: f32[256,768], index: 0, kind: input, shape index: {}]
  %s1 = inlined_call_operand.hbm [shape: f32[256,768], index: 1, kind: input, shape index: {}]
  %s2 = inlined_call_operand.hbm [shape: f32[256,768], index: 2, kind: input, shape index: {}]
  %s3 = inlined_call_operand.hbm [shape: f32[256,128], index: 3, kind: input, shape index: {}]
  %s4 = inlined_call_operand.hbm [shape: bf16[768,768], index: 4, kind: input, shape index: {}]
  %s5 = inlined_call_operand.hbm [shape: f32[2,768], index: 5, kind: input, shape index: {}]
  %s6 = inlined_call_operand.hbm [shape: bf16[3,768,128], index: 6, kind: input, shape index: {}]
  %s7 = inlined_call_operand.hbm [shape: f32[1,128], index: 7, kind: input, shape index: {}]
  %s8 = inlined_call_operand.hbm [shape: f32[256,128], index: 8, kind: output, shape index: {}]
  %s9 = sld [smem:[#allocation0]]
  $region97: #{tpu_custom_call.1} parent=0
    _
  %s11 = ssub.s32 1, %s9
  %s12 = scalar_select 0, %s11, %s9
  $region1: #{tpu_custom_call.1} parent=0
    #allocation2 [shape = 'u8[786432]{0}', space=vmem, size = 0xc0000, scoped, tag = 'input window, operand 0']
    #allocation3 [shape = 's32[2]{0}', space=sflag, size = 0x8, scoped, tag = 'scoped memory for tpu_custom_call.1']
    #allocation4 [shape = 's32[2]{0}', space=sflag, size = 0x8, scoped, tag = 'scoped memory for tpu_custom_call.1']
    #allocation5 [shape = 'u8[786432]{0}', space=vmem, size = 0xc0000, scoped, tag = 'input window, operand 1']
    #allocation6 [shape = 's32[2]{0}', space=sflag, size = 0x8, scoped, tag = 'scoped memory for tpu_custom_call.1']
    #allocation7 [shape = 'u8[786432]{0}', space=vmem, size = 0xc0000, scoped, tag = 'input window, operand 2']
    #allocation8 [shape = 'u8[131072]{0}', space=vmem, size = 0x20000, scoped, tag = 'input window, operand 3']
    #allocation9 [shape = 's32[2]{0}', space=sflag, size = 0x8, scoped, tag = 'scoped memory for tpu_custom_call.1']
    #allocation10 [shape = 'u8[1179648]{0}', space=vmem, size = 0x120000, scoped, tag = 'input window, operand 4, single buffered']
    #allocation11 [shape = 'u8[6144]{0}', space=vmem, size = 0x1800, scoped, tag = 'input window, operand 5, single buffered']
    #allocation12 [shape = 's32[1]{0}', space=sflag, size = 0x4, scoped, tag = 'scoped memory for tpu_custom_call.1']
    #allocation13 [shape = 'u8[589824]{0}', space=vmem, size = 0x90000, scoped, tag = 'input window, operand 6, single buffered']
    #allocation14 [shape = 'u8[512]{0}', space=vmem, size = 0x400, scoped, tag = 'input window, operand 7, single buffered']
    #allocation15 [shape = 's32[1]{0}', space=sflag, size = 0x4, scoped, tag = 'scoped memory for tpu_custom_call.1']
    #allocation16 [shape = 'u8[131072]{0}', space=vmem, size = 0x20000, scoped, tag = 'output window, operand 0']
    %13 = vsyncpa [#allocation3], 0
    %s14 = scalar_lea.sflag [#allocation3], 1
    %15 = vsyncpa %s14, 0
    %16 = vsyncpa [#allocation6], 0
    %s17 = scalar_lea.sflag [#allocation6], 1
    %18 = vsyncpa %s17, 0
    %19 = vsyncpa [#allocation9], 0
    %s20 = scalar_lea.sflag [#allocation9], 1
    %21 = vsyncpa %s20, 0
    %22 = vsyncpa [#allocation12], 0
    %23 = vsyncpa [#allocation15], 0
    %24 = vsyncpa [#allocation4], 0
    %s25 = scalar_lea.sflag [#allocation4], 1
    %26 = vsyncpa %s25, 0
    loop: start=0, step=1, limit=4
    $region2: #{tpu_custom_call.1} parent=1 // loop_pre_header
      _
    $region3: #{tpu_custom_call.1} parent=1 // loop_header
      %s28 = sphi 0, %s32
      %p29 = scmp.ge.s32.totalorder %s28, 4
      %s38 = sphi 0, %s40
      %s41 = sphi 0, %s38
      %s42 = sphi 0, %s41
      %s58 = sphi 0, %s42
      %s64 = sphi 0, %s66
      %s67 = sphi 0, %s64
      %s68 = sphi 0, %s67
      %s84 = sphi 0, %s68
      %s90 = sphi 0, %s92
      %s93 = sphi 0, %s90
      %s94 = sphi 0, %s93
      %s110 = sphi 0, %s94
      %s116 = sphi 0, %s118
      %s119 = sphi 0, %s116
      %s120 = sphi 0, %s119
      %s136 = sphi 0, %s120
      %s140 = sphi 0, %s140
      %s142 = sphi 0, %s140
      %s143 = sphi 0, %s142
      %s157 = sphi 0, %s143
      %s161 = sphi 0, %s161
      %s163 = sphi 0, %s161
      %s164 = sphi 0, %s163
      %s178 = sphi 0, %s164
      %s182 = sphi 0, %s182
      %s184 = sphi 0, %s182
      %s185 = sphi 0, %s184
      %s199 = sphi 0, %s185
      %s203 = sphi 0, %s203
      %s205 = sphi 0, %s203
      %s206 = sphi 0, %s205
      %s220 = sphi 0, %s206
      %s226 = sphi 0, %s228
      %s229 = sphi 0, %s226
      %s230 = sphi 0, %s229
      %s246 = sphi 0, %s230
    $region4: #{tpu_custom_call.1} parent=1 // loop_header_branch
      %31 = sbr.rel (%p29) target = $region8
    $region5: #{tpu_custom_call.1} parent=1 // loop_body
      %s33 = ssub.s32 %s28, 1
      %s34 = ssub.s32 %s28, 2
      %s35 = sadd.s32 %s28, 1
      %s36 = ssub.s32 %s28, %s35
      %p37 = scmp.eq.s32.totalorder %s36, 0
      %s39 = sadd.s32 %s38, 1
      %s40 = scalar_select %p37, %s38, %s39
      %p43 = pneg %p37
      %p44 = scmp.eq.s32.totalorder %s28, 1
      %p45 = por %p43, %p44
      %p46 = scmp.ne.s32.totalorder %s38, %s41
      %p47 = scmp.eq.s32.totalorder %s28, 0
      %p48 = por %p46, %p47
      %p49 = scmp.ne.s32.totalorder %s38, %s41
      %p50 = scmp.eq.s32.totalorder %s33, 1
      %p51 = por %p49, %p50
      %p52 = scmp.ne.s32.totalorder %s41, %s42
      %p53 = scmp.eq.s32.totalorder %s33, 0
      %p54 = por %p52, %p53
      %p55 = scmp.ne.s32.totalorder %s41, %s42
      %p56 = scmp.eq.s32.totalorder %s34, 1
      %p57 = por %p55, %p56
      %p59 = scmp.ne.s32.totalorder %s42, %s58
      %p60 = scmp.eq.s32.totalorder %s34, 0
      %p61 = por %p59, %p60
      %s62 = ssub.s32 %s28, %s35
      %p63 = scmp.eq.s32.totalorder %s62, 0
      %s65 = sadd.s32 %s64, 1
      %s66 = scalar_select %p63, %s64, %s65
      %p69 = pneg %p63
      %p70 = scmp.eq.s32.totalorder %s28, 1
      %p71 = por %p69, %p70
      %p72 = scmp.ne.s32.totalorder %s64, %s67
      %p73 = scmp.eq.s32.totalorder %s28, 0
      %p74 = por %p72, %p73
      %p75 = scmp.ne.s32.totalorder %s64, %s67
      %p76 = scmp.eq.s32.totalorder %s33, 1
      %p77 = por %p75, %p76
      %p78 = scmp.ne.s32.totalorder %s67, %s68
      %p79 = scmp.eq.s32.totalorder %s33, 0
      %p80 = por %p78, %p79
      %p81 = scmp.ne.s32.totalorder %s67, %s68
      %p82 = scmp.eq.s32.totalorder %s34, 1
      %p83 = por %p81, %p82
      %p85 = scmp.ne.s32.totalorder %s68, %s84
      %p86 = scmp.eq.s32.totalorder %s34, 0
      %p87 = por %p85, %p86
      %s88 = ssub.s32 %s28, %s35
      %p89 = scmp.eq.s32.totalorder %s88, 0
      %s91 = sadd.s32 %s90, 1
      %s92 = scalar_select %p89, %s90, %s91
      %p95 = pneg %p89
      %p96 = scmp.eq.s32.totalorder %s28, 1
      %p97 = por %p95, %p96
      %p98 = scmp.ne.s32.totalorder %s90, %s93
      %p99 = scmp.eq.s32.totalorder %s28, 0
      %p100 = por %p98, %p99
      %p101 = scmp.ne.s32.totalorder %s90, %s93
      %p102 = scmp.eq.s32.totalorder %s33, 1
      %p103 = por %p101, %p102
      %p104 = scmp.ne.s32.totalorder %s93, %s94
      %p105 = scmp.eq.s32.totalorder %s33, 0
      %p106 = por %p104, %p105
      %p107 = scmp.ne.s32.totalorder %s93, %s94
      %p108 = scmp.eq.s32.totalorder %s34, 1
      %p109 = por %p107, %p108
      %p111 = scmp.ne.s32.totalorder %s94, %s110
      %p112 = scmp.eq.s32.totalorder %s34, 0
      %p113 = por %p111, %p112
      %s114 = ssub.s32 %s28, %s35
      %p115 = scmp.eq.s32.totalorder %s114, 0
      %s117 = sadd.s32 %s116, 1
      %s118 = scalar_select %p115, %s116, %s117
      %p121 = pneg %p115
      %p122 = scmp.eq.s32.totalorder %s28, 1
      %p123 = por %p121, %p122
      %p124 = scmp.ne.s32.totalorder %s116, %s119
      %p125 = scmp.eq.s32.totalorder %s28, 0
      %p126 = por %p124, %p125
      %p127 = scmp.ne.s32.totalorder %s116, %s119
      %p128 = scmp.eq.s32.totalorder %s33, 1
      %p129 = por %p127, %p128
      %p130 = scmp.ne.s32.totalorder %s119, %s120
      %p131 = scmp.eq.s32.totalorder %s33, 0
      %p132 = por %p130, %p131
      %p133 = scmp.ne.s32.totalorder %s119, %s120
      %p134 = scmp.eq.s32.totalorder %s34, 1
      %p135 = por %p133, %p134
      %p137 = scmp.ne.s32.totalorder %s120, %s136
      %p138 = scmp.eq.s32.totalorder %s34, 0
      %p139 = por %p137, %p138
      %s141 = sadd.s32 %s140, 1
      %p144 = scmp.eq.s32.totalorder %s28, 1
      %p145 = scmp.ne.s32.totalorder %s140, %s142
      %p146 = scmp.eq.s32.totalorder %s28, 0
      %p147 = por %p145, %p146
      %p148 = scmp.ne.s32.totalorder %s140, %s142
      %p149 = scmp.eq.s32.totalorder %s33, 1
      %p150 = por %p148, %p149
      %p151 = scmp.ne.s32.totalorder %s142, %s143
      %p152 = scmp.eq.s32.totalorder %s33, 0
      %p153 = por %p151, %p152
      %p154 = scmp.ne.s32.totalorder %s142, %s143
      %p155 = scmp.eq.s32.totalorder %s34, 1
      %p156 = por %p154, %p155
      %p158 = scmp.ne.s32.totalorder %s143, %s157
      %p159 = scmp.eq.s32.totalorder %s34, 0
      %p160 = por %p158, %p159
      %s162 = sadd.s32 %s161, 1
      %p165 = scmp.eq.s32.totalorder %s28, 1
      %p166 = scmp.ne.s32.totalorder %s161, %s163
      %p167 = scmp.eq.s32.totalorder %s28, 0
      %p168 = por %p166, %p167
      %p169 = scmp.ne.s32.totalorder %s161, %s163
      %p170 = scmp.eq.s32.totalorder %s33, 1
      %p171 = por %p169, %p170
      %p172 = scmp.ne.s32.totalorder %s163, %s164
      %p173 = scmp.eq.s32.totalorder %s33, 0
      %p174 = por %p172, %p173
      %p175 = scmp.ne.s32.totalorder %s163, %s164
      %p176 = scmp.eq.s32.totalorder %s34, 1
      %p177 = por %p175, %p176
      %p179 = scmp.ne.s32.totalorder %s164, %s178
      %p180 = scmp.eq.s32.totalorder %s34, 0
      %p181 = por %p179, %p180
      %s183 = sadd.s32 %s182, 1
      %p186 = scmp.eq.s32.totalorder %s28, 1
      %p187 = scmp.ne.s32.totalorder %s182, %s184
      %p188 = scmp.eq.s32.totalorder %s28, 0
      %p189 = por %p187, %p188
      %p190 = scmp.ne.s32.totalorder %s182, %s184
      %p191 = scmp.eq.s32.totalorder %s33, 1
      %p192 = por %p190, %p191
      %p193 = scmp.ne.s32.totalorder %s184, %s185
      %p194 = scmp.eq.s32.totalorder %s33, 0
      %p195 = por %p193, %p194
      %p196 = scmp.ne.s32.totalorder %s184, %s185
      %p197 = scmp.eq.s32.totalorder %s34, 1
      %p198 = por %p196, %p197
      %p200 = scmp.ne.s32.totalorder %s185, %s199
      %p201 = scmp.eq.s32.totalorder %s34, 0
      %p202 = por %p200, %p201
      %s204 = sadd.s32 %s203, 1
      %p207 = scmp.eq.s32.totalorder %s28, 1
      %p208 = scmp.ne.s32.totalorder %s203, %s205
      %p209 = scmp.eq.s32.totalorder %s28, 0
      %p210 = por %p208, %p209
      %p211 = scmp.ne.s32.totalorder %s203, %s205
      %p212 = scmp.eq.s32.totalorder %s33, 1
      %p213 = por %p211, %p212
      %p214 = scmp.ne.s32.totalorder %s205, %s206
      %p215 = scmp.eq.s32.totalorder %s33, 0
      %p216 = por %p214, %p215
      %p217 = scmp.ne.s32.totalorder %s205, %s206
      %p218 = scmp.eq.s32.totalorder %s34, 1
      %p219 = por %p217, %p218
      %p221 = scmp.ne.s32.totalorder %s206, %s220
      %p222 = scmp.eq.s32.totalorder %s34, 0
      %p223 = por %p221, %p222
      %s224 = ssub.s32 %s28, %s35
      %p225 = scmp.eq.s32.totalorder %s224, 0
      %s227 = sadd.s32 %s226, 1
      %s228 = scalar_select %p225, %s226, %s227
      %p231 = pneg %p225
      %p232 = scmp.eq.s32.totalorder %s28, 1
      %p233 = por %p231, %p232
      %p234 = scmp.ne.s32.totalorder %s226, %s229
      %p235 = scmp.eq.s32.totalorder %s28, 0
      %p236 = por %p234, %p235
      %p237 = scmp.ne.s32.totalorder %s226, %s229
      %p238 = scmp.eq.s32.totalorder %s33, 1
      %p239 = por %p237, %p238
      %p240 = scmp.ne.s32.totalorder %s229, %s230
      %p241 = scmp.eq.s32.totalorder %s33, 0
      %p242 = por %p240, %p241
      %p243 = scmp.ne.s32.totalorder %s229, %s230
      %p244 = scmp.eq.s32.totalorder %s34, 1
      %p245 = por %p243, %p244
      %p247 = scmp.ne.s32.totalorder %s230, %s246
      %p248 = scmp.eq.s32.totalorder %s34, 0
      %p249 = por %p247, %p248
      %p250 = scmp.le.s32.totalorder 1, %s28
      %p251 = scmp.lt.s32.totalorder %s28, 3
      %p252 = pnand %p250, %p251
      %p253 = pneg %p252
      // Predicated region
      $region9: #{tpu_custom_call.1} parent=5 // pred_check
        _
      $region10: #{tpu_custom_call.1} parent=5 // pred_check_branch
        %255 = sbr.rel (%p252) target = $region12
      $region11: #{tpu_custom_call.1} parent=5 // pred_region
        %s256 = ssub.s32 %s28, 1
        // Predicated region
        $region13: #{tpu_custom_call.1} parent=11 // pred_check
          %p257 = pneg %p153
        $region14: #{tpu_custom_call.1} parent=11 // pred_check_branch
          %259 = sbr.rel (%p257) target = $region16
        $region15: #{tpu_custom_call.1} parent=11 // pred_region
          %s261 = ssub.s32 36864, 36864
          %262 = vsyncadd [#allocation9], %s261
          %s263 = sshll.u32 [#allocation10], 4
          %s264 = int_to_ptr.vmem [resolvable:$true] %s263
          %269 = dma.hbm_to_vmem [thread:$0]  %s4, 36864, %s264, [#allocation9], 384, 384, 24
        $region16: #{tpu_custom_call.1} parent=11 // pred_fallthru
          _
        // Predicated region
        $region17: #{tpu_custom_call.1} parent=11 // pred_check
          %p270 = pneg %p174
        $region18: #{tpu_custom_call.1} parent=11 // pred_check_branch
          %272 = sbr.rel (%p270) target = $region20
        $region19: #{tpu_custom_call.1} parent=11 // pred_region
          %s274 = ssub.s32 192, 192
          %275 = vsyncadd [#allocation12], %s274
          %s277 = sshll.u32 [#allocation11], 4
          %s278 = int_to_ptr.vmem [resolvable:$true] %s277
          %280 = dma.hbm_to_vmem [thread:$0]  %s5, 192, %s278, [#allocation12]
        $region20: #{tpu_custom_call.1} parent=11 // pred_fallthru
          _
        // Predicated region
        $region21: #{tpu_custom_call.1} parent=11 // pred_check
          %p281 = pneg %p195
        $region22: #{tpu_custom_call.1} parent=11 // pred_check_branch
          %283 = sbr.rel (%p281) target = $region24
        $region23: #{tpu_custom_call.1} parent=11 // pred_region
          %s285 = ssub.s32 18432, 18432
          %286 = vsyncadd [#allocation12], %s285
          %s287 = sshll.u32 [#allocation13], 4
          %s288 = int_to_ptr.vmem [resolvable:$true] %s287
          %293 = dma.hbm_to_vmem [thread:$0]  %s6, 18432, %s288, [#allocation12], 64, 64, 4
        $region24: #{tpu_custom_call.1} parent=11 // pred_fallthru
          _
        // Predicated region
        $region25: #{tpu_custom_call.1} parent=11 // pred_check
          %p294 = pneg %p216
        $region26: #{tpu_custom_call.1} parent=11 // pred_check_branch
          %296 = sbr.rel (%p294) target = $region28
        $region27: #{tpu_custom_call.1} parent=11 // pred_region
          %s298 = ssub.s32 16, 16
          %299 = vsyncadd [#allocation15], %s298
          %s301 = sshll.u32 [#allocation14], 4
          %s302 = int_to_ptr.vmem [resolvable:$true] %s301
          %304 = dma.hbm_to_vmem [thread:$0]  %s7, 16, %s302, [#allocation15]
        $region28: #{tpu_custom_call.1} parent=11 // pred_fallthru
          _
      $region12: #{tpu_custom_call.1} parent=5 // pred_fallthru
        _
      %p305 = scmp.lt.s32.totalorder %s28, 2
      // Predicated region
      $region29: #{tpu_custom_call.1} parent=5 // pred_check
        %p306 = pneg %p305
      $region30: #{tpu_custom_call.1} parent=5 // pred_check_branch
        %308 = sbr.rel (%p306) target = $region32
      $region31: #{tpu_custom_call.1} parent=5 // pred_region
        // Predicated region
        $region33: #{tpu_custom_call.1} parent=31 // pred_check
          %p309 = pneg %p48
        $region34: #{tpu_custom_call.1} parent=31 // pred_check_branch
          %311 = sbr.rel (%p309) target = $region36
        $region35: #{tpu_custom_call.1} parent=31 // pred_region
          %s312 = sand.u32 %s38, 1
          %s313 = scalar_lea.sflag [#allocation3], %s312
          %s314 = sand.u32 %s38, 1
          %s315 = smul.addr %s314, 768
          %s316 = scalar_lea.vmem [#allocation2], %s315
          %s317 = smul.u32 16, %s28
          %s319 = ssub.s32 12288, 12288
          %320 = vsyncadd %s313, %s319
          %s321 = smul.addr %s317, 6
          %s322 = smul.addr %s321, 128
          %s323 = scalar_lea.hbm %s0, %s322
          %s324 = sshll.u32 %s316, 4
          %s325 = int_to_ptr.vmem [resolvable:$true] %s324
          %330 = dma.hbm_to_vmem [thread:$0]  %s323, 12288, %s325, %s313, 768, 768, 48
        $region36: #{tpu_custom_call.1} parent=31 // pred_fallthru
          _
        // Predicated region
        $region37: #{tpu_custom_call.1} parent=31 // pred_check
          %p331 = pneg %p74
        $region38: #{tpu_custom_call.1} parent=31 // pred_check_branch
          %333 = sbr.rel (%p331) target = $region40
        $region39: #{tpu_custom_call.1} parent=31 // pred_region
          %s334 = sand.u32 %s28, 1
          %s335 = scalar_lea.sflag [#allocation6], %s334
          %s336 = sand.u32 %s64, 1
          %s337 = smul.addr %s336, 768
          %s338 = scalar_lea.vmem [#allocation5], %s337
          %s339 = smul.u32 16, %s28
          %s341 = ssub.s32 12288, 12288
          %342 = vsyncadd %s335, %s341
          %s343 = smul.addr %s339, 6
          %s344 = smul.addr %s343, 128
          %s345 = scalar_lea.hbm %s1, %s344
          %s346 = sshll.u32 %s338, 4
          %s347 = int_to_ptr.vmem [resolvable:$true] %s346
          %352 = dma.hbm_to_vmem [thread:$0]  %s345, 12288, %s347, %s335, 768, 768, 48
        $region40: #{tpu_custom_call.1} parent=31 // pred_fallthru
          _
        // Predicated region
        $region41: #{tpu_custom_call.1} parent=31 // pred_check
          %p353 = pneg %p100
        $region42: #{tpu_custom_call.1} parent=31 // pred_check_branch
          %355 = sbr.rel (%p353) target = $region44
        $region43: #{tpu_custom_call.1} parent=31 // pred_region
          %s356 = sand.u32 %s28, 1
          %s357 = scalar_lea.sflag [#allocation6], %s356
          %s358 = sand.u32 %s90, 1
          %s359 = smul.addr %s358, 768
          %s360 = scalar_lea.vmem [#allocation7], %s359
          %s361 = smul.u32 16, %s28
          %s363 = ssub.s32 12288, 12288
          %364 = vsyncadd %s357, %s363
          %s365 = smul.addr %s361, 6
          %s366 = smul.addr %s365, 128
          %s367 = scalar_lea.hbm %s2, %s366
          %s368 = sshll.u32 %s360, 4
          %s369 = int_to_ptr.vmem [resolvable:$true] %s368
          %374 = dma.hbm_to_vmem [thread:$0]  %s367, 12288, %s369, %s357, 768, 768, 48
        $region44: #{tpu_custom_call.1} parent=31 // pred_fallthru
          _
        // Predicated region
        $region45: #{tpu_custom_call.1} parent=31 // pred_check
          %p375 = pneg %p126
        $region46: #{tpu_custom_call.1} parent=31 // pred_check_branch
          %377 = sbr.rel (%p375) target = $region48
        $region47: #{tpu_custom_call.1} parent=31 // pred_region
          %s378 = sand.u32 %s28, 1
          %s379 = scalar_lea.sflag [#allocation9], %s378
          %s380 = sand.u32 %s116, 1
          %s381 = smul.addr %s380, 128
          %s382 = scalar_lea.vmem [#allocation8], %s381
          %s383 = smul.u32 16, %s28
          %s385 = ssub.s32 2048, 2048
          %386 = vsyncadd %s379, %s385
          %s387 = smul.addr %s383, 128
          %s388 = scalar_lea.hbm %s3, %s387
          %s389 = sshll.u32 %s382, 4
          %s390 = int_to_ptr.vmem [resolvable:$true] %s389
          %395 = dma.hbm_to_vmem [thread:$0]  %s388, 2048, %s390, %s379, 128, 128, 8
        $region48: #{tpu_custom_call.1} parent=31 // pred_fallthru
          _
      $region32: #{tpu_custom_call.1} parent=5 // pred_fallthru
        _
      %p396 = scmp.le.s32.totalorder 1, %s28
      %p397 = scmp.lt.s32.totalorder %s28, 3
      %p398 = pnand %p396, %p397
      %p399 = pneg %p398
      // Predicated region
      $region49: #{tpu_custom_call.1} parent=5 // pred_check
        _
      $region50: #{tpu_custom_call.1} parent=5 // pred_check_branch
        %401 = sbr.rel (%p398) target = $region52
      $region51: #{tpu_custom_call.1} parent=5 // pred_region
        %s402 = ssub.s32 %s28, 1
        %s403 = sand.u32 %s41, 1
        %s404 = scalar_lea.sflag [#allocation3], %s403
        %s405 = sand.u32 %s41, 1
        %s406 = smul.addr %s405, 768
        %s407 = scalar_lea.vmem [#allocation2], %s406
        // Predicated region
        $region53: #{tpu_custom_call.1} parent=51 // pred_check
          %p408 = pneg %p54
        $region54: #{tpu_custom_call.1} parent=51 // pred_check_branch
          %410 = sbr.rel (%p408) target = $region56
        $region55: #{tpu_custom_call.1} parent=51 // pred_region
          %411 = dma.done %s404, 12288
        $region56: #{tpu_custom_call.1} parent=51 // pred_fallthru
          _
        %s412 = sand.u32 %s33, 1
        %s413 = scalar_lea.sflag [#allocation6], %s412
        %s414 = sand.u32 %s67, 1
        %s415 = smul.addr %s414, 768
        %s416 = scalar_lea.vmem [#allocation5], %s415
        // Predicated region
        $region57: #{tpu_custom_call.1} parent=51 // pred_check
          %p417 = pneg %p80
        $region58: #{tpu_custom_call.1} parent=51 // pred_check_branch
          %419 = sbr.rel (%p417) target = $region60
        $region59: #{tpu_custom_call.1} parent=51 // pred_region
          %420 = dma.done %s413, 12288
        $region60: #{tpu_custom_call.1} parent=51 // pred_fallthru
          _
        %s421 = sand.u32 %s33, 1
        %s422 = scalar_lea.sflag [#allocation6], %s421
        %s423 = sand.u32 %s93, 1
        %s424 = smul.addr %s423, 768
        %s425 = scalar_lea.vmem [#allocation7], %s424
        // Predicated region
        $region61: #{tpu_custom_call.1} parent=51 // pred_check
          %p426 = pneg %p106
        $region62: #{tpu_custom_call.1} parent=51 // pred_check_branch
          %428 = sbr.rel (%p426) target = $region64
        $region63: #{tpu_custom_call.1} parent=51 // pred_region
          %429 = dma.done %s422, 12288
        $region64: #{tpu_custom_call.1} parent=51 // pred_fallthru
          _
        %s430 = sand.u32 %s33, 1
        %s431 = scalar_lea.sflag [#allocation9], %s430
        %s432 = sand.u32 %s119, 1
        %s433 = smul.addr %s432, 128
        %s434 = scalar_lea.vmem [#allocation8], %s433
        // Predicated region
        $region65: #{tpu_custom_call.1} parent=51 // pred_check
          %p435 = pneg %p132
        $region66: #{tpu_custom_call.1} parent=51 // pred_check_branch
          %437 = sbr.rel (%p435) target = $region68
        $region67: #{tpu_custom_call.1} parent=51 // pred_region
          %438 = dma.done %s431, 2048
        $region68: #{tpu_custom_call.1} parent=51 // pred_fallthru
          _
        // Predicated region
        $region69: #{tpu_custom_call.1} parent=51 // pred_check
          %p439 = pneg %p153
        $region70: #{tpu_custom_call.1} parent=51 // pred_check_branch
          %441 = sbr.rel (%p439) target = $region72
        $region71: #{tpu_custom_call.1} parent=51 // pred_region
          %442 = dma.done [#allocation9], 36864
        $region72: #{tpu_custom_call.1} parent=51 // pred_fallthru
          _
        // Predicated region
        $region73: #{tpu_custom_call.1} parent=51 // pred_check
          %p443 = pneg %p174
        $region74: #{tpu_custom_call.1} parent=51 // pred_check_branch
          %445 = sbr.rel (%p443) target = $region76
        $region75: #{tpu_custom_call.1} parent=51 // pred_region
          %446 = dma.done [#allocation12], 192
        $region76: #{tpu_custom_call.1} parent=51 // pred_fallthru
          _
        // Predicated region
        $region77: #{tpu_custom_call.1} parent=51 // pred_check
          %p447 = pneg %p195
        $region78: #{tpu_custom_call.1} parent=51 // pred_check_branch
          %449 = sbr.rel (%p447) target = $region80
        $region79: #{tpu_custom_call.1} parent=51 // pred_region
          %450 = dma.done [#allocation12], 18432
        $region80: #{tpu_custom_call.1} parent=51 // pred_fallthru
          _
        // Predicated region
        $region81: #{tpu_custom_call.1} parent=51 // pred_check
          %p451 = pneg %p216
        $region82: #{tpu_custom_call.1} parent=51 // pred_check_branch
          %453 = sbr.rel (%p451) target = $region84
        $region83: #{tpu_custom_call.1} parent=51 // pred_region
          %454 = dma.done [#allocation15], 16
        $region84: #{tpu_custom_call.1} parent=51 // pred_fallthru
          _
        %s455 = sand.u32 %s41, 1
        %s456 = scalar_lea.sflag [#allocation3], %s455
        %s457 = sand.u32 %s41, 1
        %s458 = smul.addr %s457, 768
        %s459 = scalar_lea.vmem [#allocation2], %s458
        %p460 = pneg %p54
        %p461 = pneg %p51
        %s462 = sand.u32 %s33, 1
        %s463 = scalar_lea.sflag [#allocation6], %s462
        %s464 = sand.u32 %s67, 1
        %s465 = smul.addr %s464, 768
        %s466 = scalar_lea.vmem [#allocation5], %s465
        %p467 = pneg %p80
        %p468 = pneg %p77
        %s469 = sand.u32 %s33, 1
        %s470 = scalar_lea.sflag [#allocation6], %s469
        %s471 = sand.u32 %s93, 1
        %s472 = smul.addr %s471, 768
        %s473 = scalar_lea.vmem [#allocation7], %s472
        %p474 = pneg %p106
        %p475 = pneg %p103
        %s476 = sand.u32 %s33, 1
        %s477 = scalar_lea.sflag [#allocation9], %s476
        %s478 = sand.u32 %s119, 1
        %s479 = smul.addr %s478, 128
        %s480 = scalar_lea.vmem [#allocation8], %s479
        %p481 = pneg %p132
        %p482 = pneg %p129
        %p483 = pneg %p153
        %p484 = pneg %p150
        %p485 = pneg %p174
        %p486 = pneg %p171
        %p487 = pneg %p195
        %p488 = pneg %p192
        %p489 = pneg %p216
        %p490 = pneg %p213
        %p491 = pneg %p242
        %p492 = pneg %p239
        %s493 = sand.u32 %s229, 1
        %s494 = scalar_lea.sflag [#allocation4], %s493
        %s495 = sand.u32 %s229, 1
        %s496 = smul.addr %s495, 128
        %s497 = scalar_lea.vmem [#allocation16], %s496
        %s498 = smul.u32 16, %s33
        %s499 = smul.u32 16, %s33
        %s500 = smul.u32 16, %s33
        %s501 = smul.u32 16, %s33
        %s502 = smul.u32 16, %s33
        %v504 = vld [vmem:[#allocation14] sm:$0x1]
        %v505 = vld [vmem:[#allocation11] sm:$0xff]
        %v506 = vld [vmem:[#allocation11 + $0x8] sm:$0xf]
        %v507 = vld [vmem:[%s434] sm:$0xff]
        %v508 = vld [vmem:[%s434 + $0x8] sm:$0xff]
        %v509 = vld [vmem:[%s434 + $0x10] sm:$0xff]
        %v510 = vld [vmem:[%s434 + $0x18] sm:$0xff]
        %v511 = vld [vmem:[%s434 + $0x20] sm:$0xff]
        %v512 = vld [vmem:[%s434 + $0x28] sm:$0xff]
        %v513 = vld [vmem:[%s434 + $0x30] sm:$0xff]
        %v514 = vld [vmem:[%s434 + $0x38] sm:$0xff]
        %v515 = vld [vmem:[%s434 + $0x40] sm:$0xff]
        %v516 = vld [vmem:[%s434 + $0x48] sm:$0xff]
        %v517 = vld [vmem:[%s434 + $0x50] sm:$0xff]
        %v518 = vld [vmem:[%s434 + $0x58] sm:$0xff]
        %v519 = vld [vmem:[%s434 + $0x60] sm:$0xff]
        %v520 = vld [vmem:[%s434 + $0x68] sm:$0xff]
        %v521 = vld [vmem:[%s434 + $0x70] sm:$0xff]
        %v522 = vld [vmem:[%s434 + $0x78] sm:$0xff]
        %v523 = vld [vmem:[%s416] sm:$0xff]
        %v524 = vld [vmem:[%s416 + $0x8] sm:$0xff]
        %v525 = vld [vmem:[%s416 + $0x10] sm:$0xff]
        %v526 = vld [vmem:[%s416 + $0x18] sm:$0xff]
        %v527 = vld [vmem:[%s416 + $0x20] sm:$0xff]
        %v528 = vld [vmem:[%s416 + $0x28] sm:$0xff]
        %v529 = vld [vmem:[%s416 + $0x30] sm:$0xff]
        %v530 = vld [vmem:[%s416 + $0x38] sm:$0xff]
        %v531 = vld [vmem:[%s416 + $0x40] sm:$0xff]
        %v532 = vld [vmem:[%s416 + $0x48] sm:$0xff]
        %v533 = vld [vmem:[%s416 + $0x50] sm:$0xff]
        %v534 = vld [vmem:[%s416 + $0x58] sm:$0xff]
        %v535 = vld [vmem:[%s416 + $0x60] sm:$0xff]
        %v536 = vld [vmem:[%s416 + $0x68] sm:$0xff]
        %v537 = vld [vmem:[%s416 + $0x70] sm:$0xff]
        %v538 = vld [vmem:[%s416 + $0x78] sm:$0xff]
        %v539 = vld [vmem:[%s416 + $0x80] sm:$0xff]
        %v540 = vld [vmem:[%s416 + $0x88] sm:$0xff]
        %v541 = vld [vmem:[%s416 + $0x90] sm:$0xff]
        %v542 = vld [vmem:[%s416 + $0x98] sm:$0xff]
        %v543 = vld [vmem:[%s416 + $0xa0] sm:$0xff]
        %v544 = vld [vmem:[%s416 + $0xa8] sm:$0xff]
        %v545 = vld [vmem:[%s416 + $0xb0] sm:$0xff]
        %v546 = vld [vmem:[%s416 + $0xb8] sm:$0xff]
        %v547 = vld [vmem:[%s416 + $0xc0] sm:$0xff]
        %v548 = vld [vmem:[%s416 + $0xc8] sm:$0xff]
        %v549 = vld [vmem:[%s416 + $0xd0] sm:$0xff]
        %v550 = vld [vmem:[%s416 + $0xd8] sm:$0xff]
        %v551 = vld [vmem:[%s416 + $0xe0] sm:$0xff]
        %v552 = vld [vmem:[%s416 + $0xe8] sm:$0xff]
        %v553 = vld [vmem:[%s416 + $0xf0] sm:$0xff]
        %v554 = vld [vmem:[%s416 + $0xf8] sm:$0xff]
        %v555 = vld [vmem:[%s416 + $0x100] sm:$0xff]
        %v556 = vld [vmem:[%s416 + $0x108] sm:$0xff]
        %v557 = vld [vmem:[%s416 + $0x110] sm:$0xff]
        %v558 = vld [vmem:[%s416 + $0x118] sm:$0xff]
        %v559 = vld [vmem:[%s416 + $0x120] sm:$0xff]
        %v560 = vld [vmem:[%s416 + $0x128] sm:$0xff]
        %v561 = vld [vmem:[%s416 + $0x130] sm:$0xff]
        %v562 = vld [vmem:[%s416 + $0x138] sm:$0xff]
        %v563 = vld [vmem:[%s416 + $0x140] sm:$0xff]
        %v564 = vld [vmem:[%s416 + $0x148] sm:$0xff]
        %v565 = vld [vmem:[%s416 + $0x150] sm:$0xff]
        %v566 = vld [vmem:[%s416 + $0x158] sm:$0xff]
        %v567 = vld [vmem:[%s416 + $0x160] sm:$0xff]
        %v568 = vld [vmem:[%s416 + $0x168] sm:$0xff]
        %v569 = vld [vmem:[%s416 + $0x170] sm:$0xff]
        %v570 = vld [vmem:[%s416 + $0x178] sm:$0xff]
        %v571 = vld [vmem:[%s416 + $0x180] sm:$0xff]
        %v572 = vld [vmem:[%s416 + $0x188] sm:$0xff]
        %v573 = vld [vmem:[%s416 + $0x190] sm:$0xff]
        %v574 = vld [vmem:[%s416 + $0x198] sm:$0xff]
        %v575 = vld [vmem:[%s416 + $0x1a0] sm:$0xff]
        %v576 = vld [vmem:[%s416 + $0x1a8] sm:$0xff]
        %v577 = vld [vmem:[%s416 + $0x1b0] sm:$0xff]
        %v578 = vld [vmem:[%s416 + $0x1b8] sm:$0xff]
        %v579 = vld [vmem:[%s416 + $0x1c0] sm:$0xff]
        %v580 = vld [vmem:[%s416 + $0x1c8] sm:$0xff]
        %v581 = vld [vmem:[%s416 + $0x1d0] sm:$0xff]
        %v582 = vld [vmem:[%s416 + $0x1d8] sm:$0xff]
        %v583 = vld [vmem:[%s416 + $0x1e0] sm:$0xff]
        %v584 = vld [vmem:[%s416 + $0x1e8] sm:$0xff]
        %v585 = vld [vmem:[%s416 + $0x1f0] sm:$0xff]
        %v586 = vld [vmem:[%s416 + $0x1f8] sm:$0xff]
        %v587 = vld [vmem:[%s416 + $0x200] sm:$0xff]
        %v588 = vld [vmem:[%s416 + $0x208] sm:$0xff]
        %v589 = vld [vmem:[%s416 + $0x210] sm:$0xff]
        %v590 = vld [vmem:[%s416 + $0x218] sm:$0xff]
        %v591 = vld [vmem:[%s416 + $0x220] sm:$0xff]
        %v592 = vld [vmem:[%s416 + $0x228] sm:$0xff]
        %v593 = vld [vmem:[%s416 + $0x230] sm:$0xff]
        %v594 = vld [vmem:[%s416 + $0x238] sm:$0xff]
        %v595 = vld [vmem:[%s416 + $0x240] sm:$0xff]
        %v596 = vld [vmem:[%s416 + $0x248] sm:$0xff]
        %v597 = vld [vmem:[%s416 + $0x250] sm:$0xff]
        %v598 = vld [vmem:[%s416 + $0x258] sm:$0xff]
        %v599 = vld [vmem:[%s416 + $0x260] sm:$0xff]
        %v600 = vld [vmem:[%s416 + $0x268] sm:$0xff]
        %v601 = vld [vmem:[%s416 + $0x270] sm:$0xff]
        %v602 = vld [vmem:[%s416 + $0x278] sm:$0xff]
        %v603 = vld [vmem:[%s416 + $0x280] sm:$0xff]
        %v604 = vld [vmem:[%s416 + $0x288] sm:$0xff]
        %v605 = vld [vmem:[%s416 + $0x290] sm:$0xff]
        %v606 = vld [vmem:[%s416 + $0x298] sm:$0xff]
        %v607 = vld [vmem:[%s416 + $0x2a0] sm:$0xff]
        %v608 = vld [vmem:[%s416 + $0x2a8] sm:$0xff]
        %v609 = vld [vmem:[%s416 + $0x2b0] sm:$0xff]
        %v610 = vld [vmem:[%s416 + $0x2b8] sm:$0xff]
        %v611 = vld [vmem:[%s416 + $0x2c0] sm:$0xff]
        %v612 = vld [vmem:[%s416 + $0x2c8] sm:$0xff]
        %v613 = vld [vmem:[%s416 + $0x2d0] sm:$0xff]
        %v614 = vld [vmem:[%s416 + $0x2d8] sm:$0xff]
        %v615 = vld [vmem:[%s416 + $0x2e0] sm:$0xff]
        %v616 = vld [vmem:[%s416 + $0x2e8] sm:$0xff]
        %v617 = vld [vmem:[%s416 + $0x2f0] sm:$0xff]
        %v618 = vld [vmem:[%s416 + $0x2f8] sm:$0xff]
        %v619 = vtanh.pop %v523
        %v620 = vtanh.pop %v524
        %v621 = vtanh.pop %v525
        %v622 = vtanh.pop %v526
        %v623 = vtanh.pop %v527
        %v624 = vtanh.pop %v528
        %v625 = vtanh.pop %v529
        %v626 = vtanh.pop %v530
        %v627 = vtanh.pop %v531
        %v628 = vtanh.pop %v532
        %v629 = vtanh.pop %v533
        %v630 = vtanh.pop %v534
        %v631 = vtanh.pop %v535
        %v632 = vtanh.pop %v536
        %v633 = vtanh.pop %v537
        %v634 = vtanh.pop %v538
        %v635 = vtanh.pop %v539
        %v636 = vtanh.pop %v540
        %v637 = vtanh.pop %v541
        %v638 = vtanh.pop %v542
        %v639 = vtanh.pop %v543
        %v640 = vtanh.pop %v544
        %v641 = vtanh.pop %v545
        %v642 = vtanh.pop %v546
        %v643 = vtanh.pop %v547
        %v644 = vtanh.pop %v548
        %v645 = vtanh.pop %v549
        %v646 = vtanh.pop %v550
        %v647 = vtanh.pop %v551
        %v648 = vtanh.pop %v552
        %v649 = vtanh.pop %v553
        %v650 = vtanh.pop %v554
        %v651 = vtanh.pop %v555
        %v652 = vtanh.pop %v556
        %v653 = vtanh.pop %v557
        %v654 = vtanh.pop %v558
        %v655 = vtanh.pop %v559
        %v656 = vtanh.pop %v560
        %v657 = vtanh.pop %v561
        %v658 = vtanh.pop %v562
        %v659 = vtanh.pop %v563
        %v660 = vtanh.pop %v564
        %v661 = vtanh.pop %v565
        %v662 = vtanh.pop %v566
        %v663 = vtanh.pop %v567
        %v664 = vtanh.pop %v568
        %v665 = vtanh.pop %v569
        %v666 = vtanh.pop %v570
        %v667 = vtanh.pop %v571
        %v668 = vtanh.pop %v572
        %v669 = vtanh.pop %v573
        %v670 = vtanh.pop %v574
        %v671 = vtanh.pop %v575
        %v672 = vtanh.pop %v576
        %v673 = vtanh.pop %v577
        %v674 = vtanh.pop %v578
        %v675 = vtanh.pop %v579
        %v676 = vtanh.pop %v580
        %v677 = vtanh.pop %v581
        %v678 = vtanh.pop %v582
        %v679 = vtanh.pop %v583
        %v680 = vtanh.pop %v584
        %v681 = vtanh.pop %v585
        %v682 = vtanh.pop %v586
        %v683 = vtanh.pop %v587
        %v684 = vtanh.pop %v588
        %v685 = vtanh.pop %v589
        %v686 = vtanh.pop %v590
        %v687 = vtanh.pop %v591
        %v688 = vtanh.pop %v592
        %v689 = vtanh.pop %v593
        %v690 = vtanh.pop %v594
        %v691 = vtanh.pop %v595
        %v692 = vtanh.pop %v596
        %v693 = vtanh.pop %v597
        %v694 = vtanh.pop %v598
        %v695 = vtanh.pop %v599
        %v696 = vtanh.pop %v600
        %v697 = vtanh.pop %v601
        %v698 = vtanh.pop %v602
        %v699 = vtanh.pop %v603
        %v700 = vtanh.pop %v604
        %v701 = vtanh.pop %v605
        %v702 = vtanh.pop %v606
        %v703 = vtanh.pop %v607
        %v704 = vtanh.pop %v608
        %v705 = vtanh.pop %v609
        %v706 = vtanh.pop %v610
        %v707 = vtanh.pop %v611
        %v708 = vtanh.pop %v612
        %v709 = vtanh.pop %v613
        %v710 = vtanh.pop %v614
        %v711 = vtanh.pop %v615
        %v712 = vtanh.pop %v616
        %v713 = vtanh.pop %v617
        %v714 = vtanh.pop %v618
        %v715 = vpack.c.bf16 %v625, %v619
        %v716 = vpack.c.bf16 %v626, %v620
        %v717 = vpack.c.bf16 %v627, %v621
        %v718 = vpack.c.bf16 %v628, %v622
        %v719 = vpack.c.bf16 %v629, %v623
        %v720 = vpack.c.bf16 %v630, %v624
        %v721 = vpack.c.bf16 %v637, %v631
        %v722 = vpack.c.bf16 %v638, %v632
        %v723 = vpack.c.bf16 %v639, %v633
        %v724 = vpack.c.bf16 %v640, %v634
        %v725 = vpack.c.bf16 %v641, %v635
        %v726 = vpack.c.bf16 %v642, %v636
        %v727 = vpack.c.bf16 %v649, %v643
        %v728 = vpack.c.bf16 %v650, %v644
        %v729 = vpack.c.bf16 %v651, %v645
        %v730 = vpack.c.bf16 %v652, %v646
        %v731 = vpack.c.bf16 %v653, %v647
        %v732 = vpack.c.bf16 %v654, %v648
        %v733 = vpack.c.bf16 %v661, %v655
        %v734 = vpack.c.bf16 %v662, %v656
        %v735 = vpack.c.bf16 %v663, %v657
        %v736 = vpack.c.bf16 %v664, %v658
        %v737 = vpack.c.bf16 %v665, %v659
        %v738 = vpack.c.bf16 %v666, %v660
        %v739 = vpack.c.bf16 %v673, %v667
        %v740 = vpack.c.bf16 %v674, %v668
        %v741 = vpack.c.bf16 %v675, %v669
        %v742 = vpack.c.bf16 %v676, %v670
        %v743 = vpack.c.bf16 %v677, %v671
        %v744 = vpack.c.bf16 %v678, %v672
        %v745 = vpack.c.bf16 %v685, %v679
        %v746 = vpack.c.bf16 %v686, %v680
        %v747 = vpack.c.bf16 %v687, %v681
        %v748 = vpack.c.bf16 %v688, %v682
        %v749 = vpack.c.bf16 %v689, %v683
        %v750 = vpack.c.bf16 %v690, %v684
        %v751 = vpack.c.bf16 %v697, %v691
        %v752 = vpack.c.bf16 %v698, %v692
        %v753 = vpack.c.bf16 %v699, %v693
        %v754 = vpack.c.bf16 %v700, %v694
        %v755 = vpack.c.bf16 %v701, %v695
        %v756 = vpack.c.bf16 %v702, %v696
        %v757 = vpack.c.bf16 %v709, %v703
        %v758 = vpack.c.bf16 %v710, %v704
        %v759 = vpack.c.bf16 %v711, %v705
        %v760 = vpack.c.bf16 %v712, %v706
        %v761 = vpack.c.bf16 %v713, %v707
        %v762 = vpack.c.bf16 %v714, %v708
        %v763 = vld [vmem:[#allocation13] sm:$0xf]
        %v764 = vld [vmem:[#allocation13 + $0x4] sm:$0xf]
        %v765 = vld [vmem:[#allocation13 + $0x8] sm:$0xf]
        %v766 = vld [vmem:[#allocation13 + $0xc] sm:$0xf]
        %v767 = vld [vmem:[#allocation13 + $0x10] sm:$0xf]
        %v768 = vld [vmem:[#allocation13 + $0x14] sm:$0xf]
        %v769 = vld [vmem:[#allocation13 + $0x18] sm:$0xf]
        %v770 = vld [vmem:[#allocation13 + $0x1c] sm:$0xf]
        %v771 = vld [vmem:[#allocation13 + $0x20] sm:$0xf]
        %v772 = vld [vmem:[#allocation13 + $0x24] sm:$0xf]
        %v773 = vld [vmem:[#allocation13 + $0x28] sm:$0xf]
        %v774 = vld [vmem:[#allocation13 + $0x2c] sm:$0xf]
        %v775 = vld [vmem:[#allocation13 + $0x30] sm:$0xf]
        %v776 = vld [vmem:[#allocation13 + $0x34] sm:$0xf]
        %v777 = vld [vmem:[#allocation13 + $0x38] sm:$0xf]
        %v778 = vld [vmem:[#allocation13 + $0x3c] sm:$0xf]
        %v779 = vld [vmem:[#allocation13 + $0x40] sm:$0xf]
        %v780 = vld [vmem:[#allocation13 + $0x44] sm:$0xf]
        %v781 = vld [vmem:[#allocation13 + $0x48] sm:$0xf]
        %v782 = vld [vmem:[#allocation13 + $0x4c] sm:$0xf]
        %v783 = vld [vmem:[#allocation13 + $0x50] sm:$0xf]
        %v784 = vld [vmem:[#allocation13 + $0x54] sm:$0xf]
        %v785 = vld [vmem:[#allocation13 + $0x58] sm:$0xf]
        %v786 = vld [vmem:[#allocation13 + $0x5c] sm:$0xf]
        %v787 = vld [vmem:[#allocation13 + $0x60] sm:$0xf]
        %v788 = vld [vmem:[#allocation13 + $0x64] sm:$0xf]
        %v789 = vld [vmem:[#allocation13 + $0x68] sm:$0xf]
        %v790 = vld [vmem:[#allocation13 + $0x6c] sm:$0xf]
        %v791 = vld [vmem:[#allocation13 + $0x70] sm:$0xf]
        %v792 = vld [vmem:[#allocation13 + $0x74] sm:$0xf]
        %v793 = vld [vmem:[#allocation13 + $0x78] sm:$0xf]
        %v794 = vld [vmem:[#allocation13 + $0x7c] sm:$0xf]
        %v795 = vld [vmem:[#allocation13 + $0x80] sm:$0xf]
        %v796 = vld [vmem:[#allocation13 + $0x84] sm:$0xf]
        %v797 = vld [vmem:[#allocation13 + $0x88] sm:$0xf]
        %v798 = vld [vmem:[#allocation13 + $0x8c] sm:$0xf]
        %v799 = vld [vmem:[#allocation13 + $0x90] sm:$0xf]
        %v800 = vld [vmem:[#allocation13 + $0x94] sm:$0xf]
        %v801 = vld [vmem:[#allocation13 + $0x98] sm:$0xf]
        %v802 = vld [vmem:[#allocation13 + $0x9c] sm:$0xf]
        %v803 = vld [vmem:[#allocation13 + $0xa0] sm:$0xf]
        %v804 = vld [vmem:[#allocation13 + $0xa4] sm:$0xf]
        %v805 = vld [vmem:[#allocation13 + $0xa8] sm:$0xf]
        %v806 = vld [vmem:[#allocation13 + $0xac] sm:$0xf]
        %v807 = vld [vmem:[#allocation13 + $0xb0] sm:$0xf]
        %v808 = vld [vmem:[#allocation13 + $0xb4] sm:$0xf]
        %v809 = vld [vmem:[#allocation13 + $0xb8] sm:$0xf]
        %v810 = vld [vmem:[#allocation13 + $0xbc] sm:$0xf]
        %v811 = vld [vmem:[#allocation13 + $0xc0] sm:$0xf]
        %v812 = vld [vmem:[#allocation13 + $0xc4] sm:$0xf]
        %v813 = vld [vmem:[#allocation13 + $0xc8] sm:$0xf]
        %v814 = vld [vmem:[#allocation13 + $0xcc] sm:$0xf]
        %v815 = vld [vmem:[#allocation13 + $0xd0] sm:$0xf]
        %v816 = vld [vmem:[#allocation13 + $0xd4] sm:$0xf]
        %v817 = vld [vmem:[#allocation13 + $0xd8] sm:$0xf]
        %v818 = vld [vmem:[#allocation13 + $0xdc] sm:$0xf]
        %v819 = vld [vmem:[#allocation13 + $0xe0] sm:$0xf]
        %v820 = vld [vmem:[#allocation13 + $0xe4] sm:$0xf]
        %v821 = vld [vmem:[#allocation13 + $0xe8] sm:$0xf]
        %v822 = vld [vmem:[#allocation13 + $0xec] sm:$0xf]
        %v823 = vld [vmem:[#allocation13 + $0xf0] sm:$0xf]
        %v824 = vld [vmem:[#allocation13 + $0xf4] sm:$0xf]
        %v825 = vld [vmem:[#allocation13 + $0xf8] sm:$0xf]
        %v826 = vld [vmem:[#allocation13 + $0xfc] sm:$0xf]
        %v827 = vld [vmem:[#allocation13 + $0x100] sm:$0xf]
        %v828 = vld [vmem:[#allocation13 + $0x104] sm:$0xf]
        %v829 = vld [vmem:[#allocation13 + $0x108] sm:$0xf]
        %v830 = vld [vmem:[#allocation13 + $0x10c] sm:$0xf]
        %v831 = vld [vmem:[#allocation13 + $0x110] sm:$0xf]
        %v832 = vld [vmem:[#allocation13 + $0x114] sm:$0xf]
        %v833 = vld [vmem:[#allocation13 + $0x118] sm:$0xf]
        %v834 = vld [vmem:[#allocation13 + $0x11c] sm:$0xf]
        %v835 = vld [vmem:[#allocation13 + $0x120] sm:$0xf]
        %v836 = vld [vmem:[#allocation13 + $0x124] sm:$0xf]
        %v837 = vld [vmem:[#allocation13 + $0x128] sm:$0xf]
        %v838 = vld [vmem:[#allocation13 + $0x12c] sm:$0xf]
        %v839 = vld [vmem:[#allocation13 + $0x130] sm:$0xf]
        %v840 = vld [vmem:[#allocation13 + $0x134] sm:$0xf]
        %v841 = vld [vmem:[#allocation13 + $0x138] sm:$0xf]
        %v842 = vld [vmem:[#allocation13 + $0x13c] sm:$0xf]
        %v843 = vld [vmem:[#allocation13 + $0x140] sm:$0xf]
        %v844 = vld [vmem:[#allocation13 + $0x144] sm:$0xf]
        %v845 = vld [vmem:[#allocation13 + $0x148] sm:$0xf]
        %v846 = vld [vmem:[#allocation13 + $0x14c] sm:$0xf]
        %v847 = vld [vmem:[#allocation13 + $0x150] sm:$0xf]
        %v848 = vld [vmem:[#allocation13 + $0x154] sm:$0xf]
        %v849 = vld [vmem:[#allocation13 + $0x158] sm:$0xf]
        %v850 = vld [vmem:[#allocation13 + $0x15c] sm:$0xf]
        %v851 = vld [vmem:[#allocation13 + $0x160] sm:$0xf]
        %v852 = vld [vmem:[#allocation13 + $0x164] sm:$0xf]
        %v853 = vld [vmem:[#allocation13 + $0x168] sm:$0xf]
        %v854 = vld [vmem:[#allocation13 + $0x16c] sm:$0xf]
        %v855 = vld [vmem:[#allocation13 + $0x170] sm:$0xf]
        %v856 = vld [vmem:[#allocation13 + $0x174] sm:$0xf]
        %v857 = vld [vmem:[#allocation13 + $0x178] sm:$0xf]
        %v858 = vld [vmem:[#allocation13 + $0x17c] sm:$0xf]
        %v860 = vlaneseq
        %v861 = vshrl.u32 %v860, 7
        %v862 = vsub.s32 0, %v861
        %v863 = vrot.slane %v504, %v862
        %v961 = vunpack.c.l.b16 %v763
        %v962 = vunpack.c.l.b16 %v764
        %v963 = vunpack.c.l.b16 %v765
        %v964 = vunpack.c.l.b16 %v766
        %v965 = vunpack.c.l.b16 %v767
        %v966 = vunpack.c.l.b16 %v768
        %v967 = vunpack.c.l.b16 %v769
        %v968 = vunpack.c.l.b16 %v770
        %v969 = vunpack.c.l.b16 %v771
        %v970 = vunpack.c.l.b16 %v772
        %v971 = vunpack.c.l.b16 %v773
        %v972 = vunpack.c.l.b16 %v774
        %v973 = vunpack.c.l.b16 %v775
        %v974 = vunpack.c.l.b16 %v776
        %v975 = vunpack.c.l.b16 %v777
        %v976 = vunpack.c.l.b16 %v778
        %v977 = vunpack.c.l.b16 %v779
        %v978 = vunpack.c.l.b16 %v780
        %v979 = vunpack.c.l.b16 %v781
        %v980 = vunpack.c.l.b16 %v782
        %v981 = vunpack.c.l.b16 %v783
        %v982 = vunpack.c.l.b16 %v784
        %v983 = vunpack.c.l.b16 %v785
        %v984 = vunpack.c.l.b16 %v786
        %v985 = vunpack.c.l.b16 %v787
        %v986 = vunpack.c.l.b16 %v788
        %v987 = vunpack.c.l.b16 %v789
        %v988 = vunpack.c.l.b16 %v790
        %v989 = vunpack.c.l.b16 %v791
        %v990 = vunpack.c.l.b16 %v792
        %v991 = vunpack.c.l.b16 %v793
        %v992 = vunpack.c.l.b16 %v794
        %v993 = vunpack.c.l.b16 %v795
        %v994 = vunpack.c.l.b16 %v796
        %v995 = vunpack.c.l.b16 %v797
        %v996 = vunpack.c.l.b16 %v798
        %v997 = vunpack.c.l.b16 %v799
        %v998 = vunpack.c.l.b16 %v800
        %v999 = vunpack.c.l.b16 %v801
        %v1000 = vunpack.c.l.b16 %v802
        %v1001 = vunpack.c.l.b16 %v803
        %v1002 = vunpack.c.l.b16 %v804
        %v1003 = vunpack.c.l.b16 %v805
        %v1004 = vunpack.c.l.b16 %v806
        %v1005 = vunpack.c.l.b16 %v807
        %v1006 = vunpack.c.l.b16 %v808
        %v1007 = vunpack.c.l.b16 %v809
        %v1008 = vunpack.c.l.b16 %v810
        %v1009 = vunpack.c.l.b16 %v811
        %v1010 = vunpack.c.l.b16 %v812
        %v1011 = vunpack.c.l.b16 %v813
        %v1012 = vunpack.c.l.b16 %v814
        %v1013 = vunpack.c.l.b16 %v815
        %v1014 = vunpack.c.l.b16 %v816
        %v1015 = vunpack.c.l.b16 %v817
        %v1016 = vunpack.c.l.b16 %v818
        %v1017 = vunpack.c.l.b16 %v819
        %v1018 = vunpack.c.l.b16 %v820
        %v1019 = vunpack.c.l.b16 %v821
        %v1020 = vunpack.c.l.b16 %v822
        %v1021 = vunpack.c.l.b16 %v823
        %v1022 = vunpack.c.l.b16 %v824
        %v1023 = vunpack.c.l.b16 %v825
        %v1024 = vunpack.c.l.b16 %v826
        %v1025 = vunpack.c.l.b16 %v827
        %v1026 = vunpack.c.l.b16 %v828
        %v1027 = vunpack.c.l.b16 %v829
        %v1028 = vunpack.c.l.b16 %v830
        %v1029 = vunpack.c.l.b16 %v831
        %v1030 = vunpack.c.l.b16 %v832
        %v1031 = vunpack.c.l.b16 %v833
        %v1032 = vunpack.c.l.b16 %v834
        %v1033 = vunpack.c.l.b16 %v835
        %v1034 = vunpack.c.l.b16 %v836
        %v1035 = vunpack.c.l.b16 %v837
        %v1036 = vunpack.c.l.b16 %v838
        %v1037 = vunpack.c.l.b16 %v839
        %v1038 = vunpack.c.l.b16 %v840
        %v1039 = vunpack.c.l.b16 %v841
        %v1040 = vunpack.c.l.b16 %v842
        %v1041 = vunpack.c.l.b16 %v843
        %v1042 = vunpack.c.l.b16 %v844
        %v1043 = vunpack.c.l.b16 %v845
        %v1044 = vunpack.c.l.b16 %v846
        %v1045 = vunpack.c.l.b16 %v847
        %v1046 = vunpack.c.l.b16 %v848
        %v1047 = vunpack.c.l.b16 %v849
        %v1048 = vunpack.c.l.b16 %v850
        %v1049 = vunpack.c.l.b16 %v851
        %v1050 = vunpack.c.l.b16 %v852
        %v1051 = vunpack.c.l.b16 %v853
        %v1052 = vunpack.c.l.b16 %v854
        %v1053 = vunpack.c.l.b16 %v855
        %v1054 = vunpack.c.l.b16 %v856
        %v1055 = vunpack.c.l.b16 %v857
        %v1056 = vunpack.c.l.b16 %v858
        %v1057 = vpack.c.b16 %v962, %v961
        %v1058 = vpack.c.b16 %v964, %v963
        %v1059 = vpack.c.b16 %v966, %v965
        %v1060 = vpack.c.b16 %v968, %v967
        %v1061 = vpack.c.b16 %v970, %v969
        %v1062 = vpack.c.b16 %v972, %v971
        %v1063 = vpack.c.b16 %v974, %v973
        %v1064 = vpack.c.b16 %v976, %v975
        %v1065 = vpack.c.b16 %v978, %v977
        %v1066 = vpack.c.b16 %v980, %v979
        %v1067 = vpack.c.b16 %v982, %v981
        %v1068 = vpack.c.b16 %v984, %v983
        %v1069 = vpack.c.b16 %v986, %v985
        %v1070 = vpack.c.b16 %v988, %v987
        %v1071 = vpack.c.b16 %v990, %v989
        %v1072 = vpack.c.b16 %v992, %v991
        %v1073 = vpack.c.b16 %v994, %v993
        %v1074 = vpack.c.b16 %v996, %v995
        %v1075 = vpack.c.b16 %v998, %v997
        %v1076 = vpack.c.b16 %v1000, %v999
        %v1077 = vpack.c.b16 %v1002, %v1001
        %v1078 = vpack.c.b16 %v1004, %v1003
        %v1079 = vpack.c.b16 %v1006, %v1005
        %v1080 = vpack.c.b16 %v1008, %v1007
        %v1081 = vpack.c.b16 %v1010, %v1009
        %v1082 = vpack.c.b16 %v1012, %v1011
        %v1083 = vpack.c.b16 %v1014, %v1013
        %v1084 = vpack.c.b16 %v1016, %v1015
        %v1085 = vpack.c.b16 %v1018, %v1017
        %v1086 = vpack.c.b16 %v1020, %v1019
        %v1087 = vpack.c.b16 %v1022, %v1021
        %v1088 = vpack.c.b16 %v1024, %v1023
        %v1089 = vpack.c.b16 %v1026, %v1025
        %v1090 = vpack.c.b16 %v1028, %v1027
        %v1091 = vpack.c.b16 %v1030, %v1029
        %v1092 = vpack.c.b16 %v1032, %v1031
        %v1093 = vpack.c.b16 %v1034, %v1033
        %v1094 = vpack.c.b16 %v1036, %v1035
        %v1095 = vpack.c.b16 %v1038, %v1037
        %v1096 = vpack.c.b16 %v1040, %v1039
        %v1097 = vpack.c.b16 %v1042, %v1041
        %v1098 = vpack.c.b16 %v1044, %v1043
        %v1099 = vpack.c.b16 %v1046, %v1045
        %v1100 = vpack.c.b16 %v1048, %v1047
        %v1101 = vpack.c.b16 %v1050, %v1049
        %v1102 = vpack.c.b16 %v1052, %v1051
        %v1103 = vpack.c.b16 %v1054, %v1053
        %v1104 = vpack.c.b16 %v1056, %v1055
        %1153 = vmatprep.subr.bf16.mxu0 0
        %1154 = vmatpush1.bf16.msra.mxu0 %v1057
        %1155 = vmatprep.subr.bf16.mxu0 0
        %1156 = vmatpush1.bf16.msra.mxu0 %v1058
        %1157 = vmatprep.subr.bf16.mxu0 0
        %1158 = vmatpush1.bf16.msra.mxu0 %v1059
        %1159 = vmatprep.subr.bf16.mxu0 0
        %1160 = vmatpush1.bf16.msra.mxu0 %v1060
        %1161 = vmatprep.subr.bf16.mxu0 0
        %1162 = vmatpush1.bf16.msra.mxu0 %v1061
        %1163 = vmatprep.subr.bf16.mxu0 0
        %1164 = vmatpush1.bf16.msra.mxu0 %v1062
        %1165 = vmatprep.subr.bf16.mxu0 0
        %1166 = vmatpush1.bf16.msra.mxu0 %v1063
        %1167 = vmatprep.subr.bf16.mxu0 0
        %1168 = vmatpush1.bf16.msra.mxu0 %v1064
        %1169 = vmatprep.subr.bf16.mxu0 0
        %1170 = vmatpush1.bf16.msra.mxu0 %v1065
        %1171 = vmatprep.subr.bf16.mxu0 0
        %1172 = vmatpush1.bf16.msra.mxu0 %v1066
        %1173 = vmatprep.subr.bf16.mxu0 0
        %1174 = vmatpush1.bf16.msra.mxu0 %v1067
        %1175 = vmatprep.subr.bf16.mxu0 0
        %1176 = vmatpush1.bf16.msra.mxu0 %v1068
        %1177 = vmatprep.subr.bf16.mxu0 0
        %1178 = vmatpush1.bf16.msra.mxu0 %v1069
        %1179 = vmatprep.subr.bf16.mxu0 0
        %1180 = vmatpush1.bf16.msra.mxu0 %v1070
        %1181 = vmatprep.subr.bf16.mxu0 0
        %1182 = vmatpush1.bf16.msra.mxu0 %v1071
        %1183 = vmatprep.subr.bf16.mxu0 0
        %1184 = vmatpush1.bf16.msra.mxu0 %v1072
        %1185 = vmatprep.mubr.bf16.mxu0 %v716
        %1186 = vmatmul.mubr.bf16.gmra.mrb[0].mxu0 %v715
        %v1187 = vpop.f32.mrb[0].mxu0
        %v1188 = vadd.f32 %v863, %v1187
        %v1189 = vpop.f32.mrb[0].mxu0
        %v1190 = vpop.f32.mrb[0].mxu0
        %v1191 = vadd.f32 %v863, %v1190
        %v1192 = vpop.f32.mrb[0].mxu0
        %1193 = vmatprep.mubr.bf16.mxu0 %v722
        %1194 = vmatmul.mubr.bf16.gmra.mrb[0].mxu0 %v721
        %v1195 = vpop.f32.mrb[0].mxu0
        %v1196 = vadd.f32 %v863, %v1195
        %v1197 = vpop.f32.mrb[0].mxu0
        %v1198 = vpop.f32.mrb[0].mxu0
        %v1199 = vadd.f32 %v863, %v1198
        %v1200 = vpop.f32.mrb[0].mxu0
        %1201 = vmatprep.mubr.bf16.mxu0 %v728
        %1202 = vmatmul.mubr.bf16.gmra.mrb[0].mxu0 %v727
        %v1203 = vpop.f32.mrb[0].mxu0
        %v1204 = vadd.f32 %v863, %v1203
        %v1205 = vpop.f32.mrb[0].mxu0
        %v1206 = vpop.f32.mrb[0].mxu0
        %v1207 = vadd.f32 %v863, %v1206
        %v1208 = vpop.f32.mrb[0].mxu0
        %1209 = vmatprep.mubr.bf16.mxu0 %v734
        %1210 = vmatmul.mubr.bf16.gmra.mrb[0].mxu0 %v733
        %v1211 = vpop.f32.mrb[0].mxu0
        %v1212 = vadd.f32 %v863, %v1211
        %v1213 = vpop.f32.mrb[0].mxu0
        %v1214 = vpop.f32.mrb[0].mxu0
        %v1215 = vadd.f32 %v863, %v1214
        %v1216 = vpop.f32.mrb[0].mxu0
        %1217 = vmatprep.mubr.bf16.mxu0 %v740
        %1218 = vmatmul.mubr.bf16.gmra.mrb[0].mxu0 %v739
        %v1219 = vpop.f32.mrb[0].mxu0
        %v1220 = vadd.f32 %v863, %v1219
        %v1221 = vpop.f32.mrb[0].mxu0
        %v1222 = vpop.f32.mrb[0].mxu0
        %v1223 = vadd.f32 %v863, %v1222
        %v1224 = vpop.f32.mrb[0].mxu0
        %1225 = vmatprep.mubr.bf16.mxu0 %v746
        %1226 = vmatmul.mubr.bf16.gmra.mrb[0].mxu0 %v745
        %v1227 = vpop.f32.mrb[0].mxu0
        %v1228 = vadd.f32 %v863, %v1227
        %v1229 = vpop.f32.mrb[0].mxu0
        %v1230 = vpop.f32.mrb[0].mxu0
        %v1231 = vadd.f32 %v863, %v1230
        %v1232 = vpop.f32.mrb[0].mxu0
        %1233 = vmatprep.mubr.bf16.mxu0 %v752
        %1234 = vmatmul.mubr.bf16.gmra.mrb[0].mxu0 %v751
        %v1235 = vpop.f32.mrb[0].mxu0
        %v1236 = vadd.f32 %v863, %v1235
        %v1237 = vpop.f32.mrb[0].mxu0
        %v1238 = vpop.f32.mrb[0].mxu0
        %v1239 = vadd.f32 %v863, %v1238
        %v1240 = vpop.f32.mrb[0].mxu0
        %1241 = vmatprep.mubr.bf16.mxu0 %v758
        %1242 = vmatmul.mubr.bf16.gmra.mrb[0].mxu0 %v757
        %v1243 = vpop.f32.mrb[0].mxu0
        %v1244 = vadd.f32 %v863, %v1243
        %v1245 = vpop.f32.mrb[0].mxu0
        %v1246 = vpop.f32.mrb[0].mxu0
        %v1247 = vadd.f32 %v863, %v1246
        %v1248 = vpop.f32.mrb[0].mxu0
        %1249 = vdwg.mxu0
        %1250 = vmatprep.subr.bf16.mxu0 0
        %1251 = vmatpush1.bf16.msra.mxu0 %v1073
        %1252 = vmatprep.subr.bf16.mxu0 0
        %1253 = vmatpush1.bf16.msra.mxu0 %v1074
        %1254 = vmatprep.subr.bf16.mxu0 0
        %1255 = vmatpush1.bf16.msra.mxu0 %v1075
        %1256 = vmatprep.subr.bf16.mxu0 0
        %1257 = vmatpush1.bf16.msra.mxu0 %v1076
        %1258 = vmatprep.subr.bf16.mxu0 0
        %1259 = vmatpush1.bf16.msra.mxu0 %v1077
        %1260 = vmatprep.subr.bf16.mxu0 0
        %1261 = vmatpush1.bf16.msra.mxu0 %v1078
        %1262 = vmatprep.subr.bf16.mxu0 0
        %1263 = vmatpush1.bf16.msra.mxu0 %v1079
        %1264 = vmatprep.subr.bf16.mxu0 0
        %1265 = vmatpush1.bf16.msra.mxu0 %v1080
        %1266 = vmatprep.subr.bf16.mxu0 0
        %1267 = vmatpush1.bf16.msra.mxu0 %v1081
        %1268 = vmatprep.subr.bf16.mxu0 0
        %1269 = vmatpush1.bf16.msra.mxu0 %v1082
        %1270 = vmatprep.subr.bf16.mxu0 0
        %1271 = vmatpush1.bf16.msra.mxu0 %v1083
        %1272 = vmatprep.subr.bf16.mxu0 0
        %1273 = vmatpush1.bf16.msra.mxu0 %v1084
        %1274 = vmatprep.subr.bf16.mxu0 0
        %1275 = vmatpush1.bf16.msra.mxu0 %v1085
        %1276 = vmatprep.subr.bf16.mxu0 0
        %1277 = vmatpush1.bf16.msra.mxu0 %v1086
        %1278 = vmatprep.subr.bf16.mxu0 0
        %1279 = vmatpush1.bf16.msra.mxu0 %v1087
        %1280 = vmatprep.subr.bf16.mxu0 0
        %1281 = vmatpush1.bf16.msra.mxu0 %v1088
        %1282 = vmatprep.mubr.bf16.mxu0 %v718
        %1283 = vmatmul.mubr.bf16.gmra.mrb[0].mxu0 %v717
        %v1284 = vpop.f32.mrb[0].mxu0
        %v1285 = vadd.f32 %v1188, %v1284
        %v1286 = vpop.f32.mrb[0].mxu0
        %v1287 = vpop.f32.mrb[0].mxu0
        %v1288 = vadd.f32 %v1191, %v1287
        %v1289 = vpop.f32.mrb[0].mxu0
        %1290 = vmatprep.mubr.bf16.mxu0 %v724
        %1291 = vmatmul.mubr.bf16.gmra.mrb[0].mxu0 %v723
        %v1292 = vpop.f32.mrb[0].mxu0
        %v1293 = vadd.f32 %v1196, %v1292
        %v1294 = vpop.f32.mrb[0].mxu0
        %v1295 = vpop.f32.mrb[0].mxu0
        %v1296 = vadd.f32 %v1199, %v1295
        %v1297 = vpop.f32.mrb[0].mxu0
        %1298 = vmatprep.mubr.bf16.mxu0 %v730
        %1299 = vmatmul.mubr.bf16.gmra.mrb[0].mxu0 %v729
        %v1300 = vpop.f32.mrb[0].mxu0
        %v1301 = vadd.f32 %v1204, %v1300
        %v1302 = vpop.f32.mrb[0].mxu0
        %v1303 = vpop.f32.mrb[0].mxu0
        %v1304 = vadd.f32 %v1207, %v1303
        %v1305 = vpop.f32.mrb[0].mxu0
        %1306 = vmatprep.mubr.bf16.mxu0 %v736
        %1307 = vmatmul.mubr.bf16.gmra.mrb[0].mxu0 %v735
        %v1308 = vpop.f32.mrb[0].mxu0
        %v1309 = vadd.f32 %v1212, %v1308
        %v1310 = vpop.f32.mrb[0].mxu0
        %v1311 = vpop.f32.mrb[0].mxu0
        %v1312 = vadd.f32 %v1215, %v1311
        %v1313 = vpop.f32.mrb[0].mxu0
        %1314 = vmatprep.mubr.bf16.mxu0 %v742
        %1315 = vmatmul.mubr.bf16.gmra.mrb[0].mxu0 %v741
        %v1316 = vpop.f32.mrb[0].mxu0
        %v1317 = vadd.f32 %v1220, %v1316
        %v1318 = vpop.f32.mrb[0].mxu0
        %v1319 = vpop.f32.mrb[0].mxu0
        %v1320 = vadd.f32 %v1223, %v1319
        %v1321 = vpop.f32.mrb[0].mxu0
        %1322 = vmatprep.mubr.bf16.mxu0 %v748
        %1323 = vmatmul.mubr.bf16.gmra.mrb[0].mxu0 %v747
        %v1324 = vpop.f32.mrb[0].mxu0
        %v1325 = vadd.f32 %v1228, %v1324
        %v1326 = vpop.f32.mrb[0].mxu0
        %v1327 = vpop.f32.mrb[0].mxu0
        %v1328 = vadd.f32 %v1231, %v1327
        %v1329 = vpop.f32.mrb[0].mxu0
        %1330 = vmatprep.mubr.bf16.mxu0 %v754
        %1331 = vmatmul.mubr.bf16.gmra.mrb[0].mxu0 %v753
        %v1332 = vpop.f32.mrb[0].mxu0
        %v1333 = vadd.f32 %v1236, %v1332
        %v1334 = vpop.f32.mrb[0].mxu0
        %v1335 = vpop.f32.mrb[0].mxu0
        %v1336 = vadd.f32 %v1239, %v1335
        %v1337 = vpop.f32.mrb[0].mxu0
        %1338 = vmatprep.mubr.bf16.mxu0 %v760
        %1339 = vmatmul.mubr.bf16.gmra.mrb[0].mxu0 %v759
        %v1340 = vpop.f32.mrb[0].mxu0
        %v1341 = vadd.f32 %v1244, %v1340
        %v1342 = vpop.f32.mrb[0].mxu0
        %v1343 = vpop.f32.mrb[0].mxu0
        %v1344 = vadd.f32 %v1247, %v1343
        %v1345 = vpop.f32.mrb[0].mxu0
        %1346 = vdwg.mxu0
        %1347 = vmatprep.subr.bf16.mxu0 0
        %1348 = vmatpush1.bf16.msra.mxu0 %v1089
        %1349 = vmatprep.subr.bf16.mxu0 0
        %1350 = vmatpush1.bf16.msra.mxu0 %v1090
        %1351 = vmatprep.subr.bf16.mxu0 0
        %1352 = vmatpush1.bf16.msra.mxu0 %v1091
        %1353 = vmatprep.subr.bf16.mxu0 0
        %1354 = vmatpush1.bf16.msra.mxu0 %v1092
        %1355 = vmatprep.subr.bf16.mxu0 0
        %1356 = vmatpush1.bf16.msra.mxu0 %v1093
        %1357 = vmatprep.subr.bf16.mxu0 0
        %1358 = vmatpush1.bf16.msra.mxu0 %v1094
        %1359 = vmatprep.subr.bf16.mxu0 0
        %1360 = vmatpush1.bf16.msra.mxu0 %v1095
        %1361 = vmatprep.subr.bf16.mxu0 0
        %1362 = vmatpush1.bf16.msra.mxu0 %v1096
        %1363 = vmatprep.subr.bf16.mxu0 0
        %1364 = vmatpush1.bf16.msra.mxu0 %v1097
        %1365 = vmatprep.subr.bf16.mxu0 0
        %1366 = vmatpush1.bf16.msra.mxu0 %v1098
        %1367 = vmatprep.subr.bf16.mxu0 0
        %1368 = vmatpush1.bf16.msra.mxu0 %v1099
        %1369 = vmatprep.subr.bf16.mxu0 0
        %1370 = vmatpush1.bf16.msra.mxu0 %v1100
        %1371 = vmatprep.subr.bf16.mxu0 0
        %1372 = vmatpush1.bf16.msra.mxu0 %v1101
        %1373 = vmatprep.subr.bf16.mxu0 0
        %1374 = vmatpush1.bf16.msra.mxu0 %v1102
        %1375 = vmatprep.subr.bf16.mxu0 0
        %1376 = vmatpush1.bf16.msra.mxu0 %v1103
        %1377 = vmatprep.subr.bf16.mxu0 0
        %1378 = vmatpush1.bf16.msra.mxu0 %v1104
        %1379 = vmatprep.mubr.bf16.mxu0 %v720
        %1380 = vmatmul.mubr.bf16.gmra.mrb[0].mxu0 %v719
        %v1381 = vpop.f32.mrb[0].mxu0
        %v1382 = vadd.f32 %v1285, %v1381
        %v1383 = vpop.f32.mrb[0].mxu0
        %v1384 = vpop.f32.mrb[0].mxu0
        %v1385 = vadd.f32 %v1288, %v1384
        %v1386 = vpop.f32.mrb[0].mxu0
        %1387 = vmatprep.mubr.bf16.mxu0 %v726
        %1388 = vmatmul.mubr.bf16.gmra.mrb[0].mxu0 %v725
        %v1389 = vpop.f32.mrb[0].mxu0
        %v1390 = vadd.f32 %v1293, %v1389
        %v1391 = vpop.f32.mrb[0].mxu0
        %v1392 = vpop.f32.mrb[0].mxu0
        %v1393 = vadd.f32 %v1296, %v1392
        %v1394 = vpop.f32.mrb[0].mxu0
        %1395 = vmatprep.mubr.bf16.mxu0 %v732
        %1396 = vmatmul.mubr.bf16.gmra.mrb[0].mxu0 %v731
        %v1397 = vpop.f32.mrb[0].mxu0
        %v1398 = vadd.f32 %v1301, %v1397
        %v1399 = vpop.f32.mrb[0].mxu0
        %v1400 = vpop.f32.mrb[0].mxu0
        %v1401 = vadd.f32 %v1304, %v1400
        %v1402 = vpop.f32.mrb[0].mxu0
        %1403 = vmatprep.mubr.bf16.mxu0 %v738
        %1404 = vmatmul.mubr.bf16.gmra.mrb[0].mxu0 %v737
        %v1405 = vpop.f32.mrb[0].mxu0
        %v1406 = vadd.f32 %v1309, %v1405
        %v1407 = vpop.f32.mrb[0].mxu0
        %v1408 = vpop.f32.mrb[0].mxu0
        %v1409 = vadd.f32 %v1312, %v1408
        %v1410 = vpop.f32.mrb[0].mxu0
        %1411 = vmatprep.mubr.bf16.mxu0 %v744
        %1412 = vmatmul.mubr.bf16.gmra.mrb[0].mxu0 %v743
        %v1413 = vpop.f32.mrb[0].mxu0
        %v1414 = vadd.f32 %v1317, %v1413
        %v1415 = vpop.f32.mrb[0].mxu0
        %v1416 = vpop.f32.mrb[0].mxu0
        %v1417 = vadd.f32 %v1320, %v1416
        %v1418 = vpop.f32.mrb[0].mxu0
        %1419 = vmatprep.mubr.bf16.mxu0 %v750
        %1420 = vmatmul.mubr.bf16.gmra.mrb[0].mxu0 %v749
        %v1421 = vpop.f32.mrb[0].mxu0
        %v1422 = vadd.f32 %v1325, %v1421
        %v1423 = vpop.f32.mrb[0].mxu0
        %v1424 = vpop.f32.mrb[0].mxu0
        %v1425 = vadd.f32 %v1328, %v1424
        %v1426 = vpop.f32.mrb[0].mxu0
        %1427 = vmatprep.mubr.bf16.mxu0 %v756
        %1428 = vmatmul.mubr.bf16.gmra.mrb[0].mxu0 %v755
        %v1429 = vpop.f32.mrb[0].mxu0
        %v1430 = vadd.f32 %v1333, %v1429
        %v1431 = vpop.f32.mrb[0].mxu0
        %v1432 = vpop.f32.mrb[0].mxu0
        %v1433 = vadd.f32 %v1336, %v1432
        %v1434 = vpop.f32.mrb[0].mxu0
        %1435 = vmatprep.mubr.bf16.mxu0 %v762
        %1436 = vmatmul.mubr.bf16.gmra.mrb[0].mxu0 %v761
        %v1437 = vpop.f32.mrb[0].mxu0
        %v1438 = vadd.f32 %v1341, %v1437
        %v1439 = vpop.f32.mrb[0].mxu0
        %v1440 = vpop.f32.mrb[0].mxu0
        %v1441 = vadd.f32 %v1344, %v1440
        %v1442 = vpop.f32.mrb[0].mxu0
        %1443 = vdwg.mxu0
        %v1444 = vld [vmem:[%s425] sm:$0xff]
        %v1445 = vld [vmem:[%s425 + $0x8] sm:$0xff]
        %v1446 = vld [vmem:[%s425 + $0x10] sm:$0xff]
        %v1447 = vld [vmem:[%s425 + $0x18] sm:$0xff]
        %v1448 = vld [vmem:[%s425 + $0x20] sm:$0xff]
        %v1449 = vld [vmem:[%s425 + $0x28] sm:$0xff]
        %v1450 = vld [vmem:[%s425 + $0x30] sm:$0xff]
        %v1451 = vld [vmem:[%s425 + $0x38] sm:$0xff]
        %v1452 = vld [vmem:[%s425 + $0x40] sm:$0xff]
        %v1453 = vld [vmem:[%s425 + $0x48] sm:$0xff]
        %v1454 = vld [vmem:[%s425 + $0x50] sm:$0xff]
        %v1455 = vld [vmem:[%s425 + $0x58] sm:$0xff]
        %v1456 = vld [vmem:[%s425 + $0x60] sm:$0xff]
        %v1457 = vld [vmem:[%s425 + $0x68] sm:$0xff]
        %v1458 = vld [vmem:[%s425 + $0x70] sm:$0xff]
        %v1459 = vld [vmem:[%s425 + $0x78] sm:$0xff]
        %v1460 = vld [vmem:[%s425 + $0x80] sm:$0xff]
        %v1461 = vld [vmem:[%s425 + $0x88] sm:$0xff]
        %v1462 = vld [vmem:[%s425 + $0x90] sm:$0xff]
        %v1463 = vld [vmem:[%s425 + $0x98] sm:$0xff]
        %v1464 = vld [vmem:[%s425 + $0xa0] sm:$0xff]
        %v1465 = vld [vmem:[%s425 + $0xa8] sm:$0xff]
        %v1466 = vld [vmem:[%s425 + $0xb0] sm:$0xff]
        %v1467 = vld [vmem:[%s425 + $0xb8] sm:$0xff]
        %v1468 = vld [vmem:[%s425 + $0xc0] sm:$0xff]
        %v1469 = vld [vmem:[%s425 + $0xc8] sm:$0xff]
        %v1470 = vld [vmem:[%s425 + $0xd0] sm:$0xff]
        %v1471 = vld [vmem:[%s425 + $0xd8] sm:$0xff]
        %v1472 = vld [vmem:[%s425 + $0xe0] sm:$0xff]
        %v1473 = vld [vmem:[%s425 + $0xe8] sm:$0xff]
        %v1474 = vld [vmem:[%s425 + $0xf0] sm:$0xff]
        %v1475 = vld [vmem:[%s425 + $0xf8] sm:$0xff]
        %v1476 = vld [vmem:[%s425 + $0x100] sm:$0xff]
        %v1477 = vld [vmem:[%s425 + $0x108] sm:$0xff]
        %v1478 = vld [vmem:[%s425 + $0x110] sm:$0xff]
        %v1479 = vld [vmem:[%s425 + $0x118] sm:$0xff]
        %v1480 = vld [vmem:[%s425 + $0x120] sm:$0xff]
        %v1481 = vld [vmem:[%s425 + $0x128] sm:$0xff]
        %v1482 = vld [vmem:[%s425 + $0x130] sm:$0xff]
        %v1483 = vld [vmem:[%s425 + $0x138] sm:$0xff]
        %v1484 = vld [vmem:[%s425 + $0x140] sm:$0xff]
        %v1485 = vld [vmem:[%s425 + $0x148] sm:$0xff]
        %v1486 = vld [vmem:[%s425 + $0x150] sm:$0xff]
        %v1487 = vld [vmem:[%s425 + $0x158] sm:$0xff]
        %v1488 = vld [vmem:[%s425 + $0x160] sm:$0xff]
        %v1489 = vld [vmem:[%s425 + $0x168] sm:$0xff]
        %v1490 = vld [vmem:[%s425 + $0x170] sm:$0xff]
        %v1491 = vld [vmem:[%s425 + $0x178] sm:$0xff]
        %v1492 = vld [vmem:[%s425 + $0x180] sm:$0xff]
        %v1493 = vld [vmem:[%s425 + $0x188] sm:$0xff]
        %v1494 = vld [vmem:[%s425 + $0x190] sm:$0xff]
        %v1495 = vld [vmem:[%s425 + $0x198] sm:$0xff]
        %v1496 = vld [vmem:[%s425 + $0x1a0] sm:$0xff]
        %v1497 = vld [vmem:[%s425 + $0x1a8] sm:$0xff]
        %v1498 = vld [vmem:[%s425 + $0x1b0] sm:$0xff]
        %v1499 = vld [vmem:[%s425 + $0x1b8] sm:$0xff]
        %v1500 = vld [vmem:[%s425 + $0x1c0] sm:$0xff]
        %v1501 = vld [vmem:[%s425 + $0x1c8] sm:$0xff]
        %v1502 = vld [vmem:[%s425 + $0x1d0] sm:$0xff]
        %v1503 = vld [vmem:[%s425 + $0x1d8] sm:$0xff]
        %v1504 = vld [vmem:[%s425 + $0x1e0] sm:$0xff]
        %v1505 = vld [vmem:[%s425 + $0x1e8] sm:$0xff]
        %v1506 = vld [vmem:[%s425 + $0x1f0] sm:$0xff]
        %v1507 = vld [vmem:[%s425 + $0x1f8] sm:$0xff]
        %v1508 = vld [vmem:[%s425 + $0x200] sm:$0xff]
        %v1509 = vld [vmem:[%s425 + $0x208] sm:$0xff]
        %v1510 = vld [vmem:[%s425 + $0x210] sm:$0xff]
        %v1511 = vld [vmem:[%s425 + $0x218] sm:$0xff]
        %v1512 = vld [vmem:[%s425 + $0x220] sm:$0xff]
        %v1513 = vld [vmem:[%s425 + $0x228] sm:$0xff]
        %v1514 = vld [vmem:[%s425 + $0x230] sm:$0xff]
        %v1515 = vld [vmem:[%s425 + $0x238] sm:$0xff]
        %v1516 = vld [vmem:[%s425 + $0x240] sm:$0xff]
        %v1517 = vld [vmem:[%s425 + $0x248] sm:$0xff]
        %v1518 = vld [vmem:[%s425 + $0x250] sm:$0xff]
        %v1519 = vld [vmem:[%s425 + $0x258] sm:$0xff]
        %v1520 = vld [vmem:[%s425 + $0x260] sm:$0xff]
        %v1521 = vld [vmem:[%s425 + $0x268] sm:$0xff]
        %v1522 = vld [vmem:[%s425 + $0x270] sm:$0xff]
        %v1523 = vld [vmem:[%s425 + $0x278] sm:$0xff]
        %v1524 = vld [vmem:[%s425 + $0x280] sm:$0xff]
        %v1525 = vld [vmem:[%s425 + $0x288] sm:$0xff]
        %v1526 = vld [vmem:[%s425 + $0x290] sm:$0xff]
        %v1527 = vld [vmem:[%s425 + $0x298] sm:$0xff]
        %v1528 = vld [vmem:[%s425 + $0x2a0] sm:$0xff]
        %v1529 = vld [vmem:[%s425 + $0x2a8] sm:$0xff]
        %v1530 = vld [vmem:[%s425 + $0x2b0] sm:$0xff]
        %v1531 = vld [vmem:[%s425 + $0x2b8] sm:$0xff]
        %v1532 = vld [vmem:[%s425 + $0x2c0] sm:$0xff]
        %v1533 = vld [vmem:[%s425 + $0x2c8] sm:$0xff]
        %v1534 = vld [vmem:[%s425 + $0x2d0] sm:$0xff]
        %v1535 = vld [vmem:[%s425 + $0x2d8] sm:$0xff]
        %v1536 = vld [vmem:[%s425 + $0x2e0] sm:$0xff]
        %v1537 = vld [vmem:[%s425 + $0x2e8] sm:$0xff]
        %v1538 = vld [vmem:[%s425 + $0x2f0] sm:$0xff]
        %v1539 = vld [vmem:[%s425 + $0x2f8] sm:$0xff]
        %v1540 = vtanh.pop %v1444
        %v1541 = vtanh.pop %v1445
        %v1542 = vtanh.pop %v1446
        %v1543 = vtanh.pop %v1447
        %v1544 = vtanh.pop %v1448
        %v1545 = vtanh.pop %v1449
        %v1546 = vtanh.pop %v1450
        %v1547 = vtanh.pop %v1451
        %v1548 = vtanh.pop %v1452
        %v1549 = vtanh.pop %v1453
        %v1550 = vtanh.pop %v1454
        %v1551 = vtanh.pop %v1455
        %v1552 = vtanh.pop %v1456
        %v1553 = vtanh.pop %v1457
        %v1554 = vtanh.pop %v1458
        %v1555 = vtanh.pop %v1459
        %v1556 = vtanh.pop %v1460
        %v1557 = vtanh.pop %v1461
        %v1558 = vtanh.pop %v1462
        %v1559 = vtanh.pop %v1463
        %v1560 = vtanh.pop %v1464
        %v1561 = vtanh.pop %v1465
        %v1562 = vtanh.pop %v1466
        %v1563 = vtanh.pop %v1467
        %v1564 = vtanh.pop %v1468
        %v1565 = vtanh.pop %v1469
        %v1566 = vtanh.pop %v1470
        %v1567 = vtanh.pop %v1471
        %v1568 = vtanh.pop %v1472
        %v1569 = vtanh.pop %v1473
        %v1570 = vtanh.pop %v1474
        %v1571 = vtanh.pop %v1475
        %v1572 = vtanh.pop %v1476
        %v1573 = vtanh.pop %v1477
        %v1574 = vtanh.pop %v1478
        %v1575 = vtanh.pop %v1479
        %v1576 = vtanh.pop %v1480
        %v1577 = vtanh.pop %v1481
        %v1578 = vtanh.pop %v1482
        %v1579 = vtanh.pop %v1483
        %v1580 = vtanh.pop %v1484
        %v1581 = vtanh.pop %v1485
        %v1582 = vtanh.pop %v1486
        %v1583 = vtanh.pop %v1487
        %v1584 = vtanh.pop %v1488
        %v1585 = vtanh.pop %v1489
        %v1586 = vtanh.pop %v1490
        %v1587 = vtanh.pop %v1491
        %v1588 = vtanh.pop %v1492
        %v1589 = vtanh.pop %v1493
        %v1590 = vtanh.pop %v1494
        %v1591 = vtanh.pop %v1495
        %v1592 = vtanh.pop %v1496
        %v1593 = vtanh.pop %v1497
        %v1594 = vtanh.pop %v1498
        %v1595 = vtanh.pop %v1499
        %v1596 = vtanh.pop %v1500
        %v1597 = vtanh.pop %v1501
        %v1598 = vtanh.pop %v1502
        %v1599 = vtanh.pop %v1503
        %v1600 = vtanh.pop %v1504
        %v1601 = vtanh.pop %v1505
        %v1602 = vtanh.pop %v1506
        %v1603 = vtanh.pop %v1507
        %v1604 = vtanh.pop %v1508
        %v1605 = vtanh.pop %v1509
        %v1606 = vtanh.pop %v1510
        %v1607 = vtanh.pop %v1511
        %v1608 = vtanh.pop %v1512
        %v1609 = vtanh.pop %v1513
        %v1610 = vtanh.pop %v1514
        %v1611 = vtanh.pop %v1515
        %v1612 = vtanh.pop %v1516
        %v1613 = vtanh.pop %v1517
        %v1614 = vtanh.pop %v1518
        %v1615 = vtanh.pop %v1519
        %v1616 = vtanh.pop %v1520
        %v1617 = vtanh.pop %v1521
        %v1618 = vtanh.pop %v1522
        %v1619 = vtanh.pop %v1523
        %v1620 = vtanh.pop %v1524
        %v1621 = vtanh.pop %v1525
        %v1622 = vtanh.pop %v1526
        %v1623 = vtanh.pop %v1527
        %v1624 = vtanh.pop %v1528
        %v1625 = vtanh.pop %v1529
        %v1626 = vtanh.pop %v1530
        %v1627 = vtanh.pop %v1531
        %v1628 = vtanh.pop %v1532
        %v1629 = vtanh.pop %v1533
        %v1630 = vtanh.pop %v1534
        %v1631 = vtanh.pop %v1535
        %v1632 = vtanh.pop %v1536
        %v1633 = vtanh.pop %v1537
        %v1634 = vtanh.pop %v1538
        %v1635 = vtanh.pop %v1539
        %v1636 = vpack.c.bf16 %v1546, %v1540
        %v1637 = vpack.c.bf16 %v1547, %v1541
        %v1638 = vpack.c.bf16 %v1548, %v1542
        %v1639 = vpack.c.bf16 %v1549, %v1543
        %v1640 = vpack.c.bf16 %v1550, %v1544
        %v1641 = vpack.c.bf16 %v1551, %v1545
        %v1642 = vpack.c.bf16 %v1558, %v1552
        %v1643 = vpack.c.bf16 %v1559, %v1553
        %v1644 = vpack.c.bf16 %v1560, %v1554
        %v1645 = vpack.c.bf16 %v1561, %v1555
        %v1646 = vpack.c.bf16 %v1562, %v1556
        %v1647 = vpack.c.bf16 %v1563, %v1557
        %v1648 = vpack.c.bf16 %v1570, %v1564
        %v1649 = vpack.c.bf16 %v1571, %v1565
        %v1650 = vpack.c.bf16 %v1572, %v1566
        %v1651 = vpack.c.bf16 %v1573, %v1567
        %v1652 = vpack.c.bf16 %v1574, %v1568
        %v1653 = vpack.c.bf16 %v1575, %v1569
        %v1654 = vpack.c.bf16 %v1582, %v1576
        %v1655 = vpack.c.bf16 %v1583, %v1577
        %v1656 = vpack.c.bf16 %v1584, %v1578
        %v1657 = vpack.c.bf16 %v1585, %v1579
        %v1658 = vpack.c.bf16 %v1586, %v1580
        %v1659 = vpack.c.bf16 %v1587, %v1581
        %v1660 = vpack.c.bf16 %v1594, %v1588
        %v1661 = vpack.c.bf16 %v1595, %v1589
        %v1662 = vpack.c.bf16 %v1596, %v1590
        %v1663 = vpack.c.bf16 %v1597, %v1591
        %v1664 = vpack.c.bf16 %v1598, %v1592
        %v1665 = vpack.c.bf16 %v1599, %v1593
        %v1666 = vpack.c.bf16 %v1606, %v1600
        %v1667 = vpack.c.bf16 %v1607, %v1601
        %v1668 = vpack.c.bf16 %v1608, %v1602
        %v1669 = vpack.c.bf16 %v1609, %v1603
        %v1670 = vpack.c.bf16 %v1610, %v1604
        %v1671 = vpack.c.bf16 %v1611, %v1605
        %v1672 = vpack.c.bf16 %v1618, %v1612
        %v1673 = vpack.c.bf16 %v1619, %v1613
        %v1674 = vpack.c.bf16 %v1620, %v1614
        %v1675 = vpack.c.bf16 %v1621, %v1615
        %v1676 = vpack.c.bf16 %v1622, %v1616
        %v1677 = vpack.c.bf16 %v1623, %v1617
        %v1678 = vpack.c.bf16 %v1630, %v1624
        %v1679 = vpack.c.bf16 %v1631, %v1625
        %v1680 = vpack.c.bf16 %v1632, %v1626
        %v1681 = vpack.c.bf16 %v1633, %v1627
        %v1682 = vpack.c.bf16 %v1634, %v1628
        %v1683 = vpack.c.bf16 %v1635, %v1629
        %s1684 = scalar_lea.vmem [#allocation13], 768
        %v1685 = vld [vmem:[%s1684] sm:$0xf]
        %v1686 = vld [vmem:[%s1684 + $0x4] sm:$0xf]
        %v1687 = vld [vmem:[%s1684 + $0x8] sm:$0xf]
        %v1688 = vld [vmem:[%s1684 + $0xc] sm:$0xf]
        %v1689 = vld [vmem:[%s1684 + $0x10] sm:$0xf]
        %v1690 = vld [vmem:[%s1684 + $0x14] sm:$0xf]
        %v1691 = vld [vmem:[%s1684 + $0x18] sm:$0xf]
        %v1692 = vld [vmem:[%s1684 + $0x1c] sm:$0xf]
        %v1693 = vld [vmem:[%s1684 + $0x20] sm:$0xf]
        %v1694 = vld [vmem:[%s1684 + $0x24] sm:$0xf]
        %v1695 = vld [vmem:[%s1684 + $0x28] sm:$0xf]
        %v1696 = vld [vmem:[%s1684 + $0x2c] sm:$0xf]
        %v1697 = vld [vmem:[%s1684 + $0x30] sm:$0xf]
        %v1698 = vld [vmem:[%s1684 + $0x34] sm:$0xf]
        %v1699 = vld [vmem:[%s1684 + $0x38] sm:$0xf]
        %v1700 = vld [vmem:[%s1684 + $0x3c] sm:$0xf]
        %v1701 = vld [vmem:[%s1684 + $0x40] sm:$0xf]
        %v1702 = vld [vmem:[%s1684 + $0x44] sm:$0xf]
        %v1703 = vld [vmem:[%s1684 + $0x48] sm:$0xf]
        %v1704 = vld [vmem:[%s1684 + $0x4c] sm:$0xf]
        %v1705 = vld [vmem:[%s1684 + $0x50] sm:$0xf]
        %v1706 = vld [vmem:[%s1684 + $0x54] sm:$0xf]
        %v1707 = vld [vmem:[%s1684 + $0x58] sm:$0xf]
        %v1708 = vld [vmem:[%s1684 + $0x5c] sm:$0xf]
        %v1709 = vld [vmem:[%s1684 + $0x60] sm:$0xf]
        %v1710 = vld [vmem:[%s1684 + $0x64] sm:$0xf]
        %v1711 = vld [vmem:[%s1684 + $0x68] sm:$0xf]
        %v1712 = vld [vmem:[%s1684 + $0x6c] sm:$0xf]
        %v1713 = vld [vmem:[%s1684 + $0x70] sm:$0xf]
        %v1714 = vld [vmem:[%s1684 + $0x74] sm:$0xf]
        %v1715 = vld [vmem:[%s1684 + $0x78] sm:$0xf]
        %v1716 = vld [vmem:[%s1684 + $0x7c] sm:$0xf]
        %v1717 = vld [vmem:[%s1684 + $0x80] sm:$0xf]
        %v1718 = vld [vmem:[%s1684 + $0x84] sm:$0xf]
        %v1719 = vld [vmem:[%s1684 + $0x88] sm:$0xf]
        %v1720 = vld [vmem:[%s1684 + $0x8c] sm:$0xf]
        %v1721 = vld [vmem:[%s1684 + $0x90] sm:$0xf]
        %v1722 = vld [vmem:[%s1684 + $0x94] sm:$0xf]
        %v1723 = vld [vmem:[%s1684 + $0x98] sm:$0xf]
        %v1724 = vld [vmem:[%s1684 + $0x9c] sm:$0xf]
        %v1725 = vld [vmem:[%s1684 + $0xa0] sm:$0xf]
        %v1726 = vld [vmem:[%s1684 + $0xa4] sm:$0xf]
        %v1727 = vld [vmem:[%s1684 + $0xa8] sm:$0xf]
        %v1728 = vld [vmem:[%s1684 + $0xac] sm:$0xf]
        %v1729 = vld [vmem:[%s1684 + $0xb0] sm:$0xf]
        %v1730 = vld [vmem:[%s1684 + $0xb4] sm:$0xf]
        %v1731 = vld [vmem:[%s1684 + $0xb8] sm:$0xf]
        %v1732 = vld [vmem:[%s1684 + $0xbc] sm:$0xf]
        %v1733 = vld [vmem:[%s1684 + $0xc0] sm:$0xf]
        %v1734 = vld [vmem:[%s1684 + $0xc4] sm:$0xf]
        %v1735 = vld [vmem:[%s1684 + $0xc8] sm:$0xf]
        %v1736 = vld [vmem:[%s1684 + $0xcc] sm:$0xf]
        %v1737 = vld [vmem:[%s1684 + $0xd0] sm:$0xf]
        %v1738 = vld [vmem:[%s1684 + $0xd4] sm:$0xf]
        %v1739 = vld [vmem:[%s1684 + $0xd8] sm:$0xf]
        %v1740 = vld [vmem:[%s1684 + $0xdc] sm:$0xf]
        %v1741 = vld [vmem:[%s1684 + $0xe0] sm:$0xf]
        %v1742 = vld [vmem:[%s1684 + $0xe4] sm:$0xf]
        %v1743 = vld [vmem:[%s1684 + $0xe8] sm:$0xf]
        %v1744 = vld [vmem:[%s1684 + $0xec] sm:$0xf]
        %v1745 = vld [vmem:[%s1684 + $0xf0] sm:$0xf]
        %v1746 = vld [vmem:[%s1684 + $0xf4] sm:$0xf]
        %v1747 = vld [vmem:[%s1684 + $0xf8] sm:$0xf]
        %v1748 = vld [vmem:[%s1684 + $0xfc] sm:$0xf]
        %v1749 = vld [vmem:[%s1684 + $0x100] sm:$0xf]
        %v1750 = vld [vmem:[%s1684 + $0x104] sm:$0xf]
        %v1751 = vld [vmem:[%s1684 + $0x108] sm:$0xf]
        %v1752 = vld [vmem:[%s1684 + $0x10c] sm:$0xf]
        %v1753 = vld [vmem:[%s1684 + $0x110] sm:$0xf]
        %v1754 = vld [vmem:[%s1684 + $0x114] sm:$0xf]
        %v1755 = vld [vmem:[%s1684 + $0x118] sm:$0xf]
        %v1756 = vld [vmem:[%s1684 + $0x11c] sm:$0xf]
        %v1757 = vld [vmem:[%s1684 + $0x120] sm:$0xf]
        %v1758 = vld [vmem:[%s1684 + $0x124] sm:$0xf]
        %v1759 = vld [vmem:[%s1684 + $0x128] sm:$0xf]
        %v1760 = vld [vmem:[%s1684 + $0x12c] sm:$0xf]
        %v1761 = vld [vmem:[%s1684 + $0x130] sm:$0xf]
        %v1762 = vld [vmem:[%s1684 + $0x134] sm:$0xf]
        %v1763 = vld [vmem:[%s1684 + $0x138] sm:$0xf]
        %v1764 = vld [vmem:[%s1684 + $0x13c] sm:$0xf]
        %v1765 = vld [vmem:[%s1684 + $0x140] sm:$0xf]
        %v1766 = vld [vmem:[%s1684 + $0x144] sm:$0xf]
        %v1767 = vld [vmem:[%s1684 + $0x148] sm:$0xf]
        %v1768 = vld [vmem:[%s1684 + $0x14c] sm:$0xf]
        %v1769 = vld [vmem:[%s1684 + $0x150] sm:$0xf]
        %v1770 = vld [vmem:[%s1684 + $0x154] sm:$0xf]
        %v1771 = vld [vmem:[%s1684 + $0x158] sm:$0xf]
        %v1772 = vld [vmem:[%s1684 + $0x15c] sm:$0xf]
        %v1773 = vld [vmem:[%s1684 + $0x160] sm:$0xf]
        %v1774 = vld [vmem:[%s1684 + $0x164] sm:$0xf]
        %v1775 = vld [vmem:[%s1684 + $0x168] sm:$0xf]
        %v1776 = vld [vmem:[%s1684 + $0x16c] sm:$0xf]
        %v1777 = vld [vmem:[%s1684 + $0x170] sm:$0xf]
        %v1778 = vld [vmem:[%s1684 + $0x174] sm:$0xf]
        %v1779 = vld [vmem:[%s1684 + $0x178] sm:$0xf]
        %v1780 = vld [vmem:[%s1684 + $0x17c] sm:$0xf]
        %v1877 = vunpack.c.l.b16 %v1685
        %v1878 = vunpack.c.l.b16 %v1686
        %v1879 = vunpack.c.l.b16 %v1687
        %v1880 = vunpack.c.l.b16 %v1688
        %v1881 = vunpack.c.l.b16 %v1689
        %v1882 = vunpack.c.l.b16 %v1690
        %v1883 = vunpack.c.l.b16 %v1691
        %v1884 = vunpack.c.l.b16 %v1692
        %v1885 = vunpack.c.l.b16 %v1693
        %v1886 = vunpack.c.l.b16 %v1694
        %v1887 = vunpack.c.l.b16 %v1695
        %v1888 = vunpack.c.l.b16 %v1696
        %v1889 = vunpack.c.l.b16 %v1697
        %v1890 = vunpack.c.l.b16 %v1698
        %v1891 = vunpack.c.l.b16 %v1699
        %v1892 = vunpack.c.l.b16 %v1700
        %v1893 = vunpack.c.l.b16 %v1701
        %v1894 = vunpack.c.l.b16 %v1702
        %v1895 = vunpack.c.l.b16 %v1703
        %v1896 = vunpack.c.l.b16 %v1704
        %v1897 = vunpack.c.l.b16 %v1705
        %v1898 = vunpack.c.l.b16 %v1706
        %v1899 = vunpack.c.l.b16 %v1707
        %v1900 = vunpack.c.l.b16 %v1708
        %v1901 = vunpack.c.l.b16 %v1709
        %v1902 = vunpack.c.l.b16 %v1710
        %v1903 = vunpack.c.l.b16 %v1711
        %v1904 = vunpack.c.l.b16 %v1712
        %v1905 = vunpack.c.l.b16 %v1713
        %v1906 = vunpack.c.l.b16 %v1714
        %v1907 = vunpack.c.l.b16 %v1715
        %v1908 = vunpack.c.l.b16 %v1716
        %v1909 = vunpack.c.l.b16 %v1717
        %v1910 = vunpack.c.l.b16 %v1718
        %v1911 = vunpack.c.l.b16 %v1719
        %v1912 = vunpack.c.l.b16 %v1720
        %v1913 = vunpack.c.l.b16 %v1721
        %v1914 = vunpack.c.l.b16 %v1722
        %v1915 = vunpack.c.l.b16 %v1723
        %v1916 = vunpack.c.l.b16 %v1724
        %v1917 = vunpack.c.l.b16 %v1725
        %v1918 = vunpack.c.l.b16 %v1726
        %v1919 = vunpack.c.l.b16 %v1727
        %v1920 = vunpack.c.l.b16 %v1728
        %v1921 = vunpack.c.l.b16 %v1729
        %v1922 = vunpack.c.l.b16 %v1730
        %v1923 = vunpack.c.l.b16 %v1731
        %v1924 = vunpack.c.l.b16 %v1732
        %v1925 = vunpack.c.l.b16 %v1733
        %v1926 = vunpack.c.l.b16 %v1734
        %v1927 = vunpack.c.l.b16 %v1735
        %v1928 = vunpack.c.l.b16 %v1736
        %v1929 = vunpack.c.l.b16 %v1737
        %v1930 = vunpack.c.l.b16 %v1738
        %v1931 = vunpack.c.l.b16 %v1739
        %v1932 = vunpack.c.l.b16 %v1740
        %v1933 = vunpack.c.l.b16 %v1741
        %v1934 = vunpack.c.l.b16 %v1742
        %v1935 = vunpack.c.l.b16 %v1743
        %v1936 = vunpack.c.l.b16 %v1744
        %v1937 = vunpack.c.l.b16 %v1745
        %v1938 = vunpack.c.l.b16 %v1746
        %v1939 = vunpack.c.l.b16 %v1747
        %v1940 = vunpack.c.l.b16 %v1748
        %v1941 = vunpack.c.l.b16 %v1749
        %v1942 = vunpack.c.l.b16 %v1750
        %v1943 = vunpack.c.l.b16 %v1751
        %v1944 = vunpack.c.l.b16 %v1752
        %v1945 = vunpack.c.l.b16 %v1753
        %v1946 = vunpack.c.l.b16 %v1754
        %v1947 = vunpack.c.l.b16 %v1755
        %v1948 = vunpack.c.l.b16 %v1756
        %v1949 = vunpack.c.l.b16 %v1757
        %v1950 = vunpack.c.l.b16 %v1758
        %v1951 = vunpack.c.l.b16 %v1759
        %v1952 = vunpack.c.l.b16 %v1760
        %v1953 = vunpack.c.l.b16 %v1761
        %v1954 = vunpack.c.l.b16 %v1762
        %v1955 = vunpack.c.l.b16 %v1763
        %v1956 = vunpack.c.l.b16 %v1764
        %v1957 = vunpack.c.l.b16 %v1765
        %v1958 = vunpack.c.l.b16 %v1766
        %v1959 = vunpack.c.l.b16 %v1767
        %v1960 = vunpack.c.l.b16 %v1768
        %v1961 = vunpack.c.l.b16 %v1769
        %v1962 = vunpack.c.l.b16 %v1770
        %v1963 = vunpack.c.l.b16 %v1771
        %v1964 = vunpack.c.l.b16 %v1772
        %v1965 = vunpack.c.l.b16 %v1773
        %v1966 = vunpack.c.l.b16 %v1774
        %v1967 = vunpack.c.l.b16 %v1775
        %v1968 = vunpack.c.l.b16 %v1776
        %v1969 = vunpack.c.l.b16 %v1777
        %v1970 = vunpack.c.l.b16 %v1778
        %v1971 = vunpack.c.l.b16 %v1779
        %v1972 = vunpack.c.l.b16 %v1780
        %v1973 = vpack.c.b16 %v1878, %v1877
        %v1974 = vpack.c.b16 %v1880, %v1879
        %v1975 = vpack.c.b16 %v1882, %v1881
        %v1976 = vpack.c.b16 %v1884, %v1883
        %v1977 = vpack.c.b16 %v1886, %v1885
        %v1978 = vpack.c.b16 %v1888, %v1887
        %v1979 = vpack.c.b16 %v1890, %v1889
        %v1980 = vpack.c.b16 %v1892, %v1891
        %v1981 = vpack.c.b16 %v1894, %v1893
        %v1982 = vpack.c.b16 %v1896, %v1895
        %v1983 = vpack.c.b16 %v1898, %v1897
        %v1984 = vpack.c.b16 %v1900, %v1899
        %v1985 = vpack.c.b16 %v1902, %v1901
        %v1986 = vpack.c.b16 %v1904, %v1903
        %v1987 = vpack.c.b16 %v1906, %v1905
        %v1988 = vpack.c.b16 %v1908, %v1907
        %v1989 = vpack.c.b16 %v1910, %v1909
        %v1990 = vpack.c.b16 %v1912, %v1911
        %v1991 = vpack.c.b16 %v1914, %v1913
        %v1992 = vpack.c.b16 %v1916, %v1915
        %v1993 = vpack.c.b16 %v1918, %v1917
        %v1994 = vpack.c.b16 %v1920, %v1919
        %v1995 = vpack.c.b16 %v1922, %v1921
        %v1996 = vpack.c.b16 %v1924, %v1923
        %v1997 = vpack.c.b16 %v1926, %v1925
        %v1998 = vpack.c.b16 %v1928, %v1927
        %v1999 = vpack.c.b16 %v1930, %v1929
        %v2000 = vpack.c.b16 %v1932, %v1931
        %v2001 = vpack.c.b16 %v1934, %v1933
        %v2002 = vpack.c.b16 %v1936, %v1935
        %v2003 = vpack.c.b16 %v1938, %v1937
        %v2004 = vpack.c.b16 %v1940, %v1939
        %v2005 = vpack.c.b16 %v1942, %v1941
        %v2006 = vpack.c.b16 %v1944, %v1943
        %v2007 = vpack.c.b16 %v1946, %v1945
        %v2008 = vpack.c.b16 %v1948, %v1947
        %v2009 = vpack.c.b16 %v1950, %v1949
        %v2010 = vpack.c.b16 %v1952, %v1951
        %v2011 = vpack.c.b16 %v1954, %v1953
        %v2012 = vpack.c.b16 %v1956, %v1955
        %v2013 = vpack.c.b16 %v1958, %v1957
        %v2014 = vpack.c.b16 %v1960, %v1959
        %v2015 = vpack.c.b16 %v1962, %v1961
        %v2016 = vpack.c.b16 %v1964, %v1963
        %v2017 = vpack.c.b16 %v1966, %v1965
        %v2018 = vpack.c.b16 %v1968, %v1967
        %v2019 = vpack.c.b16 %v1970, %v1969
        %v2020 = vpack.c.b16 %v1972, %v1971
        %2069 = vmatprep.subr.bf16.mxu0 0
        %2070 = vmatpush1.bf16.msra.mxu0 %v1973
        %2071 = vmatprep.subr.bf16.mxu0 0
        %2072 = vmatpush1.bf16.msra.mxu0 %v1974
        %2073 = vmatprep.subr.bf16.mxu0 0
        %2074 = vmatpush1.bf16.msra.mxu0 %v1975
        %2075 = vmatprep.subr.bf16.mxu0 0
        %2076 = vmatpush1.bf16.msra.mxu0 %v1976
        %2077 = vmatprep.subr.bf16.mxu0 0
        %2078 = vmatpush1.bf16.msra.mxu0 %v1977
        %2079 = vmatprep.subr.bf16.mxu0 0
        %2080 = vmatpush1.bf16.msra.mxu0 %v1978
        %2081 = vmatprep.subr.bf16.mxu0 0
        %2082 = vmatpush1.bf16.msra.mxu0 %v1979
        %2083 = vmatprep.subr.bf16.mxu0 0
        %2084 = vmatpush1.bf16.msra.mxu0 %v1980
        %2085 = vmatprep.subr.bf16.mxu0 0
        %2086 = vmatpush1.bf16.msra.mxu0 %v1981
        %2087 = vmatprep.subr.bf16.mxu0 0
        %2088 = vmatpush1.bf16.msra.mxu0 %v1982
        %2089 = vmatprep.subr.bf16.mxu0 0
        %2090 = vmatpush1.bf16.msra.mxu0 %v1983
        %2091 = vmatprep.subr.bf16.mxu0 0
        %2092 = vmatpush1.bf16.msra.mxu0 %v1984
        %2093 = vmatprep.subr.bf16.mxu0 0
        %2094 = vmatpush1.bf16.msra.mxu0 %v1985
        %2095 = vmatprep.subr.bf16.mxu0 0
        %2096 = vmatpush1.bf16.msra.mxu0 %v1986
        %2097 = vmatprep.subr.bf16.mxu0 0
        %2098 = vmatpush1.bf16.msra.mxu0 %v1987
        %2099 = vmatprep.subr.bf16.mxu0 0
        %2100 = vmatpush1.bf16.msra.mxu0 %v1988
        %2101 = vmatprep.mubr.bf16.mxu0 %v1637
        %2102 = vmatmul.mubr.bf16.gmra.mrb[0].mxu0 %v1636
        %v2103 = vpop.f32.mrb[0].mxu0
        %v2104 = vadd.f32 0.0, %v2103
        %v2105 = vpop.f32.mrb[0].mxu0
        %v2106 = vpop.f32.mrb[0].mxu0
        %v2107 = vadd.f32 0.0, %v2106
        %v2108 = vpop.f32.mrb[0].mxu0
        %2109 = vmatprep.mubr.bf16.mxu0 %v1643
        %2110 = vmatmul.mubr.bf16.gmra.mrb[0].mxu0 %v1642
        %v2111 = vpop.f32.mrb[0].mxu0
        %v2112 = vadd.f32 0.0, %v2111
        %v2113 = vpop.f32.mrb[0].mxu0
        %v2114 = vpop.f32.mrb[0].mxu0
        %v2115 = vadd.f32 0.0, %v2114
        %v2116 = vpop.f32.mrb[0].mxu0
        %2117 = vmatprep.mubr.bf16.mxu0 %v1649
        %2118 = vmatmul.mubr.bf16.gmra.mrb[0].mxu0 %v1648
        %v2119 = vpop.f32.mrb[0].mxu0
        %v2120 = vadd.f32 0.0, %v2119
        %v2121 = vpop.f32.mrb[0].mxu0
        %v2122 = vpop.f32.mrb[0].mxu0
        %v2123 = vadd.f32 0.0, %v2122
        %v2124 = vpop.f32.mrb[0].mxu0
        %2125 = vmatprep.mubr.bf16.mxu0 %v1655
        %2126 = vmatmul.mubr.bf16.gmra.mrb[0].mxu0 %v1654
        %v2127 = vpop.f32.mrb[0].mxu0
        %v2128 = vadd.f32 0.0, %v2127
        %v2129 = vpop.f32.mrb[0].mxu0
        %v2130 = vpop.f32.mrb[0].mxu0
        %v2131 = vadd.f32 0.0, %v2130
        %v2132 = vpop.f32.mrb[0].mxu0
        %2133 = vmatprep.mubr.bf16.mxu0 %v1661
        %2134 = vmatmul.mubr.bf16.gmra.mrb[0].mxu0 %v1660
        %v2135 = vpop.f32.mrb[0].mxu0
        %v2136 = vadd.f32 0.0, %v2135
        %v2137 = vpop.f32.mrb[0].mxu0
        %v2138 = vpop.f32.mrb[0].mxu0
        %v2139 = vadd.f32 0.0, %v2138
        %v2140 = vpop.f32.mrb[0].mxu0
        %2141 = vmatprep.mubr.bf16.mxu0 %v1667
        %2142 = vmatmul.mubr.bf16.gmra.mrb[0].mxu0 %v1666
        %v2143 = vpop.f32.mrb[0].mxu0
        %v2144 = vadd.f32 0.0, %v2143
        %v2145 = vpop.f32.mrb[0].mxu0
        %v2146 = vpop.f32.mrb[0].mxu0
        %v2147 = vadd.f32 0.0, %v2146
        %v2148 = vpop.f32.mrb[0].mxu0
        %2149 = vmatprep.mubr.bf16.mxu0 %v1673
        %2150 = vmatmul.mubr.bf16.gmra.mrb[0].mxu0 %v1672
        %v2151 = vpop.f32.mrb[0].mxu0
        %v2152 = vadd.f32 0.0, %v2151
        %v2153 = vpop.f32.mrb[0].mxu0
        %v2154 = vpop.f32.mrb[0].mxu0
        %v2155 = vadd.f32 0.0, %v2154
        %v2156 = vpop.f32.mrb[0].mxu0
        %2157 = vmatprep.mubr.bf16.mxu0 %v1679
        %2158 = vmatmul.mubr.bf16.gmra.mrb[0].mxu0 %v1678
        %v2159 = vpop.f32.mrb[0].mxu0
        %v2160 = vadd.f32 0.0, %v2159
        %v2161 = vpop.f32.mrb[0].mxu0
        %v2162 = vpop.f32.mrb[0].mxu0
        %v2163 = vadd.f32 0.0, %v2162
        %v2164 = vpop.f32.mrb[0].mxu0
        %2165 = vdwg.mxu0
        %2166 = vmatprep.subr.bf16.mxu0 0
        %2167 = vmatpush1.bf16.msra.mxu0 %v1989
        %2168 = vmatprep.subr.bf16.mxu0 0
        %2169 = vmatpush1.bf16.msra.mxu0 %v1990
        %2170 = vmatprep.subr.bf16.mxu0 0
        %2171 = vmatpush1.bf16.msra.mxu0 %v1991
        %2172 = vmatprep.subr.bf16.mxu0 0
        %2173 = vmatpush1.bf16.msra.mxu0 %v1992
        %2174 = vmatprep.subr.bf16.mxu0 0
        %2175 = vmatpush1.bf16.msra.mxu0 %v1993
        %2176 = vmatprep.subr.bf16.mxu0 0
        %2177 = vmatpush1.bf16.msra.mxu0 %v1994
        %2178 = vmatprep.subr.bf16.mxu0 0
        %2179 = vmatpush1.bf16.msra.mxu0 %v1995
        %2180 = vmatprep.subr.bf16.mxu0 0
        %2181 = vmatpush1.bf16.msra.mxu0 %v1996
        %2182 = vmatprep.subr.bf16.mxu0 0
        %2183 = vmatpush1.bf16.msra.mxu0 %v1997
        %2184 = vmatprep.subr.bf16.mxu0 0
        %2185 = vmatpush1.bf16.msra.mxu0 %v1998
        %2186 = vmatprep.subr.bf16.mxu0 0
        %2187 = vmatpush1.bf16.msra.mxu0 %v1999
        %2188 = vmatprep.subr.bf16.mxu0 0
        %2189 = vmatpush1.bf16.msra.mxu0 %v2000
        %2190 = vmatprep.subr.bf16.mxu0 0
        %2191 = vmatpush1.bf16.msra.mxu0 %v2001
        %2192 = vmatprep.subr.bf16.mxu0 0
        %2193 = vmatpush1.bf16.msra.mxu0 %v2002
        %2194 = vmatprep.subr.bf16.mxu0 0
        %2195 = vmatpush1.bf16.msra.mxu0 %v2003
        %2196 = vmatprep.subr.bf16.mxu0 0
        %2197 = vmatpush1.bf16.msra.mxu0 %v2004
        %2198 = vmatprep.mubr.bf16.mxu0 %v1639
        %2199 = vmatmul.mubr.bf16.gmra.mrb[0].mxu0 %v1638
        %v2200 = vpop.f32.mrb[0].mxu0
        %v2201 = vadd.f32 %v2104, %v2200
        %v2202 = vpop.f32.mrb[0].mxu0
        %v2203 = vpop.f32.mrb[0].mxu0
        %v2204 = vadd.f32 %v2107, %v2203
        %v2205 = vpop.f32.mrb[0].mxu0
        %2206 = vmatprep.mubr.bf16.mxu0 %v1645
        %2207 = vmatmul.mubr.bf16.gmra.mrb[0].mxu0 %v1644
        %v2208 = vpop.f32.mrb[0].mxu0
        %v2209 = vadd.f32 %v2112, %v2208
        %v2210 = vpop.f32.mrb[0].mxu0
        %v2211 = vpop.f32.mrb[0].mxu0
        %v2212 = vadd.f32 %v2115, %v2211
        %v2213 = vpop.f32.mrb[0].mxu0
        %2214 = vmatprep.mubr.bf16.mxu0 %v1651
        %2215 = vmatmul.mubr.bf16.gmra.mrb[0].mxu0 %v1650
        %v2216 = vpop.f32.mrb[0].mxu0
        %v2217 = vadd.f32 %v2120, %v2216
        %v2218 = vpop.f32.mrb[0].mxu0
        %v2219 = vpop.f32.mrb[0].mxu0
        %v2220 = vadd.f32 %v2123, %v2219
        %v2221 = vpop.f32.mrb[0].mxu0
        %2222 = vmatprep.mubr.bf16.mxu0 %v1657
        %2223 = vmatmul.mubr.bf16.gmra.mrb[0].mxu0 %v1656
        %v2224 = vpop.f32.mrb[0].mxu0
        %v2225 = vadd.f32 %v2128, %v2224
        %v2226 = vpop.f32.mrb[0].mxu0
        %v2227 = vpop.f32.mrb[0].mxu0
        %v2228 = vadd.f32 %v2131, %v2227
        %v2229 = vpop.f32.mrb[0].mxu0
        %2230 = vmatprep.mubr.bf16.mxu0 %v1663
        %2231 = vmatmul.mubr.bf16.gmra.mrb[0].mxu0 %v1662
        %v2232 = vpop.f32.mrb[0].mxu0
        %v2233 = vadd.f32 %v2136, %v2232
        %v2234 = vpop.f32.mrb[0].mxu0
        %v2235 = vpop.f32.mrb[0].mxu0
        %v2236 = vadd.f32 %v2139, %v2235
        %v2237 = vpop.f32.mrb[0].mxu0
        %2238 = vmatprep.mubr.bf16.mxu0 %v1669
        %2239 = vmatmul.mubr.bf16.gmra.mrb[0].mxu0 %v1668
        %v2240 = vpop.f32.mrb[0].mxu0
        %v2241 = vadd.f32 %v2144, %v2240
        %v2242 = vpop.f32.mrb[0].mxu0
        %v2243 = vpop.f32.mrb[0].mxu0
        %v2244 = vadd.f32 %v2147, %v2243
        %v2245 = vpop.f32.mrb[0].mxu0
        %2246 = vmatprep.mubr.bf16.mxu0 %v1675
        %2247 = vmatmul.mubr.bf16.gmra.mrb[0].mxu0 %v1674
        %v2248 = vpop.f32.mrb[0].mxu0
        %v2249 = vadd.f32 %v2152, %v2248
        %v2250 = vpop.f32.mrb[0].mxu0
        %v2251 = vpop.f32.mrb[0].mxu0
        %v2252 = vadd.f32 %v2155, %v2251
        %v2253 = vpop.f32.mrb[0].mxu0
        %2254 = vmatprep.mubr.bf16.mxu0 %v1681
        %2255 = vmatmul.mubr.bf16.gmra.mrb[0].mxu0 %v1680
        %v2256 = vpop.f32.mrb[0].mxu0
        %v2257 = vadd.f32 %v2160, %v2256
        %v2258 = vpop.f32.mrb[0].mxu0
        %v2259 = vpop.f32.mrb[0].mxu0
        %v2260 = vadd.f32 %v2163, %v2259
        %v2261 = vpop.f32.mrb[0].mxu0
        %2262 = vdwg.mxu0
        %2263 = vmatprep.subr.bf16.mxu0 0
        %2264 = vmatpush1.bf16.msra.mxu0 %v2005
        %2265 = vmatprep.subr.bf16.mxu0 0
        %2266 = vmatpush1.bf16.msra.mxu0 %v2006
        %2267 = vmatprep.subr.bf16.mxu0 0
        %2268 = vmatpush1.bf16.msra.mxu0 %v2007
        %2269 = vmatprep.subr.bf16.mxu0 0
        %2270 = vmatpush1.bf16.msra.mxu0 %v2008
        %2271 = vmatprep.subr.bf16.mxu0 0
        %2272 = vmatpush1.bf16.msra.mxu0 %v2009
        %2273 = vmatprep.subr.bf16.mxu0 0
        %2274 = vmatpush1.bf16.msra.mxu0 %v2010
        %2275 = vmatprep.subr.bf16.mxu0 0
        %2276 = vmatpush1.bf16.msra.mxu0 %v2011
        %2277 = vmatprep.subr.bf16.mxu0 0
        %2278 = vmatpush1.bf16.msra.mxu0 %v2012
        %2279 = vmatprep.subr.bf16.mxu0 0
        %2280 = vmatpush1.bf16.msra.mxu0 %v2013
        %2281 = vmatprep.subr.bf16.mxu0 0
        %2282 = vmatpush1.bf16.msra.mxu0 %v2014
        %2283 = vmatprep.subr.bf16.mxu0 0
        %2284 = vmatpush1.bf16.msra.mxu0 %v2015
        %2285 = vmatprep.subr.bf16.mxu0 0
        %2286 = vmatpush1.bf16.msra.mxu0 %v2016
        %2287 = vmatprep.subr.bf16.mxu0 0
        %2288 = vmatpush1.bf16.msra.mxu0 %v2017
        %2289 = vmatprep.subr.bf16.mxu0 0
        %2290 = vmatpush1.bf16.msra.mxu0 %v2018
        %2291 = vmatprep.subr.bf16.mxu0 0
        %2292 = vmatpush1.bf16.msra.mxu0 %v2019
        %2293 = vmatprep.subr.bf16.mxu0 0
        %2294 = vmatpush1.bf16.msra.mxu0 %v2020
        %2295 = vmatprep.mubr.bf16.mxu0 %v1641
        %2296 = vmatmul.mubr.bf16.gmra.mrb[0].mxu0 %v1640
        %v2297 = vpop.f32.mrb[0].mxu0
        %v2298 = vadd.f32 %v2201, %v2297
        %v2299 = vpop.f32.mrb[0].mxu0
        %v2300 = vpop.f32.mrb[0].mxu0
        %v2301 = vadd.f32 %v2204, %v2300
        %v2302 = vpop.f32.mrb[0].mxu0
        %2303 = vmatprep.mubr.bf16.mxu0 %v1647
        %2304 = vmatmul.mubr.bf16.gmra.mrb[0].mxu0 %v1646
        %v2305 = vpop.f32.mrb[0].mxu0
        %v2306 = vadd.f32 %v2209, %v2305
        %v2307 = vpop.f32.mrb[0].mxu0
        %v2308 = vpop.f32.mrb[0].mxu0
        %v2309 = vadd.f32 %v2212, %v2308
        %v2310 = vpop.f32.mrb[0].mxu0
        %2311 = vmatprep.mubr.bf16.mxu0 %v1653
        %2312 = vmatmul.mubr.bf16.gmra.mrb[0].mxu0 %v1652
        %v2313 = vpop.f32.mrb[0].mxu0
        %v2314 = vadd.f32 %v2217, %v2313
        %v2315 = vpop.f32.mrb[0].mxu0
        %v2316 = vpop.f32.mrb[0].mxu0
        %v2317 = vadd.f32 %v2220, %v2316
        %v2318 = vpop.f32.mrb[0].mxu0
        %2319 = vmatprep.mubr.bf16.mxu0 %v1659
        %2320 = vmatmul.mubr.bf16.gmra.mrb[0].mxu0 %v1658
        %v2321 = vpop.f32.mrb[0].mxu0
        %v2322 = vadd.f32 %v2225, %v2321
        %v2323 = vpop.f32.mrb[0].mxu0
        %v2324 = vpop.f32.mrb[0].mxu0
        %v2325 = vadd.f32 %v2228, %v2324
        %v2326 = vpop.f32.mrb[0].mxu0
        %2327 = vmatprep.mubr.bf16.mxu0 %v1665
        %2328 = vmatmul.mubr.bf16.gmra.mrb[0].mxu0 %v1664
        %v2329 = vpop.f32.mrb[0].mxu0
        %v2330 = vadd.f32 %v2233, %v2329
        %v2331 = vpop.f32.mrb[0].mxu0
        %v2332 = vpop.f32.mrb[0].mxu0
        %v2333 = vadd.f32 %v2236, %v2332
        %v2334 = vpop.f32.mrb[0].mxu0
        %2335 = vmatprep.mubr.bf16.mxu0 %v1671
        %2336 = vmatmul.mubr.bf16.gmra.mrb[0].mxu0 %v1670
        %v2337 = vpop.f32.mrb[0].mxu0
        %v2338 = vadd.f32 %v2241, %v2337
        %v2339 = vpop.f32.mrb[0].mxu0
        %v2340 = vpop.f32.mrb[0].mxu0
        %v2341 = vadd.f32 %v2244, %v2340
        %v2342 = vpop.f32.mrb[0].mxu0
        %2343 = vmatprep.mubr.bf16.mxu0 %v1677
        %2344 = vmatmul.mubr.bf16.gmra.mrb[0].mxu0 %v1676
        %v2345 = vpop.f32.mrb[0].mxu0
        %v2346 = vadd.f32 %v2249, %v2345
        %v2347 = vpop.f32.mrb[0].mxu0
        %v2348 = vpop.f32.mrb[0].mxu0
        %v2349 = vadd.f32 %v2252, %v2348
        %v2350 = vpop.f32.mrb[0].mxu0
        %2351 = vmatprep.mubr.bf16.mxu0 %v1683
        %2352 = vmatmul.mubr.bf16.gmra.mrb[0].mxu0 %v1682
        %v2353 = vpop.f32.mrb[0].mxu0
        %v2354 = vadd.f32 %v2257, %v2353
        %v2355 = vpop.f32.mrb[0].mxu0
        %v2356 = vpop.f32.mrb[0].mxu0
        %v2357 = vadd.f32 %v2260, %v2356
        %v2358 = vpop.f32.mrb[0].mxu0
        %2359 = vdwg.mxu0
        %v2360 = vadd.f32 %v1382, %v2298
        %v2361 = vadd.f32 %v1385, %v2301
        %v2362 = vadd.f32 %v1390, %v2306
        %v2363 = vadd.f32 %v1393, %v2309
        %v2364 = vadd.f32 %v1398, %v2314
        %v2365 = vadd.f32 %v1401, %v2317
        %v2366 = vadd.f32 %v1406, %v2322
        %v2367 = vadd.f32 %v1409, %v2325
        %v2368 = vadd.f32 %v1414, %v2330
        %v2369 = vadd.f32 %v1417, %v2333
        %v2370 = vadd.f32 %v1422, %v2338
        %v2371 = vadd.f32 %v1425, %v2341
        %v2372 = vadd.f32 %v1430, %v2346
        %v2373 = vadd.f32 %v1433, %v2349
        %v2374 = vadd.f32 %v1438, %v2354
        %v2375 = vadd.f32 %v1441, %v2357
        %2392 = vrot.lane.b32.xlu0 %v2360, 1
        %v2393 = vpop.permute.xlu0 %2392
        %2394 = vrot.lane.b32.xlu0 %v2361, 1
        %v2395 = vpop.permute.xlu0 %2394
        %2396 = vrot.lane.b32.xlu0 %v2362, 1
        %v2397 = vpop.permute.xlu0 %2396
        %2398 = vrot.lane.b32.xlu0 %v2363, 1
        %v2399 = vpop.permute.xlu0 %2398
        %2400 = vrot.lane.b32.xlu0 %v2364, 1
        %v2401 = vpop.permute.xlu0 %2400
        %2402 = vrot.lane.b32.xlu0 %v2365, 1
        %v2403 = vpop.permute.xlu0 %2402
        %2404 = vrot.lane.b32.xlu0 %v2366, 1
        %v2405 = vpop.permute.xlu0 %2404
        %2406 = vrot.lane.b32.xlu0 %v2367, 1
        %v2407 = vpop.permute.xlu0 %2406
        %2408 = vrot.lane.b32.xlu0 %v2368, 1
        %v2409 = vpop.permute.xlu0 %2408
        %2410 = vrot.lane.b32.xlu0 %v2369, 1
        %v2411 = vpop.permute.xlu0 %2410
        %2412 = vrot.lane.b32.xlu0 %v2370, 1
        %v2413 = vpop.permute.xlu0 %2412
        %2414 = vrot.lane.b32.xlu0 %v2371, 1
        %v2415 = vpop.permute.xlu0 %2414
        %2416 = vrot.lane.b32.xlu0 %v2372, 1
        %v2417 = vpop.permute.xlu0 %2416
        %2418 = vrot.lane.b32.xlu0 %v2373, 1
        %v2419 = vpop.permute.xlu0 %2418
        %2420 = vrot.lane.b32.xlu0 %v2374, 1
        %v2421 = vpop.permute.xlu0 %2420
        %2422 = vrot.lane.b32.xlu0 %v2375, 1
        %v2423 = vpop.permute.xlu0 %2422
        %vm2440 = vcmp.gt.f32.partialorder %v2360, %v2393
        %vm2441 = vcmp.gt.f32.partialorder %v2361, %v2395
        %vm2442 = vcmp.gt.f32.partialorder %v2362, %v2397
        %vm2443 = vcmp.gt.f32.partialorder %v2363, %v2399
        %vm2444 = vcmp.gt.f32.partialorder %v2364, %v2401
        %vm2445 = vcmp.gt.f32.partialorder %v2365, %v2403
        %vm2446 = vcmp.gt.f32.partialorder %v2366, %v2405
        %vm2447 = vcmp.gt.f32.partialorder %v2367, %v2407
        %vm2448 = vcmp.gt.f32.partialorder %v2368, %v2409
        %vm2449 = vcmp.gt.f32.partialorder %v2369, %v2411
        %vm2450 = vcmp.gt.f32.partialorder %v2370, %v2413
        %vm2451 = vcmp.gt.f32.partialorder %v2371, %v2415
        %vm2452 = vcmp.gt.f32.partialorder %v2372, %v2417
        %vm2453 = vcmp.gt.f32.partialorder %v2373, %v2419
        %vm2454 = vcmp.gt.f32.partialorder %v2374, %v2421
        %vm2455 = vcmp.gt.f32.partialorder %v2375, %v2423
        %v2456 = vsel %vm2440, 1, 0
        %v2457 = vsel %vm2441, 1, 0
        %v2458 = vsel %vm2442, 1, 0
        %v2459 = vsel %vm2443, 1, 0
        %v2460 = vsel %vm2444, 1, 0
        %v2461 = vsel %vm2445, 1, 0
        %v2462 = vsel %vm2446, 1, 0
        %v2463 = vsel %vm2447, 1, 0
        %v2464 = vsel %vm2448, 1, 0
        %v2465 = vsel %vm2449, 1, 0
        %v2466 = vsel %vm2450, 1, 0
        %v2467 = vsel %vm2451, 1, 0
        %v2468 = vsel %vm2452, 1, 0
        %v2469 = vsel %vm2453, 1, 0
        %v2470 = vsel %vm2454, 1, 0
        %v2471 = vsel %vm2455, 1, 0
        %v2472 = vcvt.s32.f32 %v2456
        %v2473 = vcvt.s32.f32 %v2457
        %v2474 = vcvt.s32.f32 %v2458
        %v2475 = vcvt.s32.f32 %v2459
        %v2476 = vcvt.s32.f32 %v2460
        %v2477 = vcvt.s32.f32 %v2461
        %v2478 = vcvt.s32.f32 %v2462
        %v2479 = vcvt.s32.f32 %v2463
        %v2480 = vcvt.s32.f32 %v2464
        %v2481 = vcvt.s32.f32 %v2465
        %v2482 = vcvt.s32.f32 %v2466
        %v2483 = vcvt.s32.f32 %v2467
        %v2484 = vcvt.s32.f32 %v2468
        %v2485 = vcvt.s32.f32 %v2469
        %v2486 = vcvt.s32.f32 %v2470
        %v2487 = vcvt.s32.f32 %v2471
        %2504 = vrot.lane.b32.xlu0 %v507, 1
        %v2505 = vpop.permute.xlu0 %2504
        %2506 = vrot.lane.b32.xlu0 %v508, 1
        %v2507 = vpop.permute.xlu0 %2506
        %2508 = vrot.lane.b32.xlu0 %v509, 1
        %v2509 = vpop.permute.xlu0 %2508
        %2510 = vrot.lane.b32.xlu0 %v510, 1
        %v2511 = vpop.permute.xlu0 %2510
        %2512 = vrot.lane.b32.xlu0 %v511, 1
        %v2513 = vpop.permute.xlu0 %2512
        %2514 = vrot.lane.b32.xlu0 %v512, 1
        %v2515 = vpop.permute.xlu0 %2514
        %2516 = vrot.lane.b32.xlu0 %v513, 1
        %v2517 = vpop.permute.xlu0 %2516
        %2518 = vrot.lane.b32.xlu0 %v514, 1
        %v2519 = vpop.permute.xlu0 %2518
        %2520 = vrot.lane.b32.xlu0 %v515, 1
        %v2521 = vpop.permute.xlu0 %2520
        %2522 = vrot.lane.b32.xlu0 %v516, 1
        %v2523 = vpop.permute.xlu0 %2522
        %2524 = vrot.lane.b32.xlu0 %v517, 1
        %v2525 = vpop.permute.xlu0 %2524
        %2526 = vrot.lane.b32.xlu0 %v518, 1
        %v2527 = vpop.permute.xlu0 %2526
        %2528 = vrot.lane.b32.xlu0 %v519, 1
        %v2529 = vpop.permute.xlu0 %2528
        %2530 = vrot.lane.b32.xlu0 %v520, 1
        %v2531 = vpop.permute.xlu0 %2530
        %2532 = vrot.lane.b32.xlu0 %v521, 1
        %v2533 = vpop.permute.xlu0 %2532
        %2534 = vrot.lane.b32.xlu0 %v522, 1
        %v2535 = vpop.permute.xlu0 %2534
        %v2552 = vmax.f32 %v2472, %v2505
        %v2553 = vmax.f32 %v2473, %v2507
        %v2554 = vmax.f32 %v2474, %v2509
        %v2555 = vmax.f32 %v2475, %v2511
        %v2556 = vmax.f32 %v2476, %v2513
        %v2557 = vmax.f32 %v2477, %v2515
        %v2558 = vmax.f32 %v2478, %v2517
        %v2559 = vmax.f32 %v2479, %v2519
        %v2560 = vmax.f32 %v2480, %v2521
        %v2561 = vmax.f32 %v2481, %v2523
        %v2562 = vmax.f32 %v2482, %v2525
        %v2563 = vmax.f32 %v2483, %v2527
        %v2564 = vmax.f32 %v2484, %v2529
        %v2565 = vmax.f32 %v2485, %v2531
        %v2566 = vmax.f32 %v2486, %v2533
        %v2567 = vmax.f32 %v2487, %v2535
        %v2568 = vld [vmem:[%s407] sm:$0xff]
        %v2569 = vld [vmem:[%s407 + $0x8] sm:$0xff]
        %v2570 = vld [vmem:[%s407 + $0x10] sm:$0xff]
        %v2571 = vld [vmem:[%s407 + $0x18] sm:$0xff]
        %v2572 = vld [vmem:[%s407 + $0x20] sm:$0xff]
        %v2573 = vld [vmem:[%s407 + $0x28] sm:$0xff]
        %v2574 = vld [vmem:[%s407 + $0x30] sm:$0xff]
        %v2575 = vld [vmem:[%s407 + $0x38] sm:$0xff]
        %v2576 = vld [vmem:[%s407 + $0x40] sm:$0xff]
        %v2577 = vld [vmem:[%s407 + $0x48] sm:$0xff]
        %v2578 = vld [vmem:[%s407 + $0x50] sm:$0xff]
        %v2579 = vld [vmem:[%s407 + $0x58] sm:$0xff]
        %v2580 = vld [vmem:[%s407 + $0x60] sm:$0xff]
        %v2581 = vld [vmem:[%s407 + $0x68] sm:$0xff]
        %v2582 = vld [vmem:[%s407 + $0x70] sm:$0xff]
        %v2583 = vld [vmem:[%s407 + $0x78] sm:$0xff]
        %v2584 = vld [vmem:[%s407 + $0x80] sm:$0xff]
        %v2585 = vld [vmem:[%s407 + $0x88] sm:$0xff]
        %v2586 = vld [vmem:[%s407 + $0x90] sm:$0xff]
        %v2587 = vld [vmem:[%s407 + $0x98] sm:$0xff]
        %v2588 = vld [vmem:[%s407 + $0xa0] sm:$0xff]
        %v2589 = vld [vmem:[%s407 + $0xa8] sm:$0xff]
        %v2590 = vld [vmem:[%s407 + $0xb0] sm:$0xff]
        %v2591 = vld [vmem:[%s407 + $0xb8] sm:$0xff]
        %v2592 = vld [vmem:[%s407 + $0xc0] sm:$0xff]
        %v2593 = vld [vmem:[%s407 + $0xc8] sm:$0xff]
        %v2594 = vld [vmem:[%s407 + $0xd0] sm:$0xff]
        %v2595 = vld [vmem:[%s407 + $0xd8] sm:$0xff]
        %v2596 = vld [vmem:[%s407 + $0xe0] sm:$0xff]
        %v2597 = vld [vmem:[%s407 + $0xe8] sm:$0xff]
        %v2598 = vld [vmem:[%s407 + $0xf0] sm:$0xff]
        %v2599 = vld [vmem:[%s407 + $0xf8] sm:$0xff]
        %v2600 = vld [vmem:[%s407 + $0x100] sm:$0xff]
        %v2601 = vld [vmem:[%s407 + $0x108] sm:$0xff]
        %v2602 = vld [vmem:[%s407 + $0x110] sm:$0xff]
        %v2603 = vld [vmem:[%s407 + $0x118] sm:$0xff]
        %v2604 = vld [vmem:[%s407 + $0x120] sm:$0xff]
        %v2605 = vld [vmem:[%s407 + $0x128] sm:$0xff]
        %v2606 = vld [vmem:[%s407 + $0x130] sm:$0xff]
        %v2607 = vld [vmem:[%s407 + $0x138] sm:$0xff]
        %v2608 = vld [vmem:[%s407 + $0x140] sm:$0xff]
        %v2609 = vld [vmem:[%s407 + $0x148] sm:$0xff]
        %v2610 = vld [vmem:[%s407 + $0x150] sm:$0xff]
        %v2611 = vld [vmem:[%s407 + $0x158] sm:$0xff]
        %v2612 = vld [vmem:[%s407 + $0x160] sm:$0xff]
        %v2613 = vld [vmem:[%s407 + $0x168] sm:$0xff]
        %v2614 = vld [vmem:[%s407 + $0x170] sm:$0xff]
        %v2615 = vld [vmem:[%s407 + $0x178] sm:$0xff]
        %v2616 = vld [vmem:[%s407 + $0x180] sm:$0xff]
        %v2617 = vld [vmem:[%s407 + $0x188] sm:$0xff]
        %v2618 = vld [vmem:[%s407 + $0x190] sm:$0xff]
        %v2619 = vld [vmem:[%s407 + $0x198] sm:$0xff]
        %v2620 = vld [vmem:[%s407 + $0x1a0] sm:$0xff]
        %v2621 = vld [vmem:[%s407 + $0x1a8] sm:$0xff]
        %v2622 = vld [vmem:[%s407 + $0x1b0] sm:$0xff]
        %v2623 = vld [vmem:[%s407 + $0x1b8] sm:$0xff]
        %v2624 = vld [vmem:[%s407 + $0x1c0] sm:$0xff]
        %v2625 = vld [vmem:[%s407 + $0x1c8] sm:$0xff]
        %v2626 = vld [vmem:[%s407 + $0x1d0] sm:$0xff]
        %v2627 = vld [vmem:[%s407 + $0x1d8] sm:$0xff]
        %v2628 = vld [vmem:[%s407 + $0x1e0] sm:$0xff]
        %v2629 = vld [vmem:[%s407 + $0x1e8] sm:$0xff]
        %v2630 = vld [vmem:[%s407 + $0x1f0] sm:$0xff]
        %v2631 = vld [vmem:[%s407 + $0x1f8] sm:$0xff]
        %v2632 = vld [vmem:[%s407 + $0x200] sm:$0xff]
        %v2633 = vld [vmem:[%s407 + $0x208] sm:$0xff]
        %v2634 = vld [vmem:[%s407 + $0x210] sm:$0xff]
        %v2635 = vld [vmem:[%s407 + $0x218] sm:$0xff]
        %v2636 = vld [vmem:[%s407 + $0x220] sm:$0xff]
        %v2637 = vld [vmem:[%s407 + $0x228] sm:$0xff]
        %v2638 = vld [vmem:[%s407 + $0x230] sm:$0xff]
        %v2639 = vld [vmem:[%s407 + $0x238] sm:$0xff]
        %v2640 = vld [vmem:[%s407 + $0x240] sm:$0xff]
        %v2641 = vld [vmem:[%s407 + $0x248] sm:$0xff]
        %v2642 = vld [vmem:[%s407 + $0x250] sm:$0xff]
        %v2643 = vld [vmem:[%s407 + $0x258] sm:$0xff]
        %v2644 = vld [vmem:[%s407 + $0x260] sm:$0xff]
        %v2645 = vld [vmem:[%s407 + $0x268] sm:$0xff]
        %v2646 = vld [vmem:[%s407 + $0x270] sm:$0xff]
        %v2647 = vld [vmem:[%s407 + $0x278] sm:$0xff]
        %v2648 = vld [vmem:[%s407 + $0x280] sm:$0xff]
        %v2649 = vld [vmem:[%s407 + $0x288] sm:$0xff]
        %v2650 = vld [vmem:[%s407 + $0x290] sm:$0xff]
        %v2651 = vld [vmem:[%s407 + $0x298] sm:$0xff]
        %v2652 = vld [vmem:[%s407 + $0x2a0] sm:$0xff]
        %v2653 = vld [vmem:[%s407 + $0x2a8] sm:$0xff]
        %v2654 = vld [vmem:[%s407 + $0x2b0] sm:$0xff]
        %v2655 = vld [vmem:[%s407 + $0x2b8] sm:$0xff]
        %v2656 = vld [vmem:[%s407 + $0x2c0] sm:$0xff]
        %v2657 = vld [vmem:[%s407 + $0x2c8] sm:$0xff]
        %v2658 = vld [vmem:[%s407 + $0x2d0] sm:$0xff]
        %v2659 = vld [vmem:[%s407 + $0x2d8] sm:$0xff]
        %v2660 = vld [vmem:[%s407 + $0x2e0] sm:$0xff]
        %v2661 = vld [vmem:[%s407 + $0x2e8] sm:$0xff]
        %v2662 = vld [vmem:[%s407 + $0x2f0] sm:$0xff]
        %v2663 = vld [vmem:[%s407 + $0x2f8] sm:$0xff]
        %v2664 = vpack.c.bf16 %v2574, %v2568
        %v2665 = vpack.c.bf16 %v2575, %v2569
        %v2666 = vpack.c.bf16 %v2576, %v2570
        %v2667 = vpack.c.bf16 %v2577, %v2571
        %v2668 = vpack.c.bf16 %v2578, %v2572
        %v2669 = vpack.c.bf16 %v2579, %v2573
        %v2670 = vpack.c.bf16 %v2586, %v2580
        %v2671 = vpack.c.bf16 %v2587, %v2581
        %v2672 = vpack.c.bf16 %v2588, %v2582
        %v2673 = vpack.c.bf16 %v2589, %v2583
        %v2674 = vpack.c.bf16 %v2590, %v2584
        %v2675 = vpack.c.bf16 %v2591, %v2585
        %v2676 = vpack.c.bf16 %v2598, %v2592
        %v2677 = vpack.c.bf16 %v2599, %v2593
        %v2678 = vpack.c.bf16 %v2600, %v2594
        %v2679 = vpack.c.bf16 %v2601, %v2595
        %v2680 = vpack.c.bf16 %v2602, %v2596
        %v2681 = vpack.c.bf16 %v2603, %v2597
        %v2682 = vpack.c.bf16 %v2610, %v2604
        %v2683 = vpack.c.bf16 %v2611, %v2605
        %v2684 = vpack.c.bf16 %v2612, %v2606
        %v2685 = vpack.c.bf16 %v2613, %v2607
        %v2686 = vpack.c.bf16 %v2614, %v2608
        %v2687 = vpack.c.bf16 %v2615, %v2609
        %v2688 = vpack.c.bf16 %v2622, %v2616
        %v2689 = vpack.c.bf16 %v2623, %v2617
        %v2690 = vpack.c.bf16 %v2624, %v2618
        %v2691 = vpack.c.bf16 %v2625, %v2619
        %v2692 = vpack.c.bf16 %v2626, %v2620
        %v2693 = vpack.c.bf16 %v2627, %v2621
        %v2694 = vpack.c.bf16 %v2634, %v2628
        %v2695 = vpack.c.bf16 %v2635, %v2629
        %v2696 = vpack.c.bf16 %v2636, %v2630
        %v2697 = vpack.c.bf16 %v2637, %v2631
        %v2698 = vpack.c.bf16 %v2638, %v2632
        %v2699 = vpack.c.bf16 %v2639, %v2633
        %v2700 = vpack.c.bf16 %v2646, %v2640
        %v2701 = vpack.c.bf16 %v2647, %v2641
        %v2702 = vpack.c.bf16 %v2648, %v2642
        %v2703 = vpack.c.bf16 %v2649, %v2643
        %v2704 = vpack.c.bf16 %v2650, %v2644
        %v2705 = vpack.c.bf16 %v2651, %v2645
        %v2706 = vpack.c.bf16 %v2658, %v2652
        %v2707 = vpack.c.bf16 %v2659, %v2653
        %v2708 = vpack.c.bf16 %v2660, %v2654
        %v2709 = vpack.c.bf16 %v2661, %v2655
        %v2710 = vpack.c.bf16 %v2662, %v2656
        %v2711 = vpack.c.bf16 %v2663, %v2657
        %v2712 = vld [vmem:[#allocation10] sm:$0xff]
        %v2713 = vld [vmem:[#allocation10 + $0x8] sm:$0xff]
        %v2714 = vld [vmem:[#allocation10 + $0x10] sm:$0xff]
        %v2715 = vld [vmem:[#allocation10 + $0x18] sm:$0xff]
        %v2716 = vld [vmem:[#allocation10 + $0x20] sm:$0xff]
        %v2717 = vld [vmem:[#allocation10 + $0x28] sm:$0xff]
        %v2718 = vld [vmem:[#allocation10 + $0x30] sm:$0xff]
        %v2719 = vld [vmem:[#allocation10 + $0x38] sm:$0xff]
        %v2720 = vld [vmem:[#allocation10 + $0x40] sm:$0xff]
        %v2721 = vld [vmem:[#allocation10 + $0x48] sm:$0xff]
        %v2722 = vld [vmem:[#allocation10 + $0x50] sm:$0xff]
        %v2723 = vld [vmem:[#allocation10 + $0x58] sm:$0xff]
        %v2724 = vld [vmem:[#allocation10 + $0x60] sm:$0xff]
        %v2725 = vld [vmem:[#allocation10 + $0x68] sm:$0xff]
        %v2726 = vld [vmem:[#allocation10 + $0x70] sm:$0xff]
        %v2727 = vld [vmem:[#allocation10 + $0x78] sm:$0xff]
        %v2728 = vld [vmem:[#allocation10 + $0x80] sm:$0xff]
        %v2729 = vld [vmem:[#allocation10 + $0x88] sm:$0xff]
        %v2730 = vld [vmem:[#allocation10 + $0x90] sm:$0xff]
        %v2731 = vld [vmem:[#allocation10 + $0x98] sm:$0xff]
        %v2732 = vld [vmem:[#allocation10 + $0xa0] sm:$0xff]
        %v2733 = vld [vmem:[#allocation10 + $0xa8] sm:$0xff]
        %v2734 = vld [vmem:[#allocation10 + $0xb0] sm:$0xff]
        %v2735 = vld [vmem:[#allocation10 + $0xb8] sm:$0xff]
        %v2736 = vld [vmem:[#allocation10 + $0xc0] sm:$0xff]
        %v2737 = vld [vmem:[#allocation10 + $0xc8] sm:$0xff]
        %v2738 = vld [vmem:[#allocation10 + $0xd0] sm:$0xff]
        %v2739 = vld [vmem:[#allocation10 + $0xd8] sm:$0xff]
        %v2740 = vld [vmem:[#allocation10 + $0xe0] sm:$0xff]
        %v2741 = vld [vmem:[#allocation10 + $0xe8] sm:$0xff]
        %v2742 = vld [vmem:[#allocation10 + $0xf0] sm:$0xff]
        %v2743 = vld [vmem:[#allocation10 + $0xf8] sm:$0xff]
        %v2744 = vld [vmem:[#allocation10 + $0x100] sm:$0xff]
        %v2745 = vld [vmem:[#allocation10 + $0x108] sm:$0xff]
        %v2746 = vld [vmem:[#allocation10 + $0x110] sm:$0xff]
        %v2747 = vld [vmem:[#allocation10 + $0x118] sm:$0xff]
        %v2748 = vld [vmem:[#allocation10 + $0x120] sm:$0xff]
        %v2749 = vld [vmem:[#allocation10 + $0x128] sm:$0xff]
        %v2750 = vld [vmem:[#allocation10 + $0x130] sm:$0xff]
        %v2751 = vld [vmem:[#allocation10 + $0x138] sm:$0xff]
        %v2752 = vld [vmem:[#allocation10 + $0x140] sm:$0xff]
        %v2753 = vld [vmem:[#allocation10 + $0x148] sm:$0xff]
        %v2754 = vld [vmem:[#allocation10 + $0x150] sm:$0xff]
        %v2755 = vld [vmem:[#allocation10 + $0x158] sm:$0xff]
        %v2756 = vld [vmem:[#allocation10 + $0x160] sm:$0xff]
        %v2757 = vld [vmem:[#allocation10 + $0x168] sm:$0xff]
        %v2758 = vld [vmem:[#allocation10 + $0x170] sm:$0xff]
        %v2759 = vld [vmem:[#allocation10 + $0x178] sm:$0xff]
        %v2760 = vld [vmem:[#allocation10 + $0x180] sm:$0xff]
        %v2761 = vld [vmem:[#allocation10 + $0x188] sm:$0xff]
        %v2762 = vld [vmem:[#allocation10 + $0x190] sm:$0xff]
        %v2763 = vld [vmem:[#allocation10 + $0x198] sm:$0xff]
        %v2764 = vld [vmem:[#allocation10 + $0x1a0] sm:$0xff]
        %v2765 = vld [vmem:[#allocation10 + $0x1a8] sm:$0xff]
        %v2766 = vld [vmem:[#allocation10 + $0x1b0] sm:$0xff]
        %v2767 = vld [vmem:[#allocation10 + $0x1b8] sm:$0xff]
        %v2768 = vld [vmem:[#allocation10 + $0x1c0] sm:$0xff]
        %v2769 = vld [vmem:[#allocation10 + $0x1c8] sm:$0xff]
        %v2770 = vld [vmem:[#allocation10 + $0x1d0] sm:$0xff]
        %v2771 = vld [vmem:[#allocation10 + $0x1d8] sm:$0xff]
        %v2772 = vld [vmem:[#allocation10 + $0x1e0] sm:$0xff]
        %v2773 = vld [vmem:[#allocation10 + $0x1e8] sm:$0xff]
        %v2774 = vld [vmem:[#allocation10 + $0x1f0] sm:$0xff]
        %v2775 = vld [vmem:[#allocation10 + $0x1f8] sm:$0xff]
        %v2776 = vld [vmem:[#allocation10 + $0x200] sm:$0xff]
        %v2777 = vld [vmem:[#allocation10 + $0x208] sm:$0xff]
        %v2778 = vld [vmem:[#allocation10 + $0x210] sm:$0xff]
        %v2779 = vld [vmem:[#allocation10 + $0x218] sm:$0xff]
        %v2780 = vld [vmem:[#allocation10 + $0x220] sm:$0xff]
        %v2781 = vld [vmem:[#allocation10 + $0x228] sm:$0xff]
        %v2782 = vld [vmem:[#allocation10 + $0x230] sm:$0xff]
        %v2783 = vld [vmem:[#allocation10 + $0x238] sm:$0xff]
        %v2784 = vld [vmem:[#allocation10 + $0x240] sm:$0xff]
        %v2785 = vld [vmem:[#allocation10 + $0x248] sm:$0xff]
        %v2786 = vld [vmem:[#allocation10 + $0x250] sm:$0xff]
        %v2787 = vld [vmem:[#allocation10 + $0x258] sm:$0xff]
        %v2788 = vld [vmem:[#allocation10 + $0x260] sm:$0xff]
        %v2789 = vld [vmem:[#allocation10 + $0x268] sm:$0xff]
        %v2790 = vld [vmem:[#allocation10 + $0x270] sm:$0xff]
        %v2791 = vld [vmem:[#allocation10 + $0x278] sm:$0xff]
        %v2792 = vld [vmem:[#allocation10 + $0x280] sm:$0xff]
        %v2793 = vld [vmem:[#allocation10 + $0x288] sm:$0xff]
        %v2794 = vld [vmem:[#allocation10 + $0x290] sm:$0xff]
        %v2795 = vld [vmem:[#allocation10 + $0x298] sm:$0xff]
        %v2796 = vld [vmem:[#allocation10 + $0x2a0] sm:$0xff]
        %v2797 = vld [vmem:[#allocation10 + $0x2a8] sm:$0xff]
        %v2798 = vld [vmem:[#allocation10 + $0x2b0] sm:$0xff]
        %v2799 = vld [vmem:[#allocation10 + $0x2b8] sm:$0xff]
        %v2800 = vld [vmem:[#allocation10 + $0x2c0] sm:$0xff]
        %v2801 = vld [vmem:[#allocation10 + $0x2c8] sm:$0xff]
        %v2802 = vld [vmem:[#allocation10 + $0x2d0] sm:$0xff]
        %v2803 = vld [vmem:[#allocation10 + $0x2d8] sm:$0xff]
        %v2804 = vld [vmem:[#allocation10 + $0x2e0] sm:$0xff]
        %v2805 = vld [vmem:[#allocation10 + $0x2e8] sm:$0xff]
        %v2806 = vld [vmem:[#allocation10 + $0x2f0] sm:$0xff]
        %v2807 = vld [vmem:[#allocation10 + $0x2f8] sm:$0xff]
        %v2808 = vld [vmem:[#allocation10 + $0x300] sm:$0xff]
        %v2809 = vld [vmem:[#allocation10 + $0x308] sm:$0xff]
        %v2810 = vld [vmem:[#allocation10 + $0x310] sm:$0xff]
        %v2811 = vld [vmem:[#allocation10 + $0x318] sm:$0xff]
        %v2812 = vld [vmem:[#allocation10 + $0x320] sm:$0xff]
        %v2813 = vld [vmem:[#allocation10 + $0x328] sm:$0xff]
        %v2814 = vld [vmem:[#allocation10 + $0x330] sm:$0xff]
        %v2815 = vld [vmem:[#allocation10 + $0x338] sm:$0xff]
        %v2816 = vld [vmem:[#allocation10 + $0x340] sm:$0xff]
        %v2817 = vld [vmem:[#allocation10 + $0x348] sm:$0xff]
        %v2818 = vld [vmem:[#allocation10 + $0x350] sm:$0xff]
        %v2819 = vld [vmem:[#allocation10 + $0x358] sm:$0xff]
        %v2820 = vld [vmem:[#allocation10 + $0x360] sm:$0xff]
        %v2821 = vld [vmem:[#allocation10 + $0x368] sm:$0xff]
        %v2822 = vld [vmem:[#allocation10 + $0x370] sm:$0xff]
        %v2823 = vld [vmem:[#allocation10 + $0x378] sm:$0xff]
        %v2824 = vld [vmem:[#allocation10 + $0x380] sm:$0xff]
        %v2825 = vld [vmem:[#allocation10 + $0x388] sm:$0xff]
        %v2826 = vld [vmem:[#allocation10 + $0x390] sm:$0xff]
        %v2827 = vld [vmem:[#allocation10 + $0x398] sm:$0xff]
        %v2828 = vld [vmem:[#allocation10 + $0x3a0] sm:$0xff]
        %v2829 = vld [vmem:[#allocation10 + $0x3a8] sm:$0xff]
        %v2830 = vld [vmem:[#allocation10 + $0x3b0] sm:$0xff]
        %v2831 = vld [vmem:[#allocation10 + $0x3b8] sm:$0xff]
        %v2832 = vld [vmem:[#allocation10 + $0x3c0] sm:$0xff]
        %v2833 = vld [vmem:[#allocation10 + $0x3c8] sm:$0xff]
        %v2834 = vld [vmem:[#allocation10 + $0x3d0] sm:$0xff]
        %v2835 = vld [vmem:[#allocation10 + $0x3d8] sm:$0xff]
        %v2836 = vld [vmem:[#allocation10 + $0x3e0] sm:$0xff]
        %v2837 = vld [vmem:[#allocation10 + $0x3e8] sm:$0xff]
        %v2838 = vld [vmem:[#allocation10 + $0x3f0] sm:$0xff]
        %v2839 = vld [vmem:[#allocation10 + $0x3f8] sm:$0xff]
        %v2840 = vld [vmem:[#allocation10 + $0x400] sm:$0xff]
        %v2841 = vld [vmem:[#allocation10 + $0x408] sm:$0xff]
        %v2842 = vld [vmem:[#allocation10 + $0x410] sm:$0xff]
        %v2843 = vld [vmem:[#allocation10 + $0x418] sm:$0xff]
        %v2844 = vld [vmem:[#allocation10 + $0x420] sm:$0xff]
        %v2845 = vld [vmem:[#allocation10 + $0x428] sm:$0xff]
        %v2846 = vld [vmem:[#allocation10 + $0x430] sm:$0xff]
        %v2847 = vld [vmem:[#allocation10 + $0x438] sm:$0xff]
        %v2848 = vld [vmem:[#allocation10 + $0x440] sm:$0xff]
        %v2849 = vld [vmem:[#allocation10 + $0x448] sm:$0xff]
        %v2850 = vld [vmem:[#allocation10 + $0x450] sm:$0xff]
        %v2851 = vld [vmem:[#allocation10 + $0x458] sm:$0xff]
        %v2852 = vld [vmem:[#allocation10 + $0x460] sm:$0xff]
        %v2853 = vld [vmem:[#allocation10 + $0x468] sm:$0xff]
        %v2854 = vld [vmem:[#allocation10 + $0x470] sm:$0xff]
        %v2855 = vld [vmem:[#allocation10 + $0x478] sm:$0xff]
        %v2856 = vld [vmem:[#allocation10 + $0x480] sm:$0xff]
        %v2857 = vld [vmem:[#allocation10 + $0x488] sm:$0xff]
        %v2858 = vld [vmem:[#allocation10 + $0x490] sm:$0xff]
        %v2859 = vld [vmem:[#allocation10 + $0x498] sm:$0xff]
        %v2860 = vld [vmem:[#allocation10 + $0x4a0] sm:$0xff]
        %v2861 = vld [vmem:[#allocation10 + $0x4a8] sm:$0xff]
        %v2862 = vld [vmem:[#allocation10 + $0x4b0] sm:$0xff]
        %v2863 = vld [vmem:[#allocation10 + $0x4b8] sm:$0xff]
        %v2864 = vld [vmem:[#allocation10 + $0x4c0] sm:$0xff]
        %v2865 = vld [vmem:[#allocation10 + $0x4c8] sm:$0xff]
        %v2866 = vld [vmem:[#allocation10 + $0x4d0] sm:$0xff]
        %v2867 = vld [vmem:[#allocation10 + $0x4d8] sm:$0xff]
        %v2868 = vld [vmem:[#allocation10 + $0x4e0] sm:$0xff]
        %v2869 = vld [vmem:[#allocation10 + $0x4e8] sm:$0xff]
        %v2870 = vld [vmem:[#allocation10 + $0x4f0] sm:$0xff]
        %v2871 = vld [vmem:[#allocation10 + $0x4f8] sm:$0xff]
        %v2872 = vld [vmem:[#allocation10 + $0x500] sm:$0xff]
        %v2873 = vld [vmem:[#allocation10 + $0x508] sm:$0xff]
        %v2874 = vld [vmem:[#allocation10 + $0x510] sm:$0xff]
        %v2875 = vld [vmem:[#allocation10 + $0x518] sm:$0xff]
        %v2876 = vld [vmem:[#allocation10 + $0x520] sm:$0xff]
        %v2877 = vld [vmem:[#allocation10 + $0x528] sm:$0xff]
        %v2878 = vld [vmem:[#allocation10 + $0x530] sm:$0xff]
        %v2879 = vld [vmem:[#allocation10 + $0x538] sm:$0xff]
        %v2880 = vld [vmem:[#allocation10 + $0x540] sm:$0xff]
        %v2881 = vld [vmem:[#allocation10 + $0x548] sm:$0xff]
        %v2882 = vld [vmem:[#allocation10 + $0x550] sm:$0xff]
        %v2883 = vld [vmem:[#allocation10 + $0x558] sm:$0xff]
        %v2884 = vld [vmem:[#allocation10 + $0x560] sm:$0xff]
        %v2885 = vld [vmem:[#allocation10 + $0x568] sm:$0xff]
        %v2886 = vld [vmem:[#allocation10 + $0x570] sm:$0xff]
        %v2887 = vld [vmem:[#allocation10 + $0x578] sm:$0xff]
        %v2888 = vld [vmem:[#allocation10 + $0x580] sm:$0xff]
        %v2889 = vld [vmem:[#allocation10 + $0x588] sm:$0xff]
        %v2890 = vld [vmem:[#allocation10 + $0x590] sm:$0xff]
        %v2891 = vld [vmem:[#allocation10 + $0x598] sm:$0xff]
        %v2892 = vld [vmem:[#allocation10 + $0x5a0] sm:$0xff]
        %v2893 = vld [vmem:[#allocation10 + $0x5a8] sm:$0xff]
        %v2894 = vld [vmem:[#allocation10 + $0x5b0] sm:$0xff]
        %v2895 = vld [vmem:[#allocation10 + $0x5b8] sm:$0xff]
        %v2896 = vld [vmem:[#allocation10 + $0x5c0] sm:$0xff]
        %v2897 = vld [vmem:[#allocation10 + $0x5c8] sm:$0xff]
        %v2898 = vld [vmem:[#allocation10 + $0x5d0] sm:$0xff]
        %v2899 = vld [vmem:[#allocation10 + $0x5d8] sm:$0xff]
        %v2900 = vld [vmem:[#allocation10 + $0x5e0] sm:$0xff]
        %v2901 = vld [vmem:[#allocation10 + $0x5e8] sm:$0xff]
        %v2902 = vld [vmem:[#allocation10 + $0x5f0] sm:$0xff]
        %v2903 = vld [vmem:[#allocation10 + $0x5f8] sm:$0xff]
        %v2904 = vld [vmem:[#allocation10 + $0x600] sm:$0xff]
        %v2905 = vld [vmem:[#allocation10 + $0x608] sm:$0xff]
        %v2906 = vld [vmem:[#allocation10 + $0x610] sm:$0xff]
        %v2907 = vld [vmem:[#allocation10 + $0x618] sm:$0xff]
        %v2908 = vld [vmem:[#allocation10 + $0x620] sm:$0xff]
        %v2909 = vld [vmem:[#allocation10 + $0x628] sm:$0xff]
        %v2910 = vld [vmem:[#allocation10 + $0x630] sm:$0xff]
        %v2911 = vld [vmem:[#allocation10 + $0x638] sm:$0xff]
        %v2912 = vld [vmem:[#allocation10 + $0x640] sm:$0xff]
        %v2913 = vld [vmem:[#allocation10 + $0x648] sm:$0xff]
        %v2914 = vld [vmem:[#allocation10 + $0x650] sm:$0xff]
        %v2915 = vld [vmem:[#allocation10 + $0x658] sm:$0xff]
        %v2916 = vld [vmem:[#allocation10 + $0x660] sm:$0xff]
        %v2917 = vld [vmem:[#allocation10 + $0x668] sm:$0xff]
        %v2918 = vld [vmem:[#allocation10 + $0x670] sm:$0xff]
        %v2919 = vld [vmem:[#allocation10 + $0x678] sm:$0xff]
        %v2920 = vld [vmem:[#allocation10 + $0x680] sm:$0xff]
        %v2921 = vld [vmem:[#allocation10 + $0x688] sm:$0xff]
        %v2922 = vld [vmem:[#allocation10 + $0x690] sm:$0xff]
        %v2923 = vld [vmem:[#allocation10 + $0x698] sm:$0xff]
        %v2924 = vld [vmem:[#allocation10 + $0x6a0] sm:$0xff]
        %v2925 = vld [vmem:[#allocation10 + $0x6a8] sm:$0xff]
        %v2926 = vld [vmem:[#allocation10 + $0x6b0] sm:$0xff]
        %v2927 = vld [vmem:[#allocation10 + $0x6b8] sm:$0xff]
        %v2928 = vld [vmem:[#allocation10 + $0x6c0] sm:$0xff]
        %v2929 = vld [vmem:[#allocation10 + $0x6c8] sm:$0xff]
        %v2930 = vld [vmem:[#allocation10 + $0x6d0] sm:$0xff]
        %v2931 = vld [vmem:[#allocation10 + $0x6d8] sm:$0xff]
        %v2932 = vld [vmem:[#allocation10 + $0x6e0] sm:$0xff]
        %v2933 = vld [vmem:[#allocation10 + $0x6e8] sm:$0xff]
        %v2934 = vld [vmem:[#allocation10 + $0x6f0] sm:$0xff]
        %v2935 = vld [vmem:[#allocation10 + $0x6f8] sm:$0xff]
        %v2936 = vld [vmem:[#allocation10 + $0x700] sm:$0xff]
        %v2937 = vld [vmem:[#allocation10 + $0x708] sm:$0xff]
        %v2938 = vld [vmem:[#allocation10 + $0x710] sm:$0xff]
        %v2939 = vld [vmem:[#allocation10 + $0x718] sm:$0xff]
        %v2940 = vld [vmem:[#allocation10 + $0x720] sm:$0xff]
        %v2941 = vld [vmem:[#allocation10 + $0x728] sm:$0xff]
        %v2942 = vld [vmem:[#allocation10 + $0x730] sm:$0xff]
        %v2943 = vld [vmem:[#allocation10 + $0x738] sm:$0xff]
        %v2944 = vld [vmem:[#allocation10 + $0x740] sm:$0xff]
        %v2945 = vld [vmem:[#allocation10 + $0x748] sm:$0xff]
        %v2946 = vld [vmem:[#allocation10 + $0x750] sm:$0xff]
        %v2947 = vld [vmem:[#allocation10 + $0x758] sm:$0xff]
        %v2948 = vld [vmem:[#allocation10 + $0x760] sm:$0xff]
        %v2949 = vld [vmem:[#allocation10 + $0x768] sm:$0xff]
        %v2950 = vld [vmem:[#allocation10 + $0x770] sm:$0xff]
        %v2951 = vld [vmem:[#allocation10 + $0x778] sm:$0xff]
        %v2952 = vld [vmem:[#allocation10 + $0x780] sm:$0xff]
        %v2953 = vld [vmem:[#allocation10 + $0x788] sm:$0xff]
        %v2954 = vld [vmem:[#allocation10 + $0x790] sm:$0xff]
        %v2955 = vld [vmem:[#allocation10 + $0x798] sm:$0xff]
        %v2956 = vld [vmem:[#allocation10 + $0x7a0] sm:$0xff]
        %v2957 = vld [vmem:[#allocation10 + $0x7a8] sm:$0xff]
        %v2958 = vld [vmem:[#allocation10 + $0x7b0] sm:$0xff]
        %v2959 = vld [vmem:[#allocation10 + $0x7b8] sm:$0xff]
        %v2960 = vld [vmem:[#allocation10 + $0x7c0] sm:$0xff]
        %v2961 = vld [vmem:[#allocation10 + $0x7c8] sm:$0xff]
        %v2962 = vld [vmem:[#allocation10 + $0x7d0] sm:$0xff]
        %v2963 = vld [vmem:[#allocation10 + $0x7d8] sm:$0xff]
        %v2964 = vld [vmem:[#allocation10 + $0x7e0] sm:$0xff]
        %v2965 = vld [vmem:[#allocation10 + $0x7e8] sm:$0xff]
        %v2966 = vld [vmem:[#allocation10 + $0x7f0] sm:$0xff]
        %v2967 = vld [vmem:[#allocation10 + $0x7f8] sm:$0xff]
        %v2968 = vld [vmem:[#allocation10 + $0x800] sm:$0xff]
        %v2969 = vld [vmem:[#allocation10 + $0x808] sm:$0xff]
        %v2970 = vld [vmem:[#allocation10 + $0x810] sm:$0xff]
        %v2971 = vld [vmem:[#allocation10 + $0x818] sm:$0xff]
        %v2972 = vld [vmem:[#allocation10 + $0x820] sm:$0xff]
        %v2973 = vld [vmem:[#allocation10 + $0x828] sm:$0xff]
        %v2974 = vld [vmem:[#allocation10 + $0x830] sm:$0xff]
        %v2975 = vld [vmem:[#allocation10 + $0x838] sm:$0xff]
        %v2976 = vld [vmem:[#allocation10 + $0x840] sm:$0xff]
        %v2977 = vld [vmem:[#allocation10 + $0x848] sm:$0xff]
        %v2978 = vld [vmem:[#allocation10 + $0x850] sm:$0xff]
        %v2979 = vld [vmem:[#allocation10 + $0x858] sm:$0xff]
        %v2980 = vld [vmem:[#allocation10 + $0x860] sm:$0xff]
        %v2981 = vld [vmem:[#allocation10 + $0x868] sm:$0xff]
        %v2982 = vld [vmem:[#allocation10 + $0x870] sm:$0xff]
        %v2983 = vld [vmem:[#allocation10 + $0x878] sm:$0xff]
        %v2984 = vld [vmem:[#allocation10 + $0x880] sm:$0xff]
        %v2985 = vld [vmem:[#allocation10 + $0x888] sm:$0xff]
        %v2986 = vld [vmem:[#allocation10 + $0x890] sm:$0xff]
        %v2987 = vld [vmem:[#allocation10 + $0x898] sm:$0xff]
        %v2988 = vld [vmem:[#allocation10 + $0x8a0] sm:$0xff]
        %v2989 = vld [vmem:[#allocation10 + $0x8a8] sm:$0xff]
        %v2990 = vld [vmem:[#allocation10 + $0x8b0] sm:$0xff]
        %v2991 = vld [vmem:[#allocation10 + $0x8b8] sm:$0xff]
        %v2992 = vld [vmem:[#allocation10 + $0x8c0] sm:$0xff]
        %v2993 = vld [vmem:[#allocation10 + $0x8c8] sm:$0xff]
        %v2994 = vld [vmem:[#allocation10 + $0x8d0] sm:$0xff]
        %v2995 = vld [vmem:[#allocation10 + $0x8d8] sm:$0xff]
        %v2996 = vld [vmem:[#allocation10 + $0x8e0] sm:$0xff]
        %v2997 = vld [vmem:[#allocation10 + $0x8e8] sm:$0xff]
        %v2998 = vld [vmem:[#allocation10 + $0x8f0] sm:$0xff]
        %v2999 = vld [vmem:[#allocation10 + $0x8f8] sm:$0xff]
        %v3002 = vlaneseq
        %v3003 = vshrl.u32 %v3002, 7
        %v3004 = vsub.s32 0, %v3003
        %v3005 = vrot.slane %v505, %v3004
        %v3006 = vlaneseq
        %v3007 = vshrl.u32 %v3006, 7
        %v3008 = vsub.s32 2, %v3007
        %v3009 = vrot.slane %v505, %v3008
        %v3010 = vlaneseq
        %v3011 = vshrl.u32 %v3010, 7
        %v3012 = vsub.s32 4, %v3011
        %v3013 = vrot.slane %v505, %v3012
        %v3014 = vlaneseq
        %v3015 = vshrl.u32 %v3014, 7
        %v3016 = vsub.s32 6, %v3015
        %v3017 = vrot.slane %v505, %v3016
        %v3018 = vlaneseq
        %v3019 = vshrl.u32 %v3018, 7
        %v3020 = vsub.s32 0, %v3019
        %v3021 = vrot.slane %v506, %v3020
        %v3022 = vlaneseq
        %v3023 = vshrl.u32 %v3022, 7
        %v3024 = vsub.s32 2, %v3023
        %v3025 = vrot.slane %v506, %v3024
        %v3032 = vlaneseq
        %v3033 = vshrl.u32 %v3032, 7
        %v3034 = vsub.s32 0, %v3033
        %v3035 = vrot.slane %v3005, %v3034
        %v3036 = vlaneseq
        %v3037 = vshrl.u32 %v3036, 7
        %v3038 = vsub.s32 0, %v3037
        %v3039 = vrot.slane %v3009, %v3038
        %v3040 = vlaneseq
        %v3041 = vshrl.u32 %v3040, 7
        %v3042 = vsub.s32 0, %v3041
        %v3043 = vrot.slane %v3013, %v3042
        %v3044 = vlaneseq
        %v3045 = vshrl.u32 %v3044, 7
        %v3046 = vsub.s32 0, %v3045
        %v3047 = vrot.slane %v3017, %v3046
        %v3048 = vlaneseq
        %v3049 = vshrl.u32 %v3048, 7
        %v3050 = vsub.s32 0, %v3049
        %v3051 = vrot.slane %v3021, %v3050
        %v3052 = vlaneseq
        %v3053 = vshrl.u32 %v3052, 7
        %v3054 = vsub.s32 0, %v3053
        %v3055 = vrot.slane %v3025, %v3054
        %v3344 = vunpack.c.l.b16 %v2712
        %v3345 = vunpack.c.h.b16 %v2712
        %v3346 = vunpack.c.l.b16 %v2713
        %v3347 = vunpack.c.h.b16 %v2713
        %v3348 = vunpack.c.l.b16 %v2714
        %v3349 = vunpack.c.h.b16 %v2714
        %v3350 = vunpack.c.l.b16 %v2715
        %v3351 = vunpack.c.h.b16 %v2715
        %v3352 = vunpack.c.l.b16 %v2716
        %v3353 = vunpack.c.h.b16 %v2716
        %v3354 = vunpack.c.l.b16 %v2717
        %v3355 = vunpack.c.h.b16 %v2717
        %v3356 = vunpack.c.l.b16 %v2718
        %v3357 = vunpack.c.h.b16 %v2718
        %v3358 = vunpack.c.l.b16 %v2719
        %v3359 = vunpack.c.h.b16 %v2719
        %v3360 = vunpack.c.l.b16 %v2720
        %v3361 = vunpack.c.h.b16 %v2720
        %v3362 = vunpack.c.l.b16 %v2721
        %v3363 = vunpack.c.h.b16 %v2721
        %v3364 = vunpack.c.l.b16 %v2722
        %v3365 = vunpack.c.h.b16 %v2722
        %v3366 = vunpack.c.l.b16 %v2723
        %v3367 = vunpack.c.h.b16 %v2723
        %v3368 = vunpack.c.l.b16 %v2724
        %v3369 = vunpack.c.h.b16 %v2724
        %v3370 = vunpack.c.l.b16 %v2725
        %v3371 = vunpack.c.h.b16 %v2725
        %v3372 = vunpack.c.l.b16 %v2726
        %v3373 = vunpack.c.h.b16 %v2726
        %v3374 = vunpack.c.l.b16 %v2727
        %v3375 = vunpack.c.h.b16 %v2727
        %v3376 = vunpack.c.l.b16 %v2728
        %v3377 = vunpack.c.h.b16 %v2728
        %v3378 = vunpack.c.l.b16 %v2729
        %v3379 = vunpack.c.h.b16 %v2729
        %v3380 = vunpack.c.l.b16 %v2730
        %v3381 = vunpack.c.h.b16 %v2730
        %v3382 = vunpack.c.l.b16 %v2731
        %v3383 = vunpack.c.h.b16 %v2731
        %v3384 = vunpack.c.l.b16 %v2732
        %v3385 = vunpack.c.h.b16 %v2732
        %v3386 = vunpack.c.l.b16 %v2733
        %v3387 = vunpack.c.h.b16 %v2733
        %v3388 = vunpack.c.l.b16 %v2734
        %v3389 = vunpack.c.h.b16 %v2734
        %v3390 = vunpack.c.l.b16 %v2735
        %v3391 = vunpack.c.h.b16 %v2735
        %v3392 = vunpack.c.l.b16 %v2736
        %v3393 = vunpack.c.h.b16 %v2736
        %v3394 = vunpack.c.l.b16 %v2737
        %v3395 = vunpack.c.h.b16 %v2737
        %v3396 = vunpack.c.l.b16 %v2738
        %v3397 = vunpack.c.h.b16 %v2738
        %v3398 = vunpack.c.l.b16 %v2739
        %v3399 = vunpack.c.h.b16 %v2739
        %v3400 = vunpack.c.l.b16 %v2740
        %v3401 = vunpack.c.h.b16 %v2740
        %v3402 = vunpack.c.l.b16 %v2741
        %v3403 = vunpack.c.h.b16 %v2741
        %v3404 = vunpack.c.l.b16 %v2742
        %v3405 = vunpack.c.h.b16 %v2742
        %v3406 = vunpack.c.l.b16 %v2743
        %v3407 = vunpack.c.h.b16 %v2743
        %v3408 = vunpack.c.l.b16 %v2744
        %v3409 = vunpack.c.h.b16 %v2744
        %v3410 = vunpack.c.l.b16 %v2745
        %v3411 = vunpack.c.h.b16 %v2745
        %v3412 = vunpack.c.l.b16 %v2746
        %v3413 = vunpack.c.h.b16 %v2746
        %v3414 = vunpack.c.l.b16 %v2747
        %v3415 = vunpack.c.h.b16 %v2747
        %v3416 = vunpack.c.l.b16 %v2748
        %v3417 = vunpack.c.h.b16 %v2748
        %v3418 = vunpack.c.l.b16 %v2749
        %v3419 = vunpack.c.h.b16 %v2749
        %v3420 = vunpack.c.l.b16 %v2750
        %v3421 = vunpack.c.h.b16 %v2750
        %v3422 = vunpack.c.l.b16 %v2751
        %v3423 = vunpack.c.h.b16 %v2751
        %v3424 = vunpack.c.l.b16 %v2752
        %v3425 = vunpack.c.h.b16 %v2752
        %v3426 = vunpack.c.l.b16 %v2753
        %v3427 = vunpack.c.h.b16 %v2753
        %v3428 = vunpack.c.l.b16 %v2754
        %v3429 = vunpack.c.h.b16 %v2754
        %v3430 = vunpack.c.l.b16 %v2755
        %v3431 = vunpack.c.h.b16 %v2755
        %v3432 = vunpack.c.l.b16 %v2756
        %v3433 = vunpack.c.h.b16 %v2756
        %v3434 = vunpack.c.l.b16 %v2757
        %v3435 = vunpack.c.h.b16 %v2757
        %v3436 = vunpack.c.l.b16 %v2758
        %v3437 = vunpack.c.h.b16 %v2758
        %v3438 = vunpack.c.l.b16 %v2759
        %v3439 = vunpack.c.h.b16 %v2759
        %v3440 = vunpack.c.l.b16 %v2760
        %v3441 = vunpack.c.h.b16 %v2760
        %v3442 = vunpack.c.l.b16 %v2761
        %v3443 = vunpack.c.h.b16 %v2761
        %v3444 = vunpack.c.l.b16 %v2762
        %v3445 = vunpack.c.h.b16 %v2762
        %v3446 = vunpack.c.l.b16 %v2763
        %v3447 = vunpack.c.h.b16 %v2763
        %v3448 = vunpack.c.l.b16 %v2764
        %v3449 = vunpack.c.h.b16 %v2764
        %v3450 = vunpack.c.l.b16 %v2765
        %v3451 = vunpack.c.h.b16 %v2765
        %v3452 = vunpack.c.l.b16 %v2766
        %v3453 = vunpack.c.h.b16 %v2766
        %v3454 = vunpack.c.l.b16 %v2767
        %v3455 = vunpack.c.h.b16 %v2767
        %v3456 = vunpack.c.l.b16 %v2768
        %v3457 = vunpack.c.h.b16 %v2768
        %v3458 = vunpack.c.l.b16 %v2769
        %v3459 = vunpack.c.h.b16 %v2769
        %v3460 = vunpack.c.l.b16 %v2770
        %v3461 = vunpack.c.h.b16 %v2770
        %v3462 = vunpack.c.l.b16 %v2771
        %v3463 = vunpack.c.h.b16 %v2771
        %v3464 = vunpack.c.l.b16 %v2772
        %v3465 = vunpack.c.h.b16 %v2772
        %v3466 = vunpack.c.l.b16 %v2773
        %v3467 = vunpack.c.h.b16 %v2773
        %v3468 = vunpack.c.l.b16 %v2774
        %v3469 = vunpack.c.h.b16 %v2774
        %v3470 = vunpack.c.l.b16 %v2775
        %v3471 = vunpack.c.h.b16 %v2775
        %v3472 = vunpack.c.l.b16 %v2776
        %v3473 = vunpack.c.h.b16 %v2776
        %v3474 = vunpack.c.l.b16 %v2777
        %v3475 = vunpack.c.h.b16 %v2777
        %v3476 = vunpack.c.l.b16 %v2778
        %v3477 = vunpack.c.h.b16 %v2778
        %v3478 = vunpack.c.l.b16 %v2779
        %v3479 = vunpack.c.h.b16 %v2779
        %v3480 = vunpack.c.l.b16 %v2780
        %v3481 = vunpack.c.h.b16 %v2780
        %v3482 = vunpack.c.l.b16 %v2781
        %v3483 = vunpack.c.h.b16 %v2781
        %v3484 = vunpack.c.l.b16 %v2782
        %v3485 = vunpack.c.h.b16 %v2782
        %v3486 = vunpack.c.l.b16 %v2783
        %v3487 = vunpack.c.h.b16 %v2783
        %v3488 = vunpack.c.l.b16 %v2784
        %v3489 = vunpack.c.h.b16 %v2784
        %v3490 = vunpack.c.l.b16 %v2785
        %v3491 = vunpack.c.h.b16 %v2785
        %v3492 = vunpack.c.l.b16 %v2786
        %v3493 = vunpack.c.h.b16 %v2786
        %v3494 = vunpack.c.l.b16 %v2787
        %v3495 = vunpack.c.h.b16 %v2787
        %v3496 = vunpack.c.l.b16 %v2788
        %v3497 = vunpack.c.h.b16 %v2788
        %v3498 = vunpack.c.l.b16 %v2789
        %v3499 = vunpack.c.h.b16 %v2789
        %v3500 = vunpack.c.l.b16 %v2790
        %v3501 = vunpack.c.h.b16 %v2790
        %v3502 = vunpack.c.l.b16 %v2791
        %v3503 = vunpack.c.h.b16 %v2791
        %v3504 = vunpack.c.l.b16 %v2792
        %v3505 = vunpack.c.h.b16 %v2792
        %v3506 = vunpack.c.l.b16 %v2793
        %v3507 = vunpack.c.h.b16 %v2793
        %v3508 = vunpack.c.l.b16 %v2794
        %v3509 = vunpack.c.h.b16 %v2794
        %v3510 = vunpack.c.l.b16 %v2795
        %v3511 = vunpack.c.h.b16 %v2795
        %v3512 = vunpack.c.l.b16 %v2796
        %v3513 = vunpack.c.h.b16 %v2796
        %v3514 = vunpack.c.l.b16 %v2797
        %v3515 = vunpack.c.h.b16 %v2797
        %v3516 = vunpack.c.l.b16 %v2798
        %v3517 = vunpack.c.h.b16 %v2798
        %v3518 = vunpack.c.l.b16 %v2799
        %v3519 = vunpack.c.h.b16 %v2799
        %v3520 = vunpack.c.l.b16 %v2800
        %v3521 = vunpack.c.h.b16 %v2800
        %v3522 = vunpack.c.l.b16 %v2801
        %v3523 = vunpack.c.h.b16 %v2801
        %v3524 = vunpack.c.l.b16 %v2802
        %v3525 = vunpack.c.h.b16 %v2802
        %v3526 = vunpack.c.l.b16 %v2803
        %v3527 = vunpack.c.h.b16 %v2803
        %v3528 = vunpack.c.l.b16 %v2804
        %v3529 = vunpack.c.h.b16 %v2804
        %v3530 = vunpack.c.l.b16 %v2805
        %v3531 = vunpack.c.h.b16 %v2805
        %v3532 = vunpack.c.l.b16 %v2806
        %v3533 = vunpack.c.h.b16 %v2806
        %v3534 = vunpack.c.l.b16 %v2807
        %v3535 = vunpack.c.h.b16 %v2807
        %v3536 = vunpack.c.l.b16 %v2808
        %v3537 = vunpack.c.h.b16 %v2808
        %v3538 = vunpack.c.l.b16 %v2809
        %v3539 = vunpack.c.h.b16 %v2809
        %v3540 = vunpack.c.l.b16 %v2810
        %v3541 = vunpack.c.h.b16 %v2810
        %v3542 = vunpack.c.l.b16 %v2811
        %v3543 = vunpack.c.h.b16 %v2811
        %v3544 = vunpack.c.l.b16 %v2812
        %v3545 = vunpack.c.h.b16 %v2812
        %v3546 = vunpack.c.l.b16 %v2813
        %v3547 = vunpack.c.h.b16 %v2813
        %v3548 = vunpack.c.l.b16 %v2814
        %v3549 = vunpack.c.h.b16 %v2814
        %v3550 = vunpack.c.l.b16 %v2815
        %v3551 = vunpack.c.h.b16 %v2815
        %v3552 = vunpack.c.l.b16 %v2816
        %v3553 = vunpack.c.h.b16 %v2816
        %v3554 = vunpack.c.l.b16 %v2817
        %v3555 = vunpack.c.h.b16 %v2817
        %v3556 = vunpack.c.l.b16 %v2818
        %v3557 = vunpack.c.h.b16 %v2818
        %v3558 = vunpack.c.l.b16 %v2819
        %v3559 = vunpack.c.h.b16 %v2819
        %v3560 = vunpack.c.l.b16 %v2820
        %v3561 = vunpack.c.h.b16 %v2820
        %v3562 = vunpack.c.l.b16 %v2821
        %v3563 = vunpack.c.h.b16 %v2821
        %v3564 = vunpack.c.l.b16 %v2822
        %v3565 = vunpack.c.h.b16 %v2822
        %v3566 = vunpack.c.l.b16 %v2823
        %v3567 = vunpack.c.h.b16 %v2823
        %v3568 = vunpack.c.l.b16 %v2824
        %v3569 = vunpack.c.h.b16 %v2824
        %v3570 = vunpack.c.l.b16 %v2825
        %v3571 = vunpack.c.h.b16 %v2825
        %v3572 = vunpack.c.l.b16 %v2826
        %v3573 = vunpack.c.h.b16 %v2826
        %v3574 = vunpack.c.l.b16 %v2827
        %v3575 = vunpack.c.h.b16 %v2827
        %v3576 = vunpack.c.l.b16 %v2828
        %v3577 = vunpack.c.h.b16 %v2828
        %v3578 = vunpack.c.l.b16 %v2829
        %v3579 = vunpack.c.h.b16 %v2829
        %v3580 = vunpack.c.l.b16 %v2830
        %v3581 = vunpack.c.h.b16 %v2830
        %v3582 = vunpack.c.l.b16 %v2831
        %v3583 = vunpack.c.h.b16 %v2831
        %v3584 = vunpack.c.l.b16 %v2832
        %v3585 = vunpack.c.h.b16 %v2832
        %v3586 = vunpack.c.l.b16 %v2833
        %v3587 = vunpack.c.h.b16 %v2833
        %v3588 = vunpack.c.l.b16 %v2834
        %v3589 = vunpack.c.h.b16 %v2834
        %v3590 = vunpack.c.l.b16 %v2835
        %v3591 = vunpack.c.h.b16 %v2835
        %v3592 = vunpack.c.l.b16 %v2836
        %v3593 = vunpack.c.h.b16 %v2836
        %v3594 = vunpack.c.l.b16 %v2837
        %v3595 = vunpack.c.h.b16 %v2837
        %v3596 = vunpack.c.l.b16 %v2838
        %v3597 = vunpack.c.h.b16 %v2838
        %v3598 = vunpack.c.l.b16 %v2839
        %v3599 = vunpack.c.h.b16 %v2839
        %v3600 = vunpack.c.l.b16 %v2840
        %v3601 = vunpack.c.h.b16 %v2840
        %v3602 = vunpack.c.l.b16 %v2841
        %v3603 = vunpack.c.h.b16 %v2841
        %v3604 = vunpack.c.l.b16 %v2842
        %v3605 = vunpack.c.h.b16 %v2842
        %v3606 = vunpack.c.l.b16 %v2843
        %v3607 = vunpack.c.h.b16 %v2843
        %v3608 = vunpack.c.l.b16 %v2844
        %v3609 = vunpack.c.h.b16 %v2844
        %v3610 = vunpack.c.l.b16 %v2845
        %v3611 = vunpack.c.h.b16 %v2845
        %v3612 = vunpack.c.l.b16 %v2846
        %v3613 = vunpack.c.h.b16 %v2846
        %v3614 = vunpack.c.l.b16 %v2847
        %v3615 = vunpack.c.h.b16 %v2847
        %v3616 = vunpack.c.l.b16 %v2848
        %v3617 = vunpack.c.h.b16 %v2848
        %v3618 = vunpack.c.l.b16 %v2849
        %v3619 = vunpack.c.h.b16 %v2849
        %v3620 = vunpack.c.l.b16 %v2850
        %v3621 = vunpack.c.h.b16 %v2850
        %v3622 = vunpack.c.l.b16 %v2851
        %v3623 = vunpack.c.h.b16 %v2851
        %v3624 = vunpack.c.l.b16 %v2852
        %v3625 = vunpack.c.h.b16 %v2852
        %v3626 = vunpack.c.l.b16 %v2853
        %v3627 = vunpack.c.h.b16 %v2853
        %v3628 = vunpack.c.l.b16 %v2854
        %v3629 = vunpack.c.h.b16 %v2854
        %v3630 = vunpack.c.l.b16 %v2855
        %v3631 = vunpack.c.h.b16 %v2855
        %v3632 = vunpack.c.l.b16 %v2856
        %v3633 = vunpack.c.h.b16 %v2856
        %v3634 = vunpack.c.l.b16 %v2857
        %v3635 = vunpack.c.h.b16 %v2857
        %v3636 = vunpack.c.l.b16 %v2858
        %v3637 = vunpack.c.h.b16 %v2858
        %v3638 = vunpack.c.l.b16 %v2859
        %v3639 = vunpack.c.h.b16 %v2859
        %v3640 = vunpack.c.l.b16 %v2860
        %v3641 = vunpack.c.h.b16 %v2860
        %v3642 = vunpack.c.l.b16 %v2861
        %v3643 = vunpack.c.h.b16 %v2861
        %v3644 = vunpack.c.l.b16 %v2862
        %v3645 = vunpack.c.h.b16 %v2862
        %v3646 = vunpack.c.l.b16 %v2863
        %v3647 = vunpack.c.h.b16 %v2863
        %v3648 = vunpack.c.l.b16 %v2864
        %v3649 = vunpack.c.h.b16 %v2864
        %v3650 = vunpack.c.l.b16 %v2865
        %v3651 = vunpack.c.h.b16 %v2865
        %v3652 = vunpack.c.l.b16 %v2866
        %v3653 = vunpack.c.h.b16 %v2866
        %v3654 = vunpack.c.l.b16 %v2867
        %v3655 = vunpack.c.h.b16 %v2867
        %v3656 = vunpack.c.l.b16 %v2868
        %v3657 = vunpack.c.h.b16 %v2868
        %v3658 = vunpack.c.l.b16 %v2869
        %v3659 = vunpack.c.h.b16 %v2869
        %v3660 = vunpack.c.l.b16 %v2870
        %v3661 = vunpack.c.h.b16 %v2870
        %v3662 = vunpack.c.l.b16 %v2871
        %v3663 = vunpack.c.h.b16 %v2871
        %v3664 = vunpack.c.l.b16 %v2872
        %v3665 = vunpack.c.h.b16 %v2872
        %v3666 = vunpack.c.l.b16 %v2873
        %v3667 = vunpack.c.h.b16 %v2873
        %v3668 = vunpack.c.l.b16 %v2874
        %v3669 = vunpack.c.h.b16 %v2874
        %v3670 = vunpack.c.l.b16 %v2875
        %v3671 = vunpack.c.h.b16 %v2875
        %v3672 = vunpack.c.l.b16 %v2876
        %v3673 = vunpack.c.h.b16 %v2876
        %v3674 = vunpack.c.l.b16 %v2877
        %v3675 = vunpack.c.h.b16 %v2877
        %v3676 = vunpack.c.l.b16 %v2878
        %v3677 = vunpack.c.h.b16 %v2878
        %v3678 = vunpack.c.l.b16 %v2879
        %v3679 = vunpack.c.h.b16 %v2879
        %v3680 = vunpack.c.l.b16 %v2880
        %v3681 = vunpack.c.h.b16 %v2880
        %v3682 = vunpack.c.l.b16 %v2881
        %v3683 = vunpack.c.h.b16 %v2881
        %v3684 = vunpack.c.l.b16 %v2882
        %v3685 = vunpack.c.h.b16 %v2882
        %v3686 = vunpack.c.l.b16 %v2883
        %v3687 = vunpack.c.h.b16 %v2883
        %v3688 = vunpack.c.l.b16 %v2884
        %v3689 = vunpack.c.h.b16 %v2884
        %v3690 = vunpack.c.l.b16 %v2885
        %v3691 = vunpack.c.h.b16 %v2885
        %v3692 = vunpack.c.l.b16 %v2886
        %v3693 = vunpack.c.h.b16 %v2886
        %v3694 = vunpack.c.l.b16 %v2887
        %v3695 = vunpack.c.h.b16 %v2887
        %v3696 = vunpack.c.l.b16 %v2888
        %v3697 = vunpack.c.h.b16 %v2888
        %v3698 = vunpack.c.l.b16 %v2889
        %v3699 = vunpack.c.h.b16 %v2889
        %v3700 = vunpack.c.l.b16 %v2890
        %v3701 = vunpack.c.h.b16 %v2890
        %v3702 = vunpack.c.l.b16 %v2891
        %v3703 = vunpack.c.h.b16 %v2891
        %v3704 = vunpack.c.l.b16 %v2892
        %v3705 = vunpack.c.h.b16 %v2892
        %v3706 = vunpack.c.l.b16 %v2893
        %v3707 = vunpack.c.h.b16 %v2893
        %v3708 = vunpack.c.l.b16 %v2894
        %v3709 = vunpack.c.h.b16 %v2894
        %v3710 = vunpack.c.l.b16 %v2895
        %v3711 = vunpack.c.h.b16 %v2895
        %v3712 = vunpack.c.l.b16 %v2896
        %v3713 = vunpack.c.h.b16 %v2896
        %v3714 = vunpack.c.l.b16 %v2897
        %v3715 = vunpack.c.h.b16 %v2897
        %v3716 = vunpack.c.l.b16 %v2898
        %v3717 = vunpack.c.h.b16 %v2898
        %v3718 = vunpack.c.l.b16 %v2899
        %v3719 = vunpack.c.h.b16 %v2899
        %v3720 = vunpack.c.l.b16 %v2900
        %v3721 = vunpack.c.h.b16 %v2900
        %v3722 = vunpack.c.l.b16 %v2901
        %v3723 = vunpack.c.h.b16 %v2901
        %v3724 = vunpack.c.l.b16 %v2902
        %v3725 = vunpack.c.h.b16 %v2902
        %v3726 = vunpack.c.l.b16 %v2903
        %v3727 = vunpack.c.h.b16 %v2903
        %v3728 = vunpack.c.l.b16 %v2904
        %v3729 = vunpack.c.h.b16 %v2904
        %v3730 = vunpack.c.l.b16 %v2905
        %v3731 = vunpack.c.h.b16 %v2905
        %v3732 = vunpack.c.l.b16 %v2906
        %v3733 = vunpack.c.h.b16 %v2906
        %v3734 = vunpack.c.l.b16 %v2907
        %v3735 = vunpack.c.h.b16 %v2907
        %v3736 = vunpack.c.l.b16 %v2908
        %v3737 = vunpack.c.h.b16 %v2908
        %v3738 = vunpack.c.l.b16 %v2909
        %v3739 = vunpack.c.h.b16 %v2909
        %v3740 = vunpack.c.l.b16 %v2910
        %v3741 = vunpack.c.h.b16 %v2910
        %v3742 = vunpack.c.l.b16 %v2911
        %v3743 = vunpack.c.h.b16 %v2911
        %v3744 = vunpack.c.l.b16 %v2912
        %v3745 = vunpack.c.h.b16 %v2912
        %v3746 = vunpack.c.l.b16 %v2913
        %v3747 = vunpack.c.h.b16 %v2913
        %v3748 = vunpack.c.l.b16 %v2914
        %v3749 = vunpack.c.h.b16 %v2914
        %v3750 = vunpack.c.l.b16 %v2915
        %v3751 = vunpack.c.h.b16 %v2915
        %v3752 = vunpack.c.l.b16 %v2916
        %v3753 = vunpack.c.h.b16 %v2916
        %v3754 = vunpack.c.l.b16 %v2917
        %v3755 = vunpack.c.h.b16 %v2917
        %v3756 = vunpack.c.l.b16 %v2918
        %v3757 = vunpack.c.h.b16 %v2918
        %v3758 = vunpack.c.l.b16 %v2919
        %v3759 = vunpack.c.h.b16 %v2919
        %v3760 = vunpack.c.l.b16 %v2920
        %v3761 = vunpack.c.h.b16 %v2920
        %v3762 = vunpack.c.l.b16 %v2921
        %v3763 = vunpack.c.h.b16 %v2921
        %v3764 = vunpack.c.l.b16 %v2922
        %v3765 = vunpack.c.h.b16 %v2922
        %v3766 = vunpack.c.l.b16 %v2923
        %v3767 = vunpack.c.h.b16 %v2923
        %v3768 = vunpack.c.l.b16 %v2924
        %v3769 = vunpack.c.h.b16 %v2924
        %v3770 = vunpack.c.l.b16 %v2925
        %v3771 = vunpack.c.h.b16 %v2925
        %v3772 = vunpack.c.l.b16 %v2926
        %v3773 = vunpack.c.h.b16 %v2926
        %v3774 = vunpack.c.l.b16 %v2927
        %v3775 = vunpack.c.h.b16 %v2927
        %v3776 = vunpack.c.l.b16 %v2928
        %v3777 = vunpack.c.h.b16 %v2928
        %v3778 = vunpack.c.l.b16 %v2929
        %v3779 = vunpack.c.h.b16 %v2929
        %v3780 = vunpack.c.l.b16 %v2930
        %v3781 = vunpack.c.h.b16 %v2930
        %v3782 = vunpack.c.l.b16 %v2931
        %v3783 = vunpack.c.h.b16 %v2931
        %v3784 = vunpack.c.l.b16 %v2932
        %v3785 = vunpack.c.h.b16 %v2932
        %v3786 = vunpack.c.l.b16 %v2933
        %v3787 = vunpack.c.h.b16 %v2933
        %v3788 = vunpack.c.l.b16 %v2934
        %v3789 = vunpack.c.h.b16 %v2934
        %v3790 = vunpack.c.l.b16 %v2935
        %v3791 = vunpack.c.h.b16 %v2935
        %v3792 = vunpack.c.l.b16 %v2936
        %v3793 = vunpack.c.h.b16 %v2936
        %v3794 = vunpack.c.l.b16 %v2937
        %v3795 = vunpack.c.h.b16 %v2937
        %v3796 = vunpack.c.l.b16 %v2938
        %v3797 = vunpack.c.h.b16 %v2938
        %v3798 = vunpack.c.l.b16 %v2939
        %v3799 = vunpack.c.h.b16 %v2939
        %v3800 = vunpack.c.l.b16 %v2940
        %v3801 = vunpack.c.h.b16 %v2940
        %v3802 = vunpack.c.l.b16 %v2941
        %v3803 = vunpack.c.h.b16 %v2941
        %v3804 = vunpack.c.l.b16 %v2942
        %v3805 = vunpack.c.h.b16 %v2942
        %v3806 = vunpack.c.l.b16 %v2943
        %v3807 = vunpack.c.h.b16 %v2943
        %v3808 = vunpack.c.l.b16 %v2944
        %v3809 = vunpack.c.h.b16 %v2944
        %v3810 = vunpack.c.l.b16 %v2945
        %v3811 = vunpack.c.h.b16 %v2945
        %v3812 = vunpack.c.l.b16 %v2946
        %v3813 = vunpack.c.h.b16 %v2946
        %v3814 = vunpack.c.l.b16 %v2947
        %v3815 = vunpack.c.h.b16 %v2947
        %v3816 = vunpack.c.l.b16 %v2948
        %v3817 = vunpack.c.h.b16 %v2948
        %v3818 = vunpack.c.l.b16 %v2949
        %v3819 = vunpack.c.h.b16 %v2949
        %v3820 = vunpack.c.l.b16 %v2950
        %v3821 = vunpack.c.h.b16 %v2950
        %v3822 = vunpack.c.l.b16 %v2951
        %v3823 = vunpack.c.h.b16 %v2951
        %v3824 = vunpack.c.l.b16 %v2952
        %v3825 = vunpack.c.h.b16 %v2952
        %v3826 = vunpack.c.l.b16 %v2953
        %v3827 = vunpack.c.h.b16 %v2953
        %v3828 = vunpack.c.l.b16 %v2954
        %v3829 = vunpack.c.h.b16 %v2954
        %v3830 = vunpack.c.l.b16 %v2955
        %v3831 = vunpack.c.h.b16 %v2955
        %v3832 = vunpack.c.l.b16 %v2956
        %v3833 = vunpack.c.h.b16 %v2956
        %v3834 = vunpack.c.l.b16 %v2957
        %v3835 = vunpack.c.h.b16 %v2957
        %v3836 = vunpack.c.l.b16 %v2958
        %v3837 = vunpack.c.h.b16 %v2958
        %v3838 = vunpack.c.l.b16 %v2959
        %v3839 = vunpack.c.h.b16 %v2959
        %v3840 = vunpack.c.l.b16 %v2960
        %v3841 = vunpack.c.h.b16 %v2960
        %v3842 = vunpack.c.l.b16 %v2961
        %v3843 = vunpack.c.h.b16 %v2961
        %v3844 = vunpack.c.l.b16 %v2962
        %v3845 = vunpack.c.h.b16 %v2962
        %v3846 = vunpack.c.l.b16 %v2963
        %v3847 = vunpack.c.h.b16 %v2963
        %v3848 = vunpack.c.l.b16 %v2964
        %v3849 = vunpack.c.h.b16 %v2964
        %v3850 = vunpack.c.l.b16 %v2965
        %v3851 = vunpack.c.h.b16 %v2965
        %v3852 = vunpack.c.l.b16 %v2966
        %v3853 = vunpack.c.h.b16 %v2966
        %v3854 = vunpack.c.l.b16 %v2967
        %v3855 = vunpack.c.h.b16 %v2967
        %v3856 = vunpack.c.l.b16 %v2968
        %v3857 = vunpack.c.h.b16 %v2968
        %v3858 = vunpack.c.l.b16 %v2969
        %v3859 = vunpack.c.h.b16 %v2969
        %v3860 = vunpack.c.l.b16 %v2970
        %v3861 = vunpack.c.h.b16 %v2970
        %v3862 = vunpack.c.l.b16 %v2971
        %v3863 = vunpack.c.h.b16 %v2971
        %v3864 = vunpack.c.l.b16 %v2972
        %v3865 = vunpack.c.h.b16 %v2972
        %v3866 = vunpack.c.l.b16 %v2973
        %v3867 = vunpack.c.h.b16 %v2973
        %v3868 = vunpack.c.l.b16 %v2974
        %v3869 = vunpack.c.h.b16 %v2974
        %v3870 = vunpack.c.l.b16 %v2975
        %v3871 = vunpack.c.h.b16 %v2975
        %v3872 = vunpack.c.l.b16 %v2976
        %v3873 = vunpack.c.h.b16 %v2976
        %v3874 = vunpack.c.l.b16 %v2977
        %v3875 = vunpack.c.h.b16 %v2977
        %v3876 = vunpack.c.l.b16 %v2978
        %v3877 = vunpack.c.h.b16 %v2978
        %v3878 = vunpack.c.l.b16 %v2979
        %v3879 = vunpack.c.h.b16 %v2979
        %v3880 = vunpack.c.l.b16 %v2980
        %v3881 = vunpack.c.h.b16 %v2980
        %v3882 = vunpack.c.l.b16 %v2981
        %v3883 = vunpack.c.h.b16 %v2981
        %v3884 = vunpack.c.l.b16 %v2982
        %v3885 = vunpack.c.h.b16 %v2982
        %v3886 = vunpack.c.l.b16 %v2983
        %v3887 = vunpack.c.h.b16 %v2983
        %v3888 = vunpack.c.l.b16 %v2984
        %v3889 = vunpack.c.h.b16 %v2984
        %v3890 = vunpack.c.l.b16 %v2985
        %v3891 = vunpack.c.h.b16 %v2985
        %v3892 = vunpack.c.l.b16 %v2986
        %v3893 = vunpack.c.h.b16 %v2986
        %v3894 = vunpack.c.l.b16 %v2987
        %v3895 = vunpack.c.h.b16 %v2987
        %v3896 = vunpack.c.l.b16 %v2988
        %v3897 = vunpack.c.h.b16 %v2988
        %v3898 = vunpack.c.l.b16 %v2989
        %v3899 = vunpack.c.h.b16 %v2989
        %v3900 = vunpack.c.l.b16 %v2990
        %v3901 = vunpack.c.h.b16 %v2990
        %v3902 = vunpack.c.l.b16 %v2991
        %v3903 = vunpack.c.h.b16 %v2991
        %v3904 = vunpack.c.l.b16 %v2992
        %v3905 = vunpack.c.h.b16 %v2992
        %v3906 = vunpack.c.l.b16 %v2993
        %v3907 = vunpack.c.h.b16 %v2993
        %v3908 = vunpack.c.l.b16 %v2994
        %v3909 = vunpack.c.h.b16 %v2994
        %v3910 = vunpack.c.l.b16 %v2995
        %v3911 = vunpack.c.h.b16 %v2995
        %v3912 = vunpack.c.l.b16 %v2996
        %v3913 = vunpack.c.h.b16 %v2996
        %v3914 = vunpack.c.l.b16 %v2997
        %v3915 = vunpack.c.h.b16 %v2997
        %v3916 = vunpack.c.l.b16 %v2998
        %v3917 = vunpack.c.h.b16 %v2998
        %v3918 = vunpack.c.l.b16 %v2999
        %v3919 = vunpack.c.h.b16 %v2999
        %v3920 = vpack.c.b16 %v3350, %v3344
        %v3921 = vpack.c.b16 %v3351, %v3345
        %v3922 = vpack.c.b16 %v3352, %v3346
        %v3923 = vpack.c.b16 %v3353, %v3347
        %v3924 = vpack.c.b16 %v3354, %v3348
        %v3925 = vpack.c.b16 %v3355, %v3349
        %v3926 = vpack.c.b16 %v3362, %v3356
        %v3927 = vpack.c.b16 %v3363, %v3357
        %v3928 = vpack.c.b16 %v3364, %v3358
        %v3929 = vpack.c.b16 %v3365, %v3359
        %v3930 = vpack.c.b16 %v3366, %v3360
        %v3931 = vpack.c.b16 %v3367, %v3361
        %v3932 = vpack.c.b16 %v3374, %v3368
        %v3933 = vpack.c.b16 %v3375, %v3369
        %v3934 = vpack.c.b16 %v3376, %v3370
        %v3935 = vpack.c.b16 %v3377, %v3371
        %v3936 = vpack.c.b16 %v3378, %v3372
        %v3937 = vpack.c.b16 %v3379, %v3373
        %v3938 = vpack.c.b16 %v3386, %v3380
        %v3939 = vpack.c.b16 %v3387, %v3381
        %v3940 = vpack.c.b16 %v3388, %v3382
        %v3941 = vpack.c.b16 %v3389, %v3383
        %v3942 = vpack.c.b16 %v3390, %v3384
        %v3943 = vpack.c.b16 %v3391, %v3385
        %v3944 = vpack.c.b16 %v3398, %v3392
        %v3945 = vpack.c.b16 %v3399, %v3393
        %v3946 = vpack.c.b16 %v3400, %v3394
        %v3947 = vpack.c.b16 %v3401, %v3395
        %v3948 = vpack.c.b16 %v3402, %v3396
        %v3949 = vpack.c.b16 %v3403, %v3397
        %v3950 = vpack.c.b16 %v3410, %v3404
        %v3951 = vpack.c.b16 %v3411, %v3405
        %v3952 = vpack.c.b16 %v3412, %v3406
        %v3953 = vpack.c.b16 %v3413, %v3407
        %v3954 = vpack.c.b16 %v3414, %v3408
        %v3955 = vpack.c.b16 %v3415, %v3409
        %v3956 = vpack.c.b16 %v3422, %v3416
        %v3957 = vpack.c.b16 %v3423, %v3417
        %v3958 = vpack.c.b16 %v3424, %v3418
        %v3959 = vpack.c.b16 %v3425, %v3419
        %v3960 = vpack.c.b16 %v3426, %v3420
        %v3961 = vpack.c.b16 %v3427, %v3421
        %v3962 = vpack.c.b16 %v3434, %v3428
        %v3963 = vpack.c.b16 %v3435, %v3429
        %v3964 = vpack.c.b16 %v3436, %v3430
        %v3965 = vpack.c.b16 %v3437, %v3431
        %v3966 = vpack.c.b16 %v3438, %v3432
        %v3967 = vpack.c.b16 %v3439, %v3433
        %v3968 = vpack.c.b16 %v3446, %v3440
        %v3969 = vpack.c.b16 %v3447, %v3441
        %v3970 = vpack.c.b16 %v3448, %v3442
        %v3971 = vpack.c.b16 %v3449, %v3443
        %v3972 = vpack.c.b16 %v3450, %v3444
        %v3973 = vpack.c.b16 %v3451, %v3445
        %v3974 = vpack.c.b16 %v3458, %v3452
        %v3975 = vpack.c.b16 %v3459, %v3453
        %v3976 = vpack.c.b16 %v3460, %v3454
        %v3977 = vpack.c.b16 %v3461, %v3455
        %v3978 = vpack.c.b16 %v3462, %v3456
        %v3979 = vpack.c.b16 %v3463, %v3457
        %v3980 = vpack.c.b16 %v3470, %v3464
        %v3981 = vpack.c.b16 %v3471, %v3465
        %v3982 = vpack.c.b16 %v3472, %v3466
        %v3983 = vpack.c.b16 %v3473, %v3467
        %v3984 = vpack.c.b16 %v3474, %v3468
        %v3985 = vpack.c.b16 %v3475, %v3469
        %v3986 = vpack.c.b16 %v3482, %v3476
        %v3987 = vpack.c.b16 %v3483, %v3477
        %v3988 = vpack.c.b16 %v3484, %v3478
        %v3989 = vpack.c.b16 %v3485, %v3479
        %v3990 = vpack.c.b16 %v3486, %v3480
        %v3991 = vpack.c.b16 %v3487, %v3481
        %v3992 = vpack.c.b16 %v3494, %v3488
        %v3993 = vpack.c.b16 %v3495, %v3489
        %v3994 = vpack.c.b16 %v3496, %v3490
        %v3995 = vpack.c.b16 %v3497, %v3491
        %v3996 = vpack.c.b16 %v3498, %v3492
        %v3997 = vpack.c.b16 %v3499, %v3493
        %v3998 = vpack.c.b16 %v3506, %v3500
        %v3999 = vpack.c.b16 %v3507, %v3501
        %v4000 = vpack.c.b16 %v3508, %v3502
        %v4001 = vpack.c.b16 %v3509, %v3503
        %v4002 = vpack.c.b16 %v3510, %v3504
        %v4003 = vpack.c.b16 %v3511, %v3505
        %v4004 = vpack.c.b16 %v3518, %v3512
        %v4005 = vpack.c.b16 %v3519, %v3513
        %v4006 = vpack.c.b16 %v3520, %v3514
        %v4007 = vpack.c.b16 %v3521, %v3515
        %v4008 = vpack.c.b16 %v3522, %v3516
        %v4009 = vpack.c.b16 %v3523, %v3517
        %v4010 = vpack.c.b16 %v3530, %v3524
        %v4011 = vpack.c.b16 %v3531, %v3525
        %v4012 = vpack.c.b16 %v3532, %v3526
        %v4013 = vpack.c.b16 %v3533, %v3527
        %v4014 = vpack.c.b16 %v3534, %v3528
        %v4015 = vpack.c.b16 %v3535, %v3529
        %v4016 = vpack.c.b16 %v3542, %v3536
        %v4017 = vpack.c.b16 %v3543, %v3537
        %v4018 = vpack.c.b16 %v3544, %v3538
        %v4019 = vpack.c.b16 %v3545, %v3539
        %v4020 = vpack.c.b16 %v3546, %v3540
        %v4021 = vpack.c.b16 %v3547, %v3541
        %v4022 = vpack.c.b16 %v3554, %v3548
        %v4023 = vpack.c.b16 %v3555, %v3549
        %v4024 = vpack.c.b16 %v3556, %v3550
        %v4025 = vpack.c.b16 %v3557, %v3551
        %v4026 = vpack.c.b16 %v3558, %v3552
        %v4027 = vpack.c.b16 %v3559, %v3553
        %v4028 = vpack.c.b16 %v3566, %v3560
        %v4029 = vpack.c.b16 %v3567, %v3561
        %v4030 = vpack.c.b16 %v3568, %v3562
        %v4031 = vpack.c.b16 %v3569, %v3563
        %v4032 = vpack.c.b16 %v3570, %v3564
        %v4033 = vpack.c.b16 %v3571, %v3565
        %v4034 = vpack.c.b16 %v3578, %v3572
        %v4035 = vpack.c.b16 %v3579, %v3573
        %v4036 = vpack.c.b16 %v3580, %v3574
        %v4037 = vpack.c.b16 %v3581, %v3575
        %v4038 = vpack.c.b16 %v3582, %v3576
        %v4039 = vpack.c.b16 %v3583, %v3577
        %v4040 = vpack.c.b16 %v3590, %v3584
        %v4041 = vpack.c.b16 %v3591, %v3585
        %v4042 = vpack.c.b16 %v3592, %v3586
        %v4043 = vpack.c.b16 %v3593, %v3587
        %v4044 = vpack.c.b16 %v3594, %v3588
        %v4045 = vpack.c.b16 %v3595, %v3589
        %v4046 = vpack.c.b16 %v3602, %v3596
        %v4047 = vpack.c.b16 %v3603, %v3597
        %v4048 = vpack.c.b16 %v3604, %v3598
        %v4049 = vpack.c.b16 %v3605, %v3599
        %v4050 = vpack.c.b16 %v3606, %v3600
        %v4051 = vpack.c.b16 %v3607, %v3601
        %v4052 = vpack.c.b16 %v3614, %v3608
        %v4053 = vpack.c.b16 %v3615, %v3609
        %v4054 = vpack.c.b16 %v3616, %v3610
        %v4055 = vpack.c.b16 %v3617, %v3611
        %v4056 = vpack.c.b16 %v3618, %v3612
        %v4057 = vpack.c.b16 %v3619, %v3613
        %v4058 = vpack.c.b16 %v3626, %v3620
        %v4059 = vpack.c.b16 %v3627, %v3621
        %v4060 = vpack.c.b16 %v3628, %v3622
        %v4061 = vpack.c.b16 %v3629, %v3623
        %v4062 = vpack.c.b16 %v3630, %v3624
        %v4063 = vpack.c.b16 %v3631, %v3625
        %v4064 = vpack.c.b16 %v3638, %v3632
        %v4065 = vpack.c.b16 %v3639, %v3633
        %v4066 = vpack.c.b16 %v3640, %v3634
        %v4067 = vpack.c.b16 %v3641, %v3635
        %v4068 = vpack.c.b16 %v3642, %v3636
        %v4069 = vpack.c.b16 %v3643, %v3637
        %v4070 = vpack.c.b16 %v3650, %v3644
        %v4071 = vpack.c.b16 %v3651, %v3645
        %v4072 = vpack.c.b16 %v3652, %v3646
        %v4073 = vpack.c.b16 %v3653, %v3647
        %v4074 = vpack.c.b16 %v3654, %v3648
        %v4075 = vpack.c.b16 %v3655, %v3649
        %v4076 = vpack.c.b16 %v3662, %v3656
        %v4077 = vpack.c.b16 %v3663, %v3657
        %v4078 = vpack.c.b16 %v3664, %v3658
        %v4079 = vpack.c.b16 %v3665, %v3659
        %v4080 = vpack.c.b16 %v3666, %v3660
        %v4081 = vpack.c.b16 %v3667, %v3661
        %v4082 = vpack.c.b16 %v3674, %v3668
        %v4083 = vpack.c.b16 %v3675, %v3669
        %v4084 = vpack.c.b16 %v3676, %v3670
        %v4085 = vpack.c.b16 %v3677, %v3671
        %v4086 = vpack.c.b16 %v3678, %v3672
        %v4087 = vpack.c.b16 %v3679, %v3673
        %v4088 = vpack.c.b16 %v3686, %v3680
        %v4089 = vpack.c.b16 %v3687, %v3681
        %v4090 = vpack.c.b16 %v3688, %v3682
        %v4091 = vpack.c.b16 %v3689, %v3683
        %v4092 = vpack.c.b16 %v3690, %v3684
        %v4093 = vpack.c.b16 %v3691, %v3685
        %v4094 = vpack.c.b16 %v3698, %v3692
        %v4095 = vpack.c.b16 %v3699, %v3693
        %v4096 = vpack.c.b16 %v3700, %v3694
        %v4097 = vpack.c.b16 %v3701, %v3695
        %v4098 = vpack.c.b16 %v3702, %v3696
        %v4099 = vpack.c.b16 %v3703, %v3697
        %v4100 = vpack.c.b16 %v3710, %v3704
        %v4101 = vpack.c.b16 %v3711, %v3705
        %v4102 = vpack.c.b16 %v3712, %v3706
        %v4103 = vpack.c.b16 %v3713, %v3707
        %v4104 = vpack.c.b16 %v3714, %v3708
        %v4105 = vpack.c.b16 %v3715, %v3709
        %v4106 = vpack.c.b16 %v3722, %v3716
        %v4107 = vpack.c.b16 %v3723, %v3717
        %v4108 = vpack.c.b16 %v3724, %v3718
        %v4109 = vpack.c.b16 %v3725, %v3719
        %v4110 = vpack.c.b16 %v3726, %v3720
        %v4111 = vpack.c.b16 %v3727, %v3721
        %v4112 = vpack.c.b16 %v3734, %v3728
        %v4113 = vpack.c.b16 %v3735, %v3729
        %v4114 = vpack.c.b16 %v3736, %v3730
        %v4115 = vpack.c.b16 %v3737, %v3731
        %v4116 = vpack.c.b16 %v3738, %v3732
        %v4117 = vpack.c.b16 %v3739, %v3733
        %v4118 = vpack.c.b16 %v3746, %v3740
        %v4119 = vpack.c.b16 %v3747, %v3741
        %v4120 = vpack.c.b16 %v3748, %v3742
        %v4121 = vpack.c.b16 %v3749, %v3743
        %v4122 = vpack.c.b16 %v3750, %v3744
        %v4123 = vpack.c.b16 %v3751, %v3745
        %v4124 = vpack.c.b16 %v3758, %v3752
        %v4125 = vpack.c.b16 %v3759, %v3753
        %v4126 = vpack.c.b16 %v3760, %v3754
        %v4127 = vpack.c.b16 %v3761, %v3755
        %v4128 = vpack.c.b16 %v3762, %v3756
        %v4129 = vpack.c.b16 %v3763, %v3757
        %v4130 = vpack.c.b16 %v3770, %v3764
        %v4131 = vpack.c.b16 %v3771, %v3765
        %v4132 = vpack.c.b16 %v3772, %v3766
        %v4133 = vpack.c.b16 %v3773, %v3767
        %v4134 = vpack.c.b16 %v3774, %v3768
        %v4135 = vpack.c.b16 %v3775, %v3769
        %v4136 = vpack.c.b16 %v3782, %v3776
        %v4137 = vpack.c.b16 %v3783, %v3777
        %v4138 = vpack.c.b16 %v3784, %v3778
        %v4139 = vpack.c.b16 %v3785, %v3779
        %v4140 = vpack.c.b16 %v3786, %v3780
        %v4141 = vpack.c.b16 %v3787, %v3781
        %v4142 = vpack.c.b16 %v3794, %v3788
        %v4143 = vpack.c.b16 %v3795, %v3789
        %v4144 = vpack.c.b16 %v3796, %v3790
        %v4145 = vpack.c.b16 %v3797, %v3791
        %v4146 = vpack.c.b16 %v3798, %v3792
        %v4147 = vpack.c.b16 %v3799, %v3793
        %v4148 = vpack.c.b16 %v3806, %v3800
        %v4149 = vpack.c.b16 %v3807, %v3801
        %v4150 = vpack.c.b16 %v3808, %v3802
        %v4151 = vpack.c.b16 %v3809, %v3803
        %v4152 = vpack.c.b16 %v3810, %v3804
        %v4153 = vpack.c.b16 %v3811, %v3805
        %v4154 = vpack.c.b16 %v3818, %v3812
        %v4155 = vpack.c.b16 %v3819, %v3813
        %v4156 = vpack.c.b16 %v3820, %v3814
        %v4157 = vpack.c.b16 %v3821, %v3815
        %v4158 = vpack.c.b16 %v3822, %v3816
        %v4159 = vpack.c.b16 %v3823, %v3817
        %v4160 = vpack.c.b16 %v3830, %v3824
        %v4161 = vpack.c.b16 %v3831, %v3825
        %v4162 = vpack.c.b16 %v3832, %v3826
        %v4163 = vpack.c.b16 %v3833, %v3827
        %v4164 = vpack.c.b16 %v3834, %v3828
        %v4165 = vpack.c.b16 %v3835, %v3829
        %v4166 = vpack.c.b16 %v3842, %v3836
        %v4167 = vpack.c.b16 %v3843, %v3837
        %v4168 = vpack.c.b16 %v3844, %v3838
        %v4169 = vpack.c.b16 %v3845, %v3839
        %v4170 = vpack.c.b16 %v3846, %v3840
        %v4171 = vpack.c.b16 %v3847, %v3841
        %v4172 = vpack.c.b16 %v3854, %v3848
        %v4173 = vpack.c.b16 %v3855, %v3849
        %v4174 = vpack.c.b16 %v3856, %v3850
        %v4175 = vpack.c.b16 %v3857, %v3851
        %v4176 = vpack.c.b16 %v3858, %v3852
        %v4177 = vpack.c.b16 %v3859, %v3853
        %v4178 = vpack.c.b16 %v3866, %v3860
        %v4179 = vpack.c.b16 %v3867, %v3861
        %v4180 = vpack.c.b16 %v3868, %v3862
        %v4181 = vpack.c.b16 %v3869, %v3863
        %v4182 = vpack.c.b16 %v3870, %v3864
        %v4183 = vpack.c.b16 %v3871, %v3865
        %v4184 = vpack.c.b16 %v3878, %v3872
        %v4185 = vpack.c.b16 %v3879, %v3873
        %v4186 = vpack.c.b16 %v3880, %v3874
        %v4187 = vpack.c.b16 %v3881, %v3875
        %v4188 = vpack.c.b16 %v3882, %v3876
        %v4189 = vpack.c.b16 %v3883, %v3877
        %v4190 = vpack.c.b16 %v3890, %v3884
        %v4191 = vpack.c.b16 %v3891, %v3885
        %v4192 = vpack.c.b16 %v3892, %v3886
        %v4193 = vpack.c.b16 %v3893, %v3887
        %v4194 = vpack.c.b16 %v3894, %v3888
        %v4195 = vpack.c.b16 %v3895, %v3889
        %v4196 = vpack.c.b16 %v3902, %v3896
        %v4197 = vpack.c.b16 %v3903, %v3897
        %v4198 = vpack.c.b16 %v3904, %v3898
        %v4199 = vpack.c.b16 %v3905, %v3899
        %v4200 = vpack.c.b16 %v3906, %v3900
        %v4201 = vpack.c.b16 %v3907, %v3901
        %v4202 = vpack.c.b16 %v3914, %v3908
        %v4203 = vpack.c.b16 %v3915, %v3909
        %v4204 = vpack.c.b16 %v3916, %v3910
        %v4205 = vpack.c.b16 %v3917, %v3911
        %v4206 = vpack.c.b16 %v3918, %v3912
        %v4207 = vpack.c.b16 %v3919, %v3913
        %4496 = vmatprep.subr.bf16.mxu0 %v3921
        %4497 = vmatpush1.bf16.msra.mxu0 %v3920
        %4498 = vmatprep.subr.bf16.mxu0 %v3927
        %4499 = vmatpush1.bf16.msra.mxu0 %v3926
        %4500 = vmatprep.subr.bf16.mxu0 %v3933
        %4501 = vmatpush1.bf16.msra.mxu0 %v3932
        %4502 = vmatprep.subr.bf16.mxu0 %v3939
        %4503 = vmatpush1.bf16.msra.mxu0 %v3938
        %4504 = vmatprep.subr.bf16.mxu0 %v3945
        %4505 = vmatpush1.bf16.msra.mxu0 %v3944
        %4506 = vmatprep.subr.bf16.mxu0 %v3951
        %4507 = vmatpush1.bf16.msra.mxu0 %v3950
        %4508 = vmatprep.subr.bf16.mxu0 %v3957
        %4509 = vmatpush1.bf16.msra.mxu0 %v3956
        %4510 = vmatprep.subr.bf16.mxu0 %v3963
        %4511 = vmatpush1.bf16.msra.mxu0 %v3962
        %4512 = vmatprep.subr.bf16.mxu0 %v3969
        %4513 = vmatpush1.bf16.msra.mxu0 %v3968
        %4514 = vmatprep.subr.bf16.mxu0 %v3975
        %4515 = vmatpush1.bf16.msra.mxu0 %v3974
        %4516 = vmatprep.subr.bf16.mxu0 %v3981
        %4517 = vmatpush1.bf16.msra.mxu0 %v3980
        %4518 = vmatprep.subr.bf16.mxu0 %v3987
        %4519 = vmatpush1.bf16.msra.mxu0 %v3986
        %4520 = vmatprep.subr.bf16.mxu0 %v3993
        %4521 = vmatpush1.bf16.msra.mxu0 %v3992
        %4522 = vmatprep.subr.bf16.mxu0 %v3999
        %4523 = vmatpush1.bf16.msra.mxu0 %v3998
        %4524 = vmatprep.subr.bf16.mxu0 %v4005
        %4525 = vmatpush1.bf16.msra.mxu0 %v4004
        %4526 = vmatprep.subr.bf16.mxu0 %v4011
        %4527 = vmatpush1.bf16.msra.mxu0 %v4010
        %4528 = vmatprep.mubr.bf16.mxu0 %v2665
        %4529 = vmatmul.mubr.bf16.gmra.mrb[0].mxu0 %v2664
        %v4530 = vpop.f32.mrb[0].mxu0
        %v4531 = vadd.f32 %v3035, %v4530
        %v4532 = vpop.f32.mrb[0].mxu0
        %v4533 = vadd.f32 %v3039, %v4532
        %v4534 = vpop.f32.mrb[0].mxu0
        %v4535 = vadd.f32 %v3035, %v4534
        %v4536 = vpop.f32.mrb[0].mxu0
        %v4537 = vadd.f32 %v3039, %v4536
        %4538 = vmatprep.mubr.bf16.mxu0 %v2671
        %4539 = vmatmul.mubr.bf16.gmra.mrb[0].mxu0 %v2670
        %v4540 = vpop.f32.mrb[0].mxu0
        %v4541 = vadd.f32 %v3035, %v4540
        %v4542 = vpop.f32.mrb[0].mxu0
        %v4543 = vadd.f32 %v3039, %v4542
        %v4544 = vpop.f32.mrb[0].mxu0
        %v4545 = vadd.f32 %v3035, %v4544
        %v4546 = vpop.f32.mrb[0].mxu0
        %v4547 = vadd.f32 %v3039, %v4546
        %4548 = vmatprep.mubr.bf16.mxu0 %v2677
        %4549 = vmatmul.mubr.bf16.gmra.mrb[0].mxu0 %v2676
        %v4550 = vpop.f32.mrb[0].mxu0
        %v4551 = vadd.f32 %v3035, %v4550
        %v4552 = vpop.f32.mrb[0].mxu0
        %v4553 = vadd.f32 %v3039, %v4552
        %v4554 = vpop.f32.mrb[0].mxu0
        %v4555 = vadd.f32 %v3035, %v4554
        %v4556 = vpop.f32.mrb[0].mxu0
        %v4557 = vadd.f32 %v3039, %v4556
        %4558 = vmatprep.mubr.bf16.mxu0 %v2683
        %4559 = vmatmul.mubr.bf16.gmra.mrb[0].mxu0 %v2682
        %v4560 = vpop.f32.mrb[0].mxu0
        %v4561 = vadd.f32 %v3035, %v4560
        %v4562 = vpop.f32.mrb[0].mxu0
        %v4563 = vadd.f32 %v3039, %v4562
        %v4564 = vpop.f32.mrb[0].mxu0
        %v4565 = vadd.f32 %v3035, %v4564
        %v4566 = vpop.f32.mrb[0].mxu0
        %v4567 = vadd.f32 %v3039, %v4566
        %4568 = vmatprep.mubr.bf16.mxu0 %v2689
        %4569 = vmatmul.mubr.bf16.gmra.mrb[0].mxu0 %v2688
        %v4570 = vpop.f32.mrb[0].mxu0
        %v4571 = vadd.f32 %v3035, %v4570
        %v4572 = vpop.f32.mrb[0].mxu0
        %v4573 = vadd.f32 %v3039, %v4572
        %v4574 = vpop.f32.mrb[0].mxu0
        %v4575 = vadd.f32 %v3035, %v4574
        %v4576 = vpop.f32.mrb[0].mxu0
        %v4577 = vadd.f32 %v3039, %v4576
        %4578 = vmatprep.mubr.bf16.mxu0 %v2695
        %4579 = vmatmul.mubr.bf16.gmra.mrb[0].mxu0 %v2694
        %v4580 = vpop.f32.mrb[0].mxu0
        %v4581 = vadd.f32 %v3035, %v4580
        %v4582 = vpop.f32.mrb[0].mxu0
        %v4583 = vadd.f32 %v3039, %v4582
        %v4584 = vpop.f32.mrb[0].mxu0
        %v4585 = vadd.f32 %v3035, %v4584
        %v4586 = vpop.f32.mrb[0].mxu0
        %v4587 = vadd.f32 %v3039, %v4586
        %4588 = vmatprep.mubr.bf16.mxu0 %v2701
        %4589 = vmatmul.mubr.bf16.gmra.mrb[0].mxu0 %v2700
        %v4590 = vpop.f32.mrb[0].mxu0
        %v4591 = vadd.f32 %v3035, %v4590
        %v4592 = vpop.f32.mrb[0].mxu0
        %v4593 = vadd.f32 %v3039, %v4592
        %v4594 = vpop.f32.mrb[0].mxu0
        %v4595 = vadd.f32 %v3035, %v4594
        %v4596 = vpop.f32.mrb[0].mxu0
        %v4597 = vadd.f32 %v3039, %v4596
        %4598 = vmatprep.mubr.bf16.mxu0 %v2707
        %4599 = vmatmul.mubr.bf16.gmra.mrb[0].mxu0 %v2706
        %v4600 = vpop.f32.mrb[0].mxu0
        %v4601 = vadd.f32 %v3035, %v4600
        %v4602 = vpop.f32.mrb[0].mxu0
        %v4603 = vadd.f32 %v3039, %v4602
        %v4604 = vpop.f32.mrb[0].mxu0
        %v4605 = vadd.f32 %v3035, %v4604
        %v4606 = vpop.f32.mrb[0].mxu0
        %v4607 = vadd.f32 %v3039, %v4606
        %4608 = vdwg.mxu0
        %4609 = vmatprep.subr.bf16.mxu0 %v4017
        %4610 = vmatpush1.bf16.msra.mxu0 %v4016
        %4611 = vmatprep.subr.bf16.mxu0 %v4023
        %4612 = vmatpush1.bf16.msra.mxu0 %v4022
        %4613 = vmatprep.subr.bf16.mxu0 %v4029
        %4614 = vmatpush1.bf16.msra.mxu0 %v4028
        %4615 = vmatprep.subr.bf16.mxu0 %v4035
        %4616 = vmatpush1.bf16.msra.mxu0 %v4034
        %4617 = vmatprep.subr.bf16.mxu0 %v4041
        %4618 = vmatpush1.bf16.msra.mxu0 %v4040
        %4619 = vmatprep.subr.bf16.mxu0 %v4047
        %4620 = vmatpush1.bf16.msra.mxu0 %v4046
        %4621 = vmatprep.subr.bf16.mxu0 %v4053
        %4622 = vmatpush1.bf16.msra.mxu0 %v4052
        %4623 = vmatprep.subr.bf16.mxu0 %v4059
        %4624 = vmatpush1.bf16.msra.mxu0 %v4058
        %4625 = vmatprep.subr.bf16.mxu0 %v4065
        %4626 = vmatpush1.bf16.msra.mxu0 %v4064
        %4627 = vmatprep.subr.bf16.mxu0 %v4071
        %4628 = vmatpush1.bf16.msra.mxu0 %v4070
        %4629 = vmatprep.subr.bf16.mxu0 %v4077
        %4630 = vmatpush1.bf16.msra.mxu0 %v4076
        %4631 = vmatprep.subr.bf16.mxu0 %v4083
        %4632 = vmatpush1.bf16.msra.mxu0 %v4082
        %4633 = vmatprep.subr.bf16.mxu0 %v4089
        %4634 = vmatpush1.bf16.msra.mxu0 %v4088
        %4635 = vmatprep.subr.bf16.mxu0 %v4095
        %4636 = vmatpush1.bf16.msra.mxu0 %v4094
        %4637 = vmatprep.subr.bf16.mxu0 %v4101
        %4638 = vmatpush1.bf16.msra.mxu0 %v4100
        %4639 = vmatprep.subr.bf16.mxu0 %v4107
        %4640 = vmatpush1.bf16.msra.mxu0 %v4106
        %4641 = vmatprep.mubr.bf16.mxu0 %v2667
        %4642 = vmatmul.mubr.bf16.gmra.mrb[0].mxu0 %v2666
        %v4643 = vpop.f32.mrb[0].mxu0
        %v4644 = vadd.f32 %v4531, %v4643
        %v4645 = vpop.f32.mrb[0].mxu0
        %v4646 = vadd.f32 %v4533, %v4645
        %v4647 = vpop.f32.mrb[0].mxu0
        %v4648 = vadd.f32 %v4535, %v4647
        %v4649 = vpop.f32.mrb[0].mxu0
        %v4650 = vadd.f32 %v4537, %v4649
        %4651 = vmatprep.mubr.bf16.mxu0 %v2673
        %4652 = vmatmul.mubr.bf16.gmra.mrb[0].mxu0 %v2672
        %v4653 = vpop.f32.mrb[0].mxu0
        %v4654 = vadd.f32 %v4541, %v4653
        %v4655 = vpop.f32.mrb[0].mxu0
        %v4656 = vadd.f32 %v4543, %v4655
        %v4657 = vpop.f32.mrb[0].mxu0
        %v4658 = vadd.f32 %v4545, %v4657
        %v4659 = vpop.f32.mrb[0].mxu0
        %v4660 = vadd.f32 %v4547, %v4659
        %4661 = vmatprep.mubr.bf16.mxu0 %v2679
        %4662 = vmatmul.mubr.bf16.gmra.mrb[0].mxu0 %v2678
        %v4663 = vpop.f32.mrb[0].mxu0
        %v4664 = vadd.f32 %v4551, %v4663
        %v4665 = vpop.f32.mrb[0].mxu0
        %v4666 = vadd.f32 %v4553, %v4665
        %v4667 = vpop.f32.mrb[0].mxu0
        %v4668 = vadd.f32 %v4555, %v4667
        %v4669 = vpop.f32.mrb[0].mxu0
        %v4670 = vadd.f32 %v4557, %v4669
        %4671 = vmatprep.mubr.bf16.mxu0 %v2685
        %4672 = vmatmul.mubr.bf16.gmra.mrb[0].mxu0 %v2684
        %v4673 = vpop.f32.mrb[0].mxu0
        %v4674 = vadd.f32 %v4561, %v4673
        %v4675 = vpop.f32.mrb[0].mxu0
        %v4676 = vadd.f32 %v4563, %v4675
        %v4677 = vpop.f32.mrb[0].mxu0
        %v4678 = vadd.f32 %v4565, %v4677
        %v4679 = vpop.f32.mrb[0].mxu0
        %v4680 = vadd.f32 %v4567, %v4679
        %4681 = vmatprep.mubr.bf16.mxu0 %v2691
        %4682 = vmatmul.mubr.bf16.gmra.mrb[0].mxu0 %v2690
        %v4683 = vpop.f32.mrb[0].mxu0
        %v4684 = vadd.f32 %v4571, %v4683
        %v4685 = vpop.f32.mrb[0].mxu0
        %v4686 = vadd.f32 %v4573, %v4685
        %v4687 = vpop.f32.mrb[0].mxu0
        %v4688 = vadd.f32 %v4575, %v4687
        %v4689 = vpop.f32.mrb[0].mxu0
        %v4690 = vadd.f32 %v4577, %v4689
        %4691 = vmatprep.mubr.bf16.mxu0 %v2697
        %4692 = vmatmul.mubr.bf16.gmra.mrb[0].mxu0 %v2696
        %v4693 = vpop.f32.mrb[0].mxu0
        %v4694 = vadd.f32 %v4581, %v4693
        %v4695 = vpop.f32.mrb[0].mxu0
        %v4696 = vadd.f32 %v4583, %v4695
        %v4697 = vpop.f32.mrb[0].mxu0
        %v4698 = vadd.f32 %v4585, %v4697
        %v4699 = vpop.f32.mrb[0].mxu0
        %v4700 = vadd.f32 %v4587, %v4699
        %4701 = vmatprep.mubr.bf16.mxu0 %v2703
        %4702 = vmatmul.mubr.bf16.gmra.mrb[0].mxu0 %v2702
        %v4703 = vpop.f32.mrb[0].mxu0
        %v4704 = vadd.f32 %v4591, %v4703
        %v4705 = vpop.f32.mrb[0].mxu0
        %v4706 = vadd.f32 %v4593, %v4705
        %v4707 = vpop.f32.mrb[0].mxu0
        %v4708 = vadd.f32 %v4595, %v4707
        %v4709 = vpop.f32.mrb[0].mxu0
        %v4710 = vadd.f32 %v4597, %v4709
        %4711 = vmatprep.mubr.bf16.mxu0 %v2709
        %4712 = vmatmul.mubr.bf16.gmra.mrb[0].mxu0 %v2708
        %v4713 = vpop.f32.mrb[0].mxu0
        %v4714 = vadd.f32 %v4601, %v4713
        %v4715 = vpop.f32.mrb[0].mxu0
        %v4716 = vadd.f32 %v4603, %v4715
        %v4717 = vpop.f32.mrb[0].mxu0
        %v4718 = vadd.f32 %v4605, %v4717
        %v4719 = vpop.f32.mrb[0].mxu0
        %v4720 = vadd.f32 %v4607, %v4719
        %4721 = vdwg.mxu0
        %4722 = vmatprep.subr.bf16.mxu0 %v4113
        %4723 = vmatpush1.bf16.msra.mxu0 %v4112
        %4724 = vmatprep.subr.bf16.mxu0 %v4119
        %4725 = vmatpush1.bf16.msra.mxu0 %v4118
        %4726 = vmatprep.subr.bf16.mxu0 %v4125
        %4727 = vmatpush1.bf16.msra.mxu0 %v4124
        %4728 = vmatprep.subr.bf16.mxu0 %v4131
        %4729 = vmatpush1.bf16.msra.mxu0 %v4130
        %4730 = vmatprep.subr.bf16.mxu0 %v4137
        %4731 = vmatpush1.bf16.msra.mxu0 %v4136
        %4732 = vmatprep.subr.bf16.mxu0 %v4143
        %4733 = vmatpush1.bf16.msra.mxu0 %v4142
        %4734 = vmatprep.subr.bf16.mxu0 %v4149
        %4735 = vmatpush1.bf16.msra.mxu0 %v4148
        %4736 = vmatprep.subr.bf16.mxu0 %v4155
        %4737 = vmatpush1.bf16.msra.mxu0 %v4154
        %4738 = vmatprep.subr.bf16.mxu0 %v4161
        %4739 = vmatpush1.bf16.msra.mxu0 %v4160
        %4740 = vmatprep.subr.bf16.mxu0 %v4167
        %4741 = vmatpush1.bf16.msra.mxu0 %v4166
        %4742 = vmatprep.subr.bf16.mxu0 %v4173
        %4743 = vmatpush1.bf16.msra.mxu0 %v4172
        %4744 = vmatprep.subr.bf16.mxu0 %v4179
        %4745 = vmatpush1.bf16.msra.mxu0 %v4178
        %4746 = vmatprep.subr.bf16.mxu0 %v4185
        %4747 = vmatpush1.bf16.msra.mxu0 %v4184
        %4748 = vmatprep.subr.bf16.mxu0 %v4191
        %4749 = vmatpush1.bf16.msra.mxu0 %v4190
        %4750 = vmatprep.subr.bf16.mxu0 %v4197
        %4751 = vmatpush1.bf16.msra.mxu0 %v4196
        %4752 = vmatprep.subr.bf16.mxu0 %v4203
        %4753 = vmatpush1.bf16.msra.mxu0 %v4202
        %4754 = vmatprep.mubr.bf16.mxu0 %v2669
        %4755 = vmatmul.mubr.bf16.gmra.mrb[0].mxu0 %v2668
        %v4756 = vpop.f32.mrb[0].mxu0
        %v4757 = vadd.f32 %v4644, %v4756
        %v4758 = vpop.f32.mrb[0].mxu0
        %v4759 = vadd.f32 %v4646, %v4758
        %v4760 = vpop.f32.mrb[0].mxu0
        %v4761 = vadd.f32 %v4648, %v4760
        %v4762 = vpop.f32.mrb[0].mxu0
        %v4763 = vadd.f32 %v4650, %v4762
        %4764 = vmatprep.mubr.bf16.mxu0 %v2675
        %4765 = vmatmul.mubr.bf16.gmra.mrb[0].mxu0 %v2674
        %v4766 = vpop.f32.mrb[0].mxu0
        %v4767 = vadd.f32 %v4654, %v4766
        %v4768 = vpop.f32.mrb[0].mxu0
        %v4769 = vadd.f32 %v4656, %v4768
        %v4770 = vpop.f32.mrb[0].mxu0
        %v4771 = vadd.f32 %v4658, %v4770
        %v4772 = vpop.f32.mrb[0].mxu0
        %v4773 = vadd.f32 %v4660, %v4772
        %4774 = vmatprep.mubr.bf16.mxu0 %v2681
        %4775 = vmatmul.mubr.bf16.gmra.mrb[0].mxu0 %v2680
        %v4776 = vpop.f32.mrb[0].mxu0
        %v4777 = vadd.f32 %v4664, %v4776
        %v4778 = vpop.f32.mrb[0].mxu0
        %v4779 = vadd.f32 %v4666, %v4778
        %v4780 = vpop.f32.mrb[0].mxu0
        %v4781 = vadd.f32 %v4668, %v4780
        %v4782 = vpop.f32.mrb[0].mxu0
        %v4783 = vadd.f32 %v4670, %v4782
        %4784 = vmatprep.mubr.bf16.mxu0 %v2687
        %4785 = vmatmul.mubr.bf16.gmra.mrb[0].mxu0 %v2686
        %v4786 = vpop.f32.mrb[0].mxu0
        %v4787 = vadd.f32 %v4674, %v4786
        %v4788 = vpop.f32.mrb[0].mxu0
        %v4789 = vadd.f32 %v4676, %v4788
        %v4790 = vpop.f32.mrb[0].mxu0
        %v4791 = vadd.f32 %v4678, %v4790
        %v4792 = vpop.f32.mrb[0].mxu0
        %v4793 = vadd.f32 %v4680, %v4792
        %4794 = vmatprep.mubr.bf16.mxu0 %v2693
        %4795 = vmatmul.mubr.bf16.gmra.mrb[0].mxu0 %v2692
        %v4796 = vpop.f32.mrb[0].mxu0
        %v4797 = vadd.f32 %v4684, %v4796
        %v4798 = vpop.f32.mrb[0].mxu0
        %v4799 = vadd.f32 %v4686, %v4798
        %v4800 = vpop.f32.mrb[0].mxu0
        %v4801 = vadd.f32 %v4688, %v4800
        %v4802 = vpop.f32.mrb[0].mxu0
        %v4803 = vadd.f32 %v4690, %v4802
        %4804 = vmatprep.mubr.bf16.mxu0 %v2699
        %4805 = vmatmul.mubr.bf16.gmra.mrb[0].mxu0 %v2698
        %v4806 = vpop.f32.mrb[0].mxu0
        %v4807 = vadd.f32 %v4694, %v4806
        %v4808 = vpop.f32.mrb[0].mxu0
        %v4809 = vadd.f32 %v4696, %v4808
        %v4810 = vpop.f32.mrb[0].mxu0
        %v4811 = vadd.f32 %v4698, %v4810
        %v4812 = vpop.f32.mrb[0].mxu0
        %v4813 = vadd.f32 %v4700, %v4812
        %4814 = vmatprep.mubr.bf16.mxu0 %v2705
        %4815 = vmatmul.mubr.bf16.gmra.mrb[0].mxu0 %v2704
        %v4816 = vpop.f32.mrb[0].mxu0
        %v4817 = vadd.f32 %v4704, %v4816
        %v4818 = vpop.f32.mrb[0].mxu0
        %v4819 = vadd.f32 %v4706, %v4818
        %v4820 = vpop.f32.mrb[0].mxu0
        %v4821 = vadd.f32 %v4708, %v4820
        %v4822 = vpop.f32.mrb[0].mxu0
        %v4823 = vadd.f32 %v4710, %v4822
        %4824 = vmatprep.mubr.bf16.mxu0 %v2711
        %4825 = vmatmul.mubr.bf16.gmra.mrb[0].mxu0 %v2710
        %v4826 = vpop.f32.mrb[0].mxu0
        %v4827 = vadd.f32 %v4714, %v4826
        %v4828 = vpop.f32.mrb[0].mxu0
        %v4829 = vadd.f32 %v4716, %v4828
        %v4830 = vpop.f32.mrb[0].mxu0
        %v4831 = vadd.f32 %v4718, %v4830
        %v4832 = vpop.f32.mrb[0].mxu0
        %v4833 = vadd.f32 %v4720, %v4832
        %4834 = vdwg.mxu0
        %4835 = vmatprep.subr.bf16.mxu0 %v3923
        %4836 = vmatpush1.bf16.msra.mxu0 %v3922
        %4837 = vmatprep.subr.bf16.mxu0 %v3929
        %4838 = vmatpush1.bf16.msra.mxu0 %v3928
        %4839 = vmatprep.subr.bf16.mxu0 %v3935
        %4840 = vmatpush1.bf16.msra.mxu0 %v3934
        %4841 = vmatprep.subr.bf16.mxu0 %v3941
        %4842 = vmatpush1.bf16.msra.mxu0 %v3940
        %4843 = vmatprep.subr.bf16.mxu0 %v3947
        %4844 = vmatpush1.bf16.msra.mxu0 %v3946
        %4845 = vmatprep.subr.bf16.mxu0 %v3953
        %4846 = vmatpush1.bf16.msra.mxu0 %v3952
        %4847 = vmatprep.subr.bf16.mxu0 %v3959
        %4848 = vmatpush1.bf16.msra.mxu0 %v3958
        %4849 = vmatprep.subr.bf16.mxu0 %v3965
        %4850 = vmatpush1.bf16.msra.mxu0 %v3964
        %4851 = vmatprep.subr.bf16.mxu0 %v3971
        %4852 = vmatpush1.bf16.msra.mxu0 %v3970
        %4853 = vmatprep.subr.bf16.mxu0 %v3977
        %4854 = vmatpush1.bf16.msra.mxu0 %v3976
        %4855 = vmatprep.subr.bf16.mxu0 %v3983
        %4856 = vmatpush1.bf16.msra.mxu0 %v3982
        %4857 = vmatprep.subr.bf16.mxu0 %v3989
        %4858 = vmatpush1.bf16.msra.mxu0 %v3988
        %4859 = vmatprep.subr.bf16.mxu0 %v3995
        %4860 = vmatpush1.bf16.msra.mxu0 %v3994
        %4861 = vmatprep.subr.bf16.mxu0 %v4001
        %4862 = vmatpush1.bf16.msra.mxu0 %v4000
        %4863 = vmatprep.subr.bf16.mxu0 %v4007
        %4864 = vmatpush1.bf16.msra.mxu0 %v4006
        %4865 = vmatprep.subr.bf16.mxu0 %v4013
        %4866 = vmatpush1.bf16.msra.mxu0 %v4012
        %4867 = vmatprep.mubr.bf16.mxu0 %v2665
        %4868 = vmatmul.mubr.bf16.gmra.mrb[0].mxu0 %v2664
        %v4869 = vpop.f32.mrb[0].mxu0
        %v4870 = vadd.f32 %v3043, %v4869
        %v4871 = vpop.f32.mrb[0].mxu0
        %v4872 = vadd.f32 %v3047, %v4871
        %v4873 = vpop.f32.mrb[0].mxu0
        %v4874 = vadd.f32 %v3043, %v4873
        %v4875 = vpop.f32.mrb[0].mxu0
        %v4876 = vadd.f32 %v3047, %v4875
        %4877 = vmatprep.mubr.bf16.mxu0 %v2671
        %4878 = vmatmul.mubr.bf16.gmra.mrb[0].mxu0 %v2670
        %v4879 = vpop.f32.mrb[0].mxu0
        %v4880 = vadd.f32 %v3043, %v4879
        %v4881 = vpop.f32.mrb[0].mxu0
        %v4882 = vadd.f32 %v3047, %v4881
        %v4883 = vpop.f32.mrb[0].mxu0
        %v4884 = vadd.f32 %v3043, %v4883
        %v4885 = vpop.f32.mrb[0].mxu0
        %v4886 = vadd.f32 %v3047, %v4885
        %4887 = vmatprep.mubr.bf16.mxu0 %v2677
        %4888 = vmatmul.mubr.bf16.gmra.mrb[0].mxu0 %v2676
        %v4889 = vpop.f32.mrb[0].mxu0
        %v4890 = vadd.f32 %v3043, %v4889
        %v4891 = vpop.f32.mrb[0].mxu0
        %v4892 = vadd.f32 %v3047, %v4891
        %v4893 = vpop.f32.mrb[0].mxu0
        %v4894 = vadd.f32 %v3043, %v4893
        %v4895 = vpop.f32.mrb[0].mxu0
        %v4896 = vadd.f32 %v3047, %v4895
        %4897 = vmatprep.mubr.bf16.mxu0 %v2683
        %4898 = vmatmul.mubr.bf16.gmra.mrb[0].mxu0 %v2682
        %v4899 = vpop.f32.mrb[0].mxu0
        %v4900 = vadd.f32 %v3043, %v4899
        %v4901 = vpop.f32.mrb[0].mxu0
        %v4902 = vadd.f32 %v3047, %v4901
        %v4903 = vpop.f32.mrb[0].mxu0
        %v4904 = vadd.f32 %v3043, %v4903
        %v4905 = vpop.f32.mrb[0].mxu0
        %v4906 = vadd.f32 %v3047, %v4905
        %4907 = vmatprep.mubr.bf16.mxu0 %v2689
        %4908 = vmatmul.mubr.bf16.gmra.mrb[0].mxu0 %v2688
        %v4909 = vpop.f32.mrb[0].mxu0
        %v4910 = vadd.f32 %v3043, %v4909
        %v4911 = vpop.f32.mrb[0].mxu0
        %v4912 = vadd.f32 %v3047, %v4911
        %v4913 = vpop.f32.mrb[0].mxu0
        %v4914 = vadd.f32 %v3043, %v4913
        %v4915 = vpop.f32.mrb[0].mxu0
        %v4916 = vadd.f32 %v3047, %v4915
        %4917 = vmatprep.mubr.bf16.mxu0 %v2695
        %4918 = vmatmul.mubr.bf16.gmra.mrb[0].mxu0 %v2694
        %v4919 = vpop.f32.mrb[0].mxu0
        %v4920 = vadd.f32 %v3043, %v4919
        %v4921 = vpop.f32.mrb[0].mxu0
        %v4922 = vadd.f32 %v3047, %v4921
        %v4923 = vpop.f32.mrb[0].mxu0
        %v4924 = vadd.f32 %v3043, %v4923
        %v4925 = vpop.f32.mrb[0].mxu0
        %v4926 = vadd.f32 %v3047, %v4925
        %4927 = vmatprep.mubr.bf16.mxu0 %v2701
        %4928 = vmatmul.mubr.bf16.gmra.mrb[0].mxu0 %v2700
        %v4929 = vpop.f32.mrb[0].mxu0
        %v4930 = vadd.f32 %v3043, %v4929
        %v4931 = vpop.f32.mrb[0].mxu0
        %v4932 = vadd.f32 %v3047, %v4931
        %v4933 = vpop.f32.mrb[0].mxu0
        %v4934 = vadd.f32 %v3043, %v4933
        %v4935 = vpop.f32.mrb[0].mxu0
        %v4936 = vadd.f32 %v3047, %v4935
        %4937 = vmatprep.mubr.bf16.mxu0 %v2707
        %4938 = vmatmul.mubr.bf16.gmra.mrb[0].mxu0 %v2706
        %v4939 = vpop.f32.mrb[0].mxu0
        %v4940 = vadd.f32 %v3043, %v4939
        %v4941 = vpop.f32.mrb[0].mxu0
        %v4942 = vadd.f32 %v3047, %v4941
        %v4943 = vpop.f32.mrb[0].mxu0
        %v4944 = vadd.f32 %v3043, %v4943
        %v4945 = vpop.f32.mrb[0].mxu0
        %v4946 = vadd.f32 %v3047, %v4945
        %4947 = vdwg.mxu0
        %4948 = vmatprep.subr.bf16.mxu0 %v4019
        %4949 = vmatpush1.bf16.msra.mxu0 %v4018
        %4950 = vmatprep.subr.bf16.mxu0 %v4025
        %4951 = vmatpush1.bf16.msra.mxu0 %v4024
        %4952 = vmatprep.subr.bf16.mxu0 %v4031
        %4953 = vmatpush1.bf16.msra.mxu0 %v4030
        %4954 = vmatprep.subr.bf16.mxu0 %v4037
        %4955 = vmatpush1.bf16.msra.mxu0 %v4036
        %4956 = vmatprep.subr.bf16.mxu0 %v4043
        %4957 = vmatpush1.bf16.msra.mxu0 %v4042
        %4958 = vmatprep.subr.bf16.mxu0 %v4049
        %4959 = vmatpush1.bf16.msra.mxu0 %v4048
        %4960 = vmatprep.subr.bf16.mxu0 %v4055
        %4961 = vmatpush1.bf16.msra.mxu0 %v4054
        %4962 = vmatprep.subr.bf16.mxu0 %v4061
        %4963 = vmatpush1.bf16.msra.mxu0 %v4060
        %4964 = vmatprep.subr.bf16.mxu0 %v4067
        %4965 = vmatpush1.bf16.msra.mxu0 %v4066
        %4966 = vmatprep.subr.bf16.mxu0 %v4073
        %4967 = vmatpush1.bf16.msra.mxu0 %v4072
        %4968 = vmatprep.subr.bf16.mxu0 %v4079
        %4969 = vmatpush1.bf16.msra.mxu0 %v4078
        %4970 = vmatprep.subr.bf16.mxu0 %v4085
        %4971 = vmatpush1.bf16.msra.mxu0 %v4084
        %4972 = vmatprep.subr.bf16.mxu0 %v4091
        %4973 = vmatpush1.bf16.msra.mxu0 %v4090
        %4974 = vmatprep.subr.bf16.mxu0 %v4097
        %4975 = vmatpush1.bf16.msra.mxu0 %v4096
        %4976 = vmatprep.subr.bf16.mxu0 %v4103
        %4977 = vmatpush1.bf16.msra.mxu0 %v4102
        %4978 = vmatprep.subr.bf16.mxu0 %v4109
        %4979 = vmatpush1.bf16.msra.mxu0 %v4108
        %4980 = vmatprep.mubr.bf16.mxu0 %v2667
        %4981 = vmatmul.mubr.bf16.gmra.mrb[0].mxu0 %v2666
        %v4982 = vpop.f32.mrb[0].mxu0
        %v4983 = vadd.f32 %v4870, %v4982
        %v4984 = vpop.f32.mrb[0].mxu0
        %v4985 = vadd.f32 %v4872, %v4984
        %v4986 = vpop.f32.mrb[0].mxu0
        %v4987 = vadd.f32 %v4874, %v4986
        %v4988 = vpop.f32.mrb[0].mxu0
        %v4989 = vadd.f32 %v4876, %v4988
        %4990 = vmatprep.mubr.bf16.mxu0 %v2673
        %4991 = vmatmul.mubr.bf16.gmra.mrb[0].mxu0 %v2672
        %v4992 = vpop.f32.mrb[0].mxu0
        %v4993 = vadd.f32 %v4880, %v4992
        %v4994 = vpop.f32.mrb[0].mxu0
        %v4995 = vadd.f32 %v4882, %v4994
        %v4996 = vpop.f32.mrb[0].mxu0
        %v4997 = vadd.f32 %v4884, %v4996
        %v4998 = vpop.f32.mrb[0].mxu0
        %v4999 = vadd.f32 %v4886, %v4998
        %5000 = vmatprep.mubr.bf16.mxu0 %v2679
        %5001 = vmatmul.mubr.bf16.gmra.mrb[0].mxu0 %v2678
        %v5002 = vpop.f32.mrb[0].mxu0
        %v5003 = vadd.f32 %v4890, %v5002
        %v5004 = vpop.f32.mrb[0].mxu0
        %v5005 = vadd.f32 %v4892, %v5004
        %v5006 = vpop.f32.mrb[0].mxu0
        %v5007 = vadd.f32 %v4894, %v5006
        %v5008 = vpop.f32.mrb[0].mxu0
        %v5009 = vadd.f32 %v4896, %v5008
        %5010 = vmatprep.mubr.bf16.mxu0 %v2685
        %5011 = vmatmul.mubr.bf16.gmra.mrb[0].mxu0 %v2684
        %v5012 = vpop.f32.mrb[0].mxu0
        %v5013 = vadd.f32 %v4900, %v5012
        %v5014 = vpop.f32.mrb[0].mxu0
        %v5015 = vadd.f32 %v4902, %v5014
        %v5016 = vpop.f32.mrb[0].mxu0
        %v5017 = vadd.f32 %v4904, %v5016
        %v5018 = vpop.f32.mrb[0].mxu0
        %v5019 = vadd.f32 %v4906, %v5018
        %5020 = vmatprep.mubr.bf16.mxu0 %v2691
        %5021 = vmatmul.mubr.bf16.gmra.mrb[0].mxu0 %v2690
        %v5022 = vpop.f32.mrb[0].mxu0
        %v5023 = vadd.f32 %v4910, %v5022
        %v5024 = vpop.f32.mrb[0].mxu0
        %v5025 = vadd.f32 %v4912, %v5024
        %v5026 = vpop.f32.mrb[0].mxu0
        %v5027 = vadd.f32 %v4914, %v5026
        %v5028 = vpop.f32.mrb[0].mxu0
        %v5029 = vadd.f32 %v4916, %v5028
        %5030 = vmatprep.mubr.bf16.mxu0 %v2697
        %5031 = vmatmul.mubr.bf16.gmra.mrb[0].mxu0 %v2696
        %v5032 = vpop.f32.mrb[0].mxu0
        %v5033 = vadd.f32 %v4920, %v5032
        %v5034 = vpop.f32.mrb[0].mxu0
        %v5035 = vadd.f32 %v4922, %v5034
        %v5036 = vpop.f32.mrb[0].mxu0
        %v5037 = vadd.f32 %v4924, %v5036
        %v5038 = vpop.f32.mrb[0].mxu0
        %v5039 = vadd.f32 %v4926, %v5038
        %5040 = vmatprep.mubr.bf16.mxu0 %v2703
        %5041 = vmatmul.mubr.bf16.gmra.mrb[0].mxu0 %v2702
        %v5042 = vpop.f32.mrb[0].mxu0
        %v5043 = vadd.f32 %v4930, %v5042
        %v5044 = vpop.f32.mrb[0].mxu0
        %v5045 = vadd.f32 %v4932, %v5044
        %v5046 = vpop.f32.mrb[0].mxu0
        %v5047 = vadd.f32 %v4934, %v5046
        %v5048 = vpop.f32.mrb[0].mxu0
        %v5049 = vadd.f32 %v4936, %v5048
        %5050 = vmatprep.mubr.bf16.mxu0 %v2709
        %5051 = vmatmul.mubr.bf16.gmra.mrb[0].mxu0 %v2708
        %v5052 = vpop.f32.mrb[0].mxu0
        %v5053 = vadd.f32 %v4940, %v5052
        %v5054 = vpop.f32.mrb[0].mxu0
        %v5055 = vadd.f32 %v4942, %v5054
        %v5056 = vpop.f32.mrb[0].mxu0
        %v5057 = vadd.f32 %v4944, %v5056
        %v5058 = vpop.f32.mrb[0].mxu0
        %v5059 = vadd.f32 %v4946, %v5058
        %5060 = vdwg.mxu0
        %5061 = vmatprep.subr.bf16.mxu0 %v4115
        %5062 = vmatpush1.bf16.msra.mxu0 %v4114
        %5063 = vmatprep.subr.bf16.mxu0 %v4121
        %5064 = vmatpush1.bf16.msra.mxu0 %v4120
        %5065 = vmatprep.subr.bf16.mxu0 %v4127
        %5066 = vmatpush1.bf16.msra.mxu0 %v4126
        %5067 = vmatprep.subr.bf16.mxu0 %v4133
        %5068 = vmatpush1.bf16.msra.mxu0 %v4132
        %5069 = vmatprep.subr.bf16.mxu0 %v4139
        %5070 = vmatpush1.bf16.msra.mxu0 %v4138
        %5071 = vmatprep.subr.bf16.mxu0 %v4145
        %5072 = vmatpush1.bf16.msra.mxu0 %v4144
        %5073 = vmatprep.subr.bf16.mxu0 %v4151
        %5074 = vmatpush1.bf16.msra.mxu0 %v4150
        %5075 = vmatprep.subr.bf16.mxu0 %v4157
        %5076 = vmatpush1.bf16.msra.mxu0 %v4156
        %5077 = vmatprep.subr.bf16.mxu0 %v4163
        %5078 = vmatpush1.bf16.msra.mxu0 %v4162
        %5079 = vmatprep.subr.bf16.mxu0 %v4169
        %5080 = vmatpush1.bf16.msra.mxu0 %v4168
        %5081 = vmatprep.subr.bf16.mxu0 %v4175
        %5082 = vmatpush1.bf16.msra.mxu0 %v4174
        %5083 = vmatprep.subr.bf16.mxu0 %v4181
        %5084 = vmatpush1.bf16.msra.mxu0 %v4180
        %5085 = vmatprep.subr.bf16.mxu0 %v4187
        %5086 = vmatpush1.bf16.msra.mxu0 %v4186
        %5087 = vmatprep.subr.bf16.mxu0 %v4193
        %5088 = vmatpush1.bf16.msra.mxu0 %v4192
        %5089 = vmatprep.subr.bf16.mxu0 %v4199
        %5090 = vmatpush1.bf16.msra.mxu0 %v4198
        %5091 = vmatprep.subr.bf16.mxu0 %v4205
        %5092 = vmatpush1.bf16.msra.mxu0 %v4204
        %5093 = vmatprep.mubr.bf16.mxu0 %v2669
        %5094 = vmatmul.mubr.bf16.gmra.mrb[0].mxu0 %v2668
        %v5095 = vpop.f32.mrb[0].mxu0
        %v5096 = vadd.f32 %v4983, %v5095
        %v5097 = vpop.f32.mrb[0].mxu0
        %v5098 = vadd.f32 %v4985, %v5097
        %v5099 = vpop.f32.mrb[0].mxu0
        %v5100 = vadd.f32 %v4987, %v5099
        %v5101 = vpop.f32.mrb[0].mxu0
        %v5102 = vadd.f32 %v4989, %v5101
        %5103 = vmatprep.mubr.bf16.mxu0 %v2675
        %5104 = vmatmul.mubr.bf16.gmra.mrb[0].mxu0 %v2674
        %v5105 = vpop.f32.mrb[0].mxu0
        %v5106 = vadd.f32 %v4993, %v5105
        %v5107 = vpop.f32.mrb[0].mxu0
        %v5108 = vadd.f32 %v4995, %v5107
        %v5109 = vpop.f32.mrb[0].mxu0
        %v5110 = vadd.f32 %v4997, %v5109
        %v5111 = vpop.f32.mrb[0].mxu0
        %v5112 = vadd.f32 %v4999, %v5111
        %5113 = vmatprep.mubr.bf16.mxu0 %v2681
        %5114 = vmatmul.mubr.bf16.gmra.mrb[0].mxu0 %v2680
        %v5115 = vpop.f32.mrb[0].mxu0
        %v5116 = vadd.f32 %v5003, %v5115
        %v5117 = vpop.f32.mrb[0].mxu0
        %v5118 = vadd.f32 %v5005, %v5117
        %v5119 = vpop.f32.mrb[0].mxu0
        %v5120 = vadd.f32 %v5007, %v5119
        %v5121 = vpop.f32.mrb[0].mxu0
        %v5122 = vadd.f32 %v5009, %v5121
        %5123 = vmatprep.mubr.bf16.mxu0 %v2687
        %5124 = vmatmul.mubr.bf16.gmra.mrb[0].mxu0 %v2686
        %v5125 = vpop.f32.mrb[0].mxu0
        %v5126 = vadd.f32 %v5013, %v5125
        %v5127 = vpop.f32.mrb[0].mxu0
        %v5128 = vadd.f32 %v5015, %v5127
        %v5129 = vpop.f32.mrb[0].mxu0
        %v5130 = vadd.f32 %v5017, %v5129
        %v5131 = vpop.f32.mrb[0].mxu0
        %v5132 = vadd.f32 %v5019, %v5131
        %5133 = vmatprep.mubr.bf16.mxu0 %v2693
        %5134 = vmatmul.mubr.bf16.gmra.mrb[0].mxu0 %v2692
        %v5135 = vpop.f32.mrb[0].mxu0
        %v5136 = vadd.f32 %v5023, %v5135
        %v5137 = vpop.f32.mrb[0].mxu0
        %v5138 = vadd.f32 %v5025, %v5137
        %v5139 = vpop.f32.mrb[0].mxu0
        %v5140 = vadd.f32 %v5027, %v5139
        %v5141 = vpop.f32.mrb[0].mxu0
        %v5142 = vadd.f32 %v5029, %v5141
        %5143 = vmatprep.mubr.bf16.mxu0 %v2699
        %5144 = vmatmul.mubr.bf16.gmra.mrb[0].mxu0 %v2698
        %v5145 = vpop.f32.mrb[0].mxu0
        %v5146 = vadd.f32 %v5033, %v5145
        %v5147 = vpop.f32.mrb[0].mxu0
        %v5148 = vadd.f32 %v5035, %v5147
        %v5149 = vpop.f32.mrb[0].mxu0
        %v5150 = vadd.f32 %v5037, %v5149
        %v5151 = vpop.f32.mrb[0].mxu0
        %v5152 = vadd.f32 %v5039, %v5151
        %5153 = vmatprep.mubr.bf16.mxu0 %v2705
        %5154 = vmatmul.mubr.bf16.gmra.mrb[0].mxu0 %v2704
        %v5155 = vpop.f32.mrb[0].mxu0
        %v5156 = vadd.f32 %v5043, %v5155
        %v5157 = vpop.f32.mrb[0].mxu0
        %v5158 = vadd.f32 %v5045, %v5157
        %v5159 = vpop.f32.mrb[0].mxu0
        %v5160 = vadd.f32 %v5047, %v5159
        %v5161 = vpop.f32.mrb[0].mxu0
        %v5162 = vadd.f32 %v5049, %v5161
        %5163 = vmatprep.mubr.bf16.mxu0 %v2711
        %5164 = vmatmul.mubr.bf16.gmra.mrb[0].mxu0 %v2710
        %v5165 = vpop.f32.mrb[0].mxu0
        %v5166 = vadd.f32 %v5053, %v5165
        %v5167 = vpop.f32.mrb[0].mxu0
        %v5168 = vadd.f32 %v5055, %v5167
        %v5169 = vpop.f32.mrb[0].mxu0
        %v5170 = vadd.f32 %v5057, %v5169
        %v5171 = vpop.f32.mrb[0].mxu0
        %v5172 = vadd.f32 %v5059, %v5171
        %5173 = vdwg.mxu0
        %5174 = vmatprep.subr.bf16.mxu0 %v3925
        %5175 = vmatpush1.bf16.msra.mxu0 %v3924
        %5176 = vmatprep.subr.bf16.mxu0 %v3931
        %5177 = vmatpush1.bf16.msra.mxu0 %v3930
        %5178 = vmatprep.subr.bf16.mxu0 %v3937
        %5179 = vmatpush1.bf16.msra.mxu0 %v3936
        %5180 = vmatprep.subr.bf16.mxu0 %v3943
        %5181 = vmatpush1.bf16.msra.mxu0 %v3942
        %5182 = vmatprep.subr.bf16.mxu0 %v3949
        %5183 = vmatpush1.bf16.msra.mxu0 %v3948
        %5184 = vmatprep.subr.bf16.mxu0 %v3955
        %5185 = vmatpush1.bf16.msra.mxu0 %v3954
        %5186 = vmatprep.subr.bf16.mxu0 %v3961
        %5187 = vmatpush1.bf16.msra.mxu0 %v3960
        %5188 = vmatprep.subr.bf16.mxu0 %v3967
        %5189 = vmatpush1.bf16.msra.mxu0 %v3966
        %5190 = vmatprep.subr.bf16.mxu0 %v3973
        %5191 = vmatpush1.bf16.msra.mxu0 %v3972
        %5192 = vmatprep.subr.bf16.mxu0 %v3979
        %5193 = vmatpush1.bf16.msra.mxu0 %v3978
        %5194 = vmatprep.subr.bf16.mxu0 %v3985
        %5195 = vmatpush1.bf16.msra.mxu0 %v3984
        %5196 = vmatprep.subr.bf16.mxu0 %v3991
        %5197 = vmatpush1.bf16.msra.mxu0 %v3990
        %5198 = vmatprep.subr.bf16.mxu0 %v3997
        %5199 = vmatpush1.bf16.msra.mxu0 %v3996
        %5200 = vmatprep.subr.bf16.mxu0 %v4003
        %5201 = vmatpush1.bf16.msra.mxu0 %v4002
        %5202 = vmatprep.subr.bf16.mxu0 %v4009
        %5203 = vmatpush1.bf16.msra.mxu0 %v4008
        %5204 = vmatprep.subr.bf16.mxu0 %v4015
        %5205 = vmatpush1.bf16.msra.mxu0 %v4014
        %5206 = vmatprep.mubr.bf16.mxu0 %v2665
        %5207 = vmatmul.mubr.bf16.gmra.mrb[0].mxu0 %v2664
        %v5208 = vpop.f32.mrb[0].mxu0
        %v5209 = vadd.f32 %v3051, %v5208
        %v5210 = vpop.f32.mrb[0].mxu0
        %v5211 = vadd.f32 %v3055, %v5210
        %v5212 = vpop.f32.mrb[0].mxu0
        %v5213 = vadd.f32 %v3051, %v5212
        %v5214 = vpop.f32.mrb[0].mxu0
        %v5215 = vadd.f32 %v3055, %v5214
        %5216 = vmatprep.mubr.bf16.mxu0 %v2671
        %5217 = vmatmul.mubr.bf16.gmra.mrb[0].mxu0 %v2670
        %v5218 = vpop.f32.mrb[0].mxu0
        %v5219 = vadd.f32 %v3051, %v5218
        %v5220 = vpop.f32.mrb[0].mxu0
        %v5221 = vadd.f32 %v3055, %v5220
        %v5222 = vpop.f32.mrb[0].mxu0
        %v5223 = vadd.f32 %v3051, %v5222
        %v5224 = vpop.f32.mrb[0].mxu0
        %v5225 = vadd.f32 %v3055, %v5224
        %5226 = vmatprep.mubr.bf16.mxu0 %v2677
        %5227 = vmatmul.mubr.bf16.gmra.mrb[0].mxu0 %v2676
        %v5228 = vpop.f32.mrb[0].mxu0
        %v5229 = vadd.f32 %v3051, %v5228
        %v5230 = vpop.f32.mrb[0].mxu0
        %v5231 = vadd.f32 %v3055, %v5230
        %v5232 = vpop.f32.mrb[0].mxu0
        %v5233 = vadd.f32 %v3051, %v5232
        %v5234 = vpop.f32.mrb[0].mxu0
        %v5235 = vadd.f32 %v3055, %v5234
        %5236 = vmatprep.mubr.bf16.mxu0 %v2683
        %5237 = vmatmul.mubr.bf16.gmra.mrb[0].mxu0 %v2682
        %v5238 = vpop.f32.mrb[0].mxu0
        %v5239 = vadd.f32 %v3051, %v5238
        %v5240 = vpop.f32.mrb[0].mxu0
        %v5241 = vadd.f32 %v3055, %v5240
        %v5242 = vpop.f32.mrb[0].mxu0
        %v5243 = vadd.f32 %v3051, %v5242
        %v5244 = vpop.f32.mrb[0].mxu0
        %v5245 = vadd.f32 %v3055, %v5244
        %5246 = vmatprep.mubr.bf16.mxu0 %v2689
        %5247 = vmatmul.mubr.bf16.gmra.mrb[0].mxu0 %v2688
        %v5248 = vpop.f32.mrb[0].mxu0
        %v5249 = vadd.f32 %v3051, %v5248
        %v5250 = vpop.f32.mrb[0].mxu0
        %v5251 = vadd.f32 %v3055, %v5250
        %v5252 = vpop.f32.mrb[0].mxu0
        %v5253 = vadd.f32 %v3051, %v5252
        %v5254 = vpop.f32.mrb[0].mxu0
        %v5255 = vadd.f32 %v3055, %v5254
        %5256 = vmatprep.mubr.bf16.mxu0 %v2695
        %5257 = vmatmul.mubr.bf16.gmra.mrb[0].mxu0 %v2694
        %v5258 = vpop.f32.mrb[0].mxu0
        %v5259 = vadd.f32 %v3051, %v5258
        %v5260 = vpop.f32.mrb[0].mxu0
        %v5261 = vadd.f32 %v3055, %v5260
        %v5262 = vpop.f32.mrb[0].mxu0
        %v5263 = vadd.f32 %v3051, %v5262
        %v5264 = vpop.f32.mrb[0].mxu0
        %v5265 = vadd.f32 %v3055, %v5264
        %5266 = vmatprep.mubr.bf16.mxu0 %v2701
        %5267 = vmatmul.mubr.bf16.gmra.mrb[0].mxu0 %v2700
        %v5268 = vpop.f32.mrb[0].mxu0
        %v5269 = vadd.f32 %v3051, %v5268
        %v5270 = vpop.f32.mrb[0].mxu0
        %v5271 = vadd.f32 %v3055, %v5270
        %v5272 = vpop.f32.mrb[0].mxu0
        %v5273 = vadd.f32 %v3051, %v5272
        %v5274 = vpop.f32.mrb[0].mxu0
        %v5275 = vadd.f32 %v3055, %v5274
        %5276 = vmatprep.mubr.bf16.mxu0 %v2707
        %5277 = vmatmul.mubr.bf16.gmra.mrb[0].mxu0 %v2706
        %v5278 = vpop.f32.mrb[0].mxu0
        %v5279 = vadd.f32 %v3051, %v5278
        %v5280 = vpop.f32.mrb[0].mxu0
        %v5281 = vadd.f32 %v3055, %v5280
        %v5282 = vpop.f32.mrb[0].mxu0
        %v5283 = vadd.f32 %v3051, %v5282
        %v5284 = vpop.f32.mrb[0].mxu0
        %v5285 = vadd.f32 %v3055, %v5284
        %5286 = vdwg.mxu0
        %5287 = vmatprep.subr.bf16.mxu0 %v4021
        %5288 = vmatpush1.bf16.msra.mxu0 %v4020
        %5289 = vmatprep.subr.bf16.mxu0 %v4027
        %5290 = vmatpush1.bf16.msra.mxu0 %v4026
        %5291 = vmatprep.subr.bf16.mxu0 %v4033
        %5292 = vmatpush1.bf16.msra.mxu0 %v4032
        %5293 = vmatprep.subr.bf16.mxu0 %v4039
        %5294 = vmatpush1.bf16.msra.mxu0 %v4038
        %5295 = vmatprep.subr.bf16.mxu0 %v4045
        %5296 = vmatpush1.bf16.msra.mxu0 %v4044
        %5297 = vmatprep.subr.bf16.mxu0 %v4051
        %5298 = vmatpush1.bf16.msra.mxu0 %v4050
        %5299 = vmatprep.subr.bf16.mxu0 %v4057
        %5300 = vmatpush1.bf16.msra.mxu0 %v4056
        %5301 = vmatprep.subr.bf16.mxu0 %v4063
        %5302 = vmatpush1.bf16.msra.mxu0 %v4062
        %5303 = vmatprep.subr.bf16.mxu0 %v4069
        %5304 = vmatpush1.bf16.msra.mxu0 %v4068
        %5305 = vmatprep.subr.bf16.mxu0 %v4075
        %5306 = vmatpush1.bf16.msra.mxu0 %v4074
        %5307 = vmatprep.subr.bf16.mxu0 %v4081
        %5308 = vmatpush1.bf16.msra.mxu0 %v4080
        %5309 = vmatprep.subr.bf16.mxu0 %v4087
        %5310 = vmatpush1.bf16.msra.mxu0 %v4086
        %5311 = vmatprep.subr.bf16.mxu0 %v4093
        %5312 = vmatpush1.bf16.msra.mxu0 %v4092
        %5313 = vmatprep.subr.bf16.mxu0 %v4099
        %5314 = vmatpush1.bf16.msra.mxu0 %v4098
        %5315 = vmatprep.subr.bf16.mxu0 %v4105
        %5316 = vmatpush1.bf16.msra.mxu0 %v4104
        %5317 = vmatprep.subr.bf16.mxu0 %v4111
        %5318 = vmatpush1.bf16.msra.mxu0 %v4110
        %5319 = vmatprep.mubr.bf16.mxu0 %v2667
        %5320 = vmatmul.mubr.bf16.gmra.mrb[0].mxu0 %v2666
        %v5321 = vpop.f32.mrb[0].mxu0
        %v5322 = vadd.f32 %v5209, %v5321
        %v5323 = vpop.f32.mrb[0].mxu0
        %v5324 = vadd.f32 %v5211, %v5323
        %v5325 = vpop.f32.mrb[0].mxu0
        %v5326 = vadd.f32 %v5213, %v5325
        %v5327 = vpop.f32.mrb[0].mxu0
        %v5328 = vadd.f32 %v5215, %v5327
        %5329 = vmatprep.mubr.bf16.mxu0 %v2673
        %5330 = vmatmul.mubr.bf16.gmra.mrb[0].mxu0 %v2672
        %v5331 = vpop.f32.mrb[0].mxu0
        %v5332 = vadd.f32 %v5219, %v5331
        %v5333 = vpop.f32.mrb[0].mxu0
        %v5334 = vadd.f32 %v5221, %v5333
        %v5335 = vpop.f32.mrb[0].mxu0
        %v5336 = vadd.f32 %v5223, %v5335
        %v5337 = vpop.f32.mrb[0].mxu0
        %v5338 = vadd.f32 %v5225, %v5337
        %5339 = vmatprep.mubr.bf16.mxu0 %v2679
        %5340 = vmatmul.mubr.bf16.gmra.mrb[0].mxu0 %v2678
        %v5341 = vpop.f32.mrb[0].mxu0
        %v5342 = vadd.f32 %v5229, %v5341
        %v5343 = vpop.f32.mrb[0].mxu0
        %v5344 = vadd.f32 %v5231, %v5343
        %v5345 = vpop.f32.mrb[0].mxu0
        %v5346 = vadd.f32 %v5233, %v5345
        %v5347 = vpop.f32.mrb[0].mxu0
        %v5348 = vadd.f32 %v5235, %v5347
        %5349 = vmatprep.mubr.bf16.mxu0 %v2685
        %5350 = vmatmul.mubr.bf16.gmra.mrb[0].mxu0 %v2684
        %v5351 = vpop.f32.mrb[0].mxu0
        %v5352 = vadd.f32 %v5239, %v5351
        %v5353 = vpop.f32.mrb[0].mxu0
        %v5354 = vadd.f32 %v5241, %v5353
        %v5355 = vpop.f32.mrb[0].mxu0
        %v5356 = vadd.f32 %v5243, %v5355
        %v5357 = vpop.f32.mrb[0].mxu0
        %v5358 = vadd.f32 %v5245, %v5357
        %5359 = vmatprep.mubr.bf16.mxu0 %v2691
        %5360 = vmatmul.mubr.bf16.gmra.mrb[0].mxu0 %v2690
        %v5361 = vpop.f32.mrb[0].mxu0
        %v5362 = vadd.f32 %v5249, %v5361
        %v5363 = vpop.f32.mrb[0].mxu0
        %v5364 = vadd.f32 %v5251, %v5363
        %v5365 = vpop.f32.mrb[0].mxu0
        %v5366 = vadd.f32 %v5253, %v5365
        %v5367 = vpop.f32.mrb[0].mxu0
        %v5368 = vadd.f32 %v5255, %v5367
        %5369 = vmatprep.mubr.bf16.mxu0 %v2697
        %5370 = vmatmul.mubr.bf16.gmra.mrb[0].mxu0 %v2696
        %v5371 = vpop.f32.mrb[0].mxu0
        %v5372 = vadd.f32 %v5259, %v5371
        %v5373 = vpop.f32.mrb[0].mxu0
        %v5374 = vadd.f32 %v5261, %v5373
        %v5375 = vpop.f32.mrb[0].mxu0
        %v5376 = vadd.f32 %v5263, %v5375
        %v5377 = vpop.f32.mrb[0].mxu0
        %v5378 = vadd.f32 %v5265, %v5377
        %5379 = vmatprep.mubr.bf16.mxu0 %v2703
        %5380 = vmatmul.mubr.bf16.gmra.mrb[0].mxu0 %v2702
        %v5381 = vpop.f32.mrb[0].mxu0
        %v5382 = vadd.f32 %v5269, %v5381
        %v5383 = vpop.f32.mrb[0].mxu0
        %v5384 = vadd.f32 %v5271, %v5383
        %v5385 = vpop.f32.mrb[0].mxu0
        %v5386 = vadd.f32 %v5273, %v5385
        %v5387 = vpop.f32.mrb[0].mxu0
        %v5388 = vadd.f32 %v5275, %v5387
        %5389 = vmatprep.mubr.bf16.mxu0 %v2709
        %5390 = vmatmul.mubr.bf16.gmra.mrb[0].mxu0 %v2708
        %v5391 = vpop.f32.mrb[0].mxu0
        %v5392 = vadd.f32 %v5279, %v5391
        %v5393 = vpop.f32.mrb[0].mxu0
        %v5394 = vadd.f32 %v5281, %v5393
        %v5395 = vpop.f32.mrb[0].mxu0
        %v5396 = vadd.f32 %v5283, %v5395
        %v5397 = vpop.f32.mrb[0].mxu0
        %v5398 = vadd.f32 %v5285, %v5397
        %5399 = vdwg.mxu0
        %5400 = vmatprep.subr.bf16.mxu0 %v4117
        %5401 = vmatpush1.bf16.msra.mxu0 %v4116
        %5402 = vmatprep.subr.bf16.mxu0 %v4123
        %5403 = vmatpush1.bf16.msra.mxu0 %v4122
        %5404 = vmatprep.subr.bf16.mxu0 %v4129
        %5405 = vmatpush1.bf16.msra.mxu0 %v4128
        %5406 = vmatprep.subr.bf16.mxu0 %v4135
        %5407 = vmatpush1.bf16.msra.mxu0 %v4134
        %5408 = vmatprep.subr.bf16.mxu0 %v4141
        %5409 = vmatpush1.bf16.msra.mxu0 %v4140
        %5410 = vmatprep.subr.bf16.mxu0 %v4147
        %5411 = vmatpush1.bf16.msra.mxu0 %v4146
        %5412 = vmatprep.subr.bf16.mxu0 %v4153
        %5413 = vmatpush1.bf16.msra.mxu0 %v4152
        %5414 = vmatprep.subr.bf16.mxu0 %v4159
        %5415 = vmatpush1.bf16.msra.mxu0 %v4158
        %5416 = vmatprep.subr.bf16.mxu0 %v4165
        %5417 = vmatpush1.bf16.msra.mxu0 %v4164
        %5418 = vmatprep.subr.bf16.mxu0 %v4171
        %5419 = vmatpush1.bf16.msra.mxu0 %v4170
        %5420 = vmatprep.subr.bf16.mxu0 %v4177
        %5421 = vmatpush1.bf16.msra.mxu0 %v4176
        %5422 = vmatprep.subr.bf16.mxu0 %v4183
        %5423 = vmatpush1.bf16.msra.mxu0 %v4182
        %5424 = vmatprep.subr.bf16.mxu0 %v4189
        %5425 = vmatpush1.bf16.msra.mxu0 %v4188
        %5426 = vmatprep.subr.bf16.mxu0 %v4195
        %5427 = vmatpush1.bf16.msra.mxu0 %v4194
        %5428 = vmatprep.subr.bf16.mxu0 %v4201
        %5429 = vmatpush1.bf16.msra.mxu0 %v4200
        %5430 = vmatprep.subr.bf16.mxu0 %v4207
        %5431 = vmatpush1.bf16.msra.mxu0 %v4206
        %5432 = vmatprep.mubr.bf16.mxu0 %v2669
        %5433 = vmatmul.mubr.bf16.gmra.mrb[0].mxu0 %v2668
        %v5434 = vpop.f32.mrb[0].mxu0
        %v5435 = vadd.f32 %v5322, %v5434
        %v5436 = vpop.f32.mrb[0].mxu0
        %v5437 = vadd.f32 %v5324, %v5436
        %v5438 = vpop.f32.mrb[0].mxu0
        %v5439 = vadd.f32 %v5326, %v5438
        %v5440 = vpop.f32.mrb[0].mxu0
        %v5441 = vadd.f32 %v5328, %v5440
        %5442 = vmatprep.mubr.bf16.mxu0 %v2675
        %5443 = vmatmul.mubr.bf16.gmra.mrb[0].mxu0 %v2674
        %v5444 = vpop.f32.mrb[0].mxu0
        %v5445 = vadd.f32 %v5332, %v5444
        %v5446 = vpop.f32.mrb[0].mxu0
        %v5447 = vadd.f32 %v5334, %v5446
        %v5448 = vpop.f32.mrb[0].mxu0
        %v5449 = vadd.f32 %v5336, %v5448
        %v5450 = vpop.f32.mrb[0].mxu0
        %v5451 = vadd.f32 %v5338, %v5450
        %5452 = vmatprep.mubr.bf16.mxu0 %v2681
        %5453 = vmatmul.mubr.bf16.gmra.mrb[0].mxu0 %v2680
        %v5454 = vpop.f32.mrb[0].mxu0
        %v5455 = vadd.f32 %v5342, %v5454
        %v5456 = vpop.f32.mrb[0].mxu0
        %v5457 = vadd.f32 %v5344, %v5456
        %v5458 = vpop.f32.mrb[0].mxu0
        %v5459 = vadd.f32 %v5346, %v5458
        %v5460 = vpop.f32.mrb[0].mxu0
        %v5461 = vadd.f32 %v5348, %v5460
        %5462 = vmatprep.mubr.bf16.mxu0 %v2687
        %5463 = vmatmul.mubr.bf16.gmra.mrb[0].mxu0 %v2686
        %v5464 = vpop.f32.mrb[0].mxu0
        %v5465 = vadd.f32 %v5352, %v5464
        %v5466 = vpop.f32.mrb[0].mxu0
        %v5467 = vadd.f32 %v5354, %v5466
        %v5468 = vpop.f32.mrb[0].mxu0
        %v5469 = vadd.f32 %v5356, %v5468
        %v5470 = vpop.f32.mrb[0].mxu0
        %v5471 = vadd.f32 %v5358, %v5470
        %5472 = vmatprep.mubr.bf16.mxu0 %v2693
        %5473 = vmatmul.mubr.bf16.gmra.mrb[0].mxu0 %v2692
        %v5474 = vpop.f32.mrb[0].mxu0
        %v5475 = vadd.f32 %v5362, %v5474
        %v5476 = vpop.f32.mrb[0].mxu0
        %v5477 = vadd.f32 %v5364, %v5476
        %v5478 = vpop.f32.mrb[0].mxu0
        %v5479 = vadd.f32 %v5366, %v5478
        %v5480 = vpop.f32.mrb[0].mxu0
        %v5481 = vadd.f32 %v5368, %v5480
        %5482 = vmatprep.mubr.bf16.mxu0 %v2699
        %5483 = vmatmul.mubr.bf16.gmra.mrb[0].mxu0 %v2698
        %v5484 = vpop.f32.mrb[0].mxu0
        %v5485 = vadd.f32 %v5372, %v5484
        %v5486 = vpop.f32.mrb[0].mxu0
        %v5487 = vadd.f32 %v5374, %v5486
        %v5488 = vpop.f32.mrb[0].mxu0
        %v5489 = vadd.f32 %v5376, %v5488
        %v5490 = vpop.f32.mrb[0].mxu0
        %v5491 = vadd.f32 %v5378, %v5490
        %5492 = vmatprep.mubr.bf16.mxu0 %v2705
        %5493 = vmatmul.mubr.bf16.gmra.mrb[0].mxu0 %v2704
        %v5494 = vpop.f32.mrb[0].mxu0
        %v5495 = vadd.f32 %v5382, %v5494
        %v5496 = vpop.f32.mrb[0].mxu0
        %v5497 = vadd.f32 %v5384, %v5496
        %v5498 = vpop.f32.mrb[0].mxu0
        %v5499 = vadd.f32 %v5386, %v5498
        %v5500 = vpop.f32.mrb[0].mxu0
        %v5501 = vadd.f32 %v5388, %v5500
        %5502 = vmatprep.mubr.bf16.mxu0 %v2711
        %5503 = vmatmul.mubr.bf16.gmra.mrb[0].mxu0 %v2710
        %v5504 = vpop.f32.mrb[0].mxu0
        %v5505 = vadd.f32 %v5392, %v5504
        %v5506 = vpop.f32.mrb[0].mxu0
        %v5507 = vadd.f32 %v5394, %v5506
        %v5508 = vpop.f32.mrb[0].mxu0
        %v5509 = vadd.f32 %v5396, %v5508
        %v5510 = vpop.f32.mrb[0].mxu0
        %v5511 = vadd.f32 %v5398, %v5510
        %5512 = vdwg.mxu0
        %v5513 = vtanh.pop %v4757
        %v5514 = vtanh.pop %v4759
        %v5515 = vtanh.pop %v5096
        %v5516 = vtanh.pop %v5098
        %v5517 = vtanh.pop %v5435
        %v5518 = vtanh.pop %v5437
        %v5519 = vtanh.pop %v4761
        %v5520 = vtanh.pop %v4763
        %v5521 = vtanh.pop %v5100
        %v5522 = vtanh.pop %v5102
        %v5523 = vtanh.pop %v5439
        %v5524 = vtanh.pop %v5441
        %v5525 = vtanh.pop %v4767
        %v5526 = vtanh.pop %v4769
        %v5527 = vtanh.pop %v5106
        %v5528 = vtanh.pop %v5108
        %v5529 = vtanh.pop %v5445
        %v5530 = vtanh.pop %v5447
        %v5531 = vtanh.pop %v4771
        %v5532 = vtanh.pop %v4773
        %v5533 = vtanh.pop %v5110
        %v5534 = vtanh.pop %v5112
        %v5535 = vtanh.pop %v5449
        %v5536 = vtanh.pop %v5451
        %v5537 = vtanh.pop %v4777
        %v5538 = vtanh.pop %v4779
        %v5539 = vtanh.pop %v5116
        %v5540 = vtanh.pop %v5118
        %v5541 = vtanh.pop %v5455
        %v5542 = vtanh.pop %v5457
        %v5543 = vtanh.pop %v4781
        %v5544 = vtanh.pop %v4783
        %v5545 = vtanh.pop %v5120
        %v5546 = vtanh.pop %v5122
        %v5547 = vtanh.pop %v5459
        %v5548 = vtanh.pop %v5461
        %v5549 = vtanh.pop %v4787
        %v5550 = vtanh.pop %v4789
        %v5551 = vtanh.pop %v5126
        %v5552 = vtanh.pop %v5128
        %v5553 = vtanh.pop %v5465
        %v5554 = vtanh.pop %v5467
        %v5555 = vtanh.pop %v4791
        %v5556 = vtanh.pop %v4793
        %v5557 = vtanh.pop %v5130
        %v5558 = vtanh.pop %v5132
        %v5559 = vtanh.pop %v5469
        %v5560 = vtanh.pop %v5471
        %v5561 = vtanh.pop %v4797
        %v5562 = vtanh.pop %v4799
        %v5563 = vtanh.pop %v5136
        %v5564 = vtanh.pop %v5138
        %v5565 = vtanh.pop %v5475
        %v5566 = vtanh.pop %v5477
        %v5567 = vtanh.pop %v4801
        %v5568 = vtanh.pop %v4803
        %v5569 = vtanh.pop %v5140
        %v5570 = vtanh.pop %v5142
        %v5571 = vtanh.pop %v5479
        %v5572 = vtanh.pop %v5481
        %v5573 = vtanh.pop %v4807
        %v5574 = vtanh.pop %v4809
        %v5575 = vtanh.pop %v5146
        %v5576 = vtanh.pop %v5148
        %v5577 = vtanh.pop %v5485
        %v5578 = vtanh.pop %v5487
        %v5579 = vtanh.pop %v4811
        %v5580 = vtanh.pop %v4813
        %v5581 = vtanh.pop %v5150
        %v5582 = vtanh.pop %v5152
        %v5583 = vtanh.pop %v5489
        %v5584 = vtanh.pop %v5491
        %v5585 = vtanh.pop %v4817
        %v5586 = vtanh.pop %v4819
        %v5587 = vtanh.pop %v5156
        %v5588 = vtanh.pop %v5158
        %v5589 = vtanh.pop %v5495
        %v5590 = vtanh.pop %v5497
        %v5591 = vtanh.pop %v4821
        %v5592 = vtanh.pop %v4823
        %v5593 = vtanh.pop %v5160
        %v5594 = vtanh.pop %v5162
        %v5595 = vtanh.pop %v5499
        %v5596 = vtanh.pop %v5501
        %v5597 = vtanh.pop %v4827
        %v5598 = vtanh.pop %v4829
        %v5599 = vtanh.pop %v5166
        %v5600 = vtanh.pop %v5168
        %v5601 = vtanh.pop %v5505
        %v5602 = vtanh.pop %v5507
        %v5603 = vtanh.pop %v4831
        %v5604 = vtanh.pop %v4833
        %v5605 = vtanh.pop %v5170
        %v5606 = vtanh.pop %v5172
        %v5607 = vtanh.pop %v5509
        %v5608 = vtanh.pop %v5511
        %v5609 = vlaneseq
        %v5610 = vshrl.u32 %v5609, 7
        %v5611 = vsub.s32 1, %v5610
        %v5612 = vrot.slane %v505, %v5611
        %v5613 = vlaneseq
        %v5614 = vshrl.u32 %v5613, 7
        %v5615 = vsub.s32 3, %v5614
        %v5616 = vrot.slane %v505, %v5615
        %v5617 = vlaneseq
        %v5618 = vshrl.u32 %v5617, 7
        %v5619 = vsub.s32 5, %v5618
        %v5620 = vrot.slane %v505, %v5619
        %v5621 = vlaneseq
        %v5622 = vshrl.u32 %v5621, 7
        %v5623 = vsub.s32 7, %v5622
        %v5624 = vrot.slane %v505, %v5623
        %v5625 = vlaneseq
        %v5626 = vshrl.u32 %v5625, 7
        %v5627 = vsub.s32 1, %v5626
        %v5628 = vrot.slane %v506, %v5627
        %v5629 = vlaneseq
        %v5630 = vshrl.u32 %v5629, 7
        %v5631 = vsub.s32 3, %v5630
        %v5632 = vrot.slane %v506, %v5631
        %v5639 = vlaneseq
        %v5640 = vshrl.u32 %v5639, 7
        %v5641 = vsub.s32 1, %v5640
        %v5642 = vrot.slane %v5612, %v5641
        %v5643 = vlaneseq
        %v5644 = vshrl.u32 %v5643, 7
        %v5645 = vsub.s32 1, %v5644
        %v5646 = vrot.slane %v5616, %v5645
        %v5647 = vlaneseq
        %v5648 = vshrl.u32 %v5647, 7
        %v5649 = vsub.s32 1, %v5648
        %v5650 = vrot.slane %v5620, %v5649
        %v5651 = vlaneseq
        %v5652 = vshrl.u32 %v5651, 7
        %v5653 = vsub.s32 1, %v5652
        %v5654 = vrot.slane %v5624, %v5653
        %v5655 = vlaneseq
        %v5656 = vshrl.u32 %v5655, 7
        %v5657 = vsub.s32 1, %v5656
        %v5658 = vrot.slane %v5628, %v5657
        %v5659 = vlaneseq
        %v5660 = vshrl.u32 %v5659, 7
        %v5661 = vsub.s32 1, %v5660
        %v5662 = vrot.slane %v5632, %v5661
        %v5663 = vmul.f32 %v5513, %v5642
        %v5664 = vmul.f32 %v5514, %v5646
        %v5665 = vmul.f32 %v5515, %v5650
        %v5666 = vmul.f32 %v5516, %v5654
        %v5667 = vmul.f32 %v5517, %v5658
        %v5668 = vmul.f32 %v5518, %v5662
        %v5669 = vmul.f32 %v5519, %v5642
        %v5670 = vmul.f32 %v5520, %v5646
        %v5671 = vmul.f32 %v5521, %v5650
        %v5672 = vmul.f32 %v5522, %v5654
        %v5673 = vmul.f32 %v5523, %v5658
        %v5674 = vmul.f32 %v5524, %v5662
        %v5675 = vmul.f32 %v5525, %v5642
        %v5676 = vmul.f32 %v5526, %v5646
        %v5677 = vmul.f32 %v5527, %v5650
        %v5678 = vmul.f32 %v5528, %v5654
        %v5679 = vmul.f32 %v5529, %v5658
        %v5680 = vmul.f32 %v5530, %v5662
        %v5681 = vmul.f32 %v5531, %v5642
        %v5682 = vmul.f32 %v5532, %v5646
        %v5683 = vmul.f32 %v5533, %v5650
        %v5684 = vmul.f32 %v5534, %v5654
        %v5685 = vmul.f32 %v5535, %v5658
        %v5686 = vmul.f32 %v5536, %v5662
        %v5687 = vmul.f32 %v5537, %v5642
        %v5688 = vmul.f32 %v5538, %v5646
        %v5689 = vmul.f32 %v5539, %v5650
        %v5690 = vmul.f32 %v5540, %v5654
        %v5691 = vmul.f32 %v5541, %v5658
        %v5692 = vmul.f32 %v5542, %v5662
        %v5693 = vmul.f32 %v5543, %v5642
        %v5694 = vmul.f32 %v5544, %v5646
        %v5695 = vmul.f32 %v5545, %v5650
        %v5696 = vmul.f32 %v5546, %v5654
        %v5697 = vmul.f32 %v5547, %v5658
        %v5698 = vmul.f32 %v5548, %v5662
        %v5699 = vmul.f32 %v5549, %v5642
        %v5700 = vmul.f32 %v5550, %v5646
        %v5701 = vmul.f32 %v5551, %v5650
        %v5702 = vmul.f32 %v5552, %v5654
        %v5703 = vmul.f32 %v5553, %v5658
        %v5704 = vmul.f32 %v5554, %v5662
        %v5705 = vmul.f32 %v5555, %v5642
        %v5706 = vmul.f32 %v5556, %v5646
        %v5707 = vmul.f32 %v5557, %v5650
        %v5708 = vmul.f32 %v5558, %v5654
        %v5709 = vmul.f32 %v5559, %v5658
        %v5710 = vmul.f32 %v5560, %v5662
        %v5711 = vmul.f32 %v5561, %v5642
        %v5712 = vmul.f32 %v5562, %v5646
        %v5713 = vmul.f32 %v5563, %v5650
        %v5714 = vmul.f32 %v5564, %v5654
        %v5715 = vmul.f32 %v5565, %v5658
        %v5716 = vmul.f32 %v5566, %v5662
        %v5717 = vmul.f32 %v5567, %v5642
        %v5718 = vmul.f32 %v5568, %v5646
        %v5719 = vmul.f32 %v5569, %v5650
        %v5720 = vmul.f32 %v5570, %v5654
        %v5721 = vmul.f32 %v5571, %v5658
        %v5722 = vmul.f32 %v5572, %v5662
        %v5723 = vmul.f32 %v5573, %v5642
        %v5724 = vmul.f32 %v5574, %v5646
        %v5725 = vmul.f32 %v5575, %v5650
        %v5726 = vmul.f32 %v5576, %v5654
        %v5727 = vmul.f32 %v5577, %v5658
        %v5728 = vmul.f32 %v5578, %v5662
        %v5729 = vmul.f32 %v5579, %v5642
        %v5730 = vmul.f32 %v5580, %v5646
        %v5731 = vmul.f32 %v5581, %v5650
        %v5732 = vmul.f32 %v5582, %v5654
        %v5733 = vmul.f32 %v5583, %v5658
        %v5734 = vmul.f32 %v5584, %v5662
        %v5735 = vmul.f32 %v5585, %v5642
        %v5736 = vmul.f32 %v5586, %v5646
        %v5737 = vmul.f32 %v5587, %v5650
        %v5738 = vmul.f32 %v5588, %v5654
        %v5739 = vmul.f32 %v5589, %v5658
        %v5740 = vmul.f32 %v5590, %v5662
        %v5741 = vmul.f32 %v5591, %v5642
        %v5742 = vmul.f32 %v5592, %v5646
        %v5743 = vmul.f32 %v5593, %v5650
        %v5744 = vmul.f32 %v5594, %v5654
        %v5745 = vmul.f32 %v5595, %v5658
        %v5746 = vmul.f32 %v5596, %v5662
        %v5747 = vmul.f32 %v5597, %v5642
        %v5748 = vmul.f32 %v5598, %v5646
        %v5749 = vmul.f32 %v5599, %v5650
        %v5750 = vmul.f32 %v5600, %v5654
        %v5751 = vmul.f32 %v5601, %v5658
        %v5752 = vmul.f32 %v5602, %v5662
        %v5753 = vmul.f32 %v5603, %v5642
        %v5754 = vmul.f32 %v5604, %v5646
        %v5755 = vmul.f32 %v5605, %v5650
        %v5756 = vmul.f32 %v5606, %v5654
        %v5757 = vmul.f32 %v5607, %v5658
        %v5758 = vmul.f32 %v5608, %v5662
        %v5759 = vadd.f32 %v5663, %v5664
        %v5760 = vadd.f32 %v5759, %v5665
        %v5761 = vadd.f32 %v5760, %v5666
        %v5762 = vadd.f32 %v5761, %v5667
        %v5763 = vadd.f32 %v5762, %v5668
        %5764 = vadd.xlane.f32.xlu0 %v5763
        %v5765 = vpop.xlane.xlu0 %5764
        %v5766 = vadd.f32 %v5669, %v5670
        %v5767 = vadd.f32 %v5766, %v5671
        %v5768 = vadd.f32 %v5767, %v5672
        %v5769 = vadd.f32 %v5768, %v5673
        %v5770 = vadd.f32 %v5769, %v5674
        %5771 = vadd.xlane.f32.xlu0 %v5770
        %v5772 = vpop.xlane.xlu0 %5771
        %v5773 = vadd.f32 %v5675, %v5676
        %v5774 = vadd.f32 %v5773, %v5677
        %v5775 = vadd.f32 %v5774, %v5678
        %v5776 = vadd.f32 %v5775, %v5679
        %v5777 = vadd.f32 %v5776, %v5680
        %5778 = vadd.xlane.f32.xlu0 %v5777
        %v5779 = vpop.xlane.xlu0 %5778
        %v5780 = vadd.f32 %v5681, %v5682
        %v5781 = vadd.f32 %v5780, %v5683
        %v5782 = vadd.f32 %v5781, %v5684
        %v5783 = vadd.f32 %v5782, %v5685
        %v5784 = vadd.f32 %v5783, %v5686
        %5785 = vadd.xlane.f32.xlu0 %v5784
        %v5786 = vpop.xlane.xlu0 %5785
        %v5787 = vadd.f32 %v5687, %v5688
        %v5788 = vadd.f32 %v5787, %v5689
        %v5789 = vadd.f32 %v5788, %v5690
        %v5790 = vadd.f32 %v5789, %v5691
        %v5791 = vadd.f32 %v5790, %v5692
        %5792 = vadd.xlane.f32.xlu0 %v5791
        %v5793 = vpop.xlane.xlu0 %5792
        %v5794 = vadd.f32 %v5693, %v5694
        %v5795 = vadd.f32 %v5794, %v5695
        %v5796 = vadd.f32 %v5795, %v5696
        %v5797 = vadd.f32 %v5796, %v5697
        %v5798 = vadd.f32 %v5797, %v5698
        %5799 = vadd.xlane.f32.xlu0 %v5798
        %v5800 = vpop.xlane.xlu0 %5799
        %v5801 = vadd.f32 %v5699, %v5700
        %v5802 = vadd.f32 %v5801, %v5701
        %v5803 = vadd.f32 %v5802, %v5702
        %v5804 = vadd.f32 %v5803, %v5703
        %v5805 = vadd.f32 %v5804, %v5704
        %5806 = vadd.xlane.f32.xlu0 %v5805
        %v5807 = vpop.xlane.xlu0 %5806
        %v5808 = vadd.f32 %v5705, %v5706
        %v5809 = vadd.f32 %v5808, %v5707
        %v5810 = vadd.f32 %v5809, %v5708
        %v5811 = vadd.f32 %v5810, %v5709
        %v5812 = vadd.f32 %v5811, %v5710
        %5813 = vadd.xlane.f32.xlu0 %v5812
        %v5814 = vpop.xlane.xlu0 %5813
        %v5815 = vadd.f32 %v5711, %v5712
        %v5816 = vadd.f32 %v5815, %v5713
        %v5817 = vadd.f32 %v5816, %v5714
        %v5818 = vadd.f32 %v5817, %v5715
        %v5819 = vadd.f32 %v5818, %v5716
        %5820 = vadd.xlane.f32.xlu0 %v5819
        %v5821 = vpop.xlane.xlu0 %5820
        %v5822 = vadd.f32 %v5717, %v5718
        %v5823 = vadd.f32 %v5822, %v5719
        %v5824 = vadd.f32 %v5823, %v5720
        %v5825 = vadd.f32 %v5824, %v5721
        %v5826 = vadd.f32 %v5825, %v5722
        %5827 = vadd.xlane.f32.xlu0 %v5826
        %v5828 = vpop.xlane.xlu0 %5827
        %v5829 = vadd.f32 %v5723, %v5724
        %v5830 = vadd.f32 %v5829, %v5725
        %v5831 = vadd.f32 %v5830, %v5726
        %v5832 = vadd.f32 %v5831, %v5727
        %v5833 = vadd.f32 %v5832, %v5728
        %5834 = vadd.xlane.f32.xlu0 %v5833
        %v5835 = vpop.xlane.xlu0 %5834
        %v5836 = vadd.f32 %v5729, %v5730
        %v5837 = vadd.f32 %v5836, %v5731
        %v5838 = vadd.f32 %v5837, %v5732
        %v5839 = vadd.f32 %v5838, %v5733
        %v5840 = vadd.f32 %v5839, %v5734
        %5841 = vadd.xlane.f32.xlu0 %v5840
        %v5842 = vpop.xlane.xlu0 %5841
        %v5843 = vadd.f32 %v5735, %v5736
        %v5844 = vadd.f32 %v5843, %v5737
        %v5845 = vadd.f32 %v5844, %v5738
        %v5846 = vadd.f32 %v5845, %v5739
        %v5847 = vadd.f32 %v5846, %v5740
        %5848 = vadd.xlane.f32.xlu0 %v5847
        %v5849 = vpop.xlane.xlu0 %5848
        %v5850 = vadd.f32 %v5741, %v5742
        %v5851 = vadd.f32 %v5850, %v5743
        %v5852 = vadd.f32 %v5851, %v5744
        %v5853 = vadd.f32 %v5852, %v5745
        %v5854 = vadd.f32 %v5853, %v5746
        %5855 = vadd.xlane.f32.xlu0 %v5854
        %v5856 = vpop.xlane.xlu0 %5855
        %v5857 = vadd.f32 %v5747, %v5748
        %v5858 = vadd.f32 %v5857, %v5749
        %v5859 = vadd.f32 %v5858, %v5750
        %v5860 = vadd.f32 %v5859, %v5751
        %v5861 = vadd.f32 %v5860, %v5752
        %5862 = vadd.xlane.f32.xlu0 %v5861
        %v5863 = vpop.xlane.xlu0 %5862
        %v5864 = vadd.f32 %v5753, %v5754
        %v5865 = vadd.f32 %v5864, %v5755
        %v5866 = vadd.f32 %v5865, %v5756
        %v5867 = vadd.f32 %v5866, %v5757
        %v5868 = vadd.f32 %v5867, %v5758
        %5869 = vadd.xlane.f32.xlu0 %v5868
        %v5870 = vpop.xlane.xlu0 %5869
        %v5871 = vadd.f32 %v5765, %v863
        %v5872 = vadd.f32 %v5772, %v863
        %v5873 = vadd.f32 %v5779, %v863
        %v5874 = vadd.f32 %v5786, %v863
        %v5875 = vadd.f32 %v5793, %v863
        %v5876 = vadd.f32 %v5800, %v863
        %v5877 = vadd.f32 %v5807, %v863
        %v5878 = vadd.f32 %v5814, %v863
        %v5879 = vadd.f32 %v5821, %v863
        %v5880 = vadd.f32 %v5828, %v863
        %v5881 = vadd.f32 %v5835, %v863
        %v5882 = vadd.f32 %v5842, %v863
        %v5883 = vadd.f32 %v5849, %v863
        %v5884 = vadd.f32 %v5856, %v863
        %v5885 = vadd.f32 %v5863, %v863
        %v5886 = vadd.f32 %v5870, %v863
        %v5887 = vlaneseq
        %v5888 = vand.u32 %v5887, 127
        %vm5889 = vcmp.eq.s32.totalorder %v5888, 0
        %v5890 = vsel %vm5889, 1, 0
        %v5891 = vcvt.s32.f32 %v5890
        %5893 = vset.pattern.permute.xlu0 1
        %5894 = vperm.xlu0 %5893, %v2552
        %v5895 = vpop.permute.xlu0 %5894
        %5898 = vset.pattern.permute.xlu0 1
        %5899 = vperm.xlu0 %5898, %v2553
        %v5900 = vpop.permute.xlu0 %5899
        %5903 = vset.pattern.permute.xlu0 1
        %5904 = vperm.xlu0 %5903, %v2554
        %v5905 = vpop.permute.xlu0 %5904
        %5908 = vset.pattern.permute.xlu0 1
        %5909 = vperm.xlu0 %5908, %v2555
        %v5910 = vpop.permute.xlu0 %5909
        %5913 = vset.pattern.permute.xlu0 1
        %5914 = vperm.xlu0 %5913, %v2556
        %v5915 = vpop.permute.xlu0 %5914
        %5918 = vset.pattern.permute.xlu0 1
        %5919 = vperm.xlu0 %5918, %v2557
        %v5920 = vpop.permute.xlu0 %5919
        %5923 = vset.pattern.permute.xlu0 1
        %5924 = vperm.xlu0 %5923, %v2558
        %v5925 = vpop.permute.xlu0 %5924
        %5928 = vset.pattern.permute.xlu0 1
        %5929 = vperm.xlu0 %5928, %v2559
        %v5930 = vpop.permute.xlu0 %5929
        %5933 = vset.pattern.permute.xlu0 1
        %5934 = vperm.xlu0 %5933, %v2560
        %v5935 = vpop.permute.xlu0 %5934
        %5938 = vset.pattern.permute.xlu0 1
        %5939 = vperm.xlu0 %5938, %v2561
        %v5940 = vpop.permute.xlu0 %5939
        %5943 = vset.pattern.permute.xlu0 1
        %5944 = vperm.xlu0 %5943, %v2562
        %v5945 = vpop.permute.xlu0 %5944
        %5948 = vset.pattern.permute.xlu0 1
        %5949 = vperm.xlu0 %5948, %v2563
        %v5950 = vpop.permute.xlu0 %5949
        %5953 = vset.pattern.permute.xlu0 1
        %5954 = vperm.xlu0 %5953, %v2564
        %v5955 = vpop.permute.xlu0 %5954
        %5958 = vset.pattern.permute.xlu0 1
        %5959 = vperm.xlu0 %5958, %v2565
        %v5960 = vpop.permute.xlu0 %5959
        %5963 = vset.pattern.permute.xlu0 1
        %5964 = vperm.xlu0 %5963, %v2566
        %v5965 = vpop.permute.xlu0 %5964
        %5968 = vset.pattern.permute.xlu0 1
        %5969 = vperm.xlu0 %5968, %v2567
        %v5970 = vpop.permute.xlu0 %5969
        %v5972 = vmul.f32 %v5895, %v5891
        %v5973 = vmul.f32 %v5900, %v5891
        %v5974 = vmul.f32 %v5905, %v5891
        %v5975 = vmul.f32 %v5910, %v5891
        %v5976 = vmul.f32 %v5915, %v5891
        %v5977 = vmul.f32 %v5920, %v5891
        %v5978 = vmul.f32 %v5925, %v5891
        %v5979 = vmul.f32 %v5930, %v5891
        %v5980 = vmul.f32 %v5935, %v5891
        %v5981 = vmul.f32 %v5940, %v5891
        %v5982 = vmul.f32 %v5945, %v5891
        %v5983 = vmul.f32 %v5950, %v5891
        %v5984 = vmul.f32 %v5955, %v5891
        %v5985 = vmul.f32 %v5960, %v5891
        %v5986 = vmul.f32 %v5965, %v5891
        %v5987 = vmul.f32 %v5970, %v5891
        %vm5988 = vcmp.eq.s32.totalorder %v5888, 1
        %v5989 = vsel %vm5988, 1, 0
        %v5990 = vcvt.s32.f32 %v5989
        %5992 = vset.pattern.permute.xlu0 17
        %5993 = vperm.xlu0 %5992, %v5871
        %v5994 = vpop.permute.xlu0 %5993
        %5997 = vset.pattern.permute.xlu0 17
        %5998 = vperm.xlu0 %5997, %v5872
        %v5999 = vpop.permute.xlu0 %5998
        %6002 = vset.pattern.permute.xlu0 17
        %6003 = vperm.xlu0 %6002, %v5873
        %v6004 = vpop.permute.xlu0 %6003
        %6007 = vset.pattern.permute.xlu0 17
        %6008 = vperm.xlu0 %6007, %v5874
        %v6009 = vpop.permute.xlu0 %6008
        %6012 = vset.pattern.permute.xlu0 17
        %6013 = vperm.xlu0 %6012, %v5875
        %v6014 = vpop.permute.xlu0 %6013
        %6017 = vset.pattern.permute.xlu0 17
        %6018 = vperm.xlu0 %6017, %v5876
        %v6019 = vpop.permute.xlu0 %6018
        %6022 = vset.pattern.permute.xlu0 17
        %6023 = vperm.xlu0 %6022, %v5877
        %v6024 = vpop.permute.xlu0 %6023
        %6027 = vset.pattern.permute.xlu0 17
        %6028 = vperm.xlu0 %6027, %v5878
        %v6029 = vpop.permute.xlu0 %6028
        %6032 = vset.pattern.permute.xlu0 17
        %6033 = vperm.xlu0 %6032, %v5879
        %v6034 = vpop.permute.xlu0 %6033
        %6037 = vset.pattern.permute.xlu0 17
        %6038 = vperm.xlu0 %6037, %v5880
        %v6039 = vpop.permute.xlu0 %6038
        %6042 = vset.pattern.permute.xlu0 17
        %6043 = vperm.xlu0 %6042, %v5881
        %v6044 = vpop.permute.xlu0 %6043
        %6047 = vset.pattern.permute.xlu0 17
        %6048 = vperm.xlu0 %6047, %v5882
        %v6049 = vpop.permute.xlu0 %6048
        %6052 = vset.pattern.permute.xlu0 17
        %6053 = vperm.xlu0 %6052, %v5883
        %v6054 = vpop.permute.xlu0 %6053
        %6057 = vset.pattern.permute.xlu0 17
        %6058 = vperm.xlu0 %6057, %v5884
        %v6059 = vpop.permute.xlu0 %6058
        %6062 = vset.pattern.permute.xlu0 17
        %6063 = vperm.xlu0 %6062, %v5885
        %v6064 = vpop.permute.xlu0 %6063
        %6067 = vset.pattern.permute.xlu0 17
        %6068 = vperm.xlu0 %6067, %v5886
        %v6069 = vpop.permute.xlu0 %6068
        %v6071 = vmul.f32 %v5994, %v5990
        %v6072 = vmul.f32 %v5999, %v5990
        %v6073 = vmul.f32 %v6004, %v5990
        %v6074 = vmul.f32 %v6009, %v5990
        %v6075 = vmul.f32 %v6014, %v5990
        %v6076 = vmul.f32 %v6019, %v5990
        %v6077 = vmul.f32 %v6024, %v5990
        %v6078 = vmul.f32 %v6029, %v5990
        %v6079 = vmul.f32 %v6034, %v5990
        %v6080 = vmul.f32 %v6039, %v5990
        %v6081 = vmul.f32 %v6044, %v5990
        %v6082 = vmul.f32 %v6049, %v5990
        %v6083 = vmul.f32 %v6054, %v5990
        %v6084 = vmul.f32 %v6059, %v5990
        %v6085 = vmul.f32 %v6064, %v5990
        %v6086 = vmul.f32 %v6069, %v5990
        %v6087 = vadd.f32 %v5972, %v6071
        %v6088 = vadd.f32 %v5973, %v6072
        %v6089 = vadd.f32 %v5974, %v6073
        %v6090 = vadd.f32 %v5975, %v6074
        %v6091 = vadd.f32 %v5976, %v6075
        %v6092 = vadd.f32 %v5977, %v6076
        %v6093 = vadd.f32 %v5978, %v6077
        %v6094 = vadd.f32 %v5979, %v6078
        %v6095 = vadd.f32 %v5980, %v6079
        %v6096 = vadd.f32 %v5981, %v6080
        %v6097 = vadd.f32 %v5982, %v6081
        %v6098 = vadd.f32 %v5983, %v6082
        %v6099 = vadd.f32 %v5984, %v6083
        %v6100 = vadd.f32 %v5985, %v6084
        %v6101 = vadd.f32 %v5986, %v6085
        %v6102 = vadd.f32 %v5987, %v6086
        %6103 = vxpose.xlu0.b32.start [1/16] %v6087, 128
        %6104 = vxpose.xlu0.b32.cont [2/16] %v6088, 128
        %6105 = vxpose.xlu0.b32.cont [3/16] %v6089, 128
        %6106 = vxpose.xlu0.b32.cont [4/16] %v6090, 128
        %6107 = vxpose.xlu0.b32.cont [5/16] %v6091, 128
        %6108 = vxpose.xlu0.b32.cont [6/16] %v6092, 128
        %6109 = vxpose.xlu0.b32.cont [7/16] %v6093, 128
        %6110 = vxpose.xlu0.b32.cont [8/16] %v6094, 128
        %6111 = vxpose.xlu0.b32.cont [9/16] %v6095, 128
        %6112 = vxpose.xlu0.b32.cont [10/16] %v6096, 128
        %6113 = vxpose.xlu0.b32.cont [11/16] %v6097, 128
        %6114 = vxpose.xlu0.b32.cont [12/16] %v6098, 128
        %6115 = vxpose.xlu0.b32.cont [13/16] %v6099, 128
        %6116 = vxpose.xlu0.b32.cont [14/16] %v6100, 128
        %6117 = vxpose.xlu0.b32.cont [15/16] %v6101, 128
        %6118 = vxpose.xlu0.b32.end [16/16] %v6102, 128
        %v6119 = vpop.trf.xlu0
        %v6120 = vpop.trf.xlu0
        %v6121 = vpop.trf.xlu0
        %v6122 = vpop.trf.xlu0
        %v6123 = vpop.trf.xlu0
        %v6124 = vpop.trf.xlu0
        %v6125 = vpop.trf.xlu0
        %v6126 = vpop.trf.xlu0
        %v6127 = vpop.trf.xlu0
        %v6128 = vpop.trf.xlu0
        %v6129 = vpop.trf.xlu0
        %v6130 = vpop.trf.xlu0
        %v6131 = vpop.trf.xlu0
        %v6132 = vpop.trf.xlu0
        %v6133 = vpop.trf.xlu0
        %v6134 = vpop.trf.xlu0
        %v6135 = vlaneseq
        %v6136 = vshrl.u32 %v6135, 7
        %v6137 = vadd.s32 %v6136, 8
        %v6138 = vadd.s32 %v6136, 16
        %v6139 = vadd.s32 %v6136, 24
        %v6140 = vadd.s32 %v6136, 32
        %v6141 = vadd.s32 %v6136, 40
        %v6142 = vadd.s32 %v6136, 48
        %v6143 = vadd.s32 %v6136, 56
        %v6144 = vadd.s32 %v6136, 64
        %v6145 = vadd.s32 %v6136, 72
        %v6146 = vadd.s32 %v6136, 80
        %v6147 = vadd.s32 %v6136, 88
        %v6148 = vadd.s32 %v6136, 96
        %v6149 = vadd.s32 %v6136, 104
        %v6150 = vadd.s32 %v6136, 112
        %v6151 = vadd.s32 %v6136, 120
        %vm6152 = vcmp.lt.s32.totalorder %v5888, %v6136
        %vm6153 = vcmp.lt.s32.totalorder %v5888, %v6137
        %vm6154 = vcmp.lt.s32.totalorder %v5888, %v6138
        %vm6155 = vcmp.lt.s32.totalorder %v5888, %v6139
        %vm6156 = vcmp.lt.s32.totalorder %v5888, %v6140
        %vm6157 = vcmp.lt.s32.totalorder %v5888, %v6141
        %vm6158 = vcmp.lt.s32.totalorder %v5888, %v6142
        %vm6159 = vcmp.lt.s32.totalorder %v5888, %v6143
        %vm6160 = vcmp.lt.s32.totalorder %v5888, %v6144
        %vm6161 = vcmp.lt.s32.totalorder %v5888, %v6145
        %vm6162 = vcmp.lt.s32.totalorder %v5888, %v6146
        %vm6163 = vcmp.lt.s32.totalorder %v5888, %v6147
        %vm6164 = vcmp.lt.s32.totalorder %v5888, %v6148
        %vm6165 = vcmp.lt.s32.totalorder %v5888, %v6149
        %vm6166 = vcmp.lt.s32.totalorder %v5888, %v6150
        %vm6167 = vcmp.lt.s32.totalorder %v5888, %v6151
        %v6168 = vlaneseq
        %v6169 = vshrl.u32 %v6168, 7
        %v6170 = vsub.s32 0, %v6169
        %v6171 = vrot.slane %v6119, %v6170
        %v6172 = vsel %vm6152, %v6171, 0.0
        %v6173 = vsel %vm6153, %v6171, 0.0
        %v6174 = vsel %vm6154, %v6171, 0.0
        %v6175 = vsel %vm6155, %v6171, 0.0
        %v6176 = vsel %vm6156, %v6171, 0.0
        %v6177 = vsel %vm6157, %v6171, 0.0
        %v6178 = vsel %vm6158, %v6171, 0.0
        %v6179 = vsel %vm6159, %v6171, 0.0
        %v6180 = vsel %vm6160, %v6171, 0.0
        %v6181 = vsel %vm6161, %v6171, 0.0
        %v6182 = vsel %vm6162, %v6171, 0.0
        %v6183 = vsel %vm6163, %v6171, 0.0
        %v6184 = vsel %vm6164, %v6171, 0.0
        %v6185 = vsel %vm6165, %v6171, 0.0
        %v6186 = vsel %vm6166, %v6171, 0.0
        %v6187 = vsel %vm6167, %v6171, 0.0
        %6188 = vadd.xlane.f32.xlu0 %v6172
        %v6189 = vpop.xlane.xlu0 %6188
        %6190 = vadd.xlane.f32.xlu0 %v6173
        %v6191 = vpop.xlane.xlu0 %6190
        %6192 = vadd.xlane.f32.xlu0 %v6174
        %v6193 = vpop.xlane.xlu0 %6192
        %6194 = vadd.xlane.f32.xlu0 %v6175
        %v6195 = vpop.xlane.xlu0 %6194
        %6196 = vadd.xlane.f32.xlu0 %v6176
        %v6197 = vpop.xlane.xlu0 %6196
        %6198 = vadd.xlane.f32.xlu0 %v6177
        %v6199 = vpop.xlane.xlu0 %6198
        %6200 = vadd.xlane.f32.xlu0 %v6178
        %v6201 = vpop.xlane.xlu0 %6200
        %6202 = vadd.xlane.f32.xlu0 %v6179
        %v6203 = vpop.xlane.xlu0 %6202
        %6204 = vadd.xlane.f32.xlu0 %v6180
        %v6205 = vpop.xlane.xlu0 %6204
        %6206 = vadd.xlane.f32.xlu0 %v6181
        %v6207 = vpop.xlane.xlu0 %6206
        %6208 = vadd.xlane.f32.xlu0 %v6182
        %v6209 = vpop.xlane.xlu0 %6208
        %6210 = vadd.xlane.f32.xlu0 %v6183
        %v6211 = vpop.xlane.xlu0 %6210
        %6212 = vadd.xlane.f32.xlu0 %v6184
        %v6213 = vpop.xlane.xlu0 %6212
        %6214 = vadd.xlane.f32.xlu0 %v6185
        %v6215 = vpop.xlane.xlu0 %6214
        %6216 = vadd.xlane.f32.xlu0 %v6186
        %v6217 = vpop.xlane.xlu0 %6216
        %6218 = vadd.xlane.f32.xlu0 %v6187
        %v6219 = vpop.xlane.xlu0 %6218
        %vm6220 = vcmp.lt.s32.totalorder %v6136, %v5888
        %vm6221 = vcmp.lt.s32.totalorder %v6137, %v5888
        %vm6222 = vcmp.lt.s32.totalorder %v6138, %v5888
        %vm6223 = vcmp.lt.s32.totalorder %v6139, %v5888
        %vm6224 = vcmp.lt.s32.totalorder %v6140, %v5888
        %vm6225 = vcmp.lt.s32.totalorder %v6141, %v5888
        %vm6226 = vcmp.lt.s32.totalorder %v6142, %v5888
        %vm6227 = vcmp.lt.s32.totalorder %v6143, %v5888
        %vm6228 = vcmp.lt.s32.totalorder %v6144, %v5888
        %vm6229 = vcmp.lt.s32.totalorder %v6145, %v5888
        %vm6230 = vcmp.lt.s32.totalorder %v6146, %v5888
        %vm6231 = vcmp.lt.s32.totalorder %v6147, %v5888
        %vm6232 = vcmp.lt.s32.totalorder %v6148, %v5888
        %vm6233 = vcmp.lt.s32.totalorder %v6149, %v5888
        %vm6234 = vcmp.lt.s32.totalorder %v6150, %v5888
        %vm6235 = vcmp.lt.s32.totalorder %v6151, %v5888
        %v6236 = vsel %vm6220, %v5895, 0.0
        %v6237 = vsel %vm6221, %v5900, 0.0
        %v6238 = vsel %vm6222, %v5905, 0.0
        %v6239 = vsel %vm6223, %v5910, 0.0
        %v6240 = vsel %vm6224, %v5915, 0.0
        %v6241 = vsel %vm6225, %v5920, 0.0
        %v6242 = vsel %vm6226, %v5925, 0.0
        %v6243 = vsel %vm6227, %v5930, 0.0
        %v6244 = vsel %vm6228, %v5935, 0.0
        %v6245 = vsel %vm6229, %v5940, 0.0
        %v6246 = vsel %vm6230, %v5945, 0.0
        %v6247 = vsel %vm6231, %v5950, 0.0
        %v6248 = vsel %vm6232, %v5955, 0.0
        %v6249 = vsel %vm6233, %v5960, 0.0
        %v6250 = vsel %vm6234, %v5965, 0.0
        %v6251 = vsel %vm6235, %v5970, 0.0
        %v6252 = vadd.f32 %v6236, %v6237
        %v6253 = vadd.f32 %v6252, %v6238
        %v6254 = vadd.f32 %v6253, %v6239
        %v6255 = vadd.f32 %v6254, %v6240
        %v6256 = vadd.f32 %v6255, %v6241
        %v6257 = vadd.f32 %v6256, %v6242
        %v6258 = vadd.f32 %v6257, %v6243
        %v6259 = vadd.f32 %v6258, %v6244
        %v6260 = vadd.f32 %v6259, %v6245
        %v6261 = vadd.f32 %v6260, %v6246
        %v6262 = vadd.f32 %v6261, %v6247
        %v6263 = vadd.f32 %v6262, %v6248
        %v6264 = vadd.f32 %v6263, %v6249
        %v6265 = vadd.f32 %v6264, %v6250
        %v6266 = vadd.f32 %v6265, %v6251
        %v6267 = vrot.slane %v6266, 4
        %v6268 = vadd.f32 %v6266, %v6267
        %v6269 = vrot.slane %v6268, 2
        %v6270 = vadd.f32 %v6268, %v6269
        %v6271 = vrot.slane %v6270, 1
        %v6272 = vadd.f32 %v6270, %v6271
        %vm6273 = vcmp.eq.f32.partialorder %v6189, %v6272
        %vm6274 = vcmp.eq.f32.partialorder %v6191, %v6272
        %vm6275 = vcmp.eq.f32.partialorder %v6193, %v6272
        %vm6276 = vcmp.eq.f32.partialorder %v6195, %v6272
        %vm6277 = vcmp.eq.f32.partialorder %v6197, %v6272
        %vm6278 = vcmp.eq.f32.partialorder %v6199, %v6272
        %vm6279 = vcmp.eq.f32.partialorder %v6201, %v6272
        %vm6280 = vcmp.eq.f32.partialorder %v6203, %v6272
        %vm6281 = vcmp.eq.f32.partialorder %v6205, %v6272
        %vm6282 = vcmp.eq.f32.partialorder %v6207, %v6272
        %vm6283 = vcmp.eq.f32.partialorder %v6209, %v6272
        %vm6284 = vcmp.eq.f32.partialorder %v6211, %v6272
        %vm6285 = vcmp.eq.f32.partialorder %v6213, %v6272
        %vm6286 = vcmp.eq.f32.partialorder %v6215, %v6272
        %vm6287 = vcmp.eq.f32.partialorder %v6217, %v6272
        %vm6288 = vcmp.eq.f32.partialorder %v6219, %v6272
        %v6289 = vlaneseq
        %v6290 = vshrl.u32 %v6289, 7
        %v6291 = vsub.s32 1, %v6290
        %v6292 = vrot.slane %v6119, %v6291
        %v6293 = vsel %vm6273, %v6292, -1e+30
        %v6294 = vsel %vm6274, %v6292, -1e+30
        %v6295 = vsel %vm6275, %v6292, -1e+30
        %v6296 = vsel %vm6276, %v6292, -1e+30
        %v6297 = vsel %vm6277, %v6292, -1e+30
        %v6298 = vsel %vm6278, %v6292, -1e+30
        %v6299 = vsel %vm6279, %v6292, -1e+30
        %v6300 = vsel %vm6280, %v6292, -1e+30
        %v6301 = vsel %vm6281, %v6292, -1e+30
        %v6302 = vsel %vm6282, %v6292, -1e+30
        %v6303 = vsel %vm6283, %v6292, -1e+30
        %v6304 = vsel %vm6284, %v6292, -1e+30
        %v6305 = vsel %vm6285, %v6292, -1e+30
        %v6306 = vsel %vm6286, %v6292, -1e+30
        %v6307 = vsel %vm6287, %v6292, -1e+30
        %v6308 = vsel %vm6288, %v6292, -1e+30
        %6309 = vmax.xlane.f32.xlu0 %v6293
        %v6310 = vpop.xlane.xlu0 %6309
        %6311 = vmax.xlane.f32.xlu0 %v6294
        %v6312 = vpop.xlane.xlu0 %6311
        %6313 = vmax.xlane.f32.xlu0 %v6295
        %v6314 = vpop.xlane.xlu0 %6313
        %6315 = vmax.xlane.f32.xlu0 %v6296
        %v6316 = vpop.xlane.xlu0 %6315
        %6317 = vmax.xlane.f32.xlu0 %v6297
        %v6318 = vpop.xlane.xlu0 %6317
        %6319 = vmax.xlane.f32.xlu0 %v6298
        %v6320 = vpop.xlane.xlu0 %6319
        %6321 = vmax.xlane.f32.xlu0 %v6299
        %v6322 = vpop.xlane.xlu0 %6321
        %6323 = vmax.xlane.f32.xlu0 %v6300
        %v6324 = vpop.xlane.xlu0 %6323
        %6325 = vmax.xlane.f32.xlu0 %v6301
        %v6326 = vpop.xlane.xlu0 %6325
        %6327 = vmax.xlane.f32.xlu0 %v6302
        %v6328 = vpop.xlane.xlu0 %6327
        %6329 = vmax.xlane.f32.xlu0 %v6303
        %v6330 = vpop.xlane.xlu0 %6329
        %6331 = vmax.xlane.f32.xlu0 %v6304
        %v6332 = vpop.xlane.xlu0 %6331
        %6333 = vmax.xlane.f32.xlu0 %v6305
        %v6334 = vpop.xlane.xlu0 %6333
        %6335 = vmax.xlane.f32.xlu0 %v6306
        %v6336 = vpop.xlane.xlu0 %6335
        %6337 = vmax.xlane.f32.xlu0 %v6307
        %v6338 = vpop.xlane.xlu0 %6337
        %6339 = vmax.xlane.f32.xlu0 %v6308
        %v6340 = vpop.xlane.xlu0 %6339
        %v6341 = vsub.f32 %v6293, %v6310
        %v6342 = vsub.f32 %v6294, %v6312
        %v6343 = vsub.f32 %v6295, %v6314
        %v6344 = vsub.f32 %v6296, %v6316
        %v6345 = vsub.f32 %v6297, %v6318
        %v6346 = vsub.f32 %v6298, %v6320
        %v6347 = vsub.f32 %v6299, %v6322
        %v6348 = vsub.f32 %v6300, %v6324
        %v6349 = vsub.f32 %v6301, %v6326
        %v6350 = vsub.f32 %v6302, %v6328
        %v6351 = vsub.f32 %v6303, %v6330
        %v6352 = vsub.f32 %v6304, %v6332
        %v6353 = vsub.f32 %v6305, %v6334
        %v6354 = vsub.f32 %v6306, %v6336
        %v6355 = vsub.f32 %v6307, %v6338
        %v6356 = vsub.f32 %v6308, %v6340
        %v6357 = vmul.f32 %v6341, 1.442695
        %v6358 = vpow.pop %v6357
        %v6359 = vmul.f32 %v6342, 1.442695
        %v6360 = vpow.pop %v6359
        %v6361 = vmul.f32 %v6343, 1.442695
        %v6362 = vpow.pop %v6361
        %v6363 = vmul.f32 %v6344, 1.442695
        %v6364 = vpow.pop %v6363
        %v6365 = vmul.f32 %v6345, 1.442695
        %v6366 = vpow.pop %v6365
        %v6367 = vmul.f32 %v6346, 1.442695
        %v6368 = vpow.pop %v6367
        %v6369 = vmul.f32 %v6347, 1.442695
        %v6370 = vpow.pop %v6369
        %v6371 = vmul.f32 %v6348, 1.442695
        %v6372 = vpow.pop %v6371
        %v6373 = vmul.f32 %v6349, 1.442695
        %v6374 = vpow.pop %v6373
        %v6375 = vmul.f32 %v6350, 1.442695
        %v6376 = vpow.pop %v6375
        %v6377 = vmul.f32 %v6351, 1.442695
        %v6378 = vpow.pop %v6377
        %v6379 = vmul.f32 %v6352, 1.442695
        %v6380 = vpow.pop %v6379
        %v6381 = vmul.f32 %v6353, 1.442695
        %v6382 = vpow.pop %v6381
        %v6383 = vmul.f32 %v6354, 1.442695
        %v6384 = vpow.pop %v6383
        %v6385 = vmul.f32 %v6355, 1.442695
        %v6386 = vpow.pop %v6385
        %v6387 = vmul.f32 %v6356, 1.442695
        %v6388 = vpow.pop %v6387
        %6389 = vadd.xlane.f32.xlu0 %v6358
        %v6390 = vpop.xlane.xlu0 %6389
        %6391 = vadd.xlane.f32.xlu0 %v6360
        %v6392 = vpop.xlane.xlu0 %6391
        %6393 = vadd.xlane.f32.xlu0 %v6362
        %v6394 = vpop.xlane.xlu0 %6393
        %6395 = vadd.xlane.f32.xlu0 %v6364
        %v6396 = vpop.xlane.xlu0 %6395
        %6397 = vadd.xlane.f32.xlu0 %v6366
        %v6398 = vpop.xlane.xlu0 %6397
        %6399 = vadd.xlane.f32.xlu0 %v6368
        %v6400 = vpop.xlane.xlu0 %6399
        %6401 = vadd.xlane.f32.xlu0 %v6370
        %v6402 = vpop.xlane.xlu0 %6401
        %6403 = vadd.xlane.f32.xlu0 %v6372
        %v6404 = vpop.xlane.xlu0 %6403
        %6405 = vadd.xlane.f32.xlu0 %v6374
        %v6406 = vpop.xlane.xlu0 %6405
        %6407 = vadd.xlane.f32.xlu0 %v6376
        %v6408 = vpop.xlane.xlu0 %6407
        %6409 = vadd.xlane.f32.xlu0 %v6378
        %v6410 = vpop.xlane.xlu0 %6409
        %6411 = vadd.xlane.f32.xlu0 %v6380
        %v6412 = vpop.xlane.xlu0 %6411
        %6413 = vadd.xlane.f32.xlu0 %v6382
        %v6414 = vpop.xlane.xlu0 %6413
        %6415 = vadd.xlane.f32.xlu0 %v6384
        %v6416 = vpop.xlane.xlu0 %6415
        %6417 = vadd.xlane.f32.xlu0 %v6386
        %v6418 = vpop.xlane.xlu0 %6417
        %6419 = vadd.xlane.f32.xlu0 %v6388
        %v6420 = vpop.xlane.xlu0 %6419
        %v6421 = vrcp.pop %v6390
        %v6422 = vrcp.pop %v6392
        %v6423 = vrcp.pop %v6394
        %v6424 = vrcp.pop %v6396
        %v6425 = vrcp.pop %v6398
        %v6426 = vrcp.pop %v6400
        %v6427 = vrcp.pop %v6402
        %v6428 = vrcp.pop %v6404
        %v6429 = vrcp.pop %v6406
        %v6430 = vrcp.pop %v6408
        %v6431 = vrcp.pop %v6410
        %v6432 = vrcp.pop %v6412
        %v6433 = vrcp.pop %v6414
        %v6434 = vrcp.pop %v6416
        %v6435 = vrcp.pop %v6418
        %v6436 = vrcp.pop %v6420
        %v6437 = vmul.f32 %v6358, %v6421
        %v6438 = vmul.f32 %v6360, %v6422
        %v6439 = vmul.f32 %v6362, %v6423
        %v6440 = vmul.f32 %v6364, %v6424
        %v6441 = vmul.f32 %v6366, %v6425
        %v6442 = vmul.f32 %v6368, %v6426
        %v6443 = vmul.f32 %v6370, %v6427
        %v6444 = vmul.f32 %v6372, %v6428
        %v6445 = vmul.f32 %v6374, %v6429
        %v6446 = vmul.f32 %v6376, %v6430
        %v6447 = vmul.f32 %v6378, %v6431
        %v6448 = vmul.f32 %v6380, %v6432
        %v6449 = vmul.f32 %v6382, %v6433
        %v6450 = vmul.f32 %v6384, %v6434
        %v6451 = vmul.f32 %v6386, %v6435
        %v6452 = vmul.f32 %v6388, %v6436
        %v6453 = vpack.c.bf16 %v6438, %v6437
        %v6454 = vpack.c.bf16 %v6440, %v6439
        %v6455 = vpack.c.bf16 %v6442, %v6441
        %v6456 = vpack.c.bf16 %v6444, %v6443
        %v6457 = vpack.c.bf16 %v6446, %v6445
        %v6458 = vpack.c.bf16 %v6448, %v6447
        %v6459 = vpack.c.bf16 %v6450, %v6449
        %v6460 = vpack.c.bf16 %v6452, %v6451
        %6461 = vmatprep.subr.bf16.mxu0 %v2665
        %6462 = vmatpush1.bf16.msra.mxu0 %v2664
        %6463 = vmatprep.subr.bf16.mxu0 %v2671
        %6464 = vmatpush1.bf16.msra.mxu0 %v2670
        %6465 = vmatprep.subr.bf16.mxu0 %v2677
        %6466 = vmatpush1.bf16.msra.mxu0 %v2676
        %6467 = vmatprep.subr.bf16.mxu0 %v2683
        %6468 = vmatpush1.bf16.msra.mxu0 %v2682
        %6469 = vmatprep.subr.bf16.mxu0 %v2689
        %6470 = vmatpush1.bf16.msra.mxu0 %v2688
        %6471 = vmatprep.subr.bf16.mxu0 %v2695
        %6472 = vmatpush1.bf16.msra.mxu0 %v2694
        %6473 = vmatprep.subr.bf16.mxu0 %v2701
        %6474 = vmatpush1.bf16.msra.mxu0 %v2700
        %6475 = vmatprep.subr.bf16.mxu0 %v2707
        %6476 = vmatpush1.bf16.msra.mxu0 %v2706
        %6477 = vmatprep.subr.bf16.mxu0 0
        %6478 = vmatpush1.bf16.msra.mxu0 0
        %6479 = vmatprep.subr.bf16.mxu0 0
        %6480 = vmatpush1.bf16.msra.mxu0 0
        %6481 = vmatprep.subr.bf16.mxu0 0
        %6482 = vmatpush1.bf16.msra.mxu0 0
        %6483 = vmatprep.subr.bf16.mxu0 0
        %6484 = vmatpush1.bf16.msra.mxu0 0
        %6485 = vmatprep.subr.bf16.mxu0 0
        %6486 = vmatpush1.bf16.msra.mxu0 0
        %6487 = vmatprep.subr.bf16.mxu0 0
        %6488 = vmatpush1.bf16.msra.mxu0 0
        %6489 = vmatprep.subr.bf16.mxu0 0
        %6490 = vmatpush1.bf16.msra.mxu0 0
        %6491 = vmatprep.subr.bf16.mxu0 0
        %6492 = vmatpush1.bf16.msra.mxu0 0
        %6493 = vmatprep.mubr.bf16.mxu0 0
        %6494 = vmatmul.mubr.bf16.gmra.mrb[0].mxu0 %v6453
        %v6495 = vpop.f32.mrb[0].mxu0
        %v6496 = vadd.f32 0.0, %v6495
        %v6497 = vpop.f32.mrb[0].mxu0
        %v6498 = vadd.f32 0.0, %v6497
        %v6499 = vpop.f32.mrb[0].mxu0
        %v6500 = vadd.f32 0.0, %v6499
        %v6501 = vpop.f32.mrb[0].mxu0
        %v6502 = vadd.f32 0.0, %v6501
        %6503 = vmatprep.mubr.bf16.mxu0 0
        %6504 = vmatmul.mubr.bf16.gmra.mrb[0].mxu0 %v6454
        %v6505 = vpop.f32.mrb[0].mxu0
        %v6506 = vadd.f32 0.0, %v6505
        %v6507 = vpop.f32.mrb[0].mxu0
        %v6508 = vadd.f32 0.0, %v6507
        %v6509 = vpop.f32.mrb[0].mxu0
        %v6510 = vadd.f32 0.0, %v6509
        %v6511 = vpop.f32.mrb[0].mxu0
        %v6512 = vadd.f32 0.0, %v6511
        %6513 = vmatprep.mubr.bf16.mxu0 0
        %6514 = vmatmul.mubr.bf16.gmra.mrb[0].mxu0 %v6455
        %v6515 = vpop.f32.mrb[0].mxu0
        %v6516 = vadd.f32 0.0, %v6515
        %v6517 = vpop.f32.mrb[0].mxu0
        %v6518 = vadd.f32 0.0, %v6517
        %v6519 = vpop.f32.mrb[0].mxu0
        %v6520 = vadd.f32 0.0, %v6519
        %v6521 = vpop.f32.mrb[0].mxu0
        %v6522 = vadd.f32 0.0, %v6521
        %6523 = vmatprep.mubr.bf16.mxu0 0
        %6524 = vmatmul.mubr.bf16.gmra.mrb[0].mxu0 %v6456
        %v6525 = vpop.f32.mrb[0].mxu0
        %v6526 = vadd.f32 0.0, %v6525
        %v6527 = vpop.f32.mrb[0].mxu0
        %v6528 = vadd.f32 0.0, %v6527
        %v6529 = vpop.f32.mrb[0].mxu0
        %v6530 = vadd.f32 0.0, %v6529
        %v6531 = vpop.f32.mrb[0].mxu0
        %v6532 = vadd.f32 0.0, %v6531
        %6533 = vmatprep.mubr.bf16.mxu0 0
        %6534 = vmatmul.mubr.bf16.gmra.mrb[0].mxu0 %v6457
        %v6535 = vpop.f32.mrb[0].mxu0
        %v6536 = vadd.f32 0.0, %v6535
        %v6537 = vpop.f32.mrb[0].mxu0
        %v6538 = vadd.f32 0.0, %v6537
        %v6539 = vpop.f32.mrb[0].mxu0
        %v6540 = vadd.f32 0.0, %v6539
        %v6541 = vpop.f32.mrb[0].mxu0
        %v6542 = vadd.f32 0.0, %v6541
        %6543 = vmatprep.mubr.bf16.mxu0 0
        %6544 = vmatmul.mubr.bf16.gmra.mrb[0].mxu0 %v6458
        %v6545 = vpop.f32.mrb[0].mxu0
        %v6546 = vadd.f32 0.0, %v6545
        %v6547 = vpop.f32.mrb[0].mxu0
        %v6548 = vadd.f32 0.0, %v6547
        %v6549 = vpop.f32.mrb[0].mxu0
        %v6550 = vadd.f32 0.0, %v6549
        %v6551 = vpop.f32.mrb[0].mxu0
        %v6552 = vadd.f32 0.0, %v6551
        %6553 = vmatprep.mubr.bf16.mxu0 0
        %6554 = vmatmul.mubr.bf16.gmra.mrb[0].mxu0 %v6459
        %v6555 = vpop.f32.mrb[0].mxu0
        %v6556 = vadd.f32 0.0, %v6555
        %v6557 = vpop.f32.mrb[0].mxu0
        %v6558 = vadd.f32 0.0, %v6557
        %v6559 = vpop.f32.mrb[0].mxu0
        %v6560 = vadd.f32 0.0, %v6559
        %v6561 = vpop.f32.mrb[0].mxu0
        %v6562 = vadd.f32 0.0, %v6561
        %6563 = vmatprep.mubr.bf16.mxu0 0
        %6564 = vmatmul.mubr.bf16.gmra.mrb[0].mxu0 %v6460
        %v6565 = vpop.f32.mrb[0].mxu0
        %v6566 = vadd.f32 0.0, %v6565
        %v6567 = vpop.f32.mrb[0].mxu0
        %v6568 = vadd.f32 0.0, %v6567
        %v6569 = vpop.f32.mrb[0].mxu0
        %v6570 = vadd.f32 0.0, %v6569
        %v6571 = vpop.f32.mrb[0].mxu0
        %v6572 = vadd.f32 0.0, %v6571
        %6573 = vdwg.mxu0
        %6574 = vmatprep.subr.bf16.mxu0 %v2667
        %6575 = vmatpush1.bf16.msra.mxu0 %v2666
        %6576 = vmatprep.subr.bf16.mxu0 %v2673
        %6577 = vmatpush1.bf16.msra.mxu0 %v2672
        %6578 = vmatprep.subr.bf16.mxu0 %v2679
        %6579 = vmatpush1.bf16.msra.mxu0 %v2678
        %6580 = vmatprep.subr.bf16.mxu0 %v2685
        %6581 = vmatpush1.bf16.msra.mxu0 %v2684
        %6582 = vmatprep.subr.bf16.mxu0 %v2691
        %6583 = vmatpush1.bf16.msra.mxu0 %v2690
        %6584 = vmatprep.subr.bf16.mxu0 %v2697
        %6585 = vmatpush1.bf16.msra.mxu0 %v2696
        %6586 = vmatprep.subr.bf16.mxu0 %v2703
        %6587 = vmatpush1.bf16.msra.mxu0 %v2702
        %6588 = vmatprep.subr.bf16.mxu0 %v2709
        %6589 = vmatpush1.bf16.msra.mxu0 %v2708
        %6590 = vmatprep.subr.bf16.mxu0 0
        %6591 = vmatpush1.bf16.msra.mxu0 0
        %6592 = vmatprep.subr.bf16.mxu0 0
        %6593 = vmatpush1.bf16.msra.mxu0 0
        %6594 = vmatprep.subr.bf16.mxu0 0
        %6595 = vmatpush1.bf16.msra.mxu0 0
        %6596 = vmatprep.subr.bf16.mxu0 0
        %6597 = vmatpush1.bf16.msra.mxu0 0
        %6598 = vmatprep.subr.bf16.mxu0 0
        %6599 = vmatpush1.bf16.msra.mxu0 0
        %6600 = vmatprep.subr.bf16.mxu0 0
        %6601 = vmatpush1.bf16.msra.mxu0 0
        %6602 = vmatprep.subr.bf16.mxu0 0
        %6603 = vmatpush1.bf16.msra.mxu0 0
        %6604 = vmatprep.subr.bf16.mxu0 0
        %6605 = vmatpush1.bf16.msra.mxu0 0
        %6606 = vmatprep.mubr.bf16.mxu0 0
        %6607 = vmatmul.mubr.bf16.gmra.mrb[0].mxu0 %v6453
        %v6608 = vpop.f32.mrb[0].mxu0
        %v6609 = vadd.f32 0.0, %v6608
        %v6610 = vpop.f32.mrb[0].mxu0
        %v6611 = vadd.f32 0.0, %v6610
        %v6612 = vpop.f32.mrb[0].mxu0
        %v6613 = vadd.f32 0.0, %v6612
        %v6614 = vpop.f32.mrb[0].mxu0
        %v6615 = vadd.f32 0.0, %v6614
        %6616 = vmatprep.mubr.bf16.mxu0 0
        %6617 = vmatmul.mubr.bf16.gmra.mrb[0].mxu0 %v6454
        %v6618 = vpop.f32.mrb[0].mxu0
        %v6619 = vadd.f32 0.0, %v6618
        %v6620 = vpop.f32.mrb[0].mxu0
        %v6621 = vadd.f32 0.0, %v6620
        %v6622 = vpop.f32.mrb[0].mxu0
        %v6623 = vadd.f32 0.0, %v6622
        %v6624 = vpop.f32.mrb[0].mxu0
        %v6625 = vadd.f32 0.0, %v6624
        %6626 = vmatprep.mubr.bf16.mxu0 0
        %6627 = vmatmul.mubr.bf16.gmra.mrb[0].mxu0 %v6455
        %v6628 = vpop.f32.mrb[0].mxu0
        %v6629 = vadd.f32 0.0, %v6628
        %v6630 = vpop.f32.mrb[0].mxu0
        %v6631 = vadd.f32 0.0, %v6630
        %v6632 = vpop.f32.mrb[0].mxu0
        %v6633 = vadd.f32 0.0, %v6632
        %v6634 = vpop.f32.mrb[0].mxu0
        %v6635 = vadd.f32 0.0, %v6634
        %6636 = vmatprep.mubr.bf16.mxu0 0
        %6637 = vmatmul.mubr.bf16.gmra.mrb[0].mxu0 %v6456
        %v6638 = vpop.f32.mrb[0].mxu0
        %v6639 = vadd.f32 0.0, %v6638
        %v6640 = vpop.f32.mrb[0].mxu0
        %v6641 = vadd.f32 0.0, %v6640
        %v6642 = vpop.f32.mrb[0].mxu0
        %v6643 = vadd.f32 0.0, %v6642
        %v6644 = vpop.f32.mrb[0].mxu0
        %v6645 = vadd.f32 0.0, %v6644
        %6646 = vmatprep.mubr.bf16.mxu0 0
        %6647 = vmatmul.mubr.bf16.gmra.mrb[0].mxu0 %v6457
        %v6648 = vpop.f32.mrb[0].mxu0
        %v6649 = vadd.f32 0.0, %v6648
        %v6650 = vpop.f32.mrb[0].mxu0
        %v6651 = vadd.f32 0.0, %v6650
        %v6652 = vpop.f32.mrb[0].mxu0
        %v6653 = vadd.f32 0.0, %v6652
        %v6654 = vpop.f32.mrb[0].mxu0
        %v6655 = vadd.f32 0.0, %v6654
        %6656 = vmatprep.mubr.bf16.mxu0 0
        %6657 = vmatmul.mubr.bf16.gmra.mrb[0].mxu0 %v6458
        %v6658 = vpop.f32.mrb[0].mxu0
        %v6659 = vadd.f32 0.0, %v6658
        %v6660 = vpop.f32.mrb[0].mxu0
        %v6661 = vadd.f32 0.0, %v6660
        %v6662 = vpop.f32.mrb[0].mxu0
        %v6663 = vadd.f32 0.0, %v6662
        %v6664 = vpop.f32.mrb[0].mxu0
        %v6665 = vadd.f32 0.0, %v6664
        %6666 = vmatprep.mubr.bf16.mxu0 0
        %6667 = vmatmul.mubr.bf16.gmra.mrb[0].mxu0 %v6459
        %v6668 = vpop.f32.mrb[0].mxu0
        %v6669 = vadd.f32 0.0, %v6668
        %v6670 = vpop.f32.mrb[0].mxu0
        %v6671 = vadd.f32 0.0, %v6670
        %v6672 = vpop.f32.mrb[0].mxu0
        %v6673 = vadd.f32 0.0, %v6672
        %v6674 = vpop.f32.mrb[0].mxu0
        %v6675 = vadd.f32 0.0, %v6674
        %6676 = vmatprep.mubr.bf16.mxu0 0
        %6677 = vmatmul.mubr.bf16.gmra.mrb[0].mxu0 %v6460
        %v6678 = vpop.f32.mrb[0].mxu0
        %v6679 = vadd.f32 0.0, %v6678
        %v6680 = vpop.f32.mrb[0].mxu0
        %v6681 = vadd.f32 0.0, %v6680
        %v6682 = vpop.f32.mrb[0].mxu0
        %v6683 = vadd.f32 0.0, %v6682
        %v6684 = vpop.f32.mrb[0].mxu0
        %v6685 = vadd.f32 0.0, %v6684
        %6686 = vdwg.mxu0
        %6687 = vmatprep.subr.bf16.mxu0 %v2669
        %6688 = vmatpush1.bf16.msra.mxu0 %v2668
        %6689 = vmatprep.subr.bf16.mxu0 %v2675
        %6690 = vmatpush1.bf16.msra.mxu0 %v2674
        %6691 = vmatprep.subr.bf16.mxu0 %v2681
        %6692 = vmatpush1.bf16.msra.mxu0 %v2680
        %6693 = vmatprep.subr.bf16.mxu0 %v2687
        %6694 = vmatpush1.bf16.msra.mxu0 %v2686
        %6695 = vmatprep.subr.bf16.mxu0 %v2693
        %6696 = vmatpush1.bf16.msra.mxu0 %v2692
        %6697 = vmatprep.subr.bf16.mxu0 %v2699
        %6698 = vmatpush1.bf16.msra.mxu0 %v2698
        %6699 = vmatprep.subr.bf16.mxu0 %v2705
        %6700 = vmatpush1.bf16.msra.mxu0 %v2704
        %6701 = vmatprep.subr.bf16.mxu0 %v2711
        %6702 = vmatpush1.bf16.msra.mxu0 %v2710
        %6703 = vmatprep.subr.bf16.mxu0 0
        %6704 = vmatpush1.bf16.msra.mxu0 0
        %6705 = vmatprep.subr.bf16.mxu0 0
        %6706 = vmatpush1.bf16.msra.mxu0 0
        %6707 = vmatprep.subr.bf16.mxu0 0
        %6708 = vmatpush1.bf16.msra.mxu0 0
        %6709 = vmatprep.subr.bf16.mxu0 0
        %6710 = vmatpush1.bf16.msra.mxu0 0
        %6711 = vmatprep.subr.bf16.mxu0 0
        %6712 = vmatpush1.bf16.msra.mxu0 0
        %6713 = vmatprep.subr.bf16.mxu0 0
        %6714 = vmatpush1.bf16.msra.mxu0 0
        %6715 = vmatprep.subr.bf16.mxu0 0
        %6716 = vmatpush1.bf16.msra.mxu0 0
        %6717 = vmatprep.subr.bf16.mxu0 0
        %6718 = vmatpush1.bf16.msra.mxu0 0
        %6719 = vmatprep.mubr.bf16.mxu0 0
        %6720 = vmatmul.mubr.bf16.gmra.mrb[0].mxu0 %v6453
        %v6721 = vpop.f32.mrb[0].mxu0
        %v6722 = vadd.f32 0.0, %v6721
        %v6723 = vpop.f32.mrb[0].mxu0
        %v6724 = vadd.f32 0.0, %v6723
        %v6725 = vpop.f32.mrb[0].mxu0
        %v6726 = vadd.f32 0.0, %v6725
        %v6727 = vpop.f32.mrb[0].mxu0
        %v6728 = vadd.f32 0.0, %v6727
        %6729 = vmatprep.mubr.bf16.mxu0 0
        %6730 = vmatmul.mubr.bf16.gmra.mrb[0].mxu0 %v6454
        %v6731 = vpop.f32.mrb[0].mxu0
        %v6732 = vadd.f32 0.0, %v6731
        %v6733 = vpop.f32.mrb[0].mxu0
        %v6734 = vadd.f32 0.0, %v6733
        %v6735 = vpop.f32.mrb[0].mxu0
        %v6736 = vadd.f32 0.0, %v6735
        %v6737 = vpop.f32.mrb[0].mxu0
        %v6738 = vadd.f32 0.0, %v6737
        %6739 = vmatprep.mubr.bf16.mxu0 0
        %6740 = vmatmul.mubr.bf16.gmra.mrb[0].mxu0 %v6455
        %v6741 = vpop.f32.mrb[0].mxu0
        %v6742 = vadd.f32 0.0, %v6741
        %v6743 = vpop.f32.mrb[0].mxu0
        %v6744 = vadd.f32 0.0, %v6743
        %v6745 = vpop.f32.mrb[0].mxu0
        %v6746 = vadd.f32 0.0, %v6745
        %v6747 = vpop.f32.mrb[0].mxu0
        %v6748 = vadd.f32 0.0, %v6747
        %6749 = vmatprep.mubr.bf16.mxu0 0
        %6750 = vmatmul.mubr.bf16.gmra.mrb[0].mxu0 %v6456
        %v6751 = vpop.f32.mrb[0].mxu0
        %v6752 = vadd.f32 0.0, %v6751
        %v6753 = vpop.f32.mrb[0].mxu0
        %v6754 = vadd.f32 0.0, %v6753
        %v6755 = vpop.f32.mrb[0].mxu0
        %v6756 = vadd.f32 0.0, %v6755
        %v6757 = vpop.f32.mrb[0].mxu0
        %v6758 = vadd.f32 0.0, %v6757
        %6759 = vmatprep.mubr.bf16.mxu0 0
        %6760 = vmatmul.mubr.bf16.gmra.mrb[0].mxu0 %v6457
        %v6761 = vpop.f32.mrb[0].mxu0
        %v6762 = vadd.f32 0.0, %v6761
        %v6763 = vpop.f32.mrb[0].mxu0
        %v6764 = vadd.f32 0.0, %v6763
        %v6765 = vpop.f32.mrb[0].mxu0
        %v6766 = vadd.f32 0.0, %v6765
        %v6767 = vpop.f32.mrb[0].mxu0
        %v6768 = vadd.f32 0.0, %v6767
        %6769 = vmatprep.mubr.bf16.mxu0 0
        %6770 = vmatmul.mubr.bf16.gmra.mrb[0].mxu0 %v6458
        %v6771 = vpop.f32.mrb[0].mxu0
        %v6772 = vadd.f32 0.0, %v6771
        %v6773 = vpop.f32.mrb[0].mxu0
        %v6774 = vadd.f32 0.0, %v6773
        %v6775 = vpop.f32.mrb[0].mxu0
        %v6776 = vadd.f32 0.0, %v6775
        %v6777 = vpop.f32.mrb[0].mxu0
        %v6778 = vadd.f32 0.0, %v6777
        %6779 = vmatprep.mubr.bf16.mxu0 0
        %6780 = vmatmul.mubr.bf16.gmra.mrb[0].mxu0 %v6459
        %v6781 = vpop.f32.mrb[0].mxu0
        %v6782 = vadd.f32 0.0, %v6781
        %v6783 = vpop.f32.mrb[0].mxu0
        %v6784 = vadd.f32 0.0, %v6783
        %v6785 = vpop.f32.mrb[0].mxu0
        %v6786 = vadd.f32 0.0, %v6785
        %v6787 = vpop.f32.mrb[0].mxu0
        %v6788 = vadd.f32 0.0, %v6787
        %6789 = vmatprep.mubr.bf16.mxu0 0
        %6790 = vmatmul.mubr.bf16.gmra.mrb[0].mxu0 %v6460
        %v6791 = vpop.f32.mrb[0].mxu0
        %v6792 = vadd.f32 0.0, %v6791
        %v6793 = vpop.f32.mrb[0].mxu0
        %v6794 = vadd.f32 0.0, %v6793
        %v6795 = vpop.f32.mrb[0].mxu0
        %v6796 = vadd.f32 0.0, %v6795
        %v6797 = vpop.f32.mrb[0].mxu0
        %v6798 = vadd.f32 0.0, %v6797
        %6799 = vdwg.mxu0
        %v6800 = vtanh.pop %v6496
        %v6801 = vtanh.pop %v6498
        %v6802 = vtanh.pop %v6609
        %v6803 = vtanh.pop %v6611
        %v6804 = vtanh.pop %v6722
        %v6805 = vtanh.pop %v6724
        %v6806 = vtanh.pop %v6500
        %v6807 = vtanh.pop %v6502
        %v6808 = vtanh.pop %v6613
        %v6809 = vtanh.pop %v6615
        %v6810 = vtanh.pop %v6726
        %v6811 = vtanh.pop %v6728
        %v6812 = vtanh.pop %v6506
        %v6813 = vtanh.pop %v6508
        %v6814 = vtanh.pop %v6619
        %v6815 = vtanh.pop %v6621
        %v6816 = vtanh.pop %v6732
        %v6817 = vtanh.pop %v6734
        %v6818 = vtanh.pop %v6510
        %v6819 = vtanh.pop %v6512
        %v6820 = vtanh.pop %v6623
        %v6821 = vtanh.pop %v6625
        %v6822 = vtanh.pop %v6736
        %v6823 = vtanh.pop %v6738
        %v6824 = vtanh.pop %v6516
        %v6825 = vtanh.pop %v6518
        %v6826 = vtanh.pop %v6629
        %v6827 = vtanh.pop %v6631
        %v6828 = vtanh.pop %v6742
        %v6829 = vtanh.pop %v6744
        %v6830 = vtanh.pop %v6520
        %v6831 = vtanh.pop %v6522
        %v6832 = vtanh.pop %v6633
        %v6833 = vtanh.pop %v6635
        %v6834 = vtanh.pop %v6746
        %v6835 = vtanh.pop %v6748
        %v6836 = vtanh.pop %v6526
        %v6837 = vtanh.pop %v6528
        %v6838 = vtanh.pop %v6639
        %v6839 = vtanh.pop %v6641
        %v6840 = vtanh.pop %v6752
        %v6841 = vtanh.pop %v6754
        %v6842 = vtanh.pop %v6530
        %v6843 = vtanh.pop %v6532
        %v6844 = vtanh.pop %v6643
        %v6845 = vtanh.pop %v6645
        %v6846 = vtanh.pop %v6756
        %v6847 = vtanh.pop %v6758
        %v6848 = vtanh.pop %v6536
        %v6849 = vtanh.pop %v6538
        %v6850 = vtanh.pop %v6649
        %v6851 = vtanh.pop %v6651
        %v6852 = vtanh.pop %v6762
        %v6853 = vtanh.pop %v6764
        %v6854 = vtanh.pop %v6540
        %v6855 = vtanh.pop %v6542
        %v6856 = vtanh.pop %v6653
        %v6857 = vtanh.pop %v6655
        %v6858 = vtanh.pop %v6766
        %v6859 = vtanh.pop %v6768
        %v6860 = vtanh.pop %v6546
        %v6861 = vtanh.pop %v6548
        %v6862 = vtanh.pop %v6659
        %v6863 = vtanh.pop %v6661
        %v6864 = vtanh.pop %v6772
        %v6865 = vtanh.pop %v6774
        %v6866 = vtanh.pop %v6550
        %v6867 = vtanh.pop %v6552
        %v6868 = vtanh.pop %v6663
        %v6869 = vtanh.pop %v6665
        %v6870 = vtanh.pop %v6776
        %v6871 = vtanh.pop %v6778
        %v6872 = vtanh.pop %v6556
        %v6873 = vtanh.pop %v6558
        %v6874 = vtanh.pop %v6669
        %v6875 = vtanh.pop %v6671
        %v6876 = vtanh.pop %v6782
        %v6877 = vtanh.pop %v6784
        %v6878 = vtanh.pop %v6560
        %v6879 = vtanh.pop %v6562
        %v6880 = vtanh.pop %v6673
        %v6881 = vtanh.pop %v6675
        %v6882 = vtanh.pop %v6786
        %v6883 = vtanh.pop %v6788
        %v6884 = vtanh.pop %v6566
        %v6885 = vtanh.pop %v6568
        %v6886 = vtanh.pop %v6679
        %v6887 = vtanh.pop %v6681
        %v6888 = vtanh.pop %v6792
        %v6889 = vtanh.pop %v6794
        %v6890 = vtanh.pop %v6570
        %v6891 = vtanh.pop %v6572
        %v6892 = vtanh.pop %v6683
        %v6893 = vtanh.pop %v6685
        %v6894 = vtanh.pop %v6796
        %v6895 = vtanh.pop %v6798
        %v6896 = vpack.c.bf16 %v6806, %v6800
        %v6897 = vpack.c.bf16 %v6807, %v6801
        %v6898 = vpack.c.bf16 %v6808, %v6802
        %v6899 = vpack.c.bf16 %v6809, %v6803
        %v6900 = vpack.c.bf16 %v6810, %v6804
        %v6901 = vpack.c.bf16 %v6811, %v6805
        %v6902 = vpack.c.bf16 %v6818, %v6812
        %v6903 = vpack.c.bf16 %v6819, %v6813
        %v6904 = vpack.c.bf16 %v6820, %v6814
        %v6905 = vpack.c.bf16 %v6821, %v6815
        %v6906 = vpack.c.bf16 %v6822, %v6816
        %v6907 = vpack.c.bf16 %v6823, %v6817
        %v6908 = vpack.c.bf16 %v6830, %v6824
        %v6909 = vpack.c.bf16 %v6831, %v6825
        %v6910 = vpack.c.bf16 %v6832, %v6826
        %v6911 = vpack.c.bf16 %v6833, %v6827
        %v6912 = vpack.c.bf16 %v6834, %v6828
        %v6913 = vpack.c.bf16 %v6835, %v6829
        %v6914 = vpack.c.bf16 %v6842, %v6836
        %v6915 = vpack.c.bf16 %v6843, %v6837
        %v6916 = vpack.c.bf16 %v6844, %v6838
        %v6917 = vpack.c.bf16 %v6845, %v6839
        %v6918 = vpack.c.bf16 %v6846, %v6840
        %v6919 = vpack.c.bf16 %v6847, %v6841
        %v6920 = vpack.c.bf16 %v6854, %v6848
        %v6921 = vpack.c.bf16 %v6855, %v6849
        %v6922 = vpack.c.bf16 %v6856, %v6850
        %v6923 = vpack.c.bf16 %v6857, %v6851
        %v6924 = vpack.c.bf16 %v6858, %v6852
        %v6925 = vpack.c.bf16 %v6859, %v6853
        %v6926 = vpack.c.bf16 %v6866, %v6860
        %v6927 = vpack.c.bf16 %v6867, %v6861
        %v6928 = vpack.c.bf16 %v6868, %v6862
        %v6929 = vpack.c.bf16 %v6869, %v6863
        %v6930 = vpack.c.bf16 %v6870, %v6864
        %v6931 = vpack.c.bf16 %v6871, %v6865
        %v6932 = vpack.c.bf16 %v6878, %v6872
        %v6933 = vpack.c.bf16 %v6879, %v6873
        %v6934 = vpack.c.bf16 %v6880, %v6874
        %v6935 = vpack.c.bf16 %v6881, %v6875
        %v6936 = vpack.c.bf16 %v6882, %v6876
        %v6937 = vpack.c.bf16 %v6883, %v6877
        %v6938 = vpack.c.bf16 %v6890, %v6884
        %v6939 = vpack.c.bf16 %v6891, %v6885
        %v6940 = vpack.c.bf16 %v6892, %v6886
        %v6941 = vpack.c.bf16 %v6893, %v6887
        %v6942 = vpack.c.bf16 %v6894, %v6888
        %v6943 = vpack.c.bf16 %v6895, %v6889
        %s6944 = scalar_lea.vmem [#allocation13], 384
        %v6945 = vld [vmem:[%s6944] sm:$0xf]
        %v6946 = vld [vmem:[%s6944 + $0x4] sm:$0xf]
        %v6947 = vld [vmem:[%s6944 + $0x8] sm:$0xf]
        %v6948 = vld [vmem:[%s6944 + $0xc] sm:$0xf]
        %v6949 = vld [vmem:[%s6944 + $0x10] sm:$0xf]
        %v6950 = vld [vmem:[%s6944 + $0x14] sm:$0xf]
        %v6951 = vld [vmem:[%s6944 + $0x18] sm:$0xf]
        %v6952 = vld [vmem:[%s6944 + $0x1c] sm:$0xf]
        %v6953 = vld [vmem:[%s6944 + $0x20] sm:$0xf]
        %v6954 = vld [vmem:[%s6944 + $0x24] sm:$0xf]
        %v6955 = vld [vmem:[%s6944 + $0x28] sm:$0xf]
        %v6956 = vld [vmem:[%s6944 + $0x2c] sm:$0xf]
        %v6957 = vld [vmem:[%s6944 + $0x30] sm:$0xf]
        %v6958 = vld [vmem:[%s6944 + $0x34] sm:$0xf]
        %v6959 = vld [vmem:[%s6944 + $0x38] sm:$0xf]
        %v6960 = vld [vmem:[%s6944 + $0x3c] sm:$0xf]
        %v6961 = vld [vmem:[%s6944 + $0x40] sm:$0xf]
        %v6962 = vld [vmem:[%s6944 + $0x44] sm:$0xf]
        %v6963 = vld [vmem:[%s6944 + $0x48] sm:$0xf]
        %v6964 = vld [vmem:[%s6944 + $0x4c] sm:$0xf]
        %v6965 = vld [vmem:[%s6944 + $0x50] sm:$0xf]
        %v6966 = vld [vmem:[%s6944 + $0x54] sm:$0xf]
        %v6967 = vld [vmem:[%s6944 + $0x58] sm:$0xf]
        %v6968 = vld [vmem:[%s6944 + $0x5c] sm:$0xf]
        %v6969 = vld [vmem:[%s6944 + $0x60] sm:$0xf]
        %v6970 = vld [vmem:[%s6944 + $0x64] sm:$0xf]
        %v6971 = vld [vmem:[%s6944 + $0x68] sm:$0xf]
        %v6972 = vld [vmem:[%s6944 + $0x6c] sm:$0xf]
        %v6973 = vld [vmem:[%s6944 + $0x70] sm:$0xf]
        %v6974 = vld [vmem:[%s6944 + $0x74] sm:$0xf]
        %v6975 = vld [vmem:[%s6944 + $0x78] sm:$0xf]
        %v6976 = vld [vmem:[%s6944 + $0x7c] sm:$0xf]
        %v6977 = vld [vmem:[%s6944 + $0x80] sm:$0xf]
        %v6978 = vld [vmem:[%s6944 + $0x84] sm:$0xf]
        %v6979 = vld [vmem:[%s6944 + $0x88] sm:$0xf]
        %v6980 = vld [vmem:[%s6944 + $0x8c] sm:$0xf]
        %v6981 = vld [vmem:[%s6944 + $0x90] sm:$0xf]
        %v6982 = vld [vmem:[%s6944 + $0x94] sm:$0xf]
        %v6983 = vld [vmem:[%s6944 + $0x98] sm:$0xf]
        %v6984 = vld [vmem:[%s6944 + $0x9c] sm:$0xf]
        %v6985 = vld [vmem:[%s6944 + $0xa0] sm:$0xf]
        %v6986 = vld [vmem:[%s6944 + $0xa4] sm:$0xf]
        %v6987 = vld [vmem:[%s6944 + $0xa8] sm:$0xf]
        %v6988 = vld [vmem:[%s6944 + $0xac] sm:$0xf]
        %v6989 = vld [vmem:[%s6944 + $0xb0] sm:$0xf]
        %v6990 = vld [vmem:[%s6944 + $0xb4] sm:$0xf]
        %v6991 = vld [vmem:[%s6944 + $0xb8] sm:$0xf]
        %v6992 = vld [vmem:[%s6944 + $0xbc] sm:$0xf]
        %v6993 = vld [vmem:[%s6944 + $0xc0] sm:$0xf]
        %v6994 = vld [vmem:[%s6944 + $0xc4] sm:$0xf]
        %v6995 = vld [vmem:[%s6944 + $0xc8] sm:$0xf]
        %v6996 = vld [vmem:[%s6944 + $0xcc] sm:$0xf]
        %v6997 = vld [vmem:[%s6944 + $0xd0] sm:$0xf]
        %v6998 = vld [vmem:[%s6944 + $0xd4] sm:$0xf]
        %v6999 = vld [vmem:[%s6944 + $0xd8] sm:$0xf]
        %v7000 = vld [vmem:[%s6944 + $0xdc] sm:$0xf]
        %v7001 = vld [vmem:[%s6944 + $0xe0] sm:$0xf]
        %v7002 = vld [vmem:[%s6944 + $0xe4] sm:$0xf]
        %v7003 = vld [vmem:[%s6944 + $0xe8] sm:$0xf]
        %v7004 = vld [vmem:[%s6944 + $0xec] sm:$0xf]
        %v7005 = vld [vmem:[%s6944 + $0xf0] sm:$0xf]
        %v7006 = vld [vmem:[%s6944 + $0xf4] sm:$0xf]
        %v7007 = vld [vmem:[%s6944 + $0xf8] sm:$0xf]
        %v7008 = vld [vmem:[%s6944 + $0xfc] sm:$0xf]
        %v7009 = vld [vmem:[%s6944 + $0x100] sm:$0xf]
        %v7010 = vld [vmem:[%s6944 + $0x104] sm:$0xf]
        %v7011 = vld [vmem:[%s6944 + $0x108] sm:$0xf]
        %v7012 = vld [vmem:[%s6944 + $0x10c] sm:$0xf]
        %v7013 = vld [vmem:[%s6944 + $0x110] sm:$0xf]
        %v7014 = vld [vmem:[%s6944 + $0x114] sm:$0xf]
        %v7015 = vld [vmem:[%s6944 + $0x118] sm:$0xf]
        %v7016 = vld [vmem:[%s6944 + $0x11c] sm:$0xf]
        %v7017 = vld [vmem:[%s6944 + $0x120] sm:$0xf]
        %v7018 = vld [vmem:[%s6944 + $0x124] sm:$0xf]
        %v7019 = vld [vmem:[%s6944 + $0x128] sm:$0xf]
        %v7020 = vld [vmem:[%s6944 + $0x12c] sm:$0xf]
        %v7021 = vld [vmem:[%s6944 + $0x130] sm:$0xf]
        %v7022 = vld [vmem:[%s6944 + $0x134] sm:$0xf]
        %v7023 = vld [vmem:[%s6944 + $0x138] sm:$0xf]
        %v7024 = vld [vmem:[%s6944 + $0x13c] sm:$0xf]
        %v7025 = vld [vmem:[%s6944 + $0x140] sm:$0xf]
        %v7026 = vld [vmem:[%s6944 + $0x144] sm:$0xf]
        %v7027 = vld [vmem:[%s6944 + $0x148] sm:$0xf]
        %v7028 = vld [vmem:[%s6944 + $0x14c] sm:$0xf]
        %v7029 = vld [vmem:[%s6944 + $0x150] sm:$0xf]
        %v7030 = vld [vmem:[%s6944 + $0x154] sm:$0xf]
        %v7031 = vld [vmem:[%s6944 + $0x158] sm:$0xf]
        %v7032 = vld [vmem:[%s6944 + $0x15c] sm:$0xf]
        %v7033 = vld [vmem:[%s6944 + $0x160] sm:$0xf]
        %v7034 = vld [vmem:[%s6944 + $0x164] sm:$0xf]
        %v7035 = vld [vmem:[%s6944 + $0x168] sm:$0xf]
        %v7036 = vld [vmem:[%s6944 + $0x16c] sm:$0xf]
        %v7037 = vld [vmem:[%s6944 + $0x170] sm:$0xf]
        %v7038 = vld [vmem:[%s6944 + $0x174] sm:$0xf]
        %v7039 = vld [vmem:[%s6944 + $0x178] sm:$0xf]
        %v7040 = vld [vmem:[%s6944 + $0x17c] sm:$0xf]
        %v7137 = vunpack.c.l.b16 %v6945
        %v7138 = vunpack.c.l.b16 %v6946
        %v7139 = vunpack.c.l.b16 %v6947
        %v7140 = vunpack.c.l.b16 %v6948
        %v7141 = vunpack.c.l.b16 %v6949
        %v7142 = vunpack.c.l.b16 %v6950
        %v7143 = vunpack.c.l.b16 %v6951
        %v7144 = vunpack.c.l.b16 %v6952
        %v7145 = vunpack.c.l.b16 %v6953
        %v7146 = vunpack.c.l.b16 %v6954
        %v7147 = vunpack.c.l.b16 %v6955
        %v7148 = vunpack.c.l.b16 %v6956
        %v7149 = vunpack.c.l.b16 %v6957
        %v7150 = vunpack.c.l.b16 %v6958
        %v7151 = vunpack.c.l.b16 %v6959
        %v7152 = vunpack.c.l.b16 %v6960
        %v7153 = vunpack.c.l.b16 %v6961
        %v7154 = vunpack.c.l.b16 %v6962
        %v7155 = vunpack.c.l.b16 %v6963
        %v7156 = vunpack.c.l.b16 %v6964
        %v7157 = vunpack.c.l.b16 %v6965
        %v7158 = vunpack.c.l.b16 %v6966
        %v7159 = vunpack.c.l.b16 %v6967
        %v7160 = vunpack.c.l.b16 %v6968
        %v7161 = vunpack.c.l.b16 %v6969
        %v7162 = vunpack.c.l.b16 %v6970
        %v7163 = vunpack.c.l.b16 %v6971
        %v7164 = vunpack.c.l.b16 %v6972
        %v7165 = vunpack.c.l.b16 %v6973
        %v7166 = vunpack.c.l.b16 %v6974
        %v7167 = vunpack.c.l.b16 %v6975
        %v7168 = vunpack.c.l.b16 %v6976
        %v7169 = vunpack.c.l.b16 %v6977
        %v7170 = vunpack.c.l.b16 %v6978
        %v7171 = vunpack.c.l.b16 %v6979
        %v7172 = vunpack.c.l.b16 %v6980
        %v7173 = vunpack.c.l.b16 %v6981
        %v7174 = vunpack.c.l.b16 %v6982
        %v7175 = vunpack.c.l.b16 %v6983
        %v7176 = vunpack.c.l.b16 %v6984
        %v7177 = vunpack.c.l.b16 %v6985
        %v7178 = vunpack.c.l.b16 %v6986
        %v7179 = vunpack.c.l.b16 %v6987
        %v7180 = vunpack.c.l.b16 %v6988
        %v7181 = vunpack.c.l.b16 %v6989
        %v7182 = vunpack.c.l.b16 %v6990
        %v7183 = vunpack.c.l.b16 %v6991
        %v7184 = vunpack.c.l.b16 %v6992
        %v7185 = vunpack.c.l.b16 %v6993
        %v7186 = vunpack.c.l.b16 %v6994
        %v7187 = vunpack.c.l.b16 %v6995
        %v7188 = vunpack.c.l.b16 %v6996
        %v7189 = vunpack.c.l.b16 %v6997
        %v7190 = vunpack.c.l.b16 %v6998
        %v7191 = vunpack.c.l.b16 %v6999
        %v7192 = vunpack.c.l.b16 %v7000
        %v7193 = vunpack.c.l.b16 %v7001
        %v7194 = vunpack.c.l.b16 %v7002
        %v7195 = vunpack.c.l.b16 %v7003
        %v7196 = vunpack.c.l.b16 %v7004
        %v7197 = vunpack.c.l.b16 %v7005
        %v7198 = vunpack.c.l.b16 %v7006
        %v7199 = vunpack.c.l.b16 %v7007
        %v7200 = vunpack.c.l.b16 %v7008
        %v7201 = vunpack.c.l.b16 %v7009
        %v7202 = vunpack.c.l.b16 %v7010
        %v7203 = vunpack.c.l.b16 %v7011
        %v7204 = vunpack.c.l.b16 %v7012
        %v7205 = vunpack.c.l.b16 %v7013
        %v7206 = vunpack.c.l.b16 %v7014
        %v7207 = vunpack.c.l.b16 %v7015
        %v7208 = vunpack.c.l.b16 %v7016
        %v7209 = vunpack.c.l.b16 %v7017
        %v7210 = vunpack.c.l.b16 %v7018
        %v7211 = vunpack.c.l.b16 %v7019
        %v7212 = vunpack.c.l.b16 %v7020
        %v7213 = vunpack.c.l.b16 %v7021
        %v7214 = vunpack.c.l.b16 %v7022
        %v7215 = vunpack.c.l.b16 %v7023
        %v7216 = vunpack.c.l.b16 %v7024
        %v7217 = vunpack.c.l.b16 %v7025
        %v7218 = vunpack.c.l.b16 %v7026
        %v7219 = vunpack.c.l.b16 %v7027
        %v7220 = vunpack.c.l.b16 %v7028
        %v7221 = vunpack.c.l.b16 %v7029
        %v7222 = vunpack.c.l.b16 %v7030
        %v7223 = vunpack.c.l.b16 %v7031
        %v7224 = vunpack.c.l.b16 %v7032
        %v7225 = vunpack.c.l.b16 %v7033
        %v7226 = vunpack.c.l.b16 %v7034
        %v7227 = vunpack.c.l.b16 %v7035
        %v7228 = vunpack.c.l.b16 %v7036
        %v7229 = vunpack.c.l.b16 %v7037
        %v7230 = vunpack.c.l.b16 %v7038
        %v7231 = vunpack.c.l.b16 %v7039
        %v7232 = vunpack.c.l.b16 %v7040
        %v7233 = vpack.c.b16 %v7138, %v7137
        %v7234 = vpack.c.b16 %v7140, %v7139
        %v7235 = vpack.c.b16 %v7142, %v7141
        %v7236 = vpack.c.b16 %v7144, %v7143
        %v7237 = vpack.c.b16 %v7146, %v7145
        %v7238 = vpack.c.b16 %v7148, %v7147
        %v7239 = vpack.c.b16 %v7150, %v7149
        %v7240 = vpack.c.b16 %v7152, %v7151
        %v7241 = vpack.c.b16 %v7154, %v7153
        %v7242 = vpack.c.b16 %v7156, %v7155
        %v7243 = vpack.c.b16 %v7158, %v7157
        %v7244 = vpack.c.b16 %v7160, %v7159
        %v7245 = vpack.c.b16 %v7162, %v7161
        %v7246 = vpack.c.b16 %v7164, %v7163
        %v7247 = vpack.c.b16 %v7166, %v7165
        %v7248 = vpack.c.b16 %v7168, %v7167
        %v7249 = vpack.c.b16 %v7170, %v7169
        %v7250 = vpack.c.b16 %v7172, %v7171
        %v7251 = vpack.c.b16 %v7174, %v7173
        %v7252 = vpack.c.b16 %v7176, %v7175
        %v7253 = vpack.c.b16 %v7178, %v7177
        %v7254 = vpack.c.b16 %v7180, %v7179
        %v7255 = vpack.c.b16 %v7182, %v7181
        %v7256 = vpack.c.b16 %v7184, %v7183
        %v7257 = vpack.c.b16 %v7186, %v7185
        %v7258 = vpack.c.b16 %v7188, %v7187
        %v7259 = vpack.c.b16 %v7190, %v7189
        %v7260 = vpack.c.b16 %v7192, %v7191
        %v7261 = vpack.c.b16 %v7194, %v7193
        %v7262 = vpack.c.b16 %v7196, %v7195
        %v7263 = vpack.c.b16 %v7198, %v7197
        %v7264 = vpack.c.b16 %v7200, %v7199
        %v7265 = vpack.c.b16 %v7202, %v7201
        %v7266 = vpack.c.b16 %v7204, %v7203
        %v7267 = vpack.c.b16 %v7206, %v7205
        %v7268 = vpack.c.b16 %v7208, %v7207
        %v7269 = vpack.c.b16 %v7210, %v7209
        %v7270 = vpack.c.b16 %v7212, %v7211
        %v7271 = vpack.c.b16 %v7214, %v7213
        %v7272 = vpack.c.b16 %v7216, %v7215
        %v7273 = vpack.c.b16 %v7218, %v7217
        %v7274 = vpack.c.b16 %v7220, %v7219
        %v7275 = vpack.c.b16 %v7222, %v7221
        %v7276 = vpack.c.b16 %v7224, %v7223
        %v7277 = vpack.c.b16 %v7226, %v7225
        %v7278 = vpack.c.b16 %v7228, %v7227
        %v7279 = vpack.c.b16 %v7230, %v7229
        %v7280 = vpack.c.b16 %v7232, %v7231
        %7329 = vmatprep.subr.bf16.mxu0 0
        %7330 = vmatpush1.bf16.msra.mxu0 %v7233
        %7331 = vmatprep.subr.bf16.mxu0 0
        %7332 = vmatpush1.bf16.msra.mxu0 %v7234
        %7333 = vmatprep.subr.bf16.mxu0 0
        %7334 = vmatpush1.bf16.msra.mxu0 %v7235
        %7335 = vmatprep.subr.bf16.mxu0 0
        %7336 = vmatpush1.bf16.msra.mxu0 %v7236
        %7337 = vmatprep.subr.bf16.mxu0 0
        %7338 = vmatpush1.bf16.msra.mxu0 %v7237
        %7339 = vmatprep.subr.bf16.mxu0 0
        %7340 = vmatpush1.bf16.msra.mxu0 %v7238
        %7341 = vmatprep.subr.bf16.mxu0 0
        %7342 = vmatpush1.bf16.msra.mxu0 %v7239
        %7343 = vmatprep.subr.bf16.mxu0 0
        %7344 = vmatpush1.bf16.msra.mxu0 %v7240
        %7345 = vmatprep.subr.bf16.mxu0 0
        %7346 = vmatpush1.bf16.msra.mxu0 %v7241
        %7347 = vmatprep.subr.bf16.mxu0 0
        %7348 = vmatpush1.bf16.msra.mxu0 %v7242
        %7349 = vmatprep.subr.bf16.mxu0 0
        %7350 = vmatpush1.bf16.msra.mxu0 %v7243
        %7351 = vmatprep.subr.bf16.mxu0 0
        %7352 = vmatpush1.bf16.msra.mxu0 %v7244
        %7353 = vmatprep.subr.bf16.mxu0 0
        %7354 = vmatpush1.bf16.msra.mxu0 %v7245
        %7355 = vmatprep.subr.bf16.mxu0 0
        %7356 = vmatpush1.bf16.msra.mxu0 %v7246
        %7357 = vmatprep.subr.bf16.mxu0 0
        %7358 = vmatpush1.bf16.msra.mxu0 %v7247
        %7359 = vmatprep.subr.bf16.mxu0 0
        %7360 = vmatpush1.bf16.msra.mxu0 %v7248
        %7361 = vmatprep.mubr.bf16.mxu0 %v6897
        %7362 = vmatmul.mubr.bf16.gmra.mrb[0].mxu0 %v6896
        %v7363 = vpop.f32.mrb[0].mxu0
        %v7364 = vadd.f32 0.0, %v7363
        %v7365 = vpop.f32.mrb[0].mxu0
        %v7366 = vpop.f32.mrb[0].mxu0
        %v7367 = vadd.f32 0.0, %v7366
        %v7368 = vpop.f32.mrb[0].mxu0
        %7369 = vmatprep.mubr.bf16.mxu0 %v6903
        %7370 = vmatmul.mubr.bf16.gmra.mrb[0].mxu0 %v6902
        %v7371 = vpop.f32.mrb[0].mxu0
        %v7372 = vadd.f32 0.0, %v7371
        %v7373 = vpop.f32.mrb[0].mxu0
        %v7374 = vpop.f32.mrb[0].mxu0
        %v7375 = vadd.f32 0.0, %v7374
        %v7376 = vpop.f32.mrb[0].mxu0
        %7377 = vmatprep.mubr.bf16.mxu0 %v6909
        %7378 = vmatmul.mubr.bf16.gmra.mrb[0].mxu0 %v6908
        %v7379 = vpop.f32.mrb[0].mxu0
        %v7380 = vadd.f32 0.0, %v7379
        %v7381 = vpop.f32.mrb[0].mxu0
        %v7382 = vpop.f32.mrb[0].mxu0
        %v7383 = vadd.f32 0.0, %v7382
        %v7384 = vpop.f32.mrb[0].mxu0
        %7385 = vmatprep.mubr.bf16.mxu0 %v6915
        %7386 = vmatmul.mubr.bf16.gmra.mrb[0].mxu0 %v6914
        %v7387 = vpop.f32.mrb[0].mxu0
        %v7388 = vadd.f32 0.0, %v7387
        %v7389 = vpop.f32.mrb[0].mxu0
        %v7390 = vpop.f32.mrb[0].mxu0
        %v7391 = vadd.f32 0.0, %v7390
        %v7392 = vpop.f32.mrb[0].mxu0
        %7393 = vmatprep.mubr.bf16.mxu0 %v6921
        %7394 = vmatmul.mubr.bf16.gmra.mrb[0].mxu0 %v6920
        %v7395 = vpop.f32.mrb[0].mxu0
        %v7396 = vadd.f32 0.0, %v7395
        %v7397 = vpop.f32.mrb[0].mxu0
        %v7398 = vpop.f32.mrb[0].mxu0
        %v7399 = vadd.f32 0.0, %v7398
        %v7400 = vpop.f32.mrb[0].mxu0
        %7401 = vmatprep.mubr.bf16.mxu0 %v6927
        %7402 = vmatmul.mubr.bf16.gmra.mrb[0].mxu0 %v6926
        %v7403 = vpop.f32.mrb[0].mxu0
        %v7404 = vadd.f32 0.0, %v7403
        %v7405 = vpop.f32.mrb[0].mxu0
        %v7406 = vpop.f32.mrb[0].mxu0
        %v7407 = vadd.f32 0.0, %v7406
        %v7408 = vpop.f32.mrb[0].mxu0
        %7409 = vmatprep.mubr.bf16.mxu0 %v6933
        %7410 = vmatmul.mubr.bf16.gmra.mrb[0].mxu0 %v6932
        %v7411 = vpop.f32.mrb[0].mxu0
        %v7412 = vadd.f32 0.0, %v7411
        %v7413 = vpop.f32.mrb[0].mxu0
        %v7414 = vpop.f32.mrb[0].mxu0
        %v7415 = vadd.f32 0.0, %v7414
        %v7416 = vpop.f32.mrb[0].mxu0
        %7417 = vmatprep.mubr.bf16.mxu0 %v6939
        %7418 = vmatmul.mubr.bf16.gmra.mrb[0].mxu0 %v6938
        %v7419 = vpop.f32.mrb[0].mxu0
        %v7420 = vadd.f32 0.0, %v7419
        %v7421 = vpop.f32.mrb[0].mxu0
        %v7422 = vpop.f32.mrb[0].mxu0
        %v7423 = vadd.f32 0.0, %v7422
        %v7424 = vpop.f32.mrb[0].mxu0
        %7425 = vdwg.mxu0
        %7426 = vmatprep.subr.bf16.mxu0 0
        %7427 = vmatpush1.bf16.msra.mxu0 %v7249
        %7428 = vmatprep.subr.bf16.mxu0 0
        %7429 = vmatpush1.bf16.msra.mxu0 %v7250
        %7430 = vmatprep.subr.bf16.mxu0 0
        %7431 = vmatpush1.bf16.msra.mxu0 %v7251
        %7432 = vmatprep.subr.bf16.mxu0 0
        %7433 = vmatpush1.bf16.msra.mxu0 %v7252
        %7434 = vmatprep.subr.bf16.mxu0 0
        %7435 = vmatpush1.bf16.msra.mxu0 %v7253
        %7436 = vmatprep.subr.bf16.mxu0 0
        %7437 = vmatpush1.bf16.msra.mxu0 %v7254
        %7438 = vmatprep.subr.bf16.mxu0 0
        %7439 = vmatpush1.bf16.msra.mxu0 %v7255
        %7440 = vmatprep.subr.bf16.mxu0 0
        %7441 = vmatpush1.bf16.msra.mxu0 %v7256
        %7442 = vmatprep.subr.bf16.mxu0 0
        %7443 = vmatpush1.bf16.msra.mxu0 %v7257
        %7444 = vmatprep.subr.bf16.mxu0 0
        %7445 = vmatpush1.bf16.msra.mxu0 %v7258
        %7446 = vmatprep.subr.bf16.mxu0 0
        %7447 = vmatpush1.bf16.msra.mxu0 %v7259
        %7448 = vmatprep.subr.bf16.mxu0 0
        %7449 = vmatpush1.bf16.msra.mxu0 %v7260
        %7450 = vmatprep.subr.bf16.mxu0 0
        %7451 = vmatpush1.bf16.msra.mxu0 %v7261
        %7452 = vmatprep.subr.bf16.mxu0 0
        %7453 = vmatpush1.bf16.msra.mxu0 %v7262
        %7454 = vmatprep.subr.bf16.mxu0 0
        %7455 = vmatpush1.bf16.msra.mxu0 %v7263
        %7456 = vmatprep.subr.bf16.mxu0 0
        %7457 = vmatpush1.bf16.msra.mxu0 %v7264
        %7458 = vmatprep.mubr.bf16.mxu0 %v6899
        %7459 = vmatmul.mubr.bf16.gmra.mrb[0].mxu0 %v6898
        %v7460 = vpop.f32.mrb[0].mxu0
        %v7461 = vadd.f32 %v7364, %v7460
        %v7462 = vpop.f32.mrb[0].mxu0
        %v7463 = vpop.f32.mrb[0].mxu0
        %v7464 = vadd.f32 %v7367, %v7463
        %v7465 = vpop.f32.mrb[0].mxu0
        %7466 = vmatprep.mubr.bf16.mxu0 %v6905
        %7467 = vmatmul.mubr.bf16.gmra.mrb[0].mxu0 %v6904
        %v7468 = vpop.f32.mrb[0].mxu0
        %v7469 = vadd.f32 %v7372, %v7468
        %v7470 = vpop.f32.mrb[0].mxu0
        %v7471 = vpop.f32.mrb[0].mxu0
        %v7472 = vadd.f32 %v7375, %v7471
        %v7473 = vpop.f32.mrb[0].mxu0
        %7474 = vmatprep.mubr.bf16.mxu0 %v6911
        %7475 = vmatmul.mubr.bf16.gmra.mrb[0].mxu0 %v6910
        %v7476 = vpop.f32.mrb[0].mxu0
        %v7477 = vadd.f32 %v7380, %v7476
        %v7478 = vpop.f32.mrb[0].mxu0
        %v7479 = vpop.f32.mrb[0].mxu0
        %v7480 = vadd.f32 %v7383, %v7479
        %v7481 = vpop.f32.mrb[0].mxu0
        %7482 = vmatprep.mubr.bf16.mxu0 %v6917
        %7483 = vmatmul.mubr.bf16.gmra.mrb[0].mxu0 %v6916
        %v7484 = vpop.f32.mrb[0].mxu0
        %v7485 = vadd.f32 %v7388, %v7484
        %v7486 = vpop.f32.mrb[0].mxu0
        %v7487 = vpop.f32.mrb[0].mxu0
        %v7488 = vadd.f32 %v7391, %v7487
        %v7489 = vpop.f32.mrb[0].mxu0
        %7490 = vmatprep.mubr.bf16.mxu0 %v6923
        %7491 = vmatmul.mubr.bf16.gmra.mrb[0].mxu0 %v6922
        %v7492 = vpop.f32.mrb[0].mxu0
        %v7493 = vadd.f32 %v7396, %v7492
        %v7494 = vpop.f32.mrb[0].mxu0
        %v7495 = vpop.f32.mrb[0].mxu0
        %v7496 = vadd.f32 %v7399, %v7495
        %v7497 = vpop.f32.mrb[0].mxu0
        %7498 = vmatprep.mubr.bf16.mxu0 %v6929
        %7499 = vmatmul.mubr.bf16.gmra.mrb[0].mxu0 %v6928
        %v7500 = vpop.f32.mrb[0].mxu0
        %v7501 = vadd.f32 %v7404, %v7500
        %v7502 = vpop.f32.mrb[0].mxu0
        %v7503 = vpop.f32.mrb[0].mxu0
        %v7504 = vadd.f32 %v7407, %v7503
        %v7505 = vpop.f32.mrb[0].mxu0
        %7506 = vmatprep.mubr.bf16.mxu0 %v6935
        %7507 = vmatmul.mubr.bf16.gmra.mrb[0].mxu0 %v6934
        %v7508 = vpop.f32.mrb[0].mxu0
        %v7509 = vadd.f32 %v7412, %v7508
        %v7510 = vpop.f32.mrb[0].mxu0
        %v7511 = vpop.f32.mrb[0].mxu0
        %v7512 = vadd.f32 %v7415, %v7511
        %v7513 = vpop.f32.mrb[0].mxu0
        %7514 = vmatprep.mubr.bf16.mxu0 %v6941
        %7515 = vmatmul.mubr.bf16.gmra.mrb[0].mxu0 %v6940
        %v7516 = vpop.f32.mrb[0].mxu0
        %v7517 = vadd.f32 %v7420, %v7516
        %v7518 = vpop.f32.mrb[0].mxu0
        %v7519 = vpop.f32.mrb[0].mxu0
        %v7520 = vadd.f32 %v7423, %v7519
        %v7521 = vpop.f32.mrb[0].mxu0
        %7522 = vdwg.mxu0
        %7523 = vmatprep.subr.bf16.mxu0 0
        %7524 = vmatpush1.bf16.msra.mxu0 %v7265
        %7525 = vmatprep.subr.bf16.mxu0 0
        %7526 = vmatpush1.bf16.msra.mxu0 %v7266
        %7527 = vmatprep.subr.bf16.mxu0 0
        %7528 = vmatpush1.bf16.msra.mxu0 %v7267
        %7529 = vmatprep.subr.bf16.mxu0 0
        %7530 = vmatpush1.bf16.msra.mxu0 %v7268
        %7531 = vmatprep.subr.bf16.mxu0 0
        %7532 = vmatpush1.bf16.msra.mxu0 %v7269
        %7533 = vmatprep.subr.bf16.mxu0 0
        %7534 = vmatpush1.bf16.msra.mxu0 %v7270
        %7535 = vmatprep.subr.bf16.mxu0 0
        %7536 = vmatpush1.bf16.msra.mxu0 %v7271
        %7537 = vmatprep.subr.bf16.mxu0 0
        %7538 = vmatpush1.bf16.msra.mxu0 %v7272
        %7539 = vmatprep.subr.bf16.mxu0 0
        %7540 = vmatpush1.bf16.msra.mxu0 %v7273
        %7541 = vmatprep.subr.bf16.mxu0 0
        %7542 = vmatpush1.bf16.msra.mxu0 %v7274
        %7543 = vmatprep.subr.bf16.mxu0 0
        %7544 = vmatpush1.bf16.msra.mxu0 %v7275
        %7545 = vmatprep.subr.bf16.mxu0 0
        %7546 = vmatpush1.bf16.msra.mxu0 %v7276
        %7547 = vmatprep.subr.bf16.mxu0 0
        %7548 = vmatpush1.bf16.msra.mxu0 %v7277
        %7549 = vmatprep.subr.bf16.mxu0 0
        %7550 = vmatpush1.bf16.msra.mxu0 %v7278
        %7551 = vmatprep.subr.bf16.mxu0 0
        %7552 = vmatpush1.bf16.msra.mxu0 %v7279
        %7553 = vmatprep.subr.bf16.mxu0 0
        %7554 = vmatpush1.bf16.msra.mxu0 %v7280
        %7555 = vmatprep.mubr.bf16.mxu0 %v6901
        %7556 = vmatmul.mubr.bf16.gmra.mrb[0].mxu0 %v6900
        %v7557 = vpop.f32.mrb[0].mxu0
        %v7558 = vadd.f32 %v7461, %v7557
        %v7559 = vpop.f32.mrb[0].mxu0
        %v7560 = vpop.f32.mrb[0].mxu0
        %v7561 = vadd.f32 %v7464, %v7560
        %v7562 = vpop.f32.mrb[0].mxu0
        %7563 = vmatprep.mubr.bf16.mxu0 %v6907
        %7564 = vmatmul.mubr.bf16.gmra.mrb[0].mxu0 %v6906
        %v7565 = vpop.f32.mrb[0].mxu0
        %v7566 = vadd.f32 %v7469, %v7565
        %v7567 = vpop.f32.mrb[0].mxu0
        %v7568 = vpop.f32.mrb[0].mxu0
        %v7569 = vadd.f32 %v7472, %v7568
        %v7570 = vpop.f32.mrb[0].mxu0
        %7571 = vmatprep.mubr.bf16.mxu0 %v6913
        %7572 = vmatmul.mubr.bf16.gmra.mrb[0].mxu0 %v6912
        %v7573 = vpop.f32.mrb[0].mxu0
        %v7574 = vadd.f32 %v7477, %v7573
        %v7575 = vpop.f32.mrb[0].mxu0
        %v7576 = vpop.f32.mrb[0].mxu0
        %v7577 = vadd.f32 %v7480, %v7576
        %v7578 = vpop.f32.mrb[0].mxu0
        %7579 = vmatprep.mubr.bf16.mxu0 %v6919
        %7580 = vmatmul.mubr.bf16.gmra.mrb[0].mxu0 %v6918
        %v7581 = vpop.f32.mrb[0].mxu0
        %v7582 = vadd.f32 %v7485, %v7581
        %v7583 = vpop.f32.mrb[0].mxu0
        %v7584 = vpop.f32.mrb[0].mxu0
        %v7585 = vadd.f32 %v7488, %v7584
        %v7586 = vpop.f32.mrb[0].mxu0
        %7587 = vmatprep.mubr.bf16.mxu0 %v6925
        %7588 = vmatmul.mubr.bf16.gmra.mrb[0].mxu0 %v6924
        %v7589 = vpop.f32.mrb[0].mxu0
        %v7590 = vadd.f32 %v7493, %v7589
        %v7591 = vpop.f32.mrb[0].mxu0
        %v7592 = vpop.f32.mrb[0].mxu0
        %v7593 = vadd.f32 %v7496, %v7592
        %v7594 = vpop.f32.mrb[0].mxu0
        %7595 = vmatprep.mubr.bf16.mxu0 %v6931
        %7596 = vmatmul.mubr.bf16.gmra.mrb[0].mxu0 %v6930
        %v7597 = vpop.f32.mrb[0].mxu0
        %v7598 = vadd.f32 %v7501, %v7597
        %v7599 = vpop.f32.mrb[0].mxu0
        %v7600 = vpop.f32.mrb[0].mxu0
        %v7601 = vadd.f32 %v7504, %v7600
        %v7602 = vpop.f32.mrb[0].mxu0
        %7603 = vmatprep.mubr.bf16.mxu0 %v6937
        %7604 = vmatmul.mubr.bf16.gmra.mrb[0].mxu0 %v6936
        %v7605 = vpop.f32.mrb[0].mxu0
        %v7606 = vadd.f32 %v7509, %v7605
        %v7607 = vpop.f32.mrb[0].mxu0
        %v7608 = vpop.f32.mrb[0].mxu0
        %v7609 = vadd.f32 %v7512, %v7608
        %v7610 = vpop.f32.mrb[0].mxu0
        %7611 = vmatprep.mubr.bf16.mxu0 %v6943
        %7612 = vmatmul.mubr.bf16.gmra.mrb[0].mxu0 %v6942
        %v7613 = vpop.f32.mrb[0].mxu0
        %v7614 = vadd.f32 %v7517, %v7613
        %v7615 = vpop.f32.mrb[0].mxu0
        %v7616 = vpop.f32.mrb[0].mxu0
        %v7617 = vadd.f32 %v7520, %v7616
        %v7618 = vpop.f32.mrb[0].mxu0
        %7619 = vdwg.mxu0
        %v7620 = vadd.f32 %v2360, %v7558
        %v7621 = vadd.f32 %v2361, %v7561
        %v7622 = vadd.f32 %v2362, %v7566
        %v7623 = vadd.f32 %v2363, %v7569
        %v7624 = vadd.f32 %v2364, %v7574
        %v7625 = vadd.f32 %v2365, %v7577
        %v7626 = vadd.f32 %v2366, %v7582
        %v7627 = vadd.f32 %v2367, %v7585
        %v7628 = vadd.f32 %v2368, %v7590
        %v7629 = vadd.f32 %v2369, %v7593
        %v7630 = vadd.f32 %v2370, %v7598
        %v7631 = vadd.f32 %v2371, %v7601
        %v7632 = vadd.f32 %v2372, %v7606
        %v7633 = vadd.f32 %v2373, %v7609
        %v7634 = vadd.f32 %v2374, %v7614
        %v7635 = vadd.f32 %v2375, %v7617
        %7636 = vst [vmem:[%s497] sm:$0xff] %v7620
        %7637 = vst [vmem:[%s497 + $0x8] sm:$0xff] %v7621
        %7638 = vst [vmem:[%s497 + $0x10] sm:$0xff] %v7622
        %7639 = vst [vmem:[%s497 + $0x18] sm:$0xff] %v7623
        %7640 = vst [vmem:[%s497 + $0x20] sm:$0xff] %v7624
        %7641 = vst [vmem:[%s497 + $0x28] sm:$0xff] %v7625
        %7642 = vst [vmem:[%s497 + $0x30] sm:$0xff] %v7626
        %7643 = vst [vmem:[%s497 + $0x38] sm:$0xff] %v7627
        %7644 = vst [vmem:[%s497 + $0x40] sm:$0xff] %v7628
        %7645 = vst [vmem:[%s497 + $0x48] sm:$0xff] %v7629
        %7646 = vst [vmem:[%s497 + $0x50] sm:$0xff] %v7630
        %7647 = vst [vmem:[%s497 + $0x58] sm:$0xff] %v7631
        %7648 = vst [vmem:[%s497 + $0x60] sm:$0xff] %v7632
        %7649 = vst [vmem:[%s497 + $0x68] sm:$0xff] %v7633
        %7650 = vst [vmem:[%s497 + $0x70] sm:$0xff] %v7634
        %7651 = vst [vmem:[%s497 + $0x78] sm:$0xff] %v7635
        %s7652 = sand.u32 %s229, 1
        %s7653 = scalar_lea.sflag [#allocation4], %s7652
        %s7654 = sand.u32 %s229, 1
        %s7655 = smul.addr %s7654, 128
        %s7656 = scalar_lea.vmem [#allocation16], %s7655
        // Predicated region
        $region85: #{tpu_custom_call.1} parent=51 // pred_check
          %p7657 = pneg %p239
        $region86: #{tpu_custom_call.1} parent=51 // pred_check_branch
          %7659 = sbr.rel (%p7657) target = $region88
        $region87: #{tpu_custom_call.1} parent=51 // pred_region
          %s7660 = smul.u32 16, %s33
          %s7662 = ssub.s32 2048, 2048
          %7663 = vsyncadd %s7653, %s7662
          %s7664 = smul.addr %s7660, 128
          %s7665 = scalar_lea.hbm %s8, %s7664
          %s7666 = sshll.u32 %s7656, 4
          %s7667 = int_to_ptr.vmem [resolvable:$true] %s7666
          %7672 = dma.vmem_to_hbm [thread:$0]  %s7667, 2048, %s7665, %s7653, 128, 128, 8
        $region88: #{tpu_custom_call.1} parent=51 // pred_fallthru
          _
      $region52: #{tpu_custom_call.1} parent=5 // pred_fallthru
        _
      %p7673 = scmp.le.s32.totalorder 2, %s28
      // Predicated region
      $region89: #{tpu_custom_call.1} parent=5 // pred_check
        %p7674 = pneg %p7673
      $region90: #{tpu_custom_call.1} parent=5 // pred_check_branch
        %7676 = sbr.rel (%p7674) target = $region92
      $region91: #{tpu_custom_call.1} parent=5 // pred_region
        %s7677 = ssub.s32 %s28, 2
        // Predicated region
        $region93: #{tpu_custom_call.1} parent=91 // pred_check
          %p7678 = pneg %p245
        $region94: #{tpu_custom_call.1} parent=91 // pred_check_branch
          %7680 = sbr.rel (%p7678) target = $region96
        $region95: #{tpu_custom_call.1} parent=91 // pred_region
          %s7681 = sand.u32 %s230, 1
          %s7682 = scalar_lea.sflag [#allocation4], %s7681
          %s7683 = sand.u32 %s230, 1
          %s7684 = smul.addr %s7683, 128
          %s7685 = scalar_lea.vmem [#allocation16], %s7684
          %7686 = dma.done %s7682, 2048
        $region96: #{tpu_custom_call.1} parent=91 // pred_fallthru
          _
      $region92: #{tpu_custom_call.1} parent=5 // pred_fallthru
        _
    $region6: #{tpu_custom_call.1} parent=1 // loop_footer
      %s32 = sadd.s32 1, %s28
    $region7: #{tpu_custom_call.1} parent=1 // loop_footer_branch
      %27 = sbr.rel target = $region3
    $region8: #{tpu_custom_call.1} parent=1 // loop_exit
      _
    %7687 = vsyncpa [#allocation3], 1
    %s7688 = scalar_lea.sflag [#allocation3], 1
    %7689 = vsyncpa %s7688, 1
    %7690 = vsyncpa [#allocation6], 1
    %s7691 = scalar_lea.sflag [#allocation6], 1
    %7692 = vsyncpa %s7691, 1
    %7693 = vsyncpa [#allocation9], 1
    %s7694 = scalar_lea.sflag [#allocation9], 1
    %7695 = vsyncpa %s7694, 1
    %7696 = vsyncpa [#allocation12], 1
    %7697 = vsyncpa [#allocation15], 1
    %7698 = vsyncpa [#allocation4], 1
    %s7699 = scalar_lea.sflag [#allocation4], 1
    %7700 = vsyncpa %s7699, 1

</llo_original>
